<compile_context>
chip_gen: v6e
topology: v6e:2x2x1
jax: 0.10.0
libtpu: 0.0.40
codegen_flags: <defaults>
</compile_context>

<pallas_src>
import functools

import jax
import jax.numpy as jnp
from jax import lax
from jax.experimental import pallas as pl
from jax.experimental.pallas import tpu as pltpu

_EPS = 1e-5
_LANE = 128


def _round_up(x, m):
  return (x + m - 1) // m * m


# ----------------------------------------------------------------------------
# Kernel 1: matmul + bias (used once: res_out folded into LSTM layer-0 proj).
# bf16 MXU operands, f32 accumulation + f32 epilogue.
# ----------------------------------------------------------------------------
def _mm_bias_kernel(a_ref, w_ref, b_ref, o_ref):
  acc = jnp.dot(a_ref[...].astype(jnp.bfloat16), w_ref[...],
                preferred_element_type=jnp.float32)
  o_ref[...] = acc + b_ref[...]


def fused_matmul(a, w, shift, *, tm_max=512):
  """out = a @ w + shift.  N zero-padded to a 128-lane multiple (lane-dense
  stores), callers slice.  M tiled over a 1-D 'parallel' grid."""
  a = a.astype(jnp.float32)
  w = w.astype(jnp.bfloat16)                  # bf16 MXU operand
  M, K = a.shape
  N = w.shape[1]
  Np = _round_up(N, _LANE)
  if Np != N:
    w = jnp.pad(w, ((0, 0), (0, Np - N)))
  shift = jnp.pad(jnp.reshape(shift, (-1,)).astype(jnp.float32),
                  (0, Np - N)).reshape(1, Np)

  tm = min(tm_max, _round_up(M, 8))
  Mp = _round_up(M, tm)
  if Mp != M:
    a = jnp.pad(a, ((0, Mp - M), (0, 0)))

  # Explicit VMEM budget: double-buffered a/out tiles + resident w/bias.
  req = 2 * tm * K * 4 + 2 * K * Np * 2 + 2 * Np * 4 + 2 * tm * Np * 4
  vmem_limit = int(min(56 * 2**20, max(16 * 2**20, 2 * req)))

  out = pl.pallas_call(
      _mm_bias_kernel,
      out_shape=jax.ShapeDtypeStruct((Mp, Np), jnp.float32),
      grid=(Mp // tm,),
      in_specs=[
          pl.BlockSpec((tm, K), lambda i: (i, 0)),
          pl.BlockSpec((K, Np), lambda i: (0, 0)),
          pl.BlockSpec((1, Np), lambda i: (0, 0)),
      ],
      out_specs=pl.BlockSpec((tm, Np), lambda i: (i, 0)),
      compiler_params=pltpu.CompilerParams(
          dimension_semantics=("parallel",),
          vmem_limit_bytes=vmem_limit),
  )(a, w, shift)
  return out[:M]


# ----------------------------------------------------------------------------
# Kernel 2: fully fused ResBlock, one grid step per frame ("parallel").
#   conv1(3x3,stride)+BN+ReLU, 1x1(stride)+BN shortcut, conv2(3x3,1)+BN,
#   residual add, ReLU — all in VMEM.  im2col = 9 shifted-window ref reads of
#   the host-padded, phase-split input; each tap is a small bf16 matmul
#   accumulated in f32.
# ----------------------------------------------------------------------------
def _resblock_kernel(xr_ref, w1_ref, wsc_ref, sh1_ref, shsc_ref, w2_ref,
                     sh2_ref, o_ref, y1p_ref, *, stride, Ho, Wo, out_c):
  s = stride
  HWo = Ho * Wo
  # --- conv1 (+ shortcut on the center tap) ----------------------------------
  acc1 = jnp.zeros((HWo, out_c), jnp.float32)
  ysc = None
  for di in range(3):
    for dj in range(3):
      phase = (di % s) * s + (dj % s)
      win = xr_ref[phase, di // s:di // s + Ho, dj // s:dj // s + Wo, :]
      win = win.reshape(HWo, -1).astype(jnp.bfloat16)
      acc1 = acc1 + jnp.dot(win, w1_ref[di * 3 + dj],
                            preferred_element_type=jnp.float32)
      if di == 1 and dj == 1:      # 1x1(stride) shortcut == center tap
        ysc = jnp.dot(win, wsc_ref[...], preferred_element_type=jnp.float32)
  y1 = jnp.maximum(acc1 + sh1_ref[...], 0.0)           # conv1 + BN + ReLU
  # --- zero-pad y1 spatially in a VMEM scratch for conv2 ---------------------
  y1p_ref[...] = jnp.zeros_like(y1p_ref)                # re-zero border/step
  y1p_ref[1:1 + Ho, 1:1 + Wo, :] = y1.reshape(Ho, Wo, out_c)
  # --- conv2 + BN + residual(shortcut+BN) + ReLU ------------------------------
  acc2 = ysc + shsc_ref[...] + sh2_ref[...]
  for di in range(3):
    for dj in range(3):
      win = y1p_ref[di:di + Ho, dj:dj + Wo, :]
      win = win.reshape(HWo, out_c).astype(jnp.bfloat16)
      acc2 = acc2 + jnp.dot(win, w2_ref[di * 3 + dj],
                            preferred_element_type=jnp.float32)
  o_ref[0] = jnp.maximum(acc2, 0.0)


def _phase_split(x, stride):
  """(N,H,W,C) NHWC -> pad=1 and split into stride^2 phases so that strided
  3x3 windows become plain static slices in-kernel.  Returns
  (xr (N*stride^2, Hps, Wps, C), Hps, Wps, Ho, Wo).  ~1x relayout, no 9x."""
  N, H, W, C = x.shape
  Ho = (H + 2 - 3) // stride + 1
  Wo = (W + 2 - 3) // stride + 1
  xp = jnp.pad(x, ((0, 0), (1, 1), (1, 1), (0, 0)))
  Hp, Wp = H + 2, W + 2
  Hps, Wps = -(-Hp // stride), -(-Wp // stride)
  xp = jnp.pad(xp, ((0, 0), (0, Hps * stride - Hp),
                    (0, Wps * stride - Wp), (0, 0)))
  xr = xp.reshape(N, Hps, stride, Wps, stride, C).transpose(0, 2, 4, 1, 3, 5)
  return xr.reshape(N * stride * stride, Hps, Wps, C), Hps, Wps, Ho, Wo


def resblock_forward(feat, bp, stride):
  """feat: (N,H,W,Cin) NHWC f32 -> (N,Ho,Wo,out_c) f32.  Eval mode (dropout =
  identity, BN folded into the weights on the host)."""
  N, _, _, Cin = feat.shape
  out_c = bp['out_c']
  xr, Hps, Wps, Ho, Wo = _phase_split(feat, stride)
  kernel = functools.partial(_resblock_kernel, stride=stride, Ho=Ho, Wo=Wo,
                             out_c=out_c)
  out = pl.pallas_call(
      kernel,
      out_shape=jax.ShapeDtypeStruct((N, Ho * Wo, out_c), jnp.float32),
      grid=(N,),
      in_specs=[
          pl.BlockSpec((stride * stride, Hps, Wps, Cin),
                       lambda n: (n, 0, 0, 0)),
          pl.BlockSpec((9, Cin, out_c), lambda n: (0, 0, 0)),
          pl.BlockSpec((Cin, out_c), lambda n: (0, 0)),
          pl.BlockSpec((1, out_c), lambda n: (0, 0)),
          pl.BlockSpec((1, out_c), lambda n: (0, 0)),
          pl.BlockSpec((9, out_c, out_c), lambda n: (0, 0, 0)),
          pl.BlockSpec((1, out_c), lambda n: (0, 0)),
      ],
      out_specs=pl.BlockSpec((1, Ho * Wo, out_c), lambda n: (n, 0, 0)),
      scratch_shapes=[pltpu.VMEM((Ho + 2, Wo + 2, out_c), jnp.float32)],
      compiler_params=pltpu.CompilerParams(
          dimension_semantics=("parallel",)),
  )(xr, bp['w1'], bp['wsc'], bp['sh1'], bp['shsc'], bp['w2'], bp['sh2'])
  return out.reshape(N, Ho, Wo, out_c)


# ----------------------------------------------------------------------------
# Kernel 3: whole LSTM stack over all outer steps + fc head.
#   lax.fori_loop over the outer `seq` steps (bounded live ranges); one
#   contiguous (blen, 4H) xproj slab per step; per-row outputs go to a
#   (blen, H) VMEM scratch; sigmoid/tanh computed once per full 4H row.
#   Recurrent matmuls are (1,H)x(H,4H) and latency-bound -> kept f32 (bf16
#   would add per-step casts on the serial critical path for no MXU win).
# ----------------------------------------------------------------------------
def _lstm_fc_kernel(*refs, seq, blen, lstm_num, H):
  xproj_ref = refs[0]
  idx = 1
  whh = [refs[idx][...]]
  idx += 1
  wih, bias = [], []
  for _ in range(1, lstm_num):
    wih.append(refs[idx][...])
    bias.append(refs[idx + 1][...])
    whh.append(refs[idx + 2][...])
    idx += 3
  fcw_ref, fcb_ref = refs[idx], refs[idx + 1]
  o_ref, y_sc = refs[idx + 2], refs[idx + 3]

  def cell(gates, c):                    # PyTorch gate order i, f, g, o
    sig = jax.nn.sigmoid(gates)          # one full-width (1, 4H) EUP pass
    th = jnp.tanh(gates)                 # one full-width (1, 4H) EUP pass
    i, f, o = sig[:, 0:H], sig[:, H:2 * H], sig[:, 3 * H:4 * H]
    g = th[:, 2 * H:3 * H]
    c_new = f * c + i * g
    return o * jnp.tanh(c_new), c_new

  def step(si, carry):
    hs, cs = list(carry[0]), list(carry[1])
    ylay = carry[2]
    proj = xproj_ref[si]                 # contiguous (blen, 4H) slab
    for l in range(lstm_num):
      h, c = hs[l], cs[l]
      for bi in range(blen):             # unbatched "sequence" = blen rows
        gates = proj[bi:bi + 1, :] + jnp.dot(
            h, whh[l], preferred_element_type=jnp.float32)
        h, c = cell(gates, c)
        y_sc[bi:bi + 1, :] = h
      hs[l], cs[l] = h, c
      ylay = y_sc[...]                   # (blen, H) layer output rows
      if l + 1 < lstm_num:               # hoisted next-layer input projection
        proj = jnp.dot(ylay, wih[l],
                       preferred_element_type=jnp.float32) + bias[l]
    return tuple(hs), tuple(cs), ylay

  zeros = tuple(jnp.zeros((1, H), jnp.float32) for _ in range(lstm_num))
  _, _, y_last = lax.fori_loop(
      0, seq, step, (zeros, zeros, jnp.zeros((blen, H), jnp.float32)))
  # fc head (BatchNorm1d running stats folded into the Linear on the host).
  o_ref[...] = jnp.dot(y_last, fcw_ref[...],
                       preferred_element_type=jnp.float32) + fcb_ref[...]


def lstm_fc_forward(xproj, lstm_flat, fc_w, fc_b, *, seq, blen, lstm_num, H):
  inputs = ([xproj.astype(jnp.float32)] +
            [w.astype(jnp.float32) for w in lstm_flat] + [fc_w, fc_b])
  kernel = functools.partial(_lstm_fc_kernel, seq=seq, blen=blen,
                             lstm_num=lstm_num, H=H)
  return pl.pallas_call(
      kernel,
      out_shape=jax.ShapeDtypeStruct((blen, fc_w.shape[1]), jnp.float32),
      in_specs=[pl.BlockSpec(memory_space=pltpu.MemorySpace.VMEM)] *
      len(inputs),
      out_specs=pl.BlockSpec(memory_space=pltpu.MemorySpace.VMEM),
      scratch_shapes=[pltpu.VMEM((blen, H), jnp.float32)],
  )(*inputs)


# ----------------------------------------------------------------------------
# Full forward
# ----------------------------------------------------------------------------
def cnn_lstm_forward(params, strides, cfg, x):
  """x: (b, s, c, h, w) -> logits (b, cls_size)."""
  b, s = x.shape[0], x.shape[1]
  H = cfg['lstm_hsize']
  # The CNN has no time dependence: run it once over all b*s frames, NHWC.
  feat = x.reshape((b * s,) + x.shape[2:]).transpose(0, 2, 3, 1)
  feat = feat.astype(jnp.float32)
  for bp, stride in zip(params['blocks'], strides):
    feat = resblock_forward(feat, bp, stride)
  flat = feat.reshape(b * s, -1)               # (b*s, num*num*channel), HWC
  # res_out Linear folded into LSTM layer-0 input projection: one matmul over
  # all b*s rows, hoisted out of the recurrence.
  xproj = fused_matmul(flat, params['w_xproj'], params['b_xproj'])[:, :4 * H]
  # si-major layout: LSTM kernel reads one contiguous (b, 4H) slab per step.
  xproj = xproj.reshape(b, s, 4 * H).transpose(1, 0, 2)
  logits = lstm_fc_forward(xproj, params['lstm_flat'], params['fc_w_eff'],
                           params['fc_b_eff'], seq=s, blen=b,
                           lstm_num=cfg['lstm_num'], H=H)
  return logits[:, :cfg['cls_size']]


# ----------------------------------------------------------------------------
# Deterministic parameter init (PyTorch-shaped) + host-side folding
# ----------------------------------------------------------------------------
def init_raw_params(key, cfg):
  keys = iter(jax.random.split(key, 512))

  def nrm(shape, scale=0.1):
    return scale * jax.random.normal(next(keys), shape, dtype=jnp.float32)

  def pos(shape):
    return 1.0 + 0.1 * jnp.abs(
        jax.random.normal(next(keys), shape, dtype=jnp.float32))

  in_size, in_channel = cfg['in_size'], cfg['in_channel']
  res_num = cfg['res_num']
  res_outsize, lstm_hsize = cfg['res_outsize'], cfg['lstm_hsize']
  lstm_num, cls_size = cfg['lstm_num'], cfg['cls_size']

  plan = [(in_channel, in_channel * 2, 1)]
  channel, num = in_channel * 2, in_size
  for _ in range(res_num):
    plan.append((channel, channel * 2, 2))
    channel *= 2
    num = (num + 1) // 2

  resblocks, strides = [], []
  for ic, oc, stride in plan:
    resblocks.append({
        'conv1_w': nrm((oc, ic, 3, 3)), 'conv1_b': nrm((oc,)),
        'bn1_g': pos((oc,)), 'bn1_b': nrm((oc,)),
        'bn1_m': nrm((oc,)), 'bn1_v': pos((oc,)),
        'conv2_w': nrm((oc, oc, 3, 3)), 'conv2_b': nrm((oc,)),
        'bn2_g': pos((oc,)), 'bn2_b': nrm((oc,)),
        'bn2_m': nrm((oc,)), 'bn2_v': pos((oc,)),
        'sc_w': nrm((oc, ic, 1, 1)),
        'bns_g': pos((oc,)), 'bns_b': nrm((oc,)),
        'bns_m': nrm((oc,)), 'bns_v': pos((oc,)),
    })
    strides.append(stride)

  flat_dim = channel * num * num
  lstm = []
  for l in range(lstm_num):
    in_l = res_outsize if l == 0 else lstm_hsize
    lstm.append({'wih': nrm((4 * lstm_hsize, in_l)),
                 'whh': nrm((4 * lstm_hsize, lstm_hsize)),
                 'bih': nrm((4 * lstm_hsize,)),
                 'bhh': nrm((4 * lstm_hsize,))})

  raw = {
      'resblocks': resblocks,
      'res_out_w': nrm((res_outsize, flat_dim)),
      'res_out_b': nrm((res_outsize,)),
      'lstm': lstm,
      'bn_g': pos((lstm_hsize,)), 'bn_b': nrm((lstm_hsize,)),
      'bn_m': nrm((lstm_hsize,)), 'bn_v': pos((lstm_hsize,)),
      'fc_w': nrm((cls_size, lstm_hsize)), 'fc_b': nrm((cls_size,)),
      'channel': channel, 'num': num,
  }
  return raw, strides


def _bn_fold(gamma, beta, mean, var, conv_bias=None):
  s = gamma / jnp.sqrt(var + _EPS)
  shift = beta - mean * s
  if conv_bias is not None:
    shift = shift + conv_bias * s
  return s, shift


def prepare_params(raw, cfg):
  """Fold BN into the weights, build per-tap NHWC weight tensors (bf16 MXU
  operands), fold res_out into the LSTM layer-0 input projection, fold the fc
  BatchNorm1d into the final Linear (eval), pad fc output to 128 lanes."""
  H = cfg['lstm_hsize']
  blocks = []
  for p in raw['resblocks']:
    out_c, in_c = p['conv1_w'].shape[0], p['conv1_w'].shape[1]
    s1, sh1 = _bn_fold(p['bn1_g'], p['bn1_b'], p['bn1_m'], p['bn1_v'],
                       p['conv1_b'])
    w1 = (p['conv1_w'].transpose(2, 3, 1, 0) * s1).reshape(9, in_c, out_c)
    ss, shs = _bn_fold(p['bns_g'], p['bns_b'], p['bns_m'], p['bns_v'])
    wsc = p['sc_w'][:, :, 0, 0].T * ss
    s2, sh2 = _bn_fold(p['bn2_g'], p['bn2_b'], p['bn2_m'], p['bn2_v'],
                       p['conv2_b'])
    w2 = (p['conv2_w'].transpose(2, 3, 1, 0) * s2).reshape(9, out_c, out_c)
    blocks.append(dict(
        out_c=out_c,
        w1=w1.astype(jnp.bfloat16),
        wsc=wsc.astype(jnp.bfloat16),
        w2=w2.astype(jnp.bfloat16),
        sh1=sh1.reshape(1, out_c).astype(jnp.float32),
        shsc=shs.reshape(1, out_c).astype(jnp.float32),
        sh2=sh2.reshape(1, out_c).astype(jnp.float32)))

  # res_out Linear (defined on NCHW flattening) permuted to NHWC flattening,
  # then folded with LSTM layer-0 input weights: affine(affine(x)).
  channel, num = raw['channel'], raw['num']
  ro_w = raw['res_out_w'].reshape(cfg['res_outsize'], channel, num, num)
  ro_w_hwc = ro_w.transpose(0, 2, 3, 1).reshape(cfg['res_outsize'],
                                                num * num * channel)
  wih0 = raw['lstm'][0]['wih']                       # (4H, res_outsize)
  b0 = raw['lstm'][0]['bih'] + raw['lstm'][0]['bhh']
  w_xproj = ro_w_hwc.T @ wih0.T                      # (flat, 4H)
  b_xproj = raw['res_out_b'] @ wih0.T + b0           # (4H,)

  lstm_flat = [raw['lstm'][0]['whh'].T]              # (H, 4H)
  for l in range(1, cfg['lstm_num']):
    lp = raw['lstm'][l]
    lstm_flat += [lp['wih'].T,
                  (lp['bih'] + lp['bhh']).reshape(1, 4 * H),
                  lp['whh'].T]

  # fc head: BatchNorm1d (eval) folded into the Linear; pad cls to 128 lanes.
  s = raw['bn_g'] / jnp.sqrt(raw['bn_v'] + _EPS)
  t = raw['bn_b'] - raw['bn_m'] * s
  fc_w_eff = s[:, None] * raw['fc_w'].T              # (H, cls)
  fc_b_eff = t @ raw['fc_w'].T + raw['fc_b']         # (cls,)
  cls_pad = _round_up(cfg['cls_size'], _LANE)
  fc_w_eff = jnp.pad(fc_w_eff, ((0, 0), (0, cls_pad - cfg['cls_size'])))
  fc_b_eff = jnp.pad(fc_b_eff, (0, cls_pad - cfg['cls_size'])).reshape(
      1, cls_pad)

  return dict(blocks=blocks, w_xproj=w_xproj, b_xproj=b_xproj,
              lstm_flat=lstm_flat, fc_w_eff=fc_w_eff, fc_b_eff=fc_b_eff)


# ----------------------------------------------------------------------------
if __name__ == "__main__":
  cfg = dict(in_size=8, in_channel=2, res_num=2, bias=True, dropout=0.0,
             lstm_num=2, res_outsize=16, lstm_hsize=32, cls_size=5)
  batch, seq = 2, 4

  key = jax.random.PRNGKey(0)
  pkey, xkey = jax.random.split(key)
  raw, strides = init_raw_params(pkey, cfg)
  params = prepare_params(raw, cfg)

  x = jax.random.normal(
      xkey, (batch, seq, cfg['in_channel'], cfg['in_size'], cfg['in_size']),
      dtype=jnp.float32)

  fwd = jax.jit(lambda inp: cnn_lstm_forward(params, strides, cfg, inp))
  logits = jax.block_until_ready(fwd(x))

  assert logits.shape == (batch, cfg['cls_size']), logits.shape
  assert bool(jnp.all(jnp.isfinite(logits)))
  print("KERNEL_OK")
</pallas_src>

<mosaic_0001>
module attributes {stable_mosaic.version = 11 : i64} {
  func.func @_resblock_kernel(%arg0: i32, %arg1: memref<1x10x10x2xf32, #tpu.memory_space<vmem>>, %arg2: memref<9x2x4xbf16, #tpu.memory_space<vmem>>, %arg3: memref<2x4xbf16, #tpu.memory_space<vmem>>, %arg4: memref<1x4xf32, #tpu.memory_space<vmem>>, %arg5: memref<1x4xf32, #tpu.memory_space<vmem>>, %arg6: memref<9x4x4xbf16, #tpu.memory_space<vmem>>, %arg7: memref<1x4xf32, #tpu.memory_space<vmem>>, %arg8: memref<1x64x4xf32, #tpu.memory_space<vmem>>, %arg9: memref<10x10x4xf32, #tpu.memory_space<vmem>>) attributes {dimension_semantics = [#tpu.dimension_semantics<parallel>], iteration_bounds = array<i64: 8>, scalar_prefetch = 0 : i64, scratch_operands = 1 : i64, tpu.core_type = #tpu.core_type<tc>, window_params = [{transform_indices = @transform_0, window_bounds = array<i64: 1, 10, 10, 2>}, {pipeline_mode = #tpu.pipeline_mode<synchronous>, transform_indices = @transform_1, window_bounds = array<i64: 9, 2, 4>}, {pipeline_mode = #tpu.pipeline_mode<synchronous>, transform_indices = @transform_2, window_bounds = array<i64: 2, 4>}, {pipeline_mode = #tpu.pipeline_mode<synchronous>, transform_indices = @transform_3, window_bounds = array<i64: 1, 4>}, {pipeline_mode = #tpu.pipeline_mode<synchronous>, transform_indices = @transform_4, window_bounds = array<i64: 1, 4>}, {pipeline_mode = #tpu.pipeline_mode<synchronous>, transform_indices = @transform_5, window_bounds = array<i64: 9, 4, 4>}, {pipeline_mode = #tpu.pipeline_mode<synchronous>, transform_indices = @transform_6, window_bounds = array<i64: 1, 4>}, {transform_indices = @transform_7, window_bounds = array<i64: 1, 64, 4>}]} {
    %cst = arith.constant 0.000000e+00 : f32
    %0 = vector.broadcast %cst : f32 to vector<64x4xf32>
    %c0 = arith.constant 0 : index
    %c0_0 = arith.constant 0 : index
    %c0_1 = arith.constant 0 : index
    %c0_2 = arith.constant 0 : index
    %1 = vector.load %arg1[%c0, %c0_0, %c0_1, %c0_2] : memref<1x10x10x2xf32, #tpu.memory_space<vmem>>, vector<1x8x8x2xf32>
    %2 = vector.shape_cast %1 : vector<1x8x8x2xf32> to vector<8x8x2xf32>
    %3 = vector.shape_cast %2 : vector<8x8x2xf32> to vector<64x2xf32>
    %4 = arith.truncf %3 : vector<64x2xf32> to vector<64x2xbf16>
    %c0_3 = arith.constant 0 : index
    %c0_4 = arith.constant 0 : index
    %c0_5 = arith.constant 0 : index
    %5 = vector.load %arg2[%c0_3, %c0_4, %c0_5] : memref<9x2x4xbf16, #tpu.memory_space<vmem>>, vector<1x2x4xbf16>
    %6 = vector.shape_cast %5 : vector<1x2x4xbf16> to vector<2x4xbf16>
    %cst_6 = arith.constant dense<0.000000e+00> : vector<64x4xf32>
    %7 = tpu.matmul %4, %6, %cst_6 {dimension_numbers = #tpu.dot_dimension_numbers<[1], [0], [0], [1], [0, 0, 1, 1], [], []>} : vector<64x2xbf16>, vector<2x4xbf16>, vector<64x4xf32> -> vector<64x4xf32>
    %8 = arith.addf %0, %7 : vector<64x4xf32>
    %c0_7 = arith.constant 0 : index
    %c0_8 = arith.constant 0 : index
    %c1 = arith.constant 1 : index
    %c0_9 = arith.constant 0 : index
    %9 = vector.load %arg1[%c0_7, %c0_8, %c1, %c0_9] : memref<1x10x10x2xf32, #tpu.memory_space<vmem>>, vector<1x8x8x2xf32>
    %10 = vector.shape_cast %9 : vector<1x8x8x2xf32> to vector<8x8x2xf32>
    %11 = vector.shape_cast %10 : vector<8x8x2xf32> to vector<64x2xf32>
    %12 = arith.truncf %11 : vector<64x2xf32> to vector<64x2xbf16>
    %c1_10 = arith.constant 1 : index
    %c0_11 = arith.constant 0 : index
    %c0_12 = arith.constant 0 : index
    %13 = vector.load %arg2[%c1_10, %c0_11, %c0_12] : memref<9x2x4xbf16, #tpu.memory_space<vmem>>, vector<1x2x4xbf16>
    %14 = vector.shape_cast %13 : vector<1x2x4xbf16> to vector<2x4xbf16>
    %cst_13 = arith.constant dense<0.000000e+00> : vector<64x4xf32>
    %15 = tpu.matmul %12, %14, %cst_13 {dimension_numbers = #tpu.dot_dimension_numbers<[1], [0], [0], [1], [0, 0, 1, 1], [], []>} : vector<64x2xbf16>, vector<2x4xbf16>, vector<64x4xf32> -> vector<64x4xf32>
    %16 = arith.addf %8, %15 : vector<64x4xf32>
    %c0_14 = arith.constant 0 : index
    %c0_15 = arith.constant 0 : index
    %c2 = arith.constant 2 : index
    %c0_16 = arith.constant 0 : index
    %17 = vector.load %arg1[%c0_14, %c0_15, %c2, %c0_16] : memref<1x10x10x2xf32, #tpu.memory_space<vmem>>, vector<1x8x8x2xf32>
    %18 = vector.shape_cast %17 : vector<1x8x8x2xf32> to vector<8x8x2xf32>
    %19 = vector.shape_cast %18 : vector<8x8x2xf32> to vector<64x2xf32>
    %20 = arith.truncf %19 : vector<64x2xf32> to vector<64x2xbf16>
    %c2_17 = arith.constant 2 : index
    %c0_18 = arith.constant 0 : index
    %c0_19 = arith.constant 0 : index
    %21 = vector.load %arg2[%c2_17, %c0_18, %c0_19] : memref<9x2x4xbf16, #tpu.memory_space<vmem>>, vector<1x2x4xbf16>
    %22 = vector.shape_cast %21 : vector<1x2x4xbf16> to vector<2x4xbf16>
    %cst_20 = arith.constant dense<0.000000e+00> : vector<64x4xf32>
    %23 = tpu.matmul %20, %22, %cst_20 {dimension_numbers = #tpu.dot_dimension_numbers<[1], [0], [0], [1], [0, 0, 1, 1], [], []>} : vector<64x2xbf16>, vector<2x4xbf16>, vector<64x4xf32> -> vector<64x4xf32>
    %24 = arith.addf %16, %23 : vector<64x4xf32>
    %c0_21 = arith.constant 0 : index
    %c1_22 = arith.constant 1 : index
    %c0_23 = arith.constant 0 : index
    %c0_24 = arith.constant 0 : index
    %25 = vector.load %arg1[%c0_21, %c1_22, %c0_23, %c0_24] : memref<1x10x10x2xf32, #tpu.memory_space<vmem>>, vector<1x8x8x2xf32>
    %26 = vector.shape_cast %25 : vector<1x8x8x2xf32> to vector<8x8x2xf32>
    %27 = vector.shape_cast %26 : vector<8x8x2xf32> to vector<64x2xf32>
    %28 = arith.truncf %27 : vector<64x2xf32> to vector<64x2xbf16>
    %c3 = arith.constant 3 : index
    %c0_25 = arith.constant 0 : index
    %c0_26 = arith.constant 0 : index
    %29 = vector.load %arg2[%c3, %c0_25, %c0_26] : memref<9x2x4xbf16, #tpu.memory_space<vmem>>, vector<1x2x4xbf16>
    %30 = vector.shape_cast %29 : vector<1x2x4xbf16> to vector<2x4xbf16>
    %cst_27 = arith.constant dense<0.000000e+00> : vector<64x4xf32>
    %31 = tpu.matmul %28, %30, %cst_27 {dimension_numbers = #tpu.dot_dimension_numbers<[1], [0], [0], [1], [0, 0, 1, 1], [], []>} : vector<64x2xbf16>, vector<2x4xbf16>, vector<64x4xf32> -> vector<64x4xf32>
    %32 = arith.addf %24, %31 : vector<64x4xf32>
    %c0_28 = arith.constant 0 : index
    %c1_29 = arith.constant 1 : index
    %c1_30 = arith.constant 1 : index
    %c0_31 = arith.constant 0 : index
    %33 = vector.load %arg1[%c0_28, %c1_29, %c1_30, %c0_31] : memref<1x10x10x2xf32, #tpu.memory_space<vmem>>, vector<1x8x8x2xf32>
    %34 = vector.shape_cast %33 : vector<1x8x8x2xf32> to vector<8x8x2xf32>
    %35 = vector.shape_cast %34 : vector<8x8x2xf32> to vector<64x2xf32>
    %36 = arith.truncf %35 : vector<64x2xf32> to vector<64x2xbf16>
    %c4 = arith.constant 4 : index
    %c0_32 = arith.constant 0 : index
    %c0_33 = arith.constant 0 : index
    %37 = vector.load %arg2[%c4, %c0_32, %c0_33] : memref<9x2x4xbf16, #tpu.memory_space<vmem>>, vector<1x2x4xbf16>
    %38 = vector.shape_cast %37 : vector<1x2x4xbf16> to vector<2x4xbf16>
    %cst_34 = arith.constant dense<0.000000e+00> : vector<64x4xf32>
    %39 = tpu.matmul %36, %38, %cst_34 {dimension_numbers = #tpu.dot_dimension_numbers<[1], [0], [0], [1], [0, 0, 1, 1], [], []>} : vector<64x2xbf16>, vector<2x4xbf16>, vector<64x4xf32> -> vector<64x4xf32>
    %40 = arith.addf %32, %39 : vector<64x4xf32>
    %c0_35 = arith.constant 0 : index
    %c0_36 = arith.constant 0 : index
    %41 = vector.load %arg3[%c0_35, %c0_36] : memref<2x4xbf16, #tpu.memory_space<vmem>>, vector<2x4xbf16>
    %cst_37 = arith.constant dense<0.000000e+00> : vector<64x4xf32>
    %42 = tpu.matmul %36, %41, %cst_37 {dimension_numbers = #tpu.dot_dimension_numbers<[1], [0], [0], [1], [0, 0, 1, 1], [], []>} : vector<64x2xbf16>, vector<2x4xbf16>, vector<64x4xf32> -> vector<64x4xf32>
    %c0_38 = arith.constant 0 : index
    %c1_39 = arith.constant 1 : index
    %c2_40 = arith.constant 2 : index
    %c0_41 = arith.constant 0 : index
    %43 = vector.load %arg1[%c0_38, %c1_39, %c2_40, %c0_41] : memref<1x10x10x2xf32, #tpu.memory_space<vmem>>, vector<1x8x8x2xf32>
    %44 = vector.shape_cast %43 : vector<1x8x8x2xf32> to vector<8x8x2xf32>
    %45 = vector.shape_cast %44 : vector<8x8x2xf32> to vector<64x2xf32>
    %46 = arith.truncf %45 : vector<64x2xf32> to vector<64x2xbf16>
    %c5 = arith.constant 5 : index
    %c0_42 = arith.constant 0 : index
    %c0_43 = arith.constant 0 : index
    %47 = vector.load %arg2[%c5, %c0_42, %c0_43] : memref<9x2x4xbf16, #tpu.memory_space<vmem>>, vector<1x2x4xbf16>
    %48 = vector.shape_cast %47 : vector<1x2x4xbf16> to vector<2x4xbf16>
    %cst_44 = arith.constant dense<0.000000e+00> : vector<64x4xf32>
    %49 = tpu.matmul %46, %48, %cst_44 {dimension_numbers = #tpu.dot_dimension_numbers<[1], [0], [0], [1], [0, 0, 1, 1], [], []>} : vector<64x2xbf16>, vector<2x4xbf16>, vector<64x4xf32> -> vector<64x4xf32>
    %50 = arith.addf %40, %49 : vector<64x4xf32>
    %c0_45 = arith.constant 0 : index
    %c2_46 = arith.constant 2 : index
    %c0_47 = arith.constant 0 : index
    %c0_48 = arith.constant 0 : index
    %51 = vector.load %arg1[%c0_45, %c2_46, %c0_47, %c0_48] : memref<1x10x10x2xf32, #tpu.memory_space<vmem>>, vector<1x8x8x2xf32>
    %52 = vector.shape_cast %51 : vector<1x8x8x2xf32> to vector<8x8x2xf32>
    %53 = vector.shape_cast %52 : vector<8x8x2xf32> to vector<64x2xf32>
    %54 = arith.truncf %53 : vector<64x2xf32> to vector<64x2xbf16>
    %c6 = arith.constant 6 : index
    %c0_49 = arith.constant 0 : index
    %c0_50 = arith.constant 0 : index
    %55 = vector.load %arg2[%c6, %c0_49, %c0_50] : memref<9x2x4xbf16, #tpu.memory_space<vmem>>, vector<1x2x4xbf16>
    %56 = vector.shape_cast %55 : vector<1x2x4xbf16> to vector<2x4xbf16>
    %cst_51 = arith.constant dense<0.000000e+00> : vector<64x4xf32>
    %57 = tpu.matmul %54, %56, %cst_51 {dimension_numbers = #tpu.dot_dimension_numbers<[1], [0], [0], [1], [0, 0, 1, 1], [], []>} : vector<64x2xbf16>, vector<2x4xbf16>, vector<64x4xf32> -> vector<64x4xf32>
    %58 = arith.addf %50, %57 : vector<64x4xf32>
    %c0_52 = arith.constant 0 : index
    %c2_53 = arith.constant 2 : index
    %c1_54 = arith.constant 1 : index
    %c0_55 = arith.constant 0 : index
    %59 = vector.load %arg1[%c0_52, %c2_53, %c1_54, %c0_55] : memref<1x10x10x2xf32, #tpu.memory_space<vmem>>, vector<1x8x8x2xf32>
    %60 = vector.shape_cast %59 : vector<1x8x8x2xf32> to vector<8x8x2xf32>
    %61 = vector.shape_cast %60 : vector<8x8x2xf32> to vector<64x2xf32>
    %62 = arith.truncf %61 : vector<64x2xf32> to vector<64x2xbf16>
    %c7 = arith.constant 7 : index
    %c0_56 = arith.constant 0 : index
    %c0_57 = arith.constant 0 : index
    %63 = vector.load %arg2[%c7, %c0_56, %c0_57] : memref<9x2x4xbf16, #tpu.memory_space<vmem>>, vector<1x2x4xbf16>
    %64 = vector.shape_cast %63 : vector<1x2x4xbf16> to vector<2x4xbf16>
    %cst_58 = arith.constant dense<0.000000e+00> : vector<64x4xf32>
    %65 = tpu.matmul %62, %64, %cst_58 {dimension_numbers = #tpu.dot_dimension_numbers<[1], [0], [0], [1], [0, 0, 1, 1], [], []>} : vector<64x2xbf16>, vector<2x4xbf16>, vector<64x4xf32> -> vector<64x4xf32>
    %66 = arith.addf %58, %65 : vector<64x4xf32>
    %c0_59 = arith.constant 0 : index
    %c2_60 = arith.constant 2 : index
    %c2_61 = arith.constant 2 : index
    %c0_62 = arith.constant 0 : index
    %67 = vector.load %arg1[%c0_59, %c2_60, %c2_61, %c0_62] : memref<1x10x10x2xf32, #tpu.memory_space<vmem>>, vector<1x8x8x2xf32>
    %68 = vector.shape_cast %67 : vector<1x8x8x2xf32> to vector<8x8x2xf32>
    %69 = vector.shape_cast %68 : vector<8x8x2xf32> to vector<64x2xf32>
    %70 = arith.truncf %69 : vector<64x2xf32> to vector<64x2xbf16>
    %c8 = arith.constant 8 : index
    %c0_63 = arith.constant 0 : index
    %c0_64 = arith.constant 0 : index
    %71 = vector.load %arg2[%c8, %c0_63, %c0_64] : memref<9x2x4xbf16, #tpu.memory_space<vmem>>, vector<1x2x4xbf16>
    %72 = vector.shape_cast %71 : vector<1x2x4xbf16> to vector<2x4xbf16>
    %cst_65 = arith.constant dense<0.000000e+00> : vector<64x4xf32>
    %73 = tpu.matmul %70, %72, %cst_65 {dimension_numbers = #tpu.dot_dimension_numbers<[1], [0], [0], [1], [0, 0, 1, 1], [], []>} : vector<64x2xbf16>, vector<2x4xbf16>, vector<64x4xf32> -> vector<64x4xf32>
    %74 = arith.addf %66, %73 : vector<64x4xf32>
    %c0_66 = arith.constant 0 : index
    %c0_67 = arith.constant 0 : index
    %75 = vector.load %arg4[%c0_66, %c0_67] : memref<1x4xf32, #tpu.memory_space<vmem>>, vector<1x4xf32>
    %76 = vector.broadcast %75 : vector<1x4xf32> to vector<64x4xf32>
    %77 = arith.addf %74, %76 : vector<64x4xf32>
    %cst_68 = arith.constant 0.000000e+00 : f32
    %78 = vector.broadcast %cst_68 : f32 to vector<64x4xf32>
    %79 = arith.maximumf %77, %78 : vector<64x4xf32>
    %cst_69 = arith.constant 0.000000e+00 : f32
    %80 = vector.broadcast %cst_69 : f32 to vector<10x10x4xf32>
    %c0_70 = arith.constant 0 : index
    %c0_71 = arith.constant 0 : index
    %c0_72 = arith.constant 0 : index
    %81 = vector.load %arg9[%c0_70, %c0_71, %c0_72] : memref<10x10x4xf32, #tpu.memory_space<vmem>>, vector<10x10x4xf32>
    tpu.vector_store %arg9[%c0_70, %c0_71, %c0_72], %80 {strides = array<i32>} : memref<10x10x4xf32, #tpu.memory_space<vmem>>, vector<10x10x4xf32>,
    %82 = vector.shape_cast %79 : vector<64x4xf32> to vector<8x8x4xf32>
    %c1_73 = arith.constant 1 : index
    %c1_74 = arith.constant 1 : index
    %c0_75 = arith.constant 0 : index
    %83 = vector.load %arg9[%c1_73, %c1_74, %c0_75] : memref<10x10x4xf32, #tpu.memory_space<vmem>>, vector<8x8x4xf32>
    tpu.vector_store %arg9[%c1_73, %c1_74, %c0_75], %82 {strides = array<i32>} : memref<10x10x4xf32, #tpu.memory_space<vmem>>, vector<8x8x4xf32>,
    %c0_76 = arith.constant 0 : index
    %c0_77 = arith.constant 0 : index
    %84 = vector.load %arg5[%c0_76, %c0_77] : memref<1x4xf32, #tpu.memory_space<vmem>>, vector<1x4xf32>
    %85 = vector.broadcast %84 : vector<1x4xf32> to vector<64x4xf32>
    %86 = arith.addf %42, %85 : vector<64x4xf32>
    %c0_78 = arith.constant 0 : index
    %c0_79 = arith.constant 0 : index
    %87 = vector.load %arg7[%c0_78, %c0_79] : memref<1x4xf32, #tpu.memory_space<vmem>>, vector<1x4xf32>
    %88 = vector.broadcast %87 : vector<1x4xf32> to vector<64x4xf32>
    %89 = arith.addf %86, %88 : vector<64x4xf32>
    %c0_80 = arith.constant 0 : index
    %c0_81 = arith.constant 0 : index
    %c0_82 = arith.constant 0 : index
    %90 = vector.load %arg9[%c0_80, %c0_81, %c0_82] : memref<10x10x4xf32, #tpu.memory_space<vmem>>, vector<8x8x4xf32>
    %91 = vector.shape_cast %90 : vector<8x8x4xf32> to vector<64x4xf32>
    %92 = arith.truncf %91 : vector<64x4xf32> to vector<64x4xbf16>
    %c0_83 = arith.constant 0 : index
    %c0_84 = arith.constant 0 : index
    %c0_85 = arith.constant 0 : index
    %93 = vector.load %arg6[%c0_83, %c0_84, %c0_85] : memref<9x4x4xbf16, #tpu.memory_space<vmem>>, vector<1x4x4xbf16>
    %94 = vector.shape_cast %93 : vector<1x4x4xbf16> to vector<4x4xbf16>
    %cst_86 = arith.constant dense<0.000000e+00> : vector<64x4xf32>
    %95 = tpu.matmul %92, %94, %cst_86 {dimension_numbers = #tpu.dot_dimension_numbers<[1], [0], [0], [1], [0, 0, 1, 1], [], []>} : vector<64x4xbf16>, vector<4x4xbf16>, vector<64x4xf32> -> vector<64x4xf32>
    %96 = arith.addf %89, %95 : vector<64x4xf32>
    %c0_87 = arith.constant 0 : index
    %c1_88 = arith.constant 1 : index
    %c0_89 = arith.constant 0 : index
    %97 = vector.load %arg9[%c0_87, %c1_88, %c0_89] : memref<10x10x4xf32, #tpu.memory_space<vmem>>, vector<8x8x4xf32>
    %98 = vector.shape_cast %97 : vector<8x8x4xf32> to vector<64x4xf32>
    %99 = arith.truncf %98 : vector<64x4xf32> to vector<64x4xbf16>
    %c1_90 = arith.constant 1 : index
    %c0_91 = arith.constant 0 : index
    %c0_92 = arith.constant 0 : index
    %100 = vector.load %arg6[%c1_90, %c0_91, %c0_92] : memref<9x4x4xbf16, #tpu.memory_space<vmem>>, vector<1x4x4xbf16>
    %101 = vector.shape_cast %100 : vector<1x4x4xbf16> to vector<4x4xbf16>
    %cst_93 = arith.constant dense<0.000000e+00> : vector<64x4xf32>
    %102 = tpu.matmul %99, %101, %cst_93 {dimension_numbers = #tpu.dot_dimension_numbers<[1], [0], [0], [1], [0, 0, 1, 1], [], []>} : vector<64x4xbf16>, vector<4x4xbf16>, vector<64x4xf32> -> vector<64x4xf32>
    %103 = arith.addf %96, %102 : vector<64x4xf32>
    %c0_94 = arith.constant 0 : index
    %c2_95 = arith.constant 2 : index
    %c0_96 = arith.constant 0 : index
    %104 = vector.load %arg9[%c0_94, %c2_95, %c0_96] : memref<10x10x4xf32, #tpu.memory_space<vmem>>, vector<8x8x4xf32>
    %105 = vector.shape_cast %104 : vector<8x8x4xf32> to vector<64x4xf32>
    %106 = arith.truncf %105 : vector<64x4xf32> to vector<64x4xbf16>
    %c2_97 = arith.constant 2 : index
    %c0_98 = arith.constant 0 : index
    %c0_99 = arith.constant 0 : index
    %107 = vector.load %arg6[%c2_97, %c0_98, %c0_99] : memref<9x4x4xbf16, #tpu.memory_space<vmem>>, vector<1x4x4xbf16>
    %108 = vector.shape_cast %107 : vector<1x4x4xbf16> to vector<4x4xbf16>
    %cst_100 = arith.constant dense<0.000000e+00> : vector<64x4xf32>
    %109 = tpu.matmul %106, %108, %cst_100 {dimension_numbers = #tpu.dot_dimension_numbers<[1], [0], [0], [1], [0, 0, 1, 1], [], []>} : vector<64x4xbf16>, vector<4x4xbf16>, vector<64x4xf32> -> vector<64x4xf32>
    %110 = arith.addf %103, %109 : vector<64x4xf32>
    %c1_101 = arith.constant 1 : index
    %c0_102 = arith.constant 0 : index
    %c0_103 = arith.constant 0 : index
    %111 = vector.load %arg9[%c1_101, %c0_102, %c0_103] : memref<10x10x4xf32, #tpu.memory_space<vmem>>, vector<8x8x4xf32>
    %112 = vector.shape_cast %111 : vector<8x8x4xf32> to vector<64x4xf32>
    %113 = arith.truncf %112 : vector<64x4xf32> to vector<64x4xbf16>
    %c3_104 = arith.constant 3 : index
    %c0_105 = arith.constant 0 : index
    %c0_106 = arith.constant 0 : index
    %114 = vector.load %arg6[%c3_104, %c0_105, %c0_106] : memref<9x4x4xbf16, #tpu.memory_space<vmem>>, vector<1x4x4xbf16>
    %115 = vector.shape_cast %114 : vector<1x4x4xbf16> to vector<4x4xbf16>
    %cst_107 = arith.constant dense<0.000000e+00> : vector<64x4xf32>
    %116 = tpu.matmul %113, %115, %cst_107 {dimension_numbers = #tpu.dot_dimension_numbers<[1], [0], [0], [1], [0, 0, 1, 1], [], []>} : vector<64x4xbf16>, vector<4x4xbf16>, vector<64x4xf32> -> vector<64x4xf32>
    %117 = arith.addf %110, %116 : vector<64x4xf32>
    %c1_108 = arith.constant 1 : index
    %c1_109 = arith.constant 1 : index
    %c0_110 = arith.constant 0 : index
    %118 = vector.load %arg9[%c1_108, %c1_109, %c0_110] : memref<10x10x4xf32, #tpu.memory_space<vmem>>, vector<8x8x4xf32>
    %119 = vector.shape_cast %118 : vector<8x8x4xf32> to vector<64x4xf32>
    %120 = arith.truncf %119 : vector<64x4xf32> to vector<64x4xbf16>
    %c4_111 = arith.constant 4 : index
    %c0_112 = arith.constant 0 : index
    %c0_113 = arith.constant 0 : index
    %121 = vector.load %arg6[%c4_111, %c0_112, %c0_113] : memref<9x4x4xbf16, #tpu.memory_space<vmem>>, vector<1x4x4xbf16>
    %122 = vector.shape_cast %121 : vector<1x4x4xbf16> to vector<4x4xbf16>
    %cst_114 = arith.constant dense<0.000000e+00> : vector<64x4xf32>
    %123 = tpu.matmul %120, %122, %cst_114 {dimension_numbers = #tpu.dot_dimension_numbers<[1], [0], [0], [1], [0, 0, 1, 1], [], []>} : vector<64x4xbf16>, vector<4x4xbf16>, vector<64x4xf32> -> vector<64x4xf32>
    %124 = arith.addf %117, %123 : vector<64x4xf32>
    %c1_115 = arith.constant 1 : index
    %c2_116 = arith.constant 2 : index
    %c0_117 = arith.constant 0 : index
    %125 = vector.load %arg9[%c1_115, %c2_116, %c0_117] : memref<10x10x4xf32, #tpu.memory_space<vmem>>, vector<8x8x4xf32>
    %126 = vector.shape_cast %125 : vector<8x8x4xf32> to vector<64x4xf32>
    %127 = arith.truncf %126 : vector<64x4xf32> to vector<64x4xbf16>
    %c5_118 = arith.constant 5 : index
    %c0_119 = arith.constant 0 : index
    %c0_120 = arith.constant 0 : index
    %128 = vector.load %arg6[%c5_118, %c0_119, %c0_120] : memref<9x4x4xbf16, #tpu.memory_space<vmem>>, vector<1x4x4xbf16>
    %129 = vector.shape_cast %128 : vector<1x4x4xbf16> to vector<4x4xbf16>
    %cst_121 = arith.constant dense<0.000000e+00> : vector<64x4xf32>
    %130 = tpu.matmul %127, %129, %cst_121 {dimension_numbers = #tpu.dot_dimension_numbers<[1], [0], [0], [1], [0, 0, 1, 1], [], []>} : vector<64x4xbf16>, vector<4x4xbf16>, vector<64x4xf32> -> vector<64x4xf32>
    %131 = arith.addf %124, %130 : vector<64x4xf32>
    %c2_122 = arith.constant 2 : index
    %c0_123 = arith.constant 0 : index
    %c0_124 = arith.constant 0 : index
    %132 = vector.load %arg9[%c2_122, %c0_123, %c0_124] : memref<10x10x4xf32, #tpu.memory_space<vmem>>, vector<8x8x4xf32>
    %133 = vector.shape_cast %132 : vector<8x8x4xf32> to vector<64x4xf32>
    %134 = arith.truncf %133 : vector<64x4xf32> to vector<64x4xbf16>
    %c6_125 = arith.constant 6 : index
    %c0_126 = arith.constant 0 : index
    %c0_127 = arith.constant 0 : index
    %135 = vector.load %arg6[%c6_125, %c0_126, %c0_127] : memref<9x4x4xbf16, #tpu.memory_space<vmem>>, vector<1x4x4xbf16>
    %136 = vector.shape_cast %135 : vector<1x4x4xbf16> to vector<4x4xbf16>
    %cst_128 = arith.constant dense<0.000000e+00> : vector<64x4xf32>
    %137 = tpu.matmul %134, %136, %cst_128 {dimension_numbers = #tpu.dot_dimension_numbers<[1], [0], [0], [1], [0, 0, 1, 1], [], []>} : vector<64x4xbf16>, vector<4x4xbf16>, vector<64x4xf32> -> vector<64x4xf32>
    %138 = arith.addf %131, %137 : vector<64x4xf32>
    %c2_129 = arith.constant 2 : index
    %c1_130 = arith.constant 1 : index
    %c0_131 = arith.constant 0 : index
    %139 = vector.load %arg9[%c2_129, %c1_130, %c0_131] : memref<10x10x4xf32, #tpu.memory_space<vmem>>, vector<8x8x4xf32>
    %140 = vector.shape_cast %139 : vector<8x8x4xf32> to vector<64x4xf32>
    %141 = arith.truncf %140 : vector<64x4xf32> to vector<64x4xbf16>
    %c7_132 = arith.constant 7 : index
    %c0_133 = arith.constant 0 : index
    %c0_134 = arith.constant 0 : index
    %142 = vector.load %arg6[%c7_132, %c0_133, %c0_134] : memref<9x4x4xbf16, #tpu.memory_space<vmem>>, vector<1x4x4xbf16>
    %143 = vector.shape_cast %142 : vector<1x4x4xbf16> to vector<4x4xbf16>
    %cst_135 = arith.constant dense<0.000000e+00> : vector<64x4xf32>
    %144 = tpu.matmul %141, %143, %cst_135 {dimension_numbers = #tpu.dot_dimension_numbers<[1], [0], [0], [1], [0, 0, 1, 1], [], []>} : vector<64x4xbf16>, vector<4x4xbf16>, vector<64x4xf32> -> vector<64x4xf32>
    %145 = arith.addf %138, %144 : vector<64x4xf32>
    %c2_136 = arith.constant 2 : index
    %c2_137 = arith.constant 2 : index
    %c0_138 = arith.constant 0 : index
    %146 = vector.load %arg9[%c2_136, %c2_137, %c0_138] : memref<10x10x4xf32, #tpu.memory_space<vmem>>, vector<8x8x4xf32>
    %147 = vector.shape_cast %146 : vector<8x8x4xf32> to vector<64x4xf32>
    %148 = arith.truncf %147 : vector<64x4xf32> to vector<64x4xbf16>
    %c8_139 = arith.constant 8 : index
    %c0_140 = arith.constant 0 : index
    %c0_141 = arith.constant 0 : index
    %149 = vector.load %arg6[%c8_139, %c0_140, %c0_141] : memref<9x4x4xbf16, #tpu.memory_space<vmem>>, vector<1x4x4xbf16>
    %150 = vector.shape_cast %149 : vector<1x4x4xbf16> to vector<4x4xbf16>
    %cst_142 = arith.constant dense<0.000000e+00> : vector<64x4xf32>
    %151 = tpu.matmul %148, %150, %cst_142 {dimension_numbers = #tpu.dot_dimension_numbers<[1], [0], [0], [1], [0, 0, 1, 1], [], []>} : vector<64x4xbf16>, vector<4x4xbf16>, vector<64x4xf32> -> vector<64x4xf32>
    %152 = arith.addf %145, %151 : vector<64x4xf32>
    %cst_143 = arith.constant 0.000000e+00 : f32
    %153 = vector.broadcast %cst_143 : f32 to vector<64x4xf32>
    %154 = arith.maximumf %152, %153 : vector<64x4xf32>
    %c0_144 = arith.constant 0 : index
    %c0_145 = arith.constant 0 : index
    %c0_146 = arith.constant 0 : index
    %155 = vector.load %arg8[%c0_144, %c0_145, %c0_146] : memref<1x64x4xf32, #tpu.memory_space<vmem>>, vector<1x64x4xf32>
    %156 = vector.shape_cast %155 : vector<1x64x4xf32> to vector<64x4xf32>
    %157 = vector.shape_cast %154 : vector<64x4xf32> to vector<1x64x4xf32>
    tpu.vector_store %arg8[%c0_144, %c0_145, %c0_146], %157 {strides = array<i32>} : memref<1x64x4xf32, #tpu.memory_space<vmem>>, vector<1x64x4xf32>,
    return
  }
  func.func @transform_0(%arg0: i32) -> (i32, i32, i32, i32) {
    %c0_i32 = arith.constant 0 : i32
    %c0_i32_0 = arith.constant 0 : i32
    %c0_i32_1 = arith.constant 0 : i32
    %c0_i32_2 = arith.constant 0 : i32
    return %arg0, %c0_i32, %c0_i32_0, %c0_i32_1 : i32, i32, i32, i32
  }
  func.func @transform_1(%arg0: i32) -> (i32, i32, i32) {
    %c0_i32 = arith.constant 0 : i32
    %c0_i32_0 = arith.constant 0 : i32
    %c0_i32_1 = arith.constant 0 : i32
    %c0_i32_2 = arith.constant 0 : i32
    return %c0_i32, %c0_i32_0, %c0_i32_1 : i32, i32, i32
  }
  func.func @transform_2(%arg0: i32) -> (i32, i32) {
    %c0_i32 = arith.constant 0 : i32
    %c0_i32_0 = arith.constant 0 : i32
    %c0_i32_1 = arith.constant 0 : i32
    return %c0_i32, %c0_i32_0 : i32, i32
  }
  func.func @transform_3(%arg0: i32) -> (i32, i32) {
    %c0_i32 = arith.constant 0 : i32
    %c0_i32_0 = arith.constant 0 : i32
    %c0_i32_1 = arith.constant 0 : i32
    return %c0_i32, %c0_i32_0 : i32, i32
  }
  func.func @transform_4(%arg0: i32) -> (i32, i32) {
    %c0_i32 = arith.constant 0 : i32
    %c0_i32_0 = arith.constant 0 : i32
    %c0_i32_1 = arith.constant 0 : i32
    return %c0_i32, %c0_i32_0 : i32, i32
  }
  func.func @transform_5(%arg0: i32) -> (i32, i32, i32) {
    %c0_i32 = arith.constant 0 : i32
    %c0_i32_0 = arith.constant 0 : i32
    %c0_i32_1 = arith.constant 0 : i32
    %c0_i32_2 = arith.constant 0 : i32
    return %c0_i32, %c0_i32_0, %c0_i32_1 : i32, i32, i32
  }
  func.func @transform_6(%arg0: i32) -> (i32, i32) {
    %c0_i32 = arith.constant 0 : i32
    %c0_i32_0 = arith.constant 0 : i32
    %c0_i32_1 = arith.constant 0 : i32
    return %c0_i32, %c0_i32_0 : i32, i32
  }
  func.func @transform_7(%arg0: i32) -> (i32, i32, i32) {
    %c0_i32 = arith.constant 0 : i32
    %c0_i32_0 = arith.constant 0 : i32
    %c0_i32_1 = arith.constant 0 : i32
    return %arg0, %c0_i32, %c0_i32_0 : i32, i32, i32
  }
}

module attributes {stable_mosaic.version = 11 : i64} {
  func.func @_resblock_kernel(%arg0: i32, %arg1: memref<4x5x5x4xf32, #tpu.memory_space<vmem>>, %arg2: memref<9x4x8xbf16, #tpu.memory_space<vmem>>, %arg3: memref<4x8xbf16, #tpu.memory_space<vmem>>, %arg4: memref<1x8xf32, #tpu.memory_space<vmem>>, %arg5: memref<1x8xf32, #tpu.memory_space<vmem>>, %arg6: memref<9x8x8xbf16, #tpu.memory_space<vmem>>, %arg7: memref<1x8xf32, #tpu.memory_space<vmem>>, %arg8: memref<1x16x8xf32, #tpu.memory_space<vmem>>, %arg9: memref<6x6x8xf32, #tpu.memory_space<vmem>>) attributes {dimension_semantics = [#tpu.dimension_semantics<parallel>], iteration_bounds = array<i64: 8>, scalar_prefetch = 0 : i64, scratch_operands = 1 : i64, tpu.core_type = #tpu.core_type<tc>, window_params = [{transform_indices = @transform_0, window_bounds = array<i64: 4, 5, 5, 4>}, {pipeline_mode = #tpu.pipeline_mode<synchronous>, transform_indices = @transform_1, window_bounds = array<i64: 9, 4, 8>}, {pipeline_mode = #tpu.pipeline_mode<synchronous>, transform_indices = @transform_2, window_bounds = array<i64: 4, 8>}, {pipeline_mode = #tpu.pipeline_mode<synchronous>, transform_indices = @transform_3, window_bounds = array<i64: 1, 8>}, {pipeline_mode = #tpu.pipeline_mode<synchronous>, transform_indices = @transform_4, window_bounds = array<i64: 1, 8>}, {pipeline_mode = #tpu.pipeline_mode<synchronous>, transform_indices = @transform_5, window_bounds = array<i64: 9, 8, 8>}, {pipeline_mode = #tpu.pipeline_mode<synchronous>, transform_indices = @transform_6, window_bounds = array<i64: 1, 8>}, {transform_indices = @transform_7, window_bounds = array<i64: 1, 16, 8>}]} {
    %cst = arith.constant 0.000000e+00 : f32
    %0 = vector.broadcast %cst : f32 to vector<16x8xf32>
    %c0 = arith.constant 0 : index
    %c0_0 = arith.constant 0 : index
    %c0_1 = arith.constant 0 : index
    %c0_2 = arith.constant 0 : index
    %1 = vector.load %arg1[%c0, %c0_0, %c0_1, %c0_2] : memref<4x5x5x4xf32, #tpu.memory_space<vmem>>, vector<1x4x4x4xf32>
    %2 = vector.shape_cast %1 : vector<1x4x4x4xf32> to vector<4x4x4xf32>
    %3 = vector.shape_cast %2 : vector<4x4x4xf32> to vector<16x4xf32>
    %4 = arith.truncf %3 : vector<16x4xf32> to vector<16x4xbf16>
    %c0_3 = arith.constant 0 : index
    %c0_4 = arith.constant 0 : index
    %c0_5 = arith.constant 0 : index
    %5 = vector.load %arg2[%c0_3, %c0_4, %c0_5] : memref<9x4x8xbf16, #tpu.memory_space<vmem>>, vector<1x4x8xbf16>
    %6 = vector.shape_cast %5 : vector<1x4x8xbf16> to vector<4x8xbf16>
    %cst_6 = arith.constant dense<0.000000e+00> : vector<16x8xf32>
    %7 = tpu.matmul %4, %6, %cst_6 {dimension_numbers = #tpu.dot_dimension_numbers<[1], [0], [0], [1], [0, 0, 1, 1], [], []>} : vector<16x4xbf16>, vector<4x8xbf16>, vector<16x8xf32> -> vector<16x8xf32>
    %8 = arith.addf %0, %7 : vector<16x8xf32>
    %c1 = arith.constant 1 : index
    %c0_7 = arith.constant 0 : index
    %c0_8 = arith.constant 0 : index
    %c0_9 = arith.constant 0 : index
    %9 = vector.load %arg1[%c1, %c0_7, %c0_8, %c0_9] : memref<4x5x5x4xf32, #tpu.memory_space<vmem>>, vector<1x4x4x4xf32>
    %10 = vector.shape_cast %9 : vector<1x4x4x4xf32> to vector<4x4x4xf32>
    %11 = vector.shape_cast %10 : vector<4x4x4xf32> to vector<16x4xf32>
    %12 = arith.truncf %11 : vector<16x4xf32> to vector<16x4xbf16>
    %c1_10 = arith.constant 1 : index
    %c0_11 = arith.constant 0 : index
    %c0_12 = arith.constant 0 : index
    %13 = vector.load %arg2[%c1_10, %c0_11, %c0_12] : memref<9x4x8xbf16, #tpu.memory_space<vmem>>, vector<1x4x8xbf16>
    %14 = vector.shape_cast %13 : vector<1x4x8xbf16> to vector<4x8xbf16>
    %cst_13 = arith.constant dense<0.000000e+00> : vector<16x8xf32>
    %15 = tpu.matmul %12, %14, %cst_13 {dimension_numbers = #tpu.dot_dimension_numbers<[1], [0], [0], [1], [0, 0, 1, 1], [], []>} : vector<16x4xbf16>, vector<4x8xbf16>, vector<16x8xf32> -> vector<16x8xf32>
    %16 = arith.addf %8, %15 : vector<16x8xf32>
    %c0_14 = arith.constant 0 : index
    %c0_15 = arith.constant 0 : index
    %c1_16 = arith.constant 1 : index
    %c0_17 = arith.constant 0 : index
    %17 = vector.load %arg1[%c0_14, %c0_15, %c1_16, %c0_17] : memref<4x5x5x4xf32, #tpu.memory_space<vmem>>, vector<1x4x4x4xf32>
    %18 = vector.shape_cast %17 : vector<1x4x4x4xf32> to vector<4x4x4xf32>
    %19 = vector.shape_cast %18 : vector<4x4x4xf32> to vector<16x4xf32>
    %20 = arith.truncf %19 : vector<16x4xf32> to vector<16x4xbf16>
    %c2 = arith.constant 2 : index
    %c0_18 = arith.constant 0 : index
    %c0_19 = arith.constant 0 : index
    %21 = vector.load %arg2[%c2, %c0_18, %c0_19] : memref<9x4x8xbf16, #tpu.memory_space<vmem>>, vector<1x4x8xbf16>
    %22 = vector.shape_cast %21 : vector<1x4x8xbf16> to vector<4x8xbf16>
    %cst_20 = arith.constant dense<0.000000e+00> : vector<16x8xf32>
    %23 = tpu.matmul %20, %22, %cst_20 {dimension_numbers = #tpu.dot_dimension_numbers<[1], [0], [0], [1], [0, 0, 1, 1], [], []>} : vector<16x4xbf16>, vector<4x8xbf16>, vector<16x8xf32> -> vector<16x8xf32>
    %24 = arith.addf %16, %23 : vector<16x8xf32>
    %c2_21 = arith.constant 2 : index
    %c0_22 = arith.constant 0 : index
    %c0_23 = arith.constant 0 : index
    %c0_24 = arith.constant 0 : index
    %25 = vector.load %arg1[%c2_21, %c0_22, %c0_23, %c0_24] : memref<4x5x5x4xf32, #tpu.memory_space<vmem>>, vector<1x4x4x4xf32>
    %26 = vector.shape_cast %25 : vector<1x4x4x4xf32> to vector<4x4x4xf32>
    %27 = vector.shape_cast %26 : vector<4x4x4xf32> to vector<16x4xf32>
    %28 = arith.truncf %27 : vector<16x4xf32> to vector<16x4xbf16>
    %c3 = arith.constant 3 : index
    %c0_25 = arith.constant 0 : index
    %c0_26 = arith.constant 0 : index
    %29 = vector.load %arg2[%c3, %c0_25, %c0_26] : memref<9x4x8xbf16, #tpu.memory_space<vmem>>, vector<1x4x8xbf16>
    %30 = vector.shape_cast %29 : vector<1x4x8xbf16> to vector<4x8xbf16>
    %cst_27 = arith.constant dense<0.000000e+00> : vector<16x8xf32>
    %31 = tpu.matmul %28, %30, %cst_27 {dimension_numbers = #tpu.dot_dimension_numbers<[1], [0], [0], [1], [0, 0, 1, 1], [], []>} : vector<16x4xbf16>, vector<4x8xbf16>, vector<16x8xf32> -> vector<16x8xf32>
    %32 = arith.addf %24, %31 : vector<16x8xf32>
    %c3_28 = arith.constant 3 : index
    %c0_29 = arith.constant 0 : index
    %c0_30 = arith.constant 0 : index
    %c0_31 = arith.constant 0 : index
    %33 = vector.load %arg1[%c3_28, %c0_29, %c0_30, %c0_31] : memref<4x5x5x4xf32, #tpu.memory_space<vmem>>, vector<1x4x4x4xf32>
    %34 = vector.shape_cast %33 : vector<1x4x4x4xf32> to vector<4x4x4xf32>
    %35 = vector.shape_cast %34 : vector<4x4x4xf32> to vector<16x4xf32>
    %36 = arith.truncf %35 : vector<16x4xf32> to vector<16x4xbf16>
    %c4 = arith.constant 4 : index
    %c0_32 = arith.constant 0 : index
    %c0_33 = arith.constant 0 : index
    %37 = vector.load %arg2[%c4, %c0_32, %c0_33] : memref<9x4x8xbf16, #tpu.memory_space<vmem>>, vector<1x4x8xbf16>
    %38 = vector.shape_cast %37 : vector<1x4x8xbf16> to vector<4x8xbf16>
    %cst_34 = arith.constant dense<0.000000e+00> : vector<16x8xf32>
    %39 = tpu.matmul %36, %38, %cst_34 {dimension_numbers = #tpu.dot_dimension_numbers<[1], [0], [0], [1], [0, 0, 1, 1], [], []>} : vector<16x4xbf16>, vector<4x8xbf16>, vector<16x8xf32> -> vector<16x8xf32>
    %40 = arith.addf %32, %39 : vector<16x8xf32>
    %c0_35 = arith.constant 0 : index
    %c0_36 = arith.constant 0 : index
    %41 = vector.load %arg3[%c0_35, %c0_36] : memref<4x8xbf16, #tpu.memory_space<vmem>>, vector<4x8xbf16>
    %cst_37 = arith.constant dense<0.000000e+00> : vector<16x8xf32>
    %42 = tpu.matmul %36, %41, %cst_37 {dimension_numbers = #tpu.dot_dimension_numbers<[1], [0], [0], [1], [0, 0, 1, 1], [], []>} : vector<16x4xbf16>, vector<4x8xbf16>, vector<16x8xf32> -> vector<16x8xf32>
    %c2_38 = arith.constant 2 : index
    %c0_39 = arith.constant 0 : index
    %c1_40 = arith.constant 1 : index
    %c0_41 = arith.constant 0 : index
    %43 = vector.load %arg1[%c2_38, %c0_39, %c1_40, %c0_41] : memref<4x5x5x4xf32, #tpu.memory_space<vmem>>, vector<1x4x4x4xf32>
    %44 = vector.shape_cast %43 : vector<1x4x4x4xf32> to vector<4x4x4xf32>
    %45 = vector.shape_cast %44 : vector<4x4x4xf32> to vector<16x4xf32>
    %46 = arith.truncf %45 : vector<16x4xf32> to vector<16x4xbf16>
    %c5 = arith.constant 5 : index
    %c0_42 = arith.constant 0 : index
    %c0_43 = arith.constant 0 : index
    %47 = vector.load %arg2[%c5, %c0_42, %c0_43] : memref<9x4x8xbf16, #tpu.memory_space<vmem>>, vector<1x4x8xbf16>
    %48 = vector.shape_cast %47 : vector<1x4x8xbf16> to vector<4x8xbf16>
    %cst_44 = arith.constant dense<0.000000e+00> : vector<16x8xf32>
    %49 = tpu.matmul %46, %48, %cst_44 {dimension_numbers = #tpu.dot_dimension_numbers<[1], [0], [0], [1], [0, 0, 1, 1], [], []>} : vector<16x4xbf16>, vector<4x8xbf16>, vector<16x8xf32> -> vector<16x8xf32>
    %50 = arith.addf %40, %49 : vector<16x8xf32>
    %c0_45 = arith.constant 0 : index
    %c1_46 = arith.constant 1 : index
    %c0_47 = arith.constant 0 : index
    %c0_48 = arith.constant 0 : index
    %51 = vector.load %arg1[%c0_45, %c1_46, %c0_47, %c0_48] : memref<4x5x5x4xf32, #tpu.memory_space<vmem>>, vector<1x4x4x4xf32>
    %52 = vector.shape_cast %51 : vector<1x4x4x4xf32> to vector<4x4x4xf32>
    %53 = vector.shape_cast %52 : vector<4x4x4xf32> to vector<16x4xf32>
    %54 = arith.truncf %53 : vector<16x4xf32> to vector<16x4xbf16>
    %c6 = arith.constant 6 : index
    %c0_49 = arith.constant 0 : index
    %c0_50 = arith.constant 0 : index
    %55 = vector.load %arg2[%c6, %c0_49, %c0_50] : memref<9x4x8xbf16, #tpu.memory_space<vmem>>, vector<1x4x8xbf16>
    %56 = vector.shape_cast %55 : vector<1x4x8xbf16> to vector<4x8xbf16>
    %cst_51 = arith.constant dense<0.000000e+00> : vector<16x8xf32>
    %57 = tpu.matmul %54, %56, %cst_51 {dimension_numbers = #tpu.dot_dimension_numbers<[1], [0], [0], [1], [0, 0, 1, 1], [], []>} : vector<16x4xbf16>, vector<4x8xbf16>, vector<16x8xf32> -> vector<16x8xf32>
    %58 = arith.addf %50, %57 : vector<16x8xf32>
    %c1_52 = arith.constant 1 : index
    %c1_53 = arith.constant 1 : index
    %c0_54 = arith.constant 0 : index
    %c0_55 = arith.constant 0 : index
    %59 = vector.load %arg1[%c1_52, %c1_53, %c0_54, %c0_55] : memref<4x5x5x4xf32, #tpu.memory_space<vmem>>, vector<1x4x4x4xf32>
    %60 = vector.shape_cast %59 : vector<1x4x4x4xf32> to vector<4x4x4xf32>
    %61 = vector.shape_cast %60 : vector<4x4x4xf32> to vector<16x4xf32>
    %62 = arith.truncf %61 : vector<16x4xf32> to vector<16x4xbf16>
    %c7 = arith.constant 7 : index
    %c0_56 = arith.constant 0 : index
    %c0_57 = arith.constant 0 : index
    %63 = vector.load %arg2[%c7, %c0_56, %c0_57] : memref<9x4x8xbf16, #tpu.memory_space<vmem>>, vector<1x4x8xbf16>
    %64 = vector.shape_cast %63 : vector<1x4x8xbf16> to vector<4x8xbf16>
    %cst_58 = arith.constant dense<0.000000e+00> : vector<16x8xf32>
    %65 = tpu.matmul %62, %64, %cst_58 {dimension_numbers = #tpu.dot_dimension_numbers<[1], [0], [0], [1], [0, 0, 1, 1], [], []>} : vector<16x4xbf16>, vector<4x8xbf16>, vector<16x8xf32> -> vector<16x8xf32>
    %66 = arith.addf %58, %65 : vector<16x8xf32>
    %c0_59 = arith.constant 0 : index
    %c1_60 = arith.constant 1 : index
    %c1_61 = arith.constant 1 : index
    %c0_62 = arith.constant 0 : index
    %67 = vector.load %arg1[%c0_59, %c1_60, %c1_61, %c0_62] : memref<4x5x5x4xf32, #tpu.memory_space<vmem>>, vector<1x4x4x4xf32>
    %68 = vector.shape_cast %67 : vector<1x4x4x4xf32> to vector<4x4x4xf32>
    %69 = vector.shape_cast %68 : vector<4x4x4xf32> to vector<16x4xf32>
    %70 = arith.truncf %69 : vector<16x4xf32> to vector<16x4xbf16>
    %c8 = arith.constant 8 : index
    %c0_63 = arith.constant 0 : index
    %c0_64 = arith.constant 0 : index
    %71 = vector.load %arg2[%c8, %c0_63, %c0_64] : memref<9x4x8xbf16, #tpu.memory_space<vmem>>, vector<1x4x8xbf16>
    %72 = vector.shape_cast %71 : vector<1x4x8xbf16> to vector<4x8xbf16>
    %cst_65 = arith.constant dense<0.000000e+00> : vector<16x8xf32>
    %73 = tpu.matmul %70, %72, %cst_65 {dimension_numbers = #tpu.dot_dimension_numbers<[1], [0], [0], [1], [0, 0, 1, 1], [], []>} : vector<16x4xbf16>, vector<4x8xbf16>, vector<16x8xf32> -> vector<16x8xf32>
    %74 = arith.addf %66, %73 : vector<16x8xf32>
    %c0_66 = arith.constant 0 : index
    %c0_67 = arith.constant 0 : index
    %75 = vector.load %arg4[%c0_66, %c0_67] : memref<1x8xf32, #tpu.memory_space<vmem>>, vector<1x8xf32>
    %76 = vector.broadcast %75 : vector<1x8xf32> to vector<16x8xf32>
    %77 = arith.addf %74, %76 : vector<16x8xf32>
    %cst_68 = arith.constant 0.000000e+00 : f32
    %78 = vector.broadcast %cst_68 : f32 to vector<16x8xf32>
    %79 = arith.maximumf %77, %78 : vector<16x8xf32>
    %cst_69 = arith.constant 0.000000e+00 : f32
    %80 = vector.broadcast %cst_69 : f32 to vector<6x6x8xf32>
    %c0_70 = arith.constant 0 : index
    %c0_71 = arith.constant 0 : index
    %c0_72 = arith.constant 0 : index
    %81 = vector.load %arg9[%c0_70, %c0_71, %c0_72] : memref<6x6x8xf32, #tpu.memory_space<vmem>>, vector<6x6x8xf32>
    tpu.vector_store %arg9[%c0_70, %c0_71, %c0_72], %80 {strides = array<i32>} : memref<6x6x8xf32, #tpu.memory_space<vmem>>, vector<6x6x8xf32>,
    %82 = vector.shape_cast %79 : vector<16x8xf32> to vector<4x4x8xf32>
    %c1_73 = arith.constant 1 : index
    %c1_74 = arith.constant 1 : index
    %c0_75 = arith.constant 0 : index
    %83 = vector.load %arg9[%c1_73, %c1_74, %c0_75] : memref<6x6x8xf32, #tpu.memory_space<vmem>>, vector<4x4x8xf32>
    tpu.vector_store %arg9[%c1_73, %c1_74, %c0_75], %82 {strides = array<i32>} : memref<6x6x8xf32, #tpu.memory_space<vmem>>, vector<4x4x8xf32>,
    %c0_76 = arith.constant 0 : index
    %c0_77 = arith.constant 0 : index
    %84 = vector.load %arg5[%c0_76, %c0_77] : memref<1x8xf32, #tpu.memory_space<vmem>>, vector<1x8xf32>
    %85 = vector.broadcast %84 : vector<1x8xf32> to vector<16x8xf32>
    %86 = arith.addf %42, %85 : vector<16x8xf32>
    %c0_78 = arith.constant 0 : index
    %c0_79 = arith.constant 0 : index
    %87 = vector.load %arg7[%c0_78, %c0_79] : memref<1x8xf32, #tpu.memory_space<vmem>>, vector<1x8xf32>
    %88 = vector.broadcast %87 : vector<1x8xf32> to vector<16x8xf32>
    %89 = arith.addf %86, %88 : vector<16x8xf32>
    %c0_80 = arith.constant 0 : index
    %c0_81 = arith.constant 0 : index
    %c0_82 = arith.constant 0 : index
    %90 = vector.load %arg9[%c0_80, %c0_81, %c0_82] : memref<6x6x8xf32, #tpu.memory_space<vmem>>, vector<4x4x8xf32>
    %91 = vector.shape_cast %90 : vector<4x4x8xf32> to vector<16x8xf32>
    %92 = arith.truncf %91 : vector<16x8xf32> to vector<16x8xbf16>
    %c0_83 = arith.constant 0 : index
    %c0_84 = arith.constant 0 : index
    %c0_85 = arith.constant 0 : index
    %93 = vector.load %arg6[%c0_83, %c0_84, %c0_85] : memref<9x8x8xbf16, #tpu.memory_space<vmem>>, vector<1x8x8xbf16>
    %94 = vector.shape_cast %93 : vector<1x8x8xbf16> to vector<8x8xbf16>
    %cst_86 = arith.constant dense<0.000000e+00> : vector<16x8xf32>
    %95 = tpu.matmul %92, %94, %cst_86 {dimension_numbers = #tpu.dot_dimension_numbers<[1], [0], [0], [1], [0, 0, 1, 1], [], []>} : vector<16x8xbf16>, vector<8x8xbf16>, vector<16x8xf32> -> vector<16x8xf32>
    %96 = arith.addf %89, %95 : vector<16x8xf32>
    %c0_87 = arith.constant 0 : index
    %c1_88 = arith.constant 1 : index
    %c0_89 = arith.constant 0 : index
    %97 = vector.load %arg9[%c0_87, %c1_88, %c0_89] : memref<6x6x8xf32, #tpu.memory_space<vmem>>, vector<4x4x8xf32>
    %98 = vector.shape_cast %97 : vector<4x4x8xf32> to vector<16x8xf32>
    %99 = arith.truncf %98 : vector<16x8xf32> to vector<16x8xbf16>
    %c1_90 = arith.constant 1 : index
    %c0_91 = arith.constant 0 : index
    %c0_92 = arith.constant 0 : index
    %100 = vector.load %arg6[%c1_90, %c0_91, %c0_92] : memref<9x8x8xbf16, #tpu.memory_space<vmem>>, vector<1x8x8xbf16>
    %101 = vector.shape_cast %100 : vector<1x8x8xbf16> to vector<8x8xbf16>
    %cst_93 = arith.constant dense<0.000000e+00> : vector<16x8xf32>
    %102 = tpu.matmul %99, %101, %cst_93 {dimension_numbers = #tpu.dot_dimension_numbers<[1], [0], [0], [1], [0, 0, 1, 1], [], []>} : vector<16x8xbf16>, vector<8x8xbf16>, vector<16x8xf32> -> vector<16x8xf32>
    %103 = arith.addf %96, %102 : vector<16x8xf32>
    %c0_94 = arith.constant 0 : index
    %c2_95 = arith.constant 2 : index
    %c0_96 = arith.constant 0 : index
    %104 = vector.load %arg9[%c0_94, %c2_95, %c0_96] : memref<6x6x8xf32, #tpu.memory_space<vmem>>, vector<4x4x8xf32>
    %105 = vector.shape_cast %104 : vector<4x4x8xf32> to vector<16x8xf32>
    %106 = arith.truncf %105 : vector<16x8xf32> to vector<16x8xbf16>
    %c2_97 = arith.constant 2 : index
    %c0_98 = arith.constant 0 : index
    %c0_99 = arith.constant 0 : index
    %107 = vector.load %arg6[%c2_97, %c0_98, %c0_99] : memref<9x8x8xbf16, #tpu.memory_space<vmem>>, vector<1x8x8xbf16>
    %108 = vector.shape_cast %107 : vector<1x8x8xbf16> to vector<8x8xbf16>
    %cst_100 = arith.constant dense<0.000000e+00> : vector<16x8xf32>
    %109 = tpu.matmul %106, %108, %cst_100 {dimension_numbers = #tpu.dot_dimension_numbers<[1], [0], [0], [1], [0, 0, 1, 1], [], []>} : vector<16x8xbf16>, vector<8x8xbf16>, vector<16x8xf32> -> vector<16x8xf32>
    %110 = arith.addf %103, %109 : vector<16x8xf32>
    %c1_101 = arith.constant 1 : index
    %c0_102 = arith.constant 0 : index
    %c0_103 = arith.constant 0 : index
    %111 = vector.load %arg9[%c1_101, %c0_102, %c0_103] : memref<6x6x8xf32, #tpu.memory_space<vmem>>, vector<4x4x8xf32>
    %112 = vector.shape_cast %111 : vector<4x4x8xf32> to vector<16x8xf32>
    %113 = arith.truncf %112 : vector<16x8xf32> to vector<16x8xbf16>
    %c3_104 = arith.constant 3 : index
    %c0_105 = arith.constant 0 : index
    %c0_106 = arith.constant 0 : index
    %114 = vector.load %arg6[%c3_104, %c0_105, %c0_106] : memref<9x8x8xbf16, #tpu.memory_space<vmem>>, vector<1x8x8xbf16>
    %115 = vector.shape_cast %114 : vector<1x8x8xbf16> to vector<8x8xbf16>
    %cst_107 = arith.constant dense<0.000000e+00> : vector<16x8xf32>
    %116 = tpu.matmul %113, %115, %cst_107 {dimension_numbers = #tpu.dot_dimension_numbers<[1], [0], [0], [1], [0, 0, 1, 1], [], []>} : vector<16x8xbf16>, vector<8x8xbf16>, vector<16x8xf32> -> vector<16x8xf32>
    %117 = arith.addf %110, %116 : vector<16x8xf32>
    %c1_108 = arith.constant 1 : index
    %c1_109 = arith.constant 1 : index
    %c0_110 = arith.constant 0 : index
    %118 = vector.load %arg9[%c1_108, %c1_109, %c0_110] : memref<6x6x8xf32, #tpu.memory_space<vmem>>, vector<4x4x8xf32>
    %119 = vector.shape_cast %118 : vector<4x4x8xf32> to vector<16x8xf32>
    %120 = arith.truncf %119 : vector<16x8xf32> to vector<16x8xbf16>
    %c4_111 = arith.constant 4 : index
    %c0_112 = arith.constant 0 : index
    %c0_113 = arith.constant 0 : index
    %121 = vector.load %arg6[%c4_111, %c0_112, %c0_113] : memref<9x8x8xbf16, #tpu.memory_space<vmem>>, vector<1x8x8xbf16>
    %122 = vector.shape_cast %121 : vector<1x8x8xbf16> to vector<8x8xbf16>
    %cst_114 = arith.constant dense<0.000000e+00> : vector<16x8xf32>
    %123 = tpu.matmul %120, %122, %cst_114 {dimension_numbers = #tpu.dot_dimension_numbers<[1], [0], [0], [1], [0, 0, 1, 1], [], []>} : vector<16x8xbf16>, vector<8x8xbf16>, vector<16x8xf32> -> vector<16x8xf32>
    %124 = arith.addf %117, %123 : vector<16x8xf32>
    %c1_115 = arith.constant 1 : index
    %c2_116 = arith.constant 2 : index
    %c0_117 = arith.constant 0 : index
    %125 = vector.load %arg9[%c1_115, %c2_116, %c0_117] : memref<6x6x8xf32, #tpu.memory_space<vmem>>, vector<4x4x8xf32>
    %126 = vector.shape_cast %125 : vector<4x4x8xf32> to vector<16x8xf32>
    %127 = arith.truncf %126 : vector<16x8xf32> to vector<16x8xbf16>
    %c5_118 = arith.constant 5 : index
    %c0_119 = arith.constant 0 : index
    %c0_120 = arith.constant 0 : index
    %128 = vector.load %arg6[%c5_118, %c0_119, %c0_120] : memref<9x8x8xbf16, #tpu.memory_space<vmem>>, vector<1x8x8xbf16>
    %129 = vector.shape_cast %128 : vector<1x8x8xbf16> to vector<8x8xbf16>
    %cst_121 = arith.constant dense<0.000000e+00> : vector<16x8xf32>
    %130 = tpu.matmul %127, %129, %cst_121 {dimension_numbers = #tpu.dot_dimension_numbers<[1], [0], [0], [1], [0, 0, 1, 1], [], []>} : vector<16x8xbf16>, vector<8x8xbf16>, vector<16x8xf32> -> vector<16x8xf32>
    %131 = arith.addf %124, %130 : vector<16x8xf32>
    %c2_122 = arith.constant 2 : index
    %c0_123 = arith.constant 0 : index
    %c0_124 = arith.constant 0 : index
    %132 = vector.load %arg9[%c2_122, %c0_123, %c0_124] : memref<6x6x8xf32, #tpu.memory_space<vmem>>, vector<4x4x8xf32>
    %133 = vector.shape_cast %132 : vector<4x4x8xf32> to vector<16x8xf32>
    %134 = arith.truncf %133 : vector<16x8xf32> to vector<16x8xbf16>
    %c6_125 = arith.constant 6 : index
    %c0_126 = arith.constant 0 : index
    %c0_127 = arith.constant 0 : index
    %135 = vector.load %arg6[%c6_125, %c0_126, %c0_127] : memref<9x8x8xbf16, #tpu.memory_space<vmem>>, vector<1x8x8xbf16>
    %136 = vector.shape_cast %135 : vector<1x8x8xbf16> to vector<8x8xbf16>
    %cst_128 = arith.constant dense<0.000000e+00> : vector<16x8xf32>
    %137 = tpu.matmul %134, %136, %cst_128 {dimension_numbers = #tpu.dot_dimension_numbers<[1], [0], [0], [1], [0, 0, 1, 1], [], []>} : vector<16x8xbf16>, vector<8x8xbf16>, vector<16x8xf32> -> vector<16x8xf32>
    %138 = arith.addf %131, %137 : vector<16x8xf32>
    %c2_129 = arith.constant 2 : index
    %c1_130 = arith.constant 1 : index
    %c0_131 = arith.constant 0 : index
    %139 = vector.load %arg9[%c2_129, %c1_130, %c0_131] : memref<6x6x8xf32, #tpu.memory_space<vmem>>, vector<4x4x8xf32>
    %140 = vector.shape_cast %139 : vector<4x4x8xf32> to vector<16x8xf32>
    %141 = arith.truncf %140 : vector<16x8xf32> to vector<16x8xbf16>
    %c7_132 = arith.constant 7 : index
    %c0_133 = arith.constant 0 : index
    %c0_134 = arith.constant 0 : index
    %142 = vector.load %arg6[%c7_132, %c0_133, %c0_134] : memref<9x8x8xbf16, #tpu.memory_space<vmem>>, vector<1x8x8xbf16>
    %143 = vector.shape_cast %142 : vector<1x8x8xbf16> to vector<8x8xbf16>
    %cst_135 = arith.constant dense<0.000000e+00> : vector<16x8xf32>
    %144 = tpu.matmul %141, %143, %cst_135 {dimension_numbers = #tpu.dot_dimension_numbers<[1], [0], [0], [1], [0, 0, 1, 1], [], []>} : vector<16x8xbf16>, vector<8x8xbf16>, vector<16x8xf32> -> vector<16x8xf32>
    %145 = arith.addf %138, %144 : vector<16x8xf32>
    %c2_136 = arith.constant 2 : index
    %c2_137 = arith.constant 2 : index
    %c0_138 = arith.constant 0 : index
    %146 = vector.load %arg9[%c2_136, %c2_137, %c0_138] : memref<6x6x8xf32, #tpu.memory_space<vmem>>, vector<4x4x8xf32>
    %147 = vector.shape_cast %146 : vector<4x4x8xf32> to vector<16x8xf32>
    %148 = arith.truncf %147 : vector<16x8xf32> to vector<16x8xbf16>
    %c8_139 = arith.constant 8 : index
    %c0_140 = arith.constant 0 : index
    %c0_141 = arith.constant 0 : index
    %149 = vector.load %arg6[%c8_139, %c0_140, %c0_141] : memref<9x8x8xbf16, #tpu.memory_space<vmem>>, vector<1x8x8xbf16>
    %150 = vector.shape_cast %149 : vector<1x8x8xbf16> to vector<8x8xbf16>
    %cst_142 = arith.constant dense<0.000000e+00> : vector<16x8xf32>
    %151 = tpu.matmul %148, %150, %cst_142 {dimension_numbers = #tpu.dot_dimension_numbers<[1], [0], [0], [1], [0, 0, 1, 1], [], []>} : vector<16x8xbf16>, vector<8x8xbf16>, vector<16x8xf32> -> vector<16x8xf32>
    %152 = arith.addf %145, %151 : vector<16x8xf32>
    %cst_143 = arith.constant 0.000000e+00 : f32
    %153 = vector.broadcast %cst_143 : f32 to vector<16x8xf32>
    %154 = arith.maximumf %152, %153 : vector<16x8xf32>
    %c0_144 = arith.constant 0 : index
    %c0_145 = arith.constant 0 : index
    %c0_146 = arith.constant 0 : index
    %155 = vector.load %arg8[%c0_144, %c0_145, %c0_146] : memref<1x16x8xf32, #tpu.memory_space<vmem>>, vector<1x16x8xf32>
    %156 = vector.shape_cast %155 : vector<1x16x8xf32> to vector<16x8xf32>
    %157 = vector.shape_cast %154 : vector<16x8xf32> to vector<1x16x8xf32>
    tpu.vector_store %arg8[%c0_144, %c0_145, %c0_146], %157 {strides = array<i32>} : memref<1x16x8xf32, #tpu.memory_space<vmem>>, vector<1x16x8xf32>,
    return
  }
  func.func @transform_0(%arg0: i32) -> (i32, i32, i32, i32) {
    %c0_i32 = arith.constant 0 : i32
    %c0_i32_0 = arith.constant 0 : i32
    %c0_i32_1 = arith.constant 0 : i32
    %c0_i32_2 = arith.constant 0 : i32
    return %arg0, %c0_i32, %c0_i32_0, %c0_i32_1 : i32, i32, i32, i32
  }
  func.func @transform_1(%arg0: i32) -> (i32, i32, i32) {
    %c0_i32 = arith.constant 0 : i32
    %c0_i32_0 = arith.constant 0 : i32
    %c0_i32_1 = arith.constant 0 : i32
    %c0_i32_2 = arith.constant 0 : i32
    return %c0_i32, %c0_i32_0, %c0_i32_1 : i32, i32, i32
  }
  func.func @transform_2(%arg0: i32) -> (i32, i32) {
    %c0_i32 = arith.constant 0 : i32
    %c0_i32_0 = arith.constant 0 : i32
    %c0_i32_1 = arith.constant 0 : i32
    return %c0_i32, %c0_i32_0 : i32, i32
  }
  func.func @transform_3(%arg0: i32) -> (i32, i32) {
    %c0_i32 = arith.constant 0 : i32
    %c0_i32_0 = arith.constant 0 : i32
    %c0_i32_1 = arith.constant 0 : i32
    return %c0_i32, %c0_i32_0 : i32, i32
  }
  func.func @transform_4(%arg0: i32) -> (i32, i32) {
    %c0_i32 = arith.constant 0 : i32
    %c0_i32_0 = arith.constant 0 : i32
    %c0_i32_1 = arith.constant 0 : i32
    return %c0_i32, %c0_i32_0 : i32, i32
  }
  func.func @transform_5(%arg0: i32) -> (i32, i32, i32) {
    %c0_i32 = arith.constant 0 : i32
    %c0_i32_0 = arith.constant 0 : i32
    %c0_i32_1 = arith.constant 0 : i32
    %c0_i32_2 = arith.constant 0 : i32
    return %c0_i32, %c0_i32_0, %c0_i32_1 : i32, i32, i32
  }
  func.func @transform_6(%arg0: i32) -> (i32, i32) {
    %c0_i32 = arith.constant 0 : i32
    %c0_i32_0 = arith.constant 0 : i32
    %c0_i32_1 = arith.constant 0 : i32
    return %c0_i32, %c0_i32_0 : i32, i32
  }
  func.func @transform_7(%arg0: i32) -> (i32, i32, i32) {
    %c0_i32 = arith.constant 0 : i32
    %c0_i32_0 = arith.constant 0 : i32
    %c0_i32_1 = arith.constant 0 : i32
    return %arg0, %c0_i32, %c0_i32_0 : i32, i32, i32
  }
}

module attributes {stable_mosaic.version = 11 : i64} {
  func.func @_resblock_kernel(%arg0: i32, %arg1: memref<4x3x3x8xf32, #tpu.memory_space<vmem>>, %arg2: memref<9x8x16xbf16, #tpu.memory_space<vmem>>, %arg3: memref<8x16xbf16, #tpu.memory_space<vmem>>, %arg4: memref<1x16xf32, #tpu.memory_space<vmem>>, %arg5: memref<1x16xf32, #tpu.memory_space<vmem>>, %arg6: memref<9x16x16xbf16, #tpu.memory_space<vmem>>, %arg7: memref<1x16xf32, #tpu.memory_space<vmem>>, %arg8: memref<1x4x16xf32, #tpu.memory_space<vmem>>, %arg9: memref<4x4x16xf32, #tpu.memory_space<vmem>>) attributes {dimension_semantics = [#tpu.dimension_semantics<parallel>], iteration_bounds = array<i64: 8>, scalar_prefetch = 0 : i64, scratch_operands = 1 : i64, tpu.core_type = #tpu.core_type<tc>, window_params = [{transform_indices = @transform_0, window_bounds = array<i64: 4, 3, 3, 8>}, {pipeline_mode = #tpu.pipeline_mode<synchronous>, transform_indices = @transform_1, window_bounds = array<i64: 9, 8, 16>}, {pipeline_mode = #tpu.pipeline_mode<synchronous>, transform_indices = @transform_2, window_bounds = array<i64: 8, 16>}, {pipeline_mode = #tpu.pipeline_mode<synchronous>, transform_indices = @transform_3, window_bounds = array<i64: 1, 16>}, {pipeline_mode = #tpu.pipeline_mode<synchronous>, transform_indices = @transform_4, window_bounds = array<i64: 1, 16>}, {pipeline_mode = #tpu.pipeline_mode<synchronous>, transform_indices = @transform_5, window_bounds = array<i64: 9, 16, 16>}, {pipeline_mode = #tpu.pipeline_mode<synchronous>, transform_indices = @transform_6, window_bounds = array<i64: 1, 16>}, {transform_indices = @transform_7, window_bounds = array<i64: 1, 4, 16>}]} {
    %cst = arith.constant 0.000000e+00 : f32
    %0 = vector.broadcast %cst : f32 to vector<4x16xf32>
    %c0 = arith.constant 0 : index
    %c0_0 = arith.constant 0 : index
    %c0_1 = arith.constant 0 : index
    %c0_2 = arith.constant 0 : index
    %1 = vector.load %arg1[%c0, %c0_0, %c0_1, %c0_2] : memref<4x3x3x8xf32, #tpu.memory_space<vmem>>, vector<1x2x2x8xf32>
    %2 = vector.shape_cast %1 : vector<1x2x2x8xf32> to vector<2x2x8xf32>
    %3 = vector.shape_cast %2 : vector<2x2x8xf32> to vector<4x8xf32>
    %4 = arith.truncf %3 : vector<4x8xf32> to vector<4x8xbf16>
    %c0_3 = arith.constant 0 : index
    %c0_4 = arith.constant 0 : index
    %c0_5 = arith.constant 0 : index
    %5 = vector.load %arg2[%c0_3, %c0_4, %c0_5] : memref<9x8x16xbf16, #tpu.memory_space<vmem>>, vector<1x8x16xbf16>
    %6 = vector.shape_cast %5 : vector<1x8x16xbf16> to vector<8x16xbf16>
    %cst_6 = arith.constant dense<0.000000e+00> : vector<4x16xf32>
    %7 = tpu.matmul %4, %6, %cst_6 {dimension_numbers = #tpu.dot_dimension_numbers<[1], [0], [0], [1], [0, 0, 1, 1], [], []>} : vector<4x8xbf16>, vector<8x16xbf16>, vector<4x16xf32> -> vector<4x16xf32>
    %8 = arith.addf %0, %7 : vector<4x16xf32>
    %c1 = arith.constant 1 : index
    %c0_7 = arith.constant 0 : index
    %c0_8 = arith.constant 0 : index
    %c0_9 = arith.constant 0 : index
    %9 = vector.load %arg1[%c1, %c0_7, %c0_8, %c0_9] : memref<4x3x3x8xf32, #tpu.memory_space<vmem>>, vector<1x2x2x8xf32>
    %10 = vector.shape_cast %9 : vector<1x2x2x8xf32> to vector<2x2x8xf32>
    %11 = vector.shape_cast %10 : vector<2x2x8xf32> to vector<4x8xf32>
    %12 = arith.truncf %11 : vector<4x8xf32> to vector<4x8xbf16>
    %c1_10 = arith.constant 1 : index
    %c0_11 = arith.constant 0 : index
    %c0_12 = arith.constant 0 : index
    %13 = vector.load %arg2[%c1_10, %c0_11, %c0_12] : memref<9x8x16xbf16, #tpu.memory_space<vmem>>, vector<1x8x16xbf16>
    %14 = vector.shape_cast %13 : vector<1x8x16xbf16> to vector<8x16xbf16>
    %cst_13 = arith.constant dense<0.000000e+00> : vector<4x16xf32>
    %15 = tpu.matmul %12, %14, %cst_13 {dimension_numbers = #tpu.dot_dimension_numbers<[1], [0], [0], [1], [0, 0, 1, 1], [], []>} : vector<4x8xbf16>, vector<8x16xbf16>, vector<4x16xf32> -> vector<4x16xf32>
    %16 = arith.addf %8, %15 : vector<4x16xf32>
    %c0_14 = arith.constant 0 : index
    %c0_15 = arith.constant 0 : index
    %c1_16 = arith.constant 1 : index
    %c0_17 = arith.constant 0 : index
    %17 = vector.load %arg1[%c0_14, %c0_15, %c1_16, %c0_17] : memref<4x3x3x8xf32, #tpu.memory_space<vmem>>, vector<1x2x2x8xf32>
    %18 = vector.shape_cast %17 : vector<1x2x2x8xf32> to vector<2x2x8xf32>
    %19 = vector.shape_cast %18 : vector<2x2x8xf32> to vector<4x8xf32>
    %20 = arith.truncf %19 : vector<4x8xf32> to vector<4x8xbf16>
    %c2 = arith.constant 2 : index
    %c0_18 = arith.constant 0 : index
    %c0_19 = arith.constant 0 : index
    %21 = vector.load %arg2[%c2, %c0_18, %c0_19] : memref<9x8x16xbf16, #tpu.memory_space<vmem>>, vector<1x8x16xbf16>
    %22 = vector.shape_cast %21 : vector<1x8x16xbf16> to vector<8x16xbf16>
    %cst_20 = arith.constant dense<0.000000e+00> : vector<4x16xf32>
    %23 = tpu.matmul %20, %22, %cst_20 {dimension_numbers = #tpu.dot_dimension_numbers<[1], [0], [0], [1], [0, 0, 1, 1], [], []>} : vector<4x8xbf16>, vector<8x16xbf16>, vector<4x16xf32> -> vector<4x16xf32>
    %24 = arith.addf %16, %23 : vector<4x16xf32>
    %c2_21 = arith.constant 2 : index
    %c0_22 = arith.constant 0 : index
    %c0_23 = arith.constant 0 : index
    %c0_24 = arith.constant 0 : index
    %25 = vector.load %arg1[%c2_21, %c0_22, %c0_23, %c0_24] : memref<4x3x3x8xf32, #tpu.memory_space<vmem>>, vector<1x2x2x8xf32>
    %26 = vector.shape_cast %25 : vector<1x2x2x8xf32> to vector<2x2x8xf32>
    %27 = vector.shape_cast %26 : vector<2x2x8xf32> to vector<4x8xf32>
    %28 = arith.truncf %27 : vector<4x8xf32> to vector<4x8xbf16>
    %c3 = arith.constant 3 : index
    %c0_25 = arith.constant 0 : index
    %c0_26 = arith.constant 0 : index
    %29 = vector.load %arg2[%c3, %c0_25, %c0_26] : memref<9x8x16xbf16, #tpu.memory_space<vmem>>, vector<1x8x16xbf16>
    %30 = vector.shape_cast %29 : vector<1x8x16xbf16> to vector<8x16xbf16>
    %cst_27 = arith.constant dense<0.000000e+00> : vector<4x16xf32>
    %31 = tpu.matmul %28, %30, %cst_27 {dimension_numbers = #tpu.dot_dimension_numbers<[1], [0], [0], [1], [0, 0, 1, 1], [], []>} : vector<4x8xbf16>, vector<8x16xbf16>, vector<4x16xf32> -> vector<4x16xf32>
    %32 = arith.addf %24, %31 : vector<4x16xf32>
    %c3_28 = arith.constant 3 : index
    %c0_29 = arith.constant 0 : index
    %c0_30 = arith.constant 0 : index
    %c0_31 = arith.constant 0 : index
    %33 = vector.load %arg1[%c3_28, %c0_29, %c0_30, %c0_31] : memref<4x3x3x8xf32, #tpu.memory_space<vmem>>, vector<1x2x2x8xf32>
    %34 = vector.shape_cast %33 : vector<1x2x2x8xf32> to vector<2x2x8xf32>
    %35 = vector.shape_cast %34 : vector<2x2x8xf32> to vector<4x8xf32>
    %36 = arith.truncf %35 : vector<4x8xf32> to vector<4x8xbf16>
    %c4 = arith.constant 4 : index
    %c0_32 = arith.constant 0 : index
    %c0_33 = arith.constant 0 : index
    %37 = vector.load %arg2[%c4, %c0_32, %c0_33] : memref<9x8x16xbf16, #tpu.memory_space<vmem>>, vector<1x8x16xbf16>
    %38 = vector.shape_cast %37 : vector<1x8x16xbf16> to vector<8x16xbf16>
    %cst_34 = arith.constant dense<0.000000e+00> : vector<4x16xf32>
    %39 = tpu.matmul %36, %38, %cst_34 {dimension_numbers = #tpu.dot_dimension_numbers<[1], [0], [0], [1], [0, 0, 1, 1], [], []>} : vector<4x8xbf16>, vector<8x16xbf16>, vector<4x16xf32> -> vector<4x16xf32>
    %40 = arith.addf %32, %39 : vector<4x16xf32>
    %c0_35 = arith.constant 0 : index
    %c0_36 = arith.constant 0 : index
    %41 = vector.load %arg3[%c0_35, %c0_36] : memref<8x16xbf16, #tpu.memory_space<vmem>>, vector<8x16xbf16>
    %cst_37 = arith.constant dense<0.000000e+00> : vector<4x16xf32>
    %42 = tpu.matmul %36, %41, %cst_37 {dimension_numbers = #tpu.dot_dimension_numbers<[1], [0], [0], [1], [0, 0, 1, 1], [], []>} : vector<4x8xbf16>, vector<8x16xbf16>, vector<4x16xf32> -> vector<4x16xf32>
    %c2_38 = arith.constant 2 : index
    %c0_39 = arith.constant 0 : index
    %c1_40 = arith.constant 1 : index
    %c0_41 = arith.constant 0 : index
    %43 = vector.load %arg1[%c2_38, %c0_39, %c1_40, %c0_41] : memref<4x3x3x8xf32, #tpu.memory_space<vmem>>, vector<1x2x2x8xf32>
    %44 = vector.shape_cast %43 : vector<1x2x2x8xf32> to vector<2x2x8xf32>
    %45 = vector.shape_cast %44 : vector<2x2x8xf32> to vector<4x8xf32>
    %46 = arith.truncf %45 : vector<4x8xf32> to vector<4x8xbf16>
    %c5 = arith.constant 5 : index
    %c0_42 = arith.constant 0 : index
    %c0_43 = arith.constant 0 : index
    %47 = vector.load %arg2[%c5, %c0_42, %c0_43] : memref<9x8x16xbf16, #tpu.memory_space<vmem>>, vector<1x8x16xbf16>
    %48 = vector.shape_cast %47 : vector<1x8x16xbf16> to vector<8x16xbf16>
    %cst_44 = arith.constant dense<0.000000e+00> : vector<4x16xf32>
    %49 = tpu.matmul %46, %48, %cst_44 {dimension_numbers = #tpu.dot_dimension_numbers<[1], [0], [0], [1], [0, 0, 1, 1], [], []>} : vector<4x8xbf16>, vector<8x16xbf16>, vector<4x16xf32> -> vector<4x16xf32>
    %50 = arith.addf %40, %49 : vector<4x16xf32>
    %c0_45 = arith.constant 0 : index
    %c1_46 = arith.constant 1 : index
    %c0_47 = arith.constant 0 : index
    %c0_48 = arith.constant 0 : index
    %51 = vector.load %arg1[%c0_45, %c1_46, %c0_47, %c0_48] : memref<4x3x3x8xf32, #tpu.memory_space<vmem>>, vector<1x2x2x8xf32>
    %52 = vector.shape_cast %51 : vector<1x2x2x8xf32> to vector<2x2x8xf32>
    %53 = vector.shape_cast %52 : vector<2x2x8xf32> to vector<4x8xf32>
    %54 = arith.truncf %53 : vector<4x8xf32> to vector<4x8xbf16>
    %c6 = arith.constant 6 : index
    %c0_49 = arith.constant 0 : index
    %c0_50 = arith.constant 0 : index
    %55 = vector.load %arg2[%c6, %c0_49, %c0_50] : memref<9x8x16xbf16, #tpu.memory_space<vmem>>, vector<1x8x16xbf16>
    %56 = vector.shape_cast %55 : vector<1x8x16xbf16> to vector<8x16xbf16>
    %cst_51 = arith.constant dense<0.000000e+00> : vector<4x16xf32>
    %57 = tpu.matmul %54, %56, %cst_51 {dimension_numbers = #tpu.dot_dimension_numbers<[1], [0], [0], [1], [0, 0, 1, 1], [], []>} : vector<4x8xbf16>, vector<8x16xbf16>, vector<4x16xf32> -> vector<4x16xf32>
    %58 = arith.addf %50, %57 : vector<4x16xf32>
    %c1_52 = arith.constant 1 : index
    %c1_53 = arith.constant 1 : index
    %c0_54 = arith.constant 0 : index
    %c0_55 = arith.constant 0 : index
    %59 = vector.load %arg1[%c1_52, %c1_53, %c0_54, %c0_55] : memref<4x3x3x8xf32, #tpu.memory_space<vmem>>, vector<1x2x2x8xf32>
    %60 = vector.shape_cast %59 : vector<1x2x2x8xf32> to vector<2x2x8xf32>
    %61 = vector.shape_cast %60 : vector<2x2x8xf32> to vector<4x8xf32>
    %62 = arith.truncf %61 : vector<4x8xf32> to vector<4x8xbf16>
    %c7 = arith.constant 7 : index
    %c0_56 = arith.constant 0 : index
    %c0_57 = arith.constant 0 : index
    %63 = vector.load %arg2[%c7, %c0_56, %c0_57] : memref<9x8x16xbf16, #tpu.memory_space<vmem>>, vector<1x8x16xbf16>
    %64 = vector.shape_cast %63 : vector<1x8x16xbf16> to vector<8x16xbf16>
    %cst_58 = arith.constant dense<0.000000e+00> : vector<4x16xf32>
    %65 = tpu.matmul %62, %64, %cst_58 {dimension_numbers = #tpu.dot_dimension_numbers<[1], [0], [0], [1], [0, 0, 1, 1], [], []>} : vector<4x8xbf16>, vector<8x16xbf16>, vector<4x16xf32> -> vector<4x16xf32>
    %66 = arith.addf %58, %65 : vector<4x16xf32>
    %c0_59 = arith.constant 0 : index
    %c1_60 = arith.constant 1 : index
    %c1_61 = arith.constant 1 : index
    %c0_62 = arith.constant 0 : index
    %67 = vector.load %arg1[%c0_59, %c1_60, %c1_61, %c0_62] : memref<4x3x3x8xf32, #tpu.memory_space<vmem>>, vector<1x2x2x8xf32>
    %68 = vector.shape_cast %67 : vector<1x2x2x8xf32> to vector<2x2x8xf32>
    %69 = vector.shape_cast %68 : vector<2x2x8xf32> to vector<4x8xf32>
    %70 = arith.truncf %69 : vector<4x8xf32> to vector<4x8xbf16>
    %c8 = arith.constant 8 : index
    %c0_63 = arith.constant 0 : index
    %c0_64 = arith.constant 0 : index
    %71 = vector.load %arg2[%c8, %c0_63, %c0_64] : memref<9x8x16xbf16, #tpu.memory_space<vmem>>, vector<1x8x16xbf16>
    %72 = vector.shape_cast %71 : vector<1x8x16xbf16> to vector<8x16xbf16>
    %cst_65 = arith.constant dense<0.000000e+00> : vector<4x16xf32>
    %73 = tpu.matmul %70, %72, %cst_65 {dimension_numbers = #tpu.dot_dimension_numbers<[1], [0], [0], [1], [0, 0, 1, 1], [], []>} : vector<4x8xbf16>, vector<8x16xbf16>, vector<4x16xf32> -> vector<4x16xf32>
    %74 = arith.addf %66, %73 : vector<4x16xf32>
    %c0_66 = arith.constant 0 : index
    %c0_67 = arith.constant 0 : index
    %75 = vector.load %arg4[%c0_66, %c0_67] : memref<1x16xf32, #tpu.memory_space<vmem>>, vector<1x16xf32>
    %76 = vector.broadcast %75 : vector<1x16xf32> to vector<4x16xf32>
    %77 = arith.addf %74, %76 : vector<4x16xf32>
    %cst_68 = arith.constant 0.000000e+00 : f32
    %78 = vector.broadcast %cst_68 : f32 to vector<4x16xf32>
    %79 = arith.maximumf %77, %78 : vector<4x16xf32>
    %cst_69 = arith.constant 0.000000e+00 : f32
    %80 = vector.broadcast %cst_69 : f32 to vector<4x4x16xf32>
    %c0_70 = arith.constant 0 : index
    %c0_71 = arith.constant 0 : index
    %c0_72 = arith.constant 0 : index
    %81 = vector.load %arg9[%c0_70, %c0_71, %c0_72] : memref<4x4x16xf32, #tpu.memory_space<vmem>>, vector<4x4x16xf32>
    tpu.vector_store %arg9[%c0_70, %c0_71, %c0_72], %80 {strides = array<i32>} : memref<4x4x16xf32, #tpu.memory_space<vmem>>, vector<4x4x16xf32>,
    %82 = vector.shape_cast %79 : vector<4x16xf32> to vector<2x2x16xf32>
    %c1_73 = arith.constant 1 : index
    %c1_74 = arith.constant 1 : index
    %c0_75 = arith.constant 0 : index
    %83 = vector.load %arg9[%c1_73, %c1_74, %c0_75] : memref<4x4x16xf32, #tpu.memory_space<vmem>>, vector<2x2x16xf32>
    tpu.vector_store %arg9[%c1_73, %c1_74, %c0_75], %82 {strides = array<i32>} : memref<4x4x16xf32, #tpu.memory_space<vmem>>, vector<2x2x16xf32>,
    %c0_76 = arith.constant 0 : index
    %c0_77 = arith.constant 0 : index
    %84 = vector.load %arg5[%c0_76, %c0_77] : memref<1x16xf32, #tpu.memory_space<vmem>>, vector<1x16xf32>
    %85 = vector.broadcast %84 : vector<1x16xf32> to vector<4x16xf32>
    %86 = arith.addf %42, %85 : vector<4x16xf32>
    %c0_78 = arith.constant 0 : index
    %c0_79 = arith.constant 0 : index
    %87 = vector.load %arg7[%c0_78, %c0_79] : memref<1x16xf32, #tpu.memory_space<vmem>>, vector<1x16xf32>
    %88 = vector.broadcast %87 : vector<1x16xf32> to vector<4x16xf32>
    %89 = arith.addf %86, %88 : vector<4x16xf32>
    %c0_80 = arith.constant 0 : index
    %c0_81 = arith.constant 0 : index
    %c0_82 = arith.constant 0 : index
    %90 = vector.load %arg9[%c0_80, %c0_81, %c0_82] : memref<4x4x16xf32, #tpu.memory_space<vmem>>, vector<2x2x16xf32>
    %91 = vector.shape_cast %90 : vector<2x2x16xf32> to vector<4x16xf32>
    %92 = arith.truncf %91 : vector<4x16xf32> to vector<4x16xbf16>
    %c0_83 = arith.constant 0 : index
    %c0_84 = arith.constant 0 : index
    %c0_85 = arith.constant 0 : index
    %93 = vector.load %arg6[%c0_83, %c0_84, %c0_85] : memref<9x16x16xbf16, #tpu.memory_space<vmem>>, vector<1x16x16xbf16>
    %94 = vector.shape_cast %93 : vector<1x16x16xbf16> to vector<16x16xbf16>
    %cst_86 = arith.constant dense<0.000000e+00> : vector<4x16xf32>
    %95 = tpu.matmul %92, %94, %cst_86 {dimension_numbers = #tpu.dot_dimension_numbers<[1], [0], [0], [1], [0, 0, 1, 1], [], []>} : vector<4x16xbf16>, vector<16x16xbf16>, vector<4x16xf32> -> vector<4x16xf32>
    %96 = arith.addf %89, %95 : vector<4x16xf32>
    %c0_87 = arith.constant 0 : index
    %c1_88 = arith.constant 1 : index
    %c0_89 = arith.constant 0 : index
    %97 = vector.load %arg9[%c0_87, %c1_88, %c0_89] : memref<4x4x16xf32, #tpu.memory_space<vmem>>, vector<2x2x16xf32>
    %98 = vector.shape_cast %97 : vector<2x2x16xf32> to vector<4x16xf32>
    %99 = arith.truncf %98 : vector<4x16xf32> to vector<4x16xbf16>
    %c1_90 = arith.constant 1 : index
    %c0_91 = arith.constant 0 : index
    %c0_92 = arith.constant 0 : index
    %100 = vector.load %arg6[%c1_90, %c0_91, %c0_92] : memref<9x16x16xbf16, #tpu.memory_space<vmem>>, vector<1x16x16xbf16>
    %101 = vector.shape_cast %100 : vector<1x16x16xbf16> to vector<16x16xbf16>
    %cst_93 = arith.constant dense<0.000000e+00> : vector<4x16xf32>
    %102 = tpu.matmul %99, %101, %cst_93 {dimension_numbers = #tpu.dot_dimension_numbers<[1], [0], [0], [1], [0, 0, 1, 1], [], []>} : vector<4x16xbf16>, vector<16x16xbf16>, vector<4x16xf32> -> vector<4x16xf32>
    %103 = arith.addf %96, %102 : vector<4x16xf32>
    %c0_94 = arith.constant 0 : index
    %c2_95 = arith.constant 2 : index
    %c0_96 = arith.constant 0 : index
    %104 = vector.load %arg9[%c0_94, %c2_95, %c0_96] : memref<4x4x16xf32, #tpu.memory_space<vmem>>, vector<2x2x16xf32>
    %105 = vector.shape_cast %104 : vector<2x2x16xf32> to vector<4x16xf32>
    %106 = arith.truncf %105 : vector<4x16xf32> to vector<4x16xbf16>
    %c2_97 = arith.constant 2 : index
    %c0_98 = arith.constant 0 : index
    %c0_99 = arith.constant 0 : index
    %107 = vector.load %arg6[%c2_97, %c0_98, %c0_99] : memref<9x16x16xbf16, #tpu.memory_space<vmem>>, vector<1x16x16xbf16>
    %108 = vector.shape_cast %107 : vector<1x16x16xbf16> to vector<16x16xbf16>
    %cst_100 = arith.constant dense<0.000000e+00> : vector<4x16xf32>
    %109 = tpu.matmul %106, %108, %cst_100 {dimension_numbers = #tpu.dot_dimension_numbers<[1], [0], [0], [1], [0, 0, 1, 1], [], []>} : vector<4x16xbf16>, vector<16x16xbf16>, vector<4x16xf32> -> vector<4x16xf32>
    %110 = arith.addf %103, %109 : vector<4x16xf32>
    %c1_101 = arith.constant 1 : index
    %c0_102 = arith.constant 0 : index
    %c0_103 = arith.constant 0 : index
    %111 = vector.load %arg9[%c1_101, %c0_102, %c0_103] : memref<4x4x16xf32, #tpu.memory_space<vmem>>, vector<2x2x16xf32>
    %112 = vector.shape_cast %111 : vector<2x2x16xf32> to vector<4x16xf32>
    %113 = arith.truncf %112 : vector<4x16xf32> to vector<4x16xbf16>
    %c3_104 = arith.constant 3 : index
    %c0_105 = arith.constant 0 : index
    %c0_106 = arith.constant 0 : index
    %114 = vector.load %arg6[%c3_104, %c0_105, %c0_106] : memref<9x16x16xbf16, #tpu.memory_space<vmem>>, vector<1x16x16xbf16>
    %115 = vector.shape_cast %114 : vector<1x16x16xbf16> to vector<16x16xbf16>
    %cst_107 = arith.constant dense<0.000000e+00> : vector<4x16xf32>
    %116 = tpu.matmul %113, %115, %cst_107 {dimension_numbers = #tpu.dot_dimension_numbers<[1], [0], [0], [1], [0, 0, 1, 1], [], []>} : vector<4x16xbf16>, vector<16x16xbf16>, vector<4x16xf32> -> vector<4x16xf32>
    %117 = arith.addf %110, %116 : vector<4x16xf32>
    %c1_108 = arith.constant 1 : index
    %c1_109 = arith.constant 1 : index
    %c0_110 = arith.constant 0 : index
    %118 = vector.load %arg9[%c1_108, %c1_109, %c0_110] : memref<4x4x16xf32, #tpu.memory_space<vmem>>, vector<2x2x16xf32>
    %119 = vector.shape_cast %118 : vector<2x2x16xf32> to vector<4x16xf32>
    %120 = arith.truncf %119 : vector<4x16xf32> to vector<4x16xbf16>
    %c4_111 = arith.constant 4 : index
    %c0_112 = arith.constant 0 : index
    %c0_113 = arith.constant 0 : index
    %121 = vector.load %arg6[%c4_111, %c0_112, %c0_113] : memref<9x16x16xbf16, #tpu.memory_space<vmem>>, vector<1x16x16xbf16>
    %122 = vector.shape_cast %121 : vector<1x16x16xbf16> to vector<16x16xbf16>
    %cst_114 = arith.constant dense<0.000000e+00> : vector<4x16xf32>
    %123 = tpu.matmul %120, %122, %cst_114 {dimension_numbers = #tpu.dot_dimension_numbers<[1], [0], [0], [1], [0, 0, 1, 1], [], []>} : vector<4x16xbf16>, vector<16x16xbf16>, vector<4x16xf32> -> vector<4x16xf32>
    %124 = arith.addf %117, %123 : vector<4x16xf32>
    %c1_115 = arith.constant 1 : index
    %c2_116 = arith.constant 2 : index
    %c0_117 = arith.constant 0 : index
    %125 = vector.load %arg9[%c1_115, %c2_116, %c0_117] : memref<4x4x16xf32, #tpu.memory_space<vmem>>, vector<2x2x16xf32>
    %126 = vector.shape_cast %125 : vector<2x2x16xf32> to vector<4x16xf32>
    %127 = arith.truncf %126 : vector<4x16xf32> to vector<4x16xbf16>
    %c5_118 = arith.constant 5 : index
    %c0_119 = arith.constant 0 : index
    %c0_120 = arith.constant 0 : index
    %128 = vector.load %arg6[%c5_118, %c0_119, %c0_120] : memref<9x16x16xbf16, #tpu.memory_space<vmem>>, vector<1x16x16xbf16>
    %129 = vector.shape_cast %128 : vector<1x16x16xbf16> to vector<16x16xbf16>
    %cst_121 = arith.constant dense<0.000000e+00> : vector<4x16xf32>
    %130 = tpu.matmul %127, %129, %cst_121 {dimension_numbers = #tpu.dot_dimension_numbers<[1], [0], [0], [1], [0, 0, 1, 1], [], []>} : vector<4x16xbf16>, vector<16x16xbf16>, vector<4x16xf32> -> vector<4x16xf32>
    %131 = arith.addf %124, %130 : vector<4x16xf32>
    %c2_122 = arith.constant 2 : index
    %c0_123 = arith.constant 0 : index
    %c0_124 = arith.constant 0 : index
    %132 = vector.load %arg9[%c2_122, %c0_123, %c0_124] : memref<4x4x16xf32, #tpu.memory_space<vmem>>, vector<2x2x16xf32>
    %133 = vector.shape_cast %132 : vector<2x2x16xf32> to vector<4x16xf32>
    %134 = arith.truncf %133 : vector<4x16xf32> to vector<4x16xbf16>
    %c6_125 = arith.constant 6 : index
    %c0_126 = arith.constant 0 : index
    %c0_127 = arith.constant 0 : index
    %135 = vector.load %arg6[%c6_125, %c0_126, %c0_127] : memref<9x16x16xbf16, #tpu.memory_space<vmem>>, vector<1x16x16xbf16>
    %136 = vector.shape_cast %135 : vector<1x16x16xbf16> to vector<16x16xbf16>
    %cst_128 = arith.constant dense<0.000000e+00> : vector<4x16xf32>
    %137 = tpu.matmul %134, %136, %cst_128 {dimension_numbers = #tpu.dot_dimension_numbers<[1], [0], [0], [1], [0, 0, 1, 1], [], []>} : vector<4x16xbf16>, vector<16x16xbf16>, vector<4x16xf32> -> vector<4x16xf32>
    %138 = arith.addf %131, %137 : vector<4x16xf32>
    %c2_129 = arith.constant 2 : index
    %c1_130 = arith.constant 1 : index
    %c0_131 = arith.constant 0 : index
    %139 = vector.load %arg9[%c2_129, %c1_130, %c0_131] : memref<4x4x16xf32, #tpu.memory_space<vmem>>, vector<2x2x16xf32>
    %140 = vector.shape_cast %139 : vector<2x2x16xf32> to vector<4x16xf32>
    %141 = arith.truncf %140 : vector<4x16xf32> to vector<4x16xbf16>
    %c7_132 = arith.constant 7 : index
    %c0_133 = arith.constant 0 : index
    %c0_134 = arith.constant 0 : index
    %142 = vector.load %arg6[%c7_132, %c0_133, %c0_134] : memref<9x16x16xbf16, #tpu.memory_space<vmem>>, vector<1x16x16xbf16>
    %143 = vector.shape_cast %142 : vector<1x16x16xbf16> to vector<16x16xbf16>
    %cst_135 = arith.constant dense<0.000000e+00> : vector<4x16xf32>
    %144 = tpu.matmul %141, %143, %cst_135 {dimension_numbers = #tpu.dot_dimension_numbers<[1], [0], [0], [1], [0, 0, 1, 1], [], []>} : vector<4x16xbf16>, vector<16x16xbf16>, vector<4x16xf32> -> vector<4x16xf32>
    %145 = arith.addf %138, %144 : vector<4x16xf32>
    %c2_136 = arith.constant 2 : index
    %c2_137 = arith.constant 2 : index
    %c0_138 = arith.constant 0 : index
    %146 = vector.load %arg9[%c2_136, %c2_137, %c0_138] : memref<4x4x16xf32, #tpu.memory_space<vmem>>, vector<2x2x16xf32>
    %147 = vector.shape_cast %146 : vector<2x2x16xf32> to vector<4x16xf32>
    %148 = arith.truncf %147 : vector<4x16xf32> to vector<4x16xbf16>
    %c8_139 = arith.constant 8 : index
    %c0_140 = arith.constant 0 : index
    %c0_141 = arith.constant 0 : index
    %149 = vector.load %arg6[%c8_139, %c0_140, %c0_141] : memref<9x16x16xbf16, #tpu.memory_space<vmem>>, vector<1x16x16xbf16>
    %150 = vector.shape_cast %149 : vector<1x16x16xbf16> to vector<16x16xbf16>
    %cst_142 = arith.constant dense<0.000000e+00> : vector<4x16xf32>
    %151 = tpu.matmul %148, %150, %cst_142 {dimension_numbers = #tpu.dot_dimension_numbers<[1], [0], [0], [1], [0, 0, 1, 1], [], []>} : vector<4x16xbf16>, vector<16x16xbf16>, vector<4x16xf32> -> vector<4x16xf32>
    %152 = arith.addf %145, %151 : vector<4x16xf32>
    %cst_143 = arith.constant 0.000000e+00 : f32
    %153 = vector.broadcast %cst_143 : f32 to vector<4x16xf32>
    %154 = arith.maximumf %152, %153 : vector<4x16xf32>
    %c0_144 = arith.constant 0 : index
    %c0_145 = arith.constant 0 : index
    %c0_146 = arith.constant 0 : index
    %155 = vector.load %arg8[%c0_144, %c0_145, %c0_146] : memref<1x4x16xf32, #tpu.memory_space<vmem>>, vector<1x4x16xf32>
    %156 = vector.shape_cast %155 : vector<1x4x16xf32> to vector<4x16xf32>
    %157 = vector.shape_cast %154 : vector<4x16xf32> to vector<1x4x16xf32>
    tpu.vector_store %arg8[%c0_144, %c0_145, %c0_146], %157 {strides = array<i32>} : memref<1x4x16xf32, #tpu.memory_space<vmem>>, vector<1x4x16xf32>,
    return
  }
  func.func @transform_0(%arg0: i32) -> (i32, i32, i32, i32) {
    %c0_i32 = arith.constant 0 : i32
    %c0_i32_0 = arith.constant 0 : i32
    %c0_i32_1 = arith.constant 0 : i32
    %c0_i32_2 = arith.constant 0 : i32
    return %arg0, %c0_i32, %c0_i32_0, %c0_i32_1 : i32, i32, i32, i32
  }
  func.func @transform_1(%arg0: i32) -> (i32, i32, i32) {
    %c0_i32 = arith.constant 0 : i32
    %c0_i32_0 = arith.constant 0 : i32
    %c0_i32_1 = arith.constant 0 : i32
    %c0_i32_2 = arith.constant 0 : i32
    return %c0_i32, %c0_i32_0, %c0_i32_1 : i32, i32, i32
  }
  func.func @transform_2(%arg0: i32) -> (i32, i32) {
    %c0_i32 = arith.constant 0 : i32
    %c0_i32_0 = arith.constant 0 : i32
    %c0_i32_1 = arith.constant 0 : i32
    return %c0_i32, %c0_i32_0 : i32, i32
  }
  func.func @transform_3(%arg0: i32) -> (i32, i32) {
    %c0_i32 = arith.constant 0 : i32
    %c0_i32_0 = arith.constant 0 : i32
    %c0_i32_1 = arith.constant 0 : i32
    return %c0_i32, %c0_i32_0 : i32, i32
  }
  func.func @transform_4(%arg0: i32) -> (i32, i32) {
    %c0_i32 = arith.constant 0 : i32
    %c0_i32_0 = arith.constant 0 : i32
    %c0_i32_1 = arith.constant 0 : i32
    return %c0_i32, %c0_i32_0 : i32, i32
  }
  func.func @transform_5(%arg0: i32) -> (i32, i32, i32) {
    %c0_i32 = arith.constant 0 : i32
    %c0_i32_0 = arith.constant 0 : i32
    %c0_i32_1 = arith.constant 0 : i32
    %c0_i32_2 = arith.constant 0 : i32
    return %c0_i32, %c0_i32_0, %c0_i32_1 : i32, i32, i32
  }
  func.func @transform_6(%arg0: i32) -> (i32, i32) {
    %c0_i32 = arith.constant 0 : i32
    %c0_i32_0 = arith.constant 0 : i32
    %c0_i32_1 = arith.constant 0 : i32
    return %c0_i32, %c0_i32_0 : i32, i32
  }
  func.func @transform_7(%arg0: i32) -> (i32, i32, i32) {
    %c0_i32 = arith.constant 0 : i32
    %c0_i32_0 = arith.constant 0 : i32
    %c0_i32_1 = arith.constant 0 : i32
    return %arg0, %c0_i32, %c0_i32_0 : i32, i32, i32
  }
}

module attributes {stable_mosaic.version = 11 : i64} {
  func.func @_mm_bias_kernel(%arg0: i32, %arg1: memref<8x64xf32, #tpu.memory_space<vmem>>, %arg2: memref<64x128xbf16, #tpu.memory_space<vmem>>, %arg3: memref<1x128xf32, #tpu.memory_space<vmem>>, %arg4: memref<8x128xf32, #tpu.memory_space<vmem>>) attributes {dimension_semantics = [#tpu.dimension_semantics<parallel>], iteration_bounds = array<i64: 1>, scalar_prefetch = 0 : i64, scratch_operands = 0 : i64, tpu.core_type = #tpu.core_type<tc>, window_params = [{transform_indices = @transform_0, window_bounds = array<i64: 8, 64>}, {pipeline_mode = #tpu.pipeline_mode<synchronous>, transform_indices = @transform_1, window_bounds = array<i64: 64, 128>}, {pipeline_mode = #tpu.pipeline_mode<synchronous>, transform_indices = @transform_2, window_bounds = array<i64: 1, 128>}, {transform_indices = @transform_3, window_bounds = array<i64: 8, 128>}]} {
    %c0 = arith.constant 0 : index
    %c0_0 = arith.constant 0 : index
    %0 = vector.load %arg1[%c0, %c0_0] : memref<8x64xf32, #tpu.memory_space<vmem>>, vector<8x64xf32>
    %1 = arith.truncf %0 : vector<8x64xf32> to vector<8x64xbf16>
    %c0_1 = arith.constant 0 : index
    %c0_2 = arith.constant 0 : index
    %2 = vector.load %arg2[%c0_1, %c0_2] : memref<64x128xbf16, #tpu.memory_space<vmem>>, vector<64x128xbf16>
    %cst = arith.constant dense<0.000000e+00> : vector<8x128xf32>
    %3 = tpu.matmul %1, %2, %cst {dimension_numbers = #tpu.dot_dimension_numbers<[1], [0], [0], [1], [0, 0, 1, 1], [], []>} : vector<8x64xbf16>, vector<64x128xbf16>, vector<8x128xf32> -> vector<8x128xf32>
    %c0_3 = arith.constant 0 : index
    %c0_4 = arith.constant 0 : index
    %4 = vector.load %arg3[%c0_3, %c0_4] : memref<1x128xf32, #tpu.memory_space<vmem>>, vector<1x128xf32>
    %5 = vector.broadcast %4 : vector<1x128xf32> to vector<8x128xf32>
    %6 = arith.addf %3, %5 : vector<8x128xf32>
    %c0_5 = arith.constant 0 : index
    %c0_6 = arith.constant 0 : index
    %7 = vector.load %arg4[%c0_5, %c0_6] : memref<8x128xf32, #tpu.memory_space<vmem>>, vector<8x128xf32>
    tpu.vector_store %arg4[%c0_5, %c0_6], %6 {strides = array<i32>} : memref<8x128xf32, #tpu.memory_space<vmem>>, vector<8x128xf32>,
    return
  }
  func.func @transform_0(%arg0: i32) -> (i32, i32) {
    %c0_i32 = arith.constant 0 : i32
    %c0_i32_0 = arith.constant 0 : i32
    return %arg0, %c0_i32 : i32, i32
  }
  func.func @transform_1(%arg0: i32) -> (i32, i32) {
    %c0_i32 = arith.constant 0 : i32
    %c0_i32_0 = arith.constant 0 : i32
    %c0_i32_1 = arith.constant 0 : i32
    return %c0_i32, %c0_i32_0 : i32, i32
  }
  func.func @transform_2(%arg0: i32) -> (i32, i32) {
    %c0_i32 = arith.constant 0 : i32
    %c0_i32_0 = arith.constant 0 : i32
    %c0_i32_1 = arith.constant 0 : i32
    return %c0_i32, %c0_i32_0 : i32, i32
  }
  func.func @transform_3(%arg0: i32) -> (i32, i32) {
    %c0_i32 = arith.constant 0 : i32
    %c0_i32_0 = arith.constant 0 : i32
    return %arg0, %c0_i32 : i32, i32
  }
}

module attributes {stable_mosaic.version = 11 : i64} {
  func.func @_lstm_fc_kernel(%arg0: memref<4x2x128xf32, #tpu.memory_space<vmem>>, %arg1: memref<32x128xf32, #tpu.memory_space<vmem>>, %arg2: memref<32x128xf32, #tpu.memory_space<vmem>>, %arg3: memref<1x128xf32, #tpu.memory_space<vmem>>, %arg4: memref<32x128xf32, #tpu.memory_space<vmem>>, %arg5: memref<32x128xf32, #tpu.memory_space<vmem>>, %arg6: memref<1x128xf32, #tpu.memory_space<vmem>>, %arg7: memref<2x128xf32, #tpu.memory_space<vmem>>, %arg8: memref<2x32xf32, #tpu.memory_space<vmem>>) attributes {dimension_semantics = [], scalar_prefetch = 0 : i64, scratch_operands = 1 : i64, tpu.core_type = #tpu.core_type<tc>} {
    %c0 = arith.constant 0 : index
    %c0_0 = arith.constant 0 : index
    %0 = vector.load %arg1[%c0, %c0_0] : memref<32x128xf32, #tpu.memory_space<vmem>>, vector<32x128xf32>
    %c0_1 = arith.constant 0 : index
    %c0_2 = arith.constant 0 : index
    %1 = vector.load %arg2[%c0_1, %c0_2] : memref<32x128xf32, #tpu.memory_space<vmem>>, vector<32x128xf32>
    %c0_3 = arith.constant 0 : index
    %c0_4 = arith.constant 0 : index
    %2 = vector.load %arg3[%c0_3, %c0_4] : memref<1x128xf32, #tpu.memory_space<vmem>>, vector<1x128xf32>
    %c0_5 = arith.constant 0 : index
    %c0_6 = arith.constant 0 : index
    %3 = vector.load %arg4[%c0_5, %c0_6] : memref<32x128xf32, #tpu.memory_space<vmem>>, vector<32x128xf32>
    %cst = arith.constant 0.000000e+00 : f32
    %4 = vector.broadcast %cst : f32 to vector<1x32xf32>
    %cst_7 = arith.constant 0.000000e+00 : f32
    %5 = vector.broadcast %cst_7 : f32 to vector<1x32xf32>
    %cst_8 = arith.constant 0.000000e+00 : f32
    %6 = vector.broadcast %cst_8 : f32 to vector<2x32xf32>
    %c0_i32 = arith.constant 0 : i32
    %c4_i32 = arith.constant 4 : i32
    %7 = arith.addi %c0_i32, %c4_i32 : i32
    %c1_i32 = arith.constant 1 : i32
    %8:5 = scf.for %arg9 = %c0_i32 to %7 step %c1_i32 iter_args(%arg10 = %4, %arg11 = %5, %arg12 = %4, %arg13 = %5, %arg14 = %6) -> (vector<1x32xf32>, vector<1x32xf32>, vector<1x32xf32>, vector<1x32xf32>, vector<2x32xf32>)  : i32 {
      %15 = arith.index_cast %arg9 : i32 to index
      %c0_17 = arith.constant 0 : index
      %c0_18 = arith.constant 0 : index
      %16 = vector.load %arg0[%15, %c0_17, %c0_18] : memref<4x2x128xf32, #tpu.memory_space<vmem>>, vector<1x2x128xf32>
      %17 = vector.shape_cast %16 : vector<1x2x128xf32> to vector<2x128xf32>
      %18 = vector.extract_strided_slice %17 {offsets = [0, 0], sizes = [1, 128], strides = [1, 1]} : vector<2x128xf32> to vector<1x128xf32>
      %cst_19 = arith.constant dense<0.000000e+00> : vector<1x128xf32>
      %19 = tpu.matmul %arg10, %0, %cst_19 {dimension_numbers = #tpu.dot_dimension_numbers<[1], [0], [0], [1], [0, 0, 1, 1], [], []>} : vector<1x32xf32>, vector<32x128xf32>, vector<1x128xf32> -> vector<1x128xf32>
      %20 = arith.addf %18, %19 : vector<1x128xf32>
      %21 = arith.negf %20 : vector<1x128xf32>
      %22 = math.exp %21 : vector<1x128xf32>
      %cst_20 = arith.constant 1.000000e+00 : f32
      %23 = vector.broadcast %cst_20 : f32 to vector<1x128xf32>
      %24 = arith.addf %23, %22 : vector<1x128xf32>
      %25 = arith.divf %23, %24 : vector<1x128xf32>
      %26 = math.tanh %20 : vector<1x128xf32>
      %27 = vector.extract_strided_slice %25 {offsets = [0, 0], sizes = [1, 32], strides = [1, 1]} : vector<1x128xf32> to vector<1x32xf32>
      %28 = vector.extract_strided_slice %25 {offsets = [0, 32], sizes = [1, 32], strides = [1, 1]} : vector<1x128xf32> to vector<1x32xf32>
      %29 = vector.extract_strided_slice %25 {offsets = [0, 96], sizes = [1, 32], strides = [1, 1]} : vector<1x128xf32> to vector<1x32xf32>
      %30 = vector.extract_strided_slice %26 {offsets = [0, 64], sizes = [1, 32], strides = [1, 1]} : vector<1x128xf32> to vector<1x32xf32>
      %31 = arith.mulf %28, %arg12 : vector<1x32xf32>
      %32 = arith.mulf %27, %30 : vector<1x32xf32>
      %33 = arith.addf %31, %32 : vector<1x32xf32>
      %34 = math.tanh %33 : vector<1x32xf32>
      %35 = arith.mulf %29, %34 : vector<1x32xf32>
      %c0_21 = arith.constant 0 : index
      %c0_22 = arith.constant 0 : index
      %36 = vector.load %arg8[%c0_21, %c0_22] : memref<2x32xf32, #tpu.memory_space<vmem>>, vector<1x32xf32>
      tpu.vector_store %arg8[%c0_21, %c0_22], %35 {strides = array<i32>} : memref<2x32xf32, #tpu.memory_space<vmem>>, vector<1x32xf32>,
      %37 = vector.extract_strided_slice %17 {offsets = [1, 0], sizes = [1, 128], strides = [1, 1]} : vector<2x128xf32> to vector<1x128xf32>
      %cst_23 = arith.constant dense<0.000000e+00> : vector<1x128xf32>
      %38 = tpu.matmul %35, %0, %cst_23 {dimension_numbers = #tpu.dot_dimension_numbers<[1], [0], [0], [1], [0, 0, 1, 1], [], []>} : vector<1x32xf32>, vector<32x128xf32>, vector<1x128xf32> -> vector<1x128xf32>
      %39 = arith.addf %37, %38 : vector<1x128xf32>
      %40 = arith.negf %39 : vector<1x128xf32>
      %41 = math.exp %40 : vector<1x128xf32>
      %cst_24 = arith.constant 1.000000e+00 : f32
      %42 = vector.broadcast %cst_24 : f32 to vector<1x128xf32>
      %43 = arith.addf %42, %41 : vector<1x128xf32>
      %44 = arith.divf %42, %43 : vector<1x128xf32>
      %45 = math.tanh %39 : vector<1x128xf32>
      %46 = vector.extract_strided_slice %44 {offsets = [0, 0], sizes = [1, 32], strides = [1, 1]} : vector<1x128xf32> to vector<1x32xf32>
      %47 = vector.extract_strided_slice %44 {offsets = [0, 32], sizes = [1, 32], strides = [1, 1]} : vector<1x128xf32> to vector<1x32xf32>
      %48 = vector.extract_strided_slice %44 {offsets = [0, 96], sizes = [1, 32], strides = [1, 1]} : vector<1x128xf32> to vector<1x32xf32>
      %49 = vector.extract_strided_slice %45 {offsets = [0, 64], sizes = [1, 32], strides = [1, 1]} : vector<1x128xf32> to vector<1x32xf32>
      %50 = arith.mulf %47, %33 : vector<1x32xf32>
      %51 = arith.mulf %46, %49 : vector<1x32xf32>
      %52 = arith.addf %50, %51 : vector<1x32xf32>
      %53 = math.tanh %52 : vector<1x32xf32>
      %54 = arith.mulf %48, %53 : vector<1x32xf32>
      %c1 = arith.constant 1 : index
      %c0_25 = arith.constant 0 : index
      %55 = vector.load %arg8[%c1, %c0_25] : memref<2x32xf32, #tpu.memory_space<vmem>>, vector<1x32xf32>
      tpu.vector_store %arg8[%c1, %c0_25], %54 {strides = array<i32>} : memref<2x32xf32, #tpu.memory_space<vmem>>, vector<1x32xf32>,
      %c0_26 = arith.constant 0 : index
      %c0_27 = arith.constant 0 : index
      %56 = vector.load %arg8[%c0_26, %c0_27] : memref<2x32xf32, #tpu.memory_space<vmem>>, vector<2x32xf32>
      %cst_28 = arith.constant dense<0.000000e+00> : vector<2x128xf32>
      %57 = tpu.matmul %56, %1, %cst_28 {dimension_numbers = #tpu.dot_dimension_numbers<[1], [0], [0], [1], [0, 0, 1, 1], [], []>} : vector<2x32xf32>, vector<32x128xf32>, vector<2x128xf32> -> vector<2x128xf32>
      %58 = vector.broadcast %2 : vector<1x128xf32> to vector<2x128xf32>
      %59 = arith.addf %57, %58 : vector<2x128xf32>
      %60 = vector.extract_strided_slice %59 {offsets = [0, 0], sizes = [1, 128], strides = [1, 1]} : vector<2x128xf32> to vector<1x128xf32>
      %cst_29 = arith.constant dense<0.000000e+00> : vector<1x128xf32>
      %61 = tpu.matmul %arg11, %3, %cst_29 {dimension_numbers = #tpu.dot_dimension_numbers<[1], [0], [0], [1], [0, 0, 1, 1], [], []>} : vector<1x32xf32>, vector<32x128xf32>, vector<1x128xf32> -> vector<1x128xf32>
      %62 = arith.addf %60, %61 : vector<1x128xf32>
      %63 = arith.negf %62 : vector<1x128xf32>
      %64 = math.exp %63 : vector<1x128xf32>
      %cst_30 = arith.constant 1.000000e+00 : f32
      %65 = vector.broadcast %cst_30 : f32 to vector<1x128xf32>
      %66 = arith.addf %65, %64 : vector<1x128xf32>
      %67 = arith.divf %65, %66 : vector<1x128xf32>
      %68 = math.tanh %62 : vector<1x128xf32>
      %69 = vector.extract_strided_slice %67 {offsets = [0, 0], sizes = [1, 32], strides = [1, 1]} : vector<1x128xf32> to vector<1x32xf32>
      %70 = vector.extract_strided_slice %67 {offsets = [0, 32], sizes = [1, 32], strides = [1, 1]} : vector<1x128xf32> to vector<1x32xf32>
      %71 = vector.extract_strided_slice %67 {offsets = [0, 96], sizes = [1, 32], strides = [1, 1]} : vector<1x128xf32> to vector<1x32xf32>
      %72 = vector.extract_strided_slice %68 {offsets = [0, 64], sizes = [1, 32], strides = [1, 1]} : vector<1x128xf32> to vector<1x32xf32>
      %73 = arith.mulf %70, %arg13 : vector<1x32xf32>
      %74 = arith.mulf %69, %72 : vector<1x32xf32>
      %75 = arith.addf %73, %74 : vector<1x32xf32>
      %76 = math.tanh %75 : vector<1x32xf32>
      %77 = arith.mulf %71, %76 : vector<1x32xf32>
      %c0_31 = arith.constant 0 : index
      %c0_32 = arith.constant 0 : index
      %78 = vector.load %arg8[%c0_31, %c0_32] : memref<2x32xf32, #tpu.memory_space<vmem>>, vector<1x32xf32>
      tpu.vector_store %arg8[%c0_31, %c0_32], %77 {strides = array<i32>} : memref<2x32xf32, #tpu.memory_space<vmem>>, vector<1x32xf32>,
      %79 = vector.extract_strided_slice %59 {offsets = [1, 0], sizes = [1, 128], strides = [1, 1]} : vector<2x128xf32> to vector<1x128xf32>
      %cst_33 = arith.constant dense<0.000000e+00> : vector<1x128xf32>
      %80 = tpu.matmul %77, %3, %cst_33 {dimension_numbers = #tpu.dot_dimension_numbers<[1], [0], [0], [1], [0, 0, 1, 1], [], []>} : vector<1x32xf32>, vector<32x128xf32>, vector<1x128xf32> -> vector<1x128xf32>
      %81 = arith.addf %79, %80 : vector<1x128xf32>
      %82 = arith.negf %81 : vector<1x128xf32>
      %83 = math.exp %82 : vector<1x128xf32>
      %cst_34 = arith.constant 1.000000e+00 : f32
      %84 = vector.broadcast %cst_34 : f32 to vector<1x128xf32>
      %85 = arith.addf %84, %83 : vector<1x128xf32>
      %86 = arith.divf %84, %85 : vector<1x128xf32>
      %87 = math.tanh %81 : vector<1x128xf32>
      %88 = vector.extract_strided_slice %86 {offsets = [0, 0], sizes = [1, 32], strides = [1, 1]} : vector<1x128xf32> to vector<1x32xf32>
      %89 = vector.extract_strided_slice %86 {offsets = [0, 32], sizes = [1, 32], strides = [1, 1]} : vector<1x128xf32> to vector<1x32xf32>
      %90 = vector.extract_strided_slice %86 {offsets = [0, 96], sizes = [1, 32], strides = [1, 1]} : vector<1x128xf32> to vector<1x32xf32>
      %91 = vector.extract_strided_slice %87 {offsets = [0, 64], sizes = [1, 32], strides = [1, 1]} : vector<1x128xf32> to vector<1x32xf32>
      %92 = arith.mulf %89, %75 : vector<1x32xf32>
      %93 = arith.mulf %88, %91 : vector<1x32xf32>
      %94 = arith.addf %92, %93 : vector<1x32xf32>
      %95 = math.tanh %94 : vector<1x32xf32>
      %96 = arith.mulf %90, %95 : vector<1x32xf32>
      %c1_35 = arith.constant 1 : index
      %c0_36 = arith.constant 0 : index
      %97 = vector.load %arg8[%c1_35, %c0_36] : memref<2x32xf32, #tpu.memory_space<vmem>>, vector<1x32xf32>
      tpu.vector_store %arg8[%c1_35, %c0_36], %96 {strides = array<i32>} : memref<2x32xf32, #tpu.memory_space<vmem>>, vector<1x32xf32>,
      %c0_37 = arith.constant 0 : index
      %c0_38 = arith.constant 0 : index
      %98 = vector.load %arg8[%c0_37, %c0_38] : memref<2x32xf32, #tpu.memory_space<vmem>>, vector<2x32xf32>
      scf.yield %54, %96, %52, %94, %98 : vector<1x32xf32>, vector<1x32xf32>, vector<1x32xf32>, vector<1x32xf32>, vector<2x32xf32>
    }
    %c4_i32_9 = arith.constant 4 : i32
    %c0_10 = arith.constant 0 : index
    %c0_11 = arith.constant 0 : index
    %9 = vector.load %arg5[%c0_10, %c0_11] : memref<32x128xf32, #tpu.memory_space<vmem>>, vector<32x128xf32>
    %cst_12 = arith.constant dense<0.000000e+00> : vector<2x128xf32>
    %10 = tpu.matmul %8#4, %9, %cst_12 {dimension_numbers = #tpu.dot_dimension_numbers<[1], [0], [0], [1], [0, 0, 1, 1], [], []>} : vector<2x32xf32>, vector<32x128xf32>, vector<2x128xf32> -> vector<2x128xf32>
    %c0_13 = arith.constant 0 : index
    %c0_14 = arith.constant 0 : index
    %11 = vector.load %arg6[%c0_13, %c0_14] : memref<1x128xf32, #tpu.memory_space<vmem>>, vector<1x128xf32>
    %12 = vector.broadcast %11 : vector<1x128xf32> to vector<2x128xf32>
    %13 = arith.addf %10, %12 : vector<2x128xf32>
    %c0_15 = arith.constant 0 : index
    %c0_16 = arith.constant 0 : index
    %14 = vector.load %arg7[%c0_15, %c0_16] : memref<2x128xf32, #tpu.memory_space<vmem>>, vector<2x128xf32>
    tpu.vector_store %arg7[%c0_15, %c0_16], %13 {strides = array<i32>} : memref<2x128xf32, #tpu.memory_space<vmem>>, vector<2x128xf32>,
    return
  }
}

</mosaic_0001>

<llo_original>
// kernel: _lambda_.5
$region0: #{_lambda_.5}
  #allocation0 [shape = 'u32[]', space=smem, size = 0x4, offset = 0x4, fixed_abs, tag = 'smem constant byte address 0x4 - core index']
  #allocation1 [shape = 'u32[144,128]{1,0:T(1,128)}', space=vmem, size = 0x12000, scoped, tag = 'internal scratch']
  #allocation2 [shape = 'f32[10,10,4]{2,1,0:T(8,128)}', space=vmem, size = 0x14000, scoped, tag = 'scratch operand']
  %s0 = inlined_call_operand.vmem [shape: f32[8,10,10,2], index: 0, kind: input, shape index: {}]
  %s1 = inlined_call_operand.vmem [shape: bf16[9,2,4], index: 1, kind: input, shape index: {}]
  %s2 = inlined_call_operand.vmem [shape: bf16[2,4], index: 2, kind: input, shape index: {}]
  %s3 = inlined_call_operand.vmem [shape: f32[1,4], index: 3, kind: input, shape index: {}]
  %s4 = inlined_call_operand.vmem [shape: f32[1,4], index: 4, kind: input, shape index: {}]
  %s5 = inlined_call_operand.vmem [shape: bf16[9,4,4], index: 5, kind: input, shape index: {}]
  %s6 = inlined_call_operand.vmem [shape: f32[1,4], index: 6, kind: input, shape index: {}]
  %s7 = inlined_call_operand.vmem [shape: f32[8,64,4], index: 7, kind: output, shape index: {}]
  %s8 = sld [smem:[#allocation0]]
  $region61: #{_lambda_.5} parent=0
    _
  %s10 = ssub.s32 1, %s8
  %s11 = scalar_select 0, %s10, %s8
  loop: start=0, step=1, limit=10
  $region2: #{_lambda_.5} parent=0 // loop_pre_header
    _
  $region3: #{_lambda_.5} parent=0 // loop_header
    %s13 = sphi 0, %s17
    %p14 = scmp.ge.s32.totalorder %s13, 10
    %s23 = sphi 0, %s25
    %s26 = sphi 0, %s23
    %s27 = sphi 0, %s26
    %s43 = sphi 0, %s27
    %s47 = sphi 0, %s47
    %s49 = sphi 0, %s47
    %s50 = sphi 0, %s49
    %s64 = sphi 0, %s50
    %s68 = sphi 0, %s68
    %s70 = sphi 0, %s68
    %s71 = sphi 0, %s70
    %s85 = sphi 0, %s71
    %s89 = sphi 0, %s89
    %s91 = sphi 0, %s89
    %s92 = sphi 0, %s91
    %s106 = sphi 0, %s92
    %s110 = sphi 0, %s110
    %s112 = sphi 0, %s110
    %s113 = sphi 0, %s112
    %s127 = sphi 0, %s113
    %s131 = sphi 0, %s131
    %s133 = sphi 0, %s131
    %s134 = sphi 0, %s133
    %s148 = sphi 0, %s134
    %s152 = sphi 0, %s152
    %s154 = sphi 0, %s152
    %s155 = sphi 0, %s154
    %s169 = sphi 0, %s155
    %s175 = sphi 0, %s177
    %s178 = sphi 0, %s175
    %s179 = sphi 0, %s178
    %s195 = sphi 0, %s179
  $region4: #{_lambda_.5} parent=0 // loop_header_branch
    %16 = sbr.rel (%p14) target = $region8
  $region5: #{_lambda_.5} parent=0 // loop_body
    %s18 = ssub.s32 %s13, 1
    %s19 = ssub.s32 %s13, 2
    %s20 = sadd.s32 %s13, 1
    %s21 = ssub.s32 %s13, %s20
    %p22 = scmp.eq.s32.totalorder %s21, 0
    %s24 = sadd.s32 %s23, 1
    %s25 = scalar_select %p22, %s23, %s24
    %p28 = pneg %p22
    %p29 = scmp.eq.s32.totalorder %s13, 7
    %p30 = por %p28, %p29
    %p31 = scmp.ne.s32.totalorder %s23, %s26
    %p32 = scmp.eq.s32.totalorder %s13, 0
    %p33 = por %p31, %p32
    %p34 = scmp.ne.s32.totalorder %s23, %s26
    %p35 = scmp.eq.s32.totalorder %s18, 7
    %p36 = por %p34, %p35
    %p37 = scmp.ne.s32.totalorder %s26, %s27
    %p38 = scmp.eq.s32.totalorder %s18, 0
    %p39 = por %p37, %p38
    %p40 = scmp.ne.s32.totalorder %s26, %s27
    %p41 = scmp.eq.s32.totalorder %s19, 7
    %p42 = por %p40, %p41
    %p44 = scmp.ne.s32.totalorder %s27, %s43
    %p45 = scmp.eq.s32.totalorder %s19, 0
    %p46 = por %p44, %p45
    %s48 = sadd.s32 %s47, 1
    %p51 = scmp.eq.s32.totalorder %s13, 7
    %p52 = scmp.ne.s32.totalorder %s47, %s49
    %p53 = scmp.eq.s32.totalorder %s13, 0
    %p54 = por %p52, %p53
    %p55 = scmp.ne.s32.totalorder %s47, %s49
    %p56 = scmp.eq.s32.totalorder %s18, 7
    %p57 = por %p55, %p56
    %p58 = scmp.ne.s32.totalorder %s49, %s50
    %p59 = scmp.eq.s32.totalorder %s18, 0
    %p60 = por %p58, %p59
    %p61 = scmp.ne.s32.totalorder %s49, %s50
    %p62 = scmp.eq.s32.totalorder %s19, 7
    %p63 = por %p61, %p62
    %p65 = scmp.ne.s32.totalorder %s50, %s64
    %p66 = scmp.eq.s32.totalorder %s19, 0
    %p67 = por %p65, %p66
    %s69 = sadd.s32 %s68, 1
    %p72 = scmp.eq.s32.totalorder %s13, 7
    %p73 = scmp.ne.s32.totalorder %s68, %s70
    %p74 = scmp.eq.s32.totalorder %s13, 0
    %p75 = por %p73, %p74
    %p76 = scmp.ne.s32.totalorder %s68, %s70
    %p77 = scmp.eq.s32.totalorder %s18, 7
    %p78 = por %p76, %p77
    %p79 = scmp.ne.s32.totalorder %s70, %s71
    %p80 = scmp.eq.s32.totalorder %s18, 0
    %p81 = por %p79, %p80
    %p82 = scmp.ne.s32.totalorder %s70, %s71
    %p83 = scmp.eq.s32.totalorder %s19, 7
    %p84 = por %p82, %p83
    %p86 = scmp.ne.s32.totalorder %s71, %s85
    %p87 = scmp.eq.s32.totalorder %s19, 0
    %p88 = por %p86, %p87
    %s90 = sadd.s32 %s89, 1
    %p93 = scmp.eq.s32.totalorder %s13, 7
    %p94 = scmp.ne.s32.totalorder %s89, %s91
    %p95 = scmp.eq.s32.totalorder %s13, 0
    %p96 = por %p94, %p95
    %p97 = scmp.ne.s32.totalorder %s89, %s91
    %p98 = scmp.eq.s32.totalorder %s18, 7
    %p99 = por %p97, %p98
    %p100 = scmp.ne.s32.totalorder %s91, %s92
    %p101 = scmp.eq.s32.totalorder %s18, 0
    %p102 = por %p100, %p101
    %p103 = scmp.ne.s32.totalorder %s91, %s92
    %p104 = scmp.eq.s32.totalorder %s19, 7
    %p105 = por %p103, %p104
    %p107 = scmp.ne.s32.totalorder %s92, %s106
    %p108 = scmp.eq.s32.totalorder %s19, 0
    %p109 = por %p107, %p108
    %s111 = sadd.s32 %s110, 1
    %p114 = scmp.eq.s32.totalorder %s13, 7
    %p115 = scmp.ne.s32.totalorder %s110, %s112
    %p116 = scmp.eq.s32.totalorder %s13, 0
    %p117 = por %p115, %p116
    %p118 = scmp.ne.s32.totalorder %s110, %s112
    %p119 = scmp.eq.s32.totalorder %s18, 7
    %p120 = por %p118, %p119
    %p121 = scmp.ne.s32.totalorder %s112, %s113
    %p122 = scmp.eq.s32.totalorder %s18, 0
    %p123 = por %p121, %p122
    %p124 = scmp.ne.s32.totalorder %s112, %s113
    %p125 = scmp.eq.s32.totalorder %s19, 7
    %p126 = por %p124, %p125
    %p128 = scmp.ne.s32.totalorder %s113, %s127
    %p129 = scmp.eq.s32.totalorder %s19, 0
    %p130 = por %p128, %p129
    %s132 = sadd.s32 %s131, 1
    %p135 = scmp.eq.s32.totalorder %s13, 7
    %p136 = scmp.ne.s32.totalorder %s131, %s133
    %p137 = scmp.eq.s32.totalorder %s13, 0
    %p138 = por %p136, %p137
    %p139 = scmp.ne.s32.totalorder %s131, %s133
    %p140 = scmp.eq.s32.totalorder %s18, 7
    %p141 = por %p139, %p140
    %p142 = scmp.ne.s32.totalorder %s133, %s134
    %p143 = scmp.eq.s32.totalorder %s18, 0
    %p144 = por %p142, %p143
    %p145 = scmp.ne.s32.totalorder %s133, %s134
    %p146 = scmp.eq.s32.totalorder %s19, 7
    %p147 = por %p145, %p146
    %p149 = scmp.ne.s32.totalorder %s134, %s148
    %p150 = scmp.eq.s32.totalorder %s19, 0
    %p151 = por %p149, %p150
    %s153 = sadd.s32 %s152, 1
    %p156 = scmp.eq.s32.totalorder %s13, 7
    %p157 = scmp.ne.s32.totalorder %s152, %s154
    %p158 = scmp.eq.s32.totalorder %s13, 0
    %p159 = por %p157, %p158
    %p160 = scmp.ne.s32.totalorder %s152, %s154
    %p161 = scmp.eq.s32.totalorder %s18, 7
    %p162 = por %p160, %p161
    %p163 = scmp.ne.s32.totalorder %s154, %s155
    %p164 = scmp.eq.s32.totalorder %s18, 0
    %p165 = por %p163, %p164
    %p166 = scmp.ne.s32.totalorder %s154, %s155
    %p167 = scmp.eq.s32.totalorder %s19, 7
    %p168 = por %p166, %p167
    %p170 = scmp.ne.s32.totalorder %s155, %s169
    %p171 = scmp.eq.s32.totalorder %s19, 0
    %p172 = por %p170, %p171
    %s173 = ssub.s32 %s13, %s20
    %p174 = scmp.eq.s32.totalorder %s173, 0
    %s176 = sadd.s32 %s175, 1
    %s177 = scalar_select %p174, %s175, %s176
    %p180 = pneg %p174
    %p181 = scmp.eq.s32.totalorder %s13, 7
    %p182 = por %p180, %p181
    %p183 = scmp.ne.s32.totalorder %s175, %s178
    %p184 = scmp.eq.s32.totalorder %s13, 0
    %p185 = por %p183, %p184
    %p186 = scmp.ne.s32.totalorder %s175, %s178
    %p187 = scmp.eq.s32.totalorder %s18, 7
    %p188 = por %p186, %p187
    %p189 = scmp.ne.s32.totalorder %s178, %s179
    %p190 = scmp.eq.s32.totalorder %s18, 0
    %p191 = por %p189, %p190
    %p192 = scmp.ne.s32.totalorder %s178, %s179
    %p193 = scmp.eq.s32.totalorder %s19, 7
    %p194 = por %p192, %p193
    %p196 = scmp.ne.s32.totalorder %s179, %s195
    %p197 = scmp.eq.s32.totalorder %s19, 0
    %p198 = por %p196, %p197
    %p199 = scmp.le.s32.totalorder 1, %s13
    %p200 = scmp.lt.s32.totalorder %s13, 9
    %p201 = pnand %p199, %p200
    %p202 = pneg %p201
    // Predicated region
    $region9: #{_lambda_.5} parent=5 // pred_check
      _
    $region10: #{_lambda_.5} parent=5 // pred_check_branch
      %204 = sbr.rel (%p201) target = $region12
    $region11: #{_lambda_.5} parent=5 // pred_region
      %s205 = ssub.s32 %s13, 1
      // Predicated region
      $region13: #{_lambda_.5} parent=11 // pred_check
        %p206 = pneg %p60
      $region14: #{_lambda_.5} parent=11 // pred_check_branch
        %208 = sbr.rel (%p206) target = $region16
      $region15: #{_lambda_.5} parent=11 // pred_region
        _
      $region16: #{_lambda_.5} parent=11 // pred_fallthru
        _
      // Predicated region
      $region17: #{_lambda_.5} parent=11 // pred_check
        %p209 = pneg %p81
      $region18: #{_lambda_.5} parent=11 // pred_check_branch
        %211 = sbr.rel (%p209) target = $region20
      $region19: #{_lambda_.5} parent=11 // pred_region
        _
      $region20: #{_lambda_.5} parent=11 // pred_fallthru
        _
      // Predicated region
      $region21: #{_lambda_.5} parent=11 // pred_check
        %p212 = pneg %p102
      $region22: #{_lambda_.5} parent=11 // pred_check_branch
        %214 = sbr.rel (%p212) target = $region24
      $region23: #{_lambda_.5} parent=11 // pred_region
        _
      $region24: #{_lambda_.5} parent=11 // pred_fallthru
        _
      // Predicated region
      $region25: #{_lambda_.5} parent=11 // pred_check
        %p215 = pneg %p123
      $region26: #{_lambda_.5} parent=11 // pred_check_branch
        %217 = sbr.rel (%p215) target = $region28
      $region27: #{_lambda_.5} parent=11 // pred_region
        _
      $region28: #{_lambda_.5} parent=11 // pred_fallthru
        _
      // Predicated region
      $region29: #{_lambda_.5} parent=11 // pred_check
        %p218 = pneg %p144
      $region30: #{_lambda_.5} parent=11 // pred_check_branch
        %220 = sbr.rel (%p218) target = $region32
      $region31: #{_lambda_.5} parent=11 // pred_region
        _
      $region32: #{_lambda_.5} parent=11 // pred_fallthru
        _
      // Predicated region
      $region33: #{_lambda_.5} parent=11 // pred_check
        %p221 = pneg %p165
      $region34: #{_lambda_.5} parent=11 // pred_check_branch
        %223 = sbr.rel (%p221) target = $region36
      $region35: #{_lambda_.5} parent=11 // pred_region
        _
      $region36: #{_lambda_.5} parent=11 // pred_fallthru
        _
    $region12: #{_lambda_.5} parent=5 // pred_fallthru
      _
    %p224 = scmp.lt.s32.totalorder %s13, 8
    // Predicated region
    $region37: #{_lambda_.5} parent=5 // pred_check
      %p225 = pneg %p224
    $region38: #{_lambda_.5} parent=5 // pred_check_branch
      %227 = sbr.rel (%p225) target = $region40
    $region39: #{_lambda_.5} parent=5 // pred_region
      // Predicated region
      $region41: #{_lambda_.5} parent=39 // pred_check
        %p228 = pneg %p33
      $region42: #{_lambda_.5} parent=39 // pred_check_branch
        %230 = sbr.rel (%p228) target = $region44
      $region43: #{_lambda_.5} parent=39 // pred_region
        %p231 = scmp.lt.s32.totalorder %s13, 7
        %s232 = scalar_select %p231, %s13, 7
        %s233 = smul.addr %s232, 20
        %s234 = smul.addr %s233, 8
        %s235 = scalar_lea.vmem %s0, %s234
      $region44: #{_lambda_.5} parent=39 // pred_fallthru
        _
    $region40: #{_lambda_.5} parent=5 // pred_fallthru
      _
    %p236 = scmp.le.s32.totalorder 1, %s13
    %p237 = scmp.lt.s32.totalorder %s13, 9
    %p238 = pnand %p236, %p237
    %p239 = pneg %p238
    // Predicated region
    $region45: #{_lambda_.5} parent=5 // pred_check
      _
    $region46: #{_lambda_.5} parent=5 // pred_check_branch
      %241 = sbr.rel (%p238) target = $region48
    $region47: #{_lambda_.5} parent=5 // pred_region
      %s242 = ssub.s32 %s13, 1
      %p243 = scmp.lt.s32.totalorder %s18, 7
      %s244 = scalar_select %p243, %s18, 7
      %s245 = smul.addr %s244, 20
      %s246 = smul.addr %s245, 8
      %s247 = scalar_lea.vmem %s0, %s246
      %p248 = pneg %p39
      %p249 = pneg %p36
      %p250 = pneg %p60
      %p251 = pneg %p57
      %p252 = pneg %p81
      %p253 = pneg %p78
      %p254 = pneg %p102
      %p255 = pneg %p99
      %p256 = pneg %p123
      %p257 = pneg %p120
      %p258 = pneg %p144
      %p259 = pneg %p141
      %p260 = pneg %p165
      %p261 = pneg %p162
      %p262 = pneg %p191
      %p263 = pneg %p188
      %p264 = scmp.lt.s32.totalorder %s18, 7
      %s265 = scalar_select %p264, %s18, 7
      %s266 = smul.addr %s265, 8
      %s267 = smul.addr %s266, 8
      %s268 = scalar_lea.vmem %s7, %s267
      %p269 = scmp.lt.s32.totalorder %s18, 7
      %s270 = scalar_select %p269, %s18, 7
      %s271 = smul.addr %s270, 20
      %s272 = smul.addr %s271, 8
      %s273 = scalar_lea.vmem %s0, %s272
      %p274 = scmp.lt.s32.totalorder %s18, 7
      %s275 = scalar_select %p274, %s18, 7
      %s276 = smul.addr %s275, 8
      %s277 = smul.addr %s276, 8
      %s278 = scalar_lea.vmem %s7, %s277
      %v280 = vld [vmem:[%s273] sm:$0xff]
      %v281 = vld [vmem:[%s273 + $0x10] sm:$0xff]
      %v282 = vld [vmem:[%s273 + $0x20] sm:$0xff]
      %v283 = vld [vmem:[%s273 + $0x30] sm:$0xff]
      %v284 = vld [vmem:[%s273 + $0x40] sm:$0xff]
      %v285 = vld [vmem:[%s273 + $0x50] sm:$0xff]
      %v286 = vld [vmem:[%s273 + $0x60] sm:$0xff]
      %v287 = vld [vmem:[%s273 + $0x70] sm:$0xff]
      %v288 = vpack.c.bf16 %v281, %v280
      %v289 = vpack.c.bf16 %v283, %v282
      %v290 = vpack.c.bf16 %v285, %v284
      %v291 = vpack.c.bf16 %v287, %v286
      %v292 = vld [vmem:[%s1] sm:$0x1]
      %v293 = vld [vmem:[%s273 + $0x1] sm:$0xff]
      %v294 = vld [vmem:[%s273 + $0x11] sm:$0xff]
      %v295 = vld [vmem:[%s273 + $0x21] sm:$0xff]
      %v296 = vld [vmem:[%s273 + $0x31] sm:$0xff]
      %v297 = vld [vmem:[%s273 + $0x41] sm:$0xff]
      %v298 = vld [vmem:[%s273 + $0x51] sm:$0xff]
      %v299 = vld [vmem:[%s273 + $0x61] sm:$0xff]
      %v300 = vld [vmem:[%s273 + $0x71] sm:$0xff]
      %v301 = vpack.c.bf16 %v294, %v293
      %v302 = vpack.c.bf16 %v296, %v295
      %v303 = vpack.c.bf16 %v298, %v297
      %v304 = vpack.c.bf16 %v300, %v299
      %s305 = scalar_lea.vmem %s1, 1
      %v306 = vld [vmem:[%s305] sm:$0x1]
      %vm307 = vcmask 15360
      %v309 = vsel %vm307, %v301, 0
      %v312 = vsel %vm307, %v302, 0
      %v315 = vsel %vm307, %v303, 0
      %v318 = vsel %vm307, %v304, 0
      %vm320 = vcmask 1040384
      %v322 = vsel %vm320, %v306, 0
      %324 = vmatprep.subr.bf16.mxu0 0
      %325 = vmatpush1.bf16.msra.mxu0 0
      %326 = vmatprep.subr.bf16.mxu0 0
      %327 = vmatpush1.bf16.msra.mxu0 0
      %328 = vmatprep.subr.bf16.mxu0 0
      %329 = vmatpush1.bf16.msra.mxu0 0
      %330 = vmatprep.subr.bf16.mxu0 0
      %331 = vmatpush1.bf16.msra.mxu0 0
      %332 = vmatprep.subr.bf16.mxu0 0
      %333 = vmatpush1.bf16.msra.mxu0 0
      %334 = vmatprep.subr.bf16.mxu0 0
      %335 = vmatpush1.bf16.msra.mxu0 0
      %336 = vmatprep.subr.bf16.mxu0 0
      %337 = vmatpush1.bf16.msra.mxu0 0
      %338 = vmatprep.subr.bf16.mxu0 0
      %339 = vmatpush1.bf16.msra.mxu0 %v322
      %340 = vmatprep.subr.bf16.mxu0 0
      %341 = vmatpush2.bf16.msra.mxu0 0
      %342 = vmatprep.subr.bf16.mxu0 0
      %343 = vmatpush2.bf16.msra.mxu0 0
      %344 = vmatprep.subr.bf16.mxu0 0
      %345 = vmatpush2.bf16.msra.mxu0 0
      %346 = vmatprep.subr.bf16.mxu0 0
      %347 = vmatpush2.bf16.msra.mxu0 0
      %348 = vmatprep.subr.bf16.mxu0 0
      %349 = vmatpush2.bf16.msra.mxu0 0
      %350 = vmatprep.subr.bf16.mxu0 0
      %351 = vmatpush2.bf16.msra.mxu0 0
      %352 = vmatprep.subr.bf16.mxu0 0
      %353 = vmatpush2.bf16.msra.mxu0 0
      %354 = vmatprep.subr.bf16.mxu0 0
      %355 = vmatpush2.bf16.msra.mxu0 0
      %356 = vmatprep.mubr.bf16.mxu0 0
      %357 = vmatmul.mubr.bf16.gmra.mxu0 %v309
      %v358 = vpop.f32.mrf.mxu0
      %v359 = vadd.f32 0.0, %v358
      %v360 = vpop.f32.mrf.mxu0
      %v361 = vpop.f32.mrf.mxu0
      %v362 = vadd.f32 0.0, %v361
      %v363 = vpop.f32.mrf.mxu0
      %364 = vmatprep.mubr.bf16.mxu0 0
      %365 = vmatmul.mubr.bf16.gmra.mxu0 %v312
      %v366 = vpop.f32.mrf.mxu0
      %v367 = vadd.f32 0.0, %v366
      %v368 = vpop.f32.mrf.mxu0
      %v369 = vpop.f32.mrf.mxu0
      %v370 = vadd.f32 0.0, %v369
      %v371 = vpop.f32.mrf.mxu0
      %372 = vmatprep.mubr.bf16.mxu0 0
      %373 = vmatmul.mubr.bf16.gmra.mxu0 %v315
      %v374 = vpop.f32.mrf.mxu0
      %v375 = vadd.f32 0.0, %v374
      %v376 = vpop.f32.mrf.mxu0
      %v377 = vpop.f32.mrf.mxu0
      %v378 = vadd.f32 0.0, %v377
      %v379 = vpop.f32.mrf.mxu0
      %380 = vmatprep.mubr.bf16.mxu0 0
      %381 = vmatmul.mubr.bf16.gmra.mxu0 %v318
      %v382 = vpop.f32.mrf.mxu0
      %v383 = vadd.f32 0.0, %v382
      %v384 = vpop.f32.mrf.mxu0
      %v385 = vpop.f32.mrf.mxu0
      %v386 = vadd.f32 0.0, %v385
      %v387 = vpop.f32.mrf.mxu0
      %388 = vdwg.mxu0
      %v390 = vsel %vm307, %v288, 0
      %v393 = vsel %vm307, %v289, 0
      %v396 = vsel %vm307, %v290, 0
      %v399 = vsel %vm307, %v291, 0
      %v402 = vsel %vm320, %v292, 0
      %404 = vmatprep.subr.bf16.mxu0 0
      %405 = vmatpush1.bf16.msra.mxu0 0
      %406 = vmatprep.subr.bf16.mxu0 0
      %407 = vmatpush1.bf16.msra.mxu0 0
      %408 = vmatprep.subr.bf16.mxu0 0
      %409 = vmatpush1.bf16.msra.mxu0 0
      %410 = vmatprep.subr.bf16.mxu0 0
      %411 = vmatpush1.bf16.msra.mxu0 0
      %412 = vmatprep.subr.bf16.mxu0 0
      %413 = vmatpush1.bf16.msra.mxu0 0
      %414 = vmatprep.subr.bf16.mxu0 0
      %415 = vmatpush1.bf16.msra.mxu0 0
      %416 = vmatprep.subr.bf16.mxu0 0
      %417 = vmatpush1.bf16.msra.mxu0 0
      %418 = vmatprep.subr.bf16.mxu0 0
      %419 = vmatpush1.bf16.msra.mxu0 %v402
      %420 = vmatprep.subr.bf16.mxu0 0
      %421 = vmatpush2.bf16.msra.mxu0 0
      %422 = vmatprep.subr.bf16.mxu0 0
      %423 = vmatpush2.bf16.msra.mxu0 0
      %424 = vmatprep.subr.bf16.mxu0 0
      %425 = vmatpush2.bf16.msra.mxu0 0
      %426 = vmatprep.subr.bf16.mxu0 0
      %427 = vmatpush2.bf16.msra.mxu0 0
      %428 = vmatprep.subr.bf16.mxu0 0
      %429 = vmatpush2.bf16.msra.mxu0 0
      %430 = vmatprep.subr.bf16.mxu0 0
      %431 = vmatpush2.bf16.msra.mxu0 0
      %432 = vmatprep.subr.bf16.mxu0 0
      %433 = vmatpush2.bf16.msra.mxu0 0
      %434 = vmatprep.subr.bf16.mxu0 0
      %435 = vmatpush2.bf16.msra.mxu0 0
      %436 = vmatprep.mubr.bf16.mxu0 0
      %437 = vmatmul.mubr.bf16.gmra.mxu0 %v390
      %v438 = vpop.f32.mrf.mxu0
      %v439 = vadd.f32 %v359, %v438
      %v440 = vpop.f32.mrf.mxu0
      %v441 = vpop.f32.mrf.mxu0
      %v442 = vadd.f32 %v362, %v441
      %v443 = vpop.f32.mrf.mxu0
      %444 = vmatprep.mubr.bf16.mxu0 0
      %445 = vmatmul.mubr.bf16.gmra.mxu0 %v393
      %v446 = vpop.f32.mrf.mxu0
      %v447 = vadd.f32 %v367, %v446
      %v448 = vpop.f32.mrf.mxu0
      %v449 = vpop.f32.mrf.mxu0
      %v450 = vadd.f32 %v370, %v449
      %v451 = vpop.f32.mrf.mxu0
      %452 = vmatprep.mubr.bf16.mxu0 0
      %453 = vmatmul.mubr.bf16.gmra.mxu0 %v396
      %v454 = vpop.f32.mrf.mxu0
      %v455 = vadd.f32 %v375, %v454
      %v456 = vpop.f32.mrf.mxu0
      %v457 = vpop.f32.mrf.mxu0
      %v458 = vadd.f32 %v378, %v457
      %v459 = vpop.f32.mrf.mxu0
      %460 = vmatprep.mubr.bf16.mxu0 0
      %461 = vmatmul.mubr.bf16.gmra.mxu0 %v399
      %v462 = vpop.f32.mrf.mxu0
      %v463 = vadd.f32 %v383, %v462
      %v464 = vpop.f32.mrf.mxu0
      %v465 = vpop.f32.mrf.mxu0
      %v466 = vadd.f32 %v386, %v465
      %v467 = vpop.f32.mrf.mxu0
      %468 = vdwg.mxu0
      %v469 = vld [vmem:[%s273 + $0x2] sm:$0xff]
      %v470 = vld [vmem:[%s273 + $0x12] sm:$0xff]
      %v471 = vld [vmem:[%s273 + $0x22] sm:$0xff]
      %v472 = vld [vmem:[%s273 + $0x32] sm:$0xff]
      %v473 = vld [vmem:[%s273 + $0x42] sm:$0xff]
      %v474 = vld [vmem:[%s273 + $0x52] sm:$0xff]
      %v475 = vld [vmem:[%s273 + $0x62] sm:$0xff]
      %v476 = vld [vmem:[%s273 + $0x72] sm:$0xff]
      %v477 = vpack.c.bf16 %v470, %v469
      %v478 = vpack.c.bf16 %v472, %v471
      %v479 = vpack.c.bf16 %v474, %v473
      %v480 = vpack.c.bf16 %v476, %v475
      %s481 = scalar_lea.vmem %s1, 2
      %v482 = vld [vmem:[%s481] sm:$0x1]
      %v484 = vsel %vm307, %v477, 0
      %v487 = vsel %vm307, %v478, 0
      %v490 = vsel %vm307, %v479, 0
      %v493 = vsel %vm307, %v480, 0
      %v496 = vsel %vm320, %v482, 0
      %498 = vmatprep.subr.bf16.mxu0 0
      %499 = vmatpush1.bf16.msra.mxu0 0
      %500 = vmatprep.subr.bf16.mxu0 0
      %501 = vmatpush1.bf16.msra.mxu0 0
      %502 = vmatprep.subr.bf16.mxu0 0
      %503 = vmatpush1.bf16.msra.mxu0 0
      %504 = vmatprep.subr.bf16.mxu0 0
      %505 = vmatpush1.bf16.msra.mxu0 0
      %506 = vmatprep.subr.bf16.mxu0 0
      %507 = vmatpush1.bf16.msra.mxu0 0
      %508 = vmatprep.subr.bf16.mxu0 0
      %509 = vmatpush1.bf16.msra.mxu0 0
      %510 = vmatprep.subr.bf16.mxu0 0
      %511 = vmatpush1.bf16.msra.mxu0 0
      %512 = vmatprep.subr.bf16.mxu0 0
      %513 = vmatpush1.bf16.msra.mxu0 %v496
      %514 = vmatprep.subr.bf16.mxu0 0
      %515 = vmatpush2.bf16.msra.mxu0 0
      %516 = vmatprep.subr.bf16.mxu0 0
      %517 = vmatpush2.bf16.msra.mxu0 0
      %518 = vmatprep.subr.bf16.mxu0 0
      %519 = vmatpush2.bf16.msra.mxu0 0
      %520 = vmatprep.subr.bf16.mxu0 0
      %521 = vmatpush2.bf16.msra.mxu0 0
      %522 = vmatprep.subr.bf16.mxu0 0
      %523 = vmatpush2.bf16.msra.mxu0 0
      %524 = vmatprep.subr.bf16.mxu0 0
      %525 = vmatpush2.bf16.msra.mxu0 0
      %526 = vmatprep.subr.bf16.mxu0 0
      %527 = vmatpush2.bf16.msra.mxu0 0
      %528 = vmatprep.subr.bf16.mxu0 0
      %529 = vmatpush2.bf16.msra.mxu0 0
      %530 = vmatprep.mubr.bf16.mxu0 0
      %531 = vmatmul.mubr.bf16.gmra.mxu0 %v484
      %v532 = vpop.f32.mrf.mxu0
      %v533 = vadd.f32 0.0, %v532
      %v534 = vpop.f32.mrf.mxu0
      %v535 = vpop.f32.mrf.mxu0
      %v536 = vadd.f32 0.0, %v535
      %v537 = vpop.f32.mrf.mxu0
      %538 = vmatprep.mubr.bf16.mxu0 0
      %539 = vmatmul.mubr.bf16.gmra.mxu0 %v487
      %v540 = vpop.f32.mrf.mxu0
      %v541 = vadd.f32 0.0, %v540
      %v542 = vpop.f32.mrf.mxu0
      %v543 = vpop.f32.mrf.mxu0
      %v544 = vadd.f32 0.0, %v543
      %v545 = vpop.f32.mrf.mxu0
      %546 = vmatprep.mubr.bf16.mxu0 0
      %547 = vmatmul.mubr.bf16.gmra.mxu0 %v490
      %v548 = vpop.f32.mrf.mxu0
      %v549 = vadd.f32 0.0, %v548
      %v550 = vpop.f32.mrf.mxu0
      %v551 = vpop.f32.mrf.mxu0
      %v552 = vadd.f32 0.0, %v551
      %v553 = vpop.f32.mrf.mxu0
      %554 = vmatprep.mubr.bf16.mxu0 0
      %555 = vmatmul.mubr.bf16.gmra.mxu0 %v493
      %v556 = vpop.f32.mrf.mxu0
      %v557 = vadd.f32 0.0, %v556
      %v558 = vpop.f32.mrf.mxu0
      %v559 = vpop.f32.mrf.mxu0
      %v560 = vadd.f32 0.0, %v559
      %v561 = vpop.f32.mrf.mxu0
      %562 = vdwg.mxu0
      %v563 = vadd.f32 %v439, %v533
      %v564 = vadd.f32 %v442, %v536
      %v565 = vadd.f32 %v447, %v541
      %v566 = vadd.f32 %v450, %v544
      %v567 = vadd.f32 %v455, %v549
      %v568 = vadd.f32 %v458, %v552
      %v569 = vadd.f32 %v463, %v557
      %v570 = vadd.f32 %v466, %v560
      %s571 = scalar_lea.vmem %s273, 16
      %v572 = vld [vmem:[%s571] sm:$0xff]
      %v573 = vld [vmem:[%s571 + $0x10] sm:$0xff]
      %v574 = vld [vmem:[%s571 + $0x20] sm:$0xff]
      %v575 = vld [vmem:[%s571 + $0x30] sm:$0xff]
      %v576 = vld [vmem:[%s571 + $0x40] sm:$0xff]
      %v577 = vld [vmem:[%s571 + $0x50] sm:$0xff]
      %v578 = vld [vmem:[%s571 + $0x60] sm:$0xff]
      %v579 = vld [vmem:[%s571 + $0x70] sm:$0xff]
      %v580 = vpack.c.bf16 %v573, %v572
      %v581 = vpack.c.bf16 %v575, %v574
      %v582 = vpack.c.bf16 %v577, %v576
      %v583 = vpack.c.bf16 %v579, %v578
      %s584 = scalar_lea.vmem %s1, 3
      %v585 = vld [vmem:[%s584] sm:$0x1]
      %v587 = vsel %vm307, %v580, 0
      %v590 = vsel %vm307, %v581, 0
      %v593 = vsel %vm307, %v582, 0
      %v596 = vsel %vm307, %v583, 0
      %v599 = vsel %vm320, %v585, 0
      %601 = vmatprep.subr.bf16.mxu0 0
      %602 = vmatpush1.bf16.msra.mxu0 0
      %603 = vmatprep.subr.bf16.mxu0 0
      %604 = vmatpush1.bf16.msra.mxu0 0
      %605 = vmatprep.subr.bf16.mxu0 0
      %606 = vmatpush1.bf16.msra.mxu0 0
      %607 = vmatprep.subr.bf16.mxu0 0
      %608 = vmatpush1.bf16.msra.mxu0 0
      %609 = vmatprep.subr.bf16.mxu0 0
      %610 = vmatpush1.bf16.msra.mxu0 0
      %611 = vmatprep.subr.bf16.mxu0 0
      %612 = vmatpush1.bf16.msra.mxu0 0
      %613 = vmatprep.subr.bf16.mxu0 0
      %614 = vmatpush1.bf16.msra.mxu0 0
      %615 = vmatprep.subr.bf16.mxu0 0
      %616 = vmatpush1.bf16.msra.mxu0 %v599
      %617 = vmatprep.subr.bf16.mxu0 0
      %618 = vmatpush2.bf16.msra.mxu0 0
      %619 = vmatprep.subr.bf16.mxu0 0
      %620 = vmatpush2.bf16.msra.mxu0 0
      %621 = vmatprep.subr.bf16.mxu0 0
      %622 = vmatpush2.bf16.msra.mxu0 0
      %623 = vmatprep.subr.bf16.mxu0 0
      %624 = vmatpush2.bf16.msra.mxu0 0
      %625 = vmatprep.subr.bf16.mxu0 0
      %626 = vmatpush2.bf16.msra.mxu0 0
      %627 = vmatprep.subr.bf16.mxu0 0
      %628 = vmatpush2.bf16.msra.mxu0 0
      %629 = vmatprep.subr.bf16.mxu0 0
      %630 = vmatpush2.bf16.msra.mxu0 0
      %631 = vmatprep.subr.bf16.mxu0 0
      %632 = vmatpush2.bf16.msra.mxu0 0
      %633 = vmatprep.mubr.bf16.mxu0 0
      %634 = vmatmul.mubr.bf16.gmra.mxu0 %v587
      %v635 = vpop.f32.mrf.mxu0
      %v636 = vadd.f32 0.0, %v635
      %v637 = vpop.f32.mrf.mxu0
      %v638 = vpop.f32.mrf.mxu0
      %v639 = vadd.f32 0.0, %v638
      %v640 = vpop.f32.mrf.mxu0
      %641 = vmatprep.mubr.bf16.mxu0 0
      %642 = vmatmul.mubr.bf16.gmra.mxu0 %v590
      %v643 = vpop.f32.mrf.mxu0
      %v644 = vadd.f32 0.0, %v643
      %v645 = vpop.f32.mrf.mxu0
      %v646 = vpop.f32.mrf.mxu0
      %v647 = vadd.f32 0.0, %v646
      %v648 = vpop.f32.mrf.mxu0
      %649 = vmatprep.mubr.bf16.mxu0 0
      %650 = vmatmul.mubr.bf16.gmra.mxu0 %v593
      %v651 = vpop.f32.mrf.mxu0
      %v652 = vadd.f32 0.0, %v651
      %v653 = vpop.f32.mrf.mxu0
      %v654 = vpop.f32.mrf.mxu0
      %v655 = vadd.f32 0.0, %v654
      %v656 = vpop.f32.mrf.mxu0
      %657 = vmatprep.mubr.bf16.mxu0 0
      %658 = vmatmul.mubr.bf16.gmra.mxu0 %v596
      %v659 = vpop.f32.mrf.mxu0
      %v660 = vadd.f32 0.0, %v659
      %v661 = vpop.f32.mrf.mxu0
      %v662 = vpop.f32.mrf.mxu0
      %v663 = vadd.f32 0.0, %v662
      %v664 = vpop.f32.mrf.mxu0
      %665 = vdwg.mxu0
      %v666 = vadd.f32 %v563, %v636
      %v667 = vadd.f32 %v564, %v639
      %v668 = vadd.f32 %v565, %v644
      %v669 = vadd.f32 %v566, %v647
      %v670 = vadd.f32 %v567, %v652
      %v671 = vadd.f32 %v568, %v655
      %v672 = vadd.f32 %v569, %v660
      %v673 = vadd.f32 %v570, %v663
      %v674 = vld [vmem:[%s571 + $0x1] sm:$0xff]
      %v675 = vld [vmem:[%s571 + $0x11] sm:$0xff]
      %v676 = vld [vmem:[%s571 + $0x21] sm:$0xff]
      %v677 = vld [vmem:[%s571 + $0x31] sm:$0xff]
      %v678 = vld [vmem:[%s571 + $0x41] sm:$0xff]
      %v679 = vld [vmem:[%s571 + $0x51] sm:$0xff]
      %v680 = vld [vmem:[%s571 + $0x61] sm:$0xff]
      %v681 = vld [vmem:[%s571 + $0x71] sm:$0xff]
      %v682 = vpack.c.bf16 %v675, %v674
      %v683 = vpack.c.bf16 %v677, %v676
      %v684 = vpack.c.bf16 %v679, %v678
      %v685 = vpack.c.bf16 %v681, %v680
      %s686 = scalar_lea.vmem %s1, 4
      %v687 = vld [vmem:[%s686] sm:$0x1]
      %v689 = vsel %vm307, %v682, 0
      %v692 = vsel %vm307, %v683, 0
      %v695 = vsel %vm307, %v684, 0
      %v698 = vsel %vm307, %v685, 0
      %v701 = vsel %vm320, %v687, 0
      %703 = vmatprep.subr.bf16.mxu0 0
      %704 = vmatpush1.bf16.msra.mxu0 0
      %705 = vmatprep.subr.bf16.mxu0 0
      %706 = vmatpush1.bf16.msra.mxu0 0
      %707 = vmatprep.subr.bf16.mxu0 0
      %708 = vmatpush1.bf16.msra.mxu0 0
      %709 = vmatprep.subr.bf16.mxu0 0
      %710 = vmatpush1.bf16.msra.mxu0 0
      %711 = vmatprep.subr.bf16.mxu0 0
      %712 = vmatpush1.bf16.msra.mxu0 0
      %713 = vmatprep.subr.bf16.mxu0 0
      %714 = vmatpush1.bf16.msra.mxu0 0
      %715 = vmatprep.subr.bf16.mxu0 0
      %716 = vmatpush1.bf16.msra.mxu0 0
      %717 = vmatprep.subr.bf16.mxu0 0
      %718 = vmatpush1.bf16.msra.mxu0 %v701
      %719 = vmatprep.subr.bf16.mxu0 0
      %720 = vmatpush2.bf16.msra.mxu0 0
      %721 = vmatprep.subr.bf16.mxu0 0
      %722 = vmatpush2.bf16.msra.mxu0 0
      %723 = vmatprep.subr.bf16.mxu0 0
      %724 = vmatpush2.bf16.msra.mxu0 0
      %725 = vmatprep.subr.bf16.mxu0 0
      %726 = vmatpush2.bf16.msra.mxu0 0
      %727 = vmatprep.subr.bf16.mxu0 0
      %728 = vmatpush2.bf16.msra.mxu0 0
      %729 = vmatprep.subr.bf16.mxu0 0
      %730 = vmatpush2.bf16.msra.mxu0 0
      %731 = vmatprep.subr.bf16.mxu0 0
      %732 = vmatpush2.bf16.msra.mxu0 0
      %733 = vmatprep.subr.bf16.mxu0 0
      %734 = vmatpush2.bf16.msra.mxu0 0
      %735 = vmatprep.mubr.bf16.mxu0 0
      %736 = vmatmul.mubr.bf16.gmra.mxu0 %v689
      %v737 = vpop.f32.mrf.mxu0
      %v738 = vadd.f32 0.0, %v737
      %v739 = vpop.f32.mrf.mxu0
      %v740 = vpop.f32.mrf.mxu0
      %v741 = vadd.f32 0.0, %v740
      %v742 = vpop.f32.mrf.mxu0
      %743 = vmatprep.mubr.bf16.mxu0 0
      %744 = vmatmul.mubr.bf16.gmra.mxu0 %v692
      %v745 = vpop.f32.mrf.mxu0
      %v746 = vadd.f32 0.0, %v745
      %v747 = vpop.f32.mrf.mxu0
      %v748 = vpop.f32.mrf.mxu0
      %v749 = vadd.f32 0.0, %v748
      %v750 = vpop.f32.mrf.mxu0
      %751 = vmatprep.mubr.bf16.mxu0 0
      %752 = vmatmul.mubr.bf16.gmra.mxu0 %v695
      %v753 = vpop.f32.mrf.mxu0
      %v754 = vadd.f32 0.0, %v753
      %v755 = vpop.f32.mrf.mxu0
      %v756 = vpop.f32.mrf.mxu0
      %v757 = vadd.f32 0.0, %v756
      %v758 = vpop.f32.mrf.mxu0
      %759 = vmatprep.mubr.bf16.mxu0 0
      %760 = vmatmul.mubr.bf16.gmra.mxu0 %v698
      %v761 = vpop.f32.mrf.mxu0
      %v762 = vadd.f32 0.0, %v761
      %v763 = vpop.f32.mrf.mxu0
      %v764 = vpop.f32.mrf.mxu0
      %v765 = vadd.f32 0.0, %v764
      %v766 = vpop.f32.mrf.mxu0
      %767 = vdwg.mxu0
      %v768 = vadd.f32 %v666, %v738
      %v769 = vadd.f32 %v667, %v741
      %v770 = vadd.f32 %v668, %v746
      %v771 = vadd.f32 %v669, %v749
      %v772 = vadd.f32 %v670, %v754
      %v773 = vadd.f32 %v671, %v757
      %v774 = vadd.f32 %v672, %v762
      %v775 = vadd.f32 %v673, %v765
      %v776 = vld [vmem:[%s2] sm:$0x1]
      %v777 = vld [vmem:[%s571 + $0x2] sm:$0xff]
      %v778 = vld [vmem:[%s571 + $0x12] sm:$0xff]
      %v779 = vld [vmem:[%s571 + $0x22] sm:$0xff]
      %v780 = vld [vmem:[%s571 + $0x32] sm:$0xff]
      %v781 = vld [vmem:[%s571 + $0x42] sm:$0xff]
      %v782 = vld [vmem:[%s571 + $0x52] sm:$0xff]
      %v783 = vld [vmem:[%s571 + $0x62] sm:$0xff]
      %v784 = vld [vmem:[%s571 + $0x72] sm:$0xff]
      %v785 = vpack.c.bf16 %v778, %v777
      %v786 = vpack.c.bf16 %v780, %v779
      %v787 = vpack.c.bf16 %v782, %v781
      %v788 = vpack.c.bf16 %v784, %v783
      %s789 = scalar_lea.vmem %s1, 5
      %v790 = vld [vmem:[%s789] sm:$0x1]
      %v792 = vsel %vm307, %v785, 0
      %v795 = vsel %vm307, %v786, 0
      %v798 = vsel %vm307, %v787, 0
      %v801 = vsel %vm307, %v788, 0
      %v804 = vsel %vm320, %v790, 0
      %806 = vmatprep.subr.bf16.mxu0 0
      %807 = vmatpush1.bf16.msra.mxu0 0
      %808 = vmatprep.subr.bf16.mxu0 0
      %809 = vmatpush1.bf16.msra.mxu0 0
      %810 = vmatprep.subr.bf16.mxu0 0
      %811 = vmatpush1.bf16.msra.mxu0 0
      %812 = vmatprep.subr.bf16.mxu0 0
      %813 = vmatpush1.bf16.msra.mxu0 0
      %814 = vmatprep.subr.bf16.mxu0 0
      %815 = vmatpush1.bf16.msra.mxu0 0
      %816 = vmatprep.subr.bf16.mxu0 0
      %817 = vmatpush1.bf16.msra.mxu0 0
      %818 = vmatprep.subr.bf16.mxu0 0
      %819 = vmatpush1.bf16.msra.mxu0 0
      %820 = vmatprep.subr.bf16.mxu0 0
      %821 = vmatpush1.bf16.msra.mxu0 %v804
      %822 = vmatprep.subr.bf16.mxu0 0
      %823 = vmatpush2.bf16.msra.mxu0 0
      %824 = vmatprep.subr.bf16.mxu0 0
      %825 = vmatpush2.bf16.msra.mxu0 0
      %826 = vmatprep.subr.bf16.mxu0 0
      %827 = vmatpush2.bf16.msra.mxu0 0
      %828 = vmatprep.subr.bf16.mxu0 0
      %829 = vmatpush2.bf16.msra.mxu0 0
      %830 = vmatprep.subr.bf16.mxu0 0
      %831 = vmatpush2.bf16.msra.mxu0 0
      %832 = vmatprep.subr.bf16.mxu0 0
      %833 = vmatpush2.bf16.msra.mxu0 0
      %834 = vmatprep.subr.bf16.mxu0 0
      %835 = vmatpush2.bf16.msra.mxu0 0
      %836 = vmatprep.subr.bf16.mxu0 0
      %837 = vmatpush2.bf16.msra.mxu0 0
      %838 = vmatprep.mubr.bf16.mxu0 0
      %839 = vmatmul.mubr.bf16.gmra.mxu0 %v792
      %v840 = vpop.f32.mrf.mxu0
      %v841 = vadd.f32 0.0, %v840
      %v842 = vpop.f32.mrf.mxu0
      %v843 = vpop.f32.mrf.mxu0
      %v844 = vadd.f32 0.0, %v843
      %v845 = vpop.f32.mrf.mxu0
      %846 = vmatprep.mubr.bf16.mxu0 0
      %847 = vmatmul.mubr.bf16.gmra.mxu0 %v795
      %v848 = vpop.f32.mrf.mxu0
      %v849 = vadd.f32 0.0, %v848
      %v850 = vpop.f32.mrf.mxu0
      %v851 = vpop.f32.mrf.mxu0
      %v852 = vadd.f32 0.0, %v851
      %v853 = vpop.f32.mrf.mxu0
      %854 = vmatprep.mubr.bf16.mxu0 0
      %855 = vmatmul.mubr.bf16.gmra.mxu0 %v798
      %v856 = vpop.f32.mrf.mxu0
      %v857 = vadd.f32 0.0, %v856
      %v858 = vpop.f32.mrf.mxu0
      %v859 = vpop.f32.mrf.mxu0
      %v860 = vadd.f32 0.0, %v859
      %v861 = vpop.f32.mrf.mxu0
      %862 = vmatprep.mubr.bf16.mxu0 0
      %863 = vmatmul.mubr.bf16.gmra.mxu0 %v801
      %v864 = vpop.f32.mrf.mxu0
      %v865 = vadd.f32 0.0, %v864
      %v866 = vpop.f32.mrf.mxu0
      %v867 = vpop.f32.mrf.mxu0
      %v868 = vadd.f32 0.0, %v867
      %v869 = vpop.f32.mrf.mxu0
      %870 = vdwg.mxu0
      %v871 = vadd.f32 %v768, %v841
      %v872 = vadd.f32 %v769, %v844
      %v873 = vadd.f32 %v770, %v849
      %v874 = vadd.f32 %v771, %v852
      %v875 = vadd.f32 %v772, %v857
      %v876 = vadd.f32 %v773, %v860
      %v877 = vadd.f32 %v774, %v865
      %v878 = vadd.f32 %v775, %v868
      %s879 = scalar_lea.vmem %s273, 32
      %v880 = vld [vmem:[%s879] sm:$0xff]
      %v881 = vld [vmem:[%s879 + $0x10] sm:$0xff]
      %v882 = vld [vmem:[%s879 + $0x20] sm:$0xff]
      %v883 = vld [vmem:[%s879 + $0x30] sm:$0xff]
      %v884 = vld [vmem:[%s879 + $0x40] sm:$0xff]
      %v885 = vld [vmem:[%s879 + $0x50] sm:$0xff]
      %v886 = vld [vmem:[%s879 + $0x60] sm:$0xff]
      %v887 = vld [vmem:[%s879 + $0x70] sm:$0xff]
      %v888 = vpack.c.bf16 %v881, %v880
      %v889 = vpack.c.bf16 %v883, %v882
      %v890 = vpack.c.bf16 %v885, %v884
      %v891 = vpack.c.bf16 %v887, %v886
      %s892 = scalar_lea.vmem %s1, 6
      %v893 = vld [vmem:[%s892] sm:$0x1]
      %v895 = vsel %vm307, %v888, 0
      %v898 = vsel %vm307, %v889, 0
      %v901 = vsel %vm307, %v890, 0
      %v904 = vsel %vm307, %v891, 0
      %v907 = vsel %vm320, %v893, 0
      %909 = vmatprep.subr.bf16.mxu0 0
      %910 = vmatpush1.bf16.msra.mxu0 0
      %911 = vmatprep.subr.bf16.mxu0 0
      %912 = vmatpush1.bf16.msra.mxu0 0
      %913 = vmatprep.subr.bf16.mxu0 0
      %914 = vmatpush1.bf16.msra.mxu0 0
      %915 = vmatprep.subr.bf16.mxu0 0
      %916 = vmatpush1.bf16.msra.mxu0 0
      %917 = vmatprep.subr.bf16.mxu0 0
      %918 = vmatpush1.bf16.msra.mxu0 0
      %919 = vmatprep.subr.bf16.mxu0 0
      %920 = vmatpush1.bf16.msra.mxu0 0
      %921 = vmatprep.subr.bf16.mxu0 0
      %922 = vmatpush1.bf16.msra.mxu0 0
      %923 = vmatprep.subr.bf16.mxu0 0
      %924 = vmatpush1.bf16.msra.mxu0 %v907
      %925 = vmatprep.subr.bf16.mxu0 0
      %926 = vmatpush2.bf16.msra.mxu0 0
      %927 = vmatprep.subr.bf16.mxu0 0
      %928 = vmatpush2.bf16.msra.mxu0 0
      %929 = vmatprep.subr.bf16.mxu0 0
      %930 = vmatpush2.bf16.msra.mxu0 0
      %931 = vmatprep.subr.bf16.mxu0 0
      %932 = vmatpush2.bf16.msra.mxu0 0
      %933 = vmatprep.subr.bf16.mxu0 0
      %934 = vmatpush2.bf16.msra.mxu0 0
      %935 = vmatprep.subr.bf16.mxu0 0
      %936 = vmatpush2.bf16.msra.mxu0 0
      %937 = vmatprep.subr.bf16.mxu0 0
      %938 = vmatpush2.bf16.msra.mxu0 0
      %939 = vmatprep.subr.bf16.mxu0 0
      %940 = vmatpush2.bf16.msra.mxu0 0
      %941 = vmatprep.mubr.bf16.mxu0 0
      %942 = vmatmul.mubr.bf16.gmra.mxu0 %v895
      %v943 = vpop.f32.mrf.mxu0
      %v944 = vadd.f32 0.0, %v943
      %v945 = vpop.f32.mrf.mxu0
      %v946 = vpop.f32.mrf.mxu0
      %v947 = vadd.f32 0.0, %v946
      %v948 = vpop.f32.mrf.mxu0
      %949 = vmatprep.mubr.bf16.mxu0 0
      %950 = vmatmul.mubr.bf16.gmra.mxu0 %v898
      %v951 = vpop.f32.mrf.mxu0
      %v952 = vadd.f32 0.0, %v951
      %v953 = vpop.f32.mrf.mxu0
      %v954 = vpop.f32.mrf.mxu0
      %v955 = vadd.f32 0.0, %v954
      %v956 = vpop.f32.mrf.mxu0
      %957 = vmatprep.mubr.bf16.mxu0 0
      %958 = vmatmul.mubr.bf16.gmra.mxu0 %v901
      %v959 = vpop.f32.mrf.mxu0
      %v960 = vadd.f32 0.0, %v959
      %v961 = vpop.f32.mrf.mxu0
      %v962 = vpop.f32.mrf.mxu0
      %v963 = vadd.f32 0.0, %v962
      %v964 = vpop.f32.mrf.mxu0
      %965 = vmatprep.mubr.bf16.mxu0 0
      %966 = vmatmul.mubr.bf16.gmra.mxu0 %v904
      %v967 = vpop.f32.mrf.mxu0
      %v968 = vadd.f32 0.0, %v967
      %v969 = vpop.f32.mrf.mxu0
      %v970 = vpop.f32.mrf.mxu0
      %v971 = vadd.f32 0.0, %v970
      %v972 = vpop.f32.mrf.mxu0
      %973 = vdwg.mxu0
      %v974 = vadd.f32 %v871, %v944
      %v975 = vadd.f32 %v872, %v947
      %v976 = vadd.f32 %v873, %v952
      %v977 = vadd.f32 %v874, %v955
      %v978 = vadd.f32 %v875, %v960
      %v979 = vadd.f32 %v876, %v963
      %v980 = vadd.f32 %v877, %v968
      %v981 = vadd.f32 %v878, %v971
      %v982 = vld [vmem:[%s879 + $0x1] sm:$0xff]
      %v983 = vld [vmem:[%s879 + $0x11] sm:$0xff]
      %v984 = vld [vmem:[%s879 + $0x21] sm:$0xff]
      %v985 = vld [vmem:[%s879 + $0x31] sm:$0xff]
      %v986 = vld [vmem:[%s879 + $0x41] sm:$0xff]
      %v987 = vld [vmem:[%s879 + $0x51] sm:$0xff]
      %v988 = vld [vmem:[%s879 + $0x61] sm:$0xff]
      %v989 = vld [vmem:[%s879 + $0x71] sm:$0xff]
      %v990 = vpack.c.bf16 %v983, %v982
      %v991 = vpack.c.bf16 %v985, %v984
      %v992 = vpack.c.bf16 %v987, %v986
      %v993 = vpack.c.bf16 %v989, %v988
      %s994 = scalar_lea.vmem %s1, 7
      %v995 = vld [vmem:[%s994] sm:$0x1]
      %v997 = vsel %vm307, %v990, 0
      %v1000 = vsel %vm307, %v991, 0
      %v1003 = vsel %vm307, %v992, 0
      %v1006 = vsel %vm307, %v993, 0
      %v1009 = vsel %vm320, %v995, 0
      %1011 = vmatprep.subr.bf16.mxu0 0
      %1012 = vmatpush1.bf16.msra.mxu0 0
      %1013 = vmatprep.subr.bf16.mxu0 0
      %1014 = vmatpush1.bf16.msra.mxu0 0
      %1015 = vmatprep.subr.bf16.mxu0 0
      %1016 = vmatpush1.bf16.msra.mxu0 0
      %1017 = vmatprep.subr.bf16.mxu0 0
      %1018 = vmatpush1.bf16.msra.mxu0 0
      %1019 = vmatprep.subr.bf16.mxu0 0
      %1020 = vmatpush1.bf16.msra.mxu0 0
      %1021 = vmatprep.subr.bf16.mxu0 0
      %1022 = vmatpush1.bf16.msra.mxu0 0
      %1023 = vmatprep.subr.bf16.mxu0 0
      %1024 = vmatpush1.bf16.msra.mxu0 0
      %1025 = vmatprep.subr.bf16.mxu0 0
      %1026 = vmatpush1.bf16.msra.mxu0 %v1009
      %1027 = vmatprep.subr.bf16.mxu0 0
      %1028 = vmatpush2.bf16.msra.mxu0 0
      %1029 = vmatprep.subr.bf16.mxu0 0
      %1030 = vmatpush2.bf16.msra.mxu0 0
      %1031 = vmatprep.subr.bf16.mxu0 0
      %1032 = vmatpush2.bf16.msra.mxu0 0
      %1033 = vmatprep.subr.bf16.mxu0 0
      %1034 = vmatpush2.bf16.msra.mxu0 0
      %1035 = vmatprep.subr.bf16.mxu0 0
      %1036 = vmatpush2.bf16.msra.mxu0 0
      %1037 = vmatprep.subr.bf16.mxu0 0
      %1038 = vmatpush2.bf16.msra.mxu0 0
      %1039 = vmatprep.subr.bf16.mxu0 0
      %1040 = vmatpush2.bf16.msra.mxu0 0
      %1041 = vmatprep.subr.bf16.mxu0 0
      %1042 = vmatpush2.bf16.msra.mxu0 0
      %1043 = vmatprep.mubr.bf16.mxu0 0
      %1044 = vmatmul.mubr.bf16.gmra.mxu0 %v997
      %v1045 = vpop.f32.mrf.mxu0
      %v1046 = vadd.f32 0.0, %v1045
      %v1047 = vpop.f32.mrf.mxu0
      %v1048 = vpop.f32.mrf.mxu0
      %v1049 = vadd.f32 0.0, %v1048
      %v1050 = vpop.f32.mrf.mxu0
      %1051 = vmatprep.mubr.bf16.mxu0 0
      %1052 = vmatmul.mubr.bf16.gmra.mxu0 %v1000
      %v1053 = vpop.f32.mrf.mxu0
      %v1054 = vadd.f32 0.0, %v1053
      %v1055 = vpop.f32.mrf.mxu0
      %v1056 = vpop.f32.mrf.mxu0
      %v1057 = vadd.f32 0.0, %v1056
      %v1058 = vpop.f32.mrf.mxu0
      %1059 = vmatprep.mubr.bf16.mxu0 0
      %1060 = vmatmul.mubr.bf16.gmra.mxu0 %v1003
      %v1061 = vpop.f32.mrf.mxu0
      %v1062 = vadd.f32 0.0, %v1061
      %v1063 = vpop.f32.mrf.mxu0
      %v1064 = vpop.f32.mrf.mxu0
      %v1065 = vadd.f32 0.0, %v1064
      %v1066 = vpop.f32.mrf.mxu0
      %1067 = vmatprep.mubr.bf16.mxu0 0
      %1068 = vmatmul.mubr.bf16.gmra.mxu0 %v1006
      %v1069 = vpop.f32.mrf.mxu0
      %v1070 = vadd.f32 0.0, %v1069
      %v1071 = vpop.f32.mrf.mxu0
      %v1072 = vpop.f32.mrf.mxu0
      %v1073 = vadd.f32 0.0, %v1072
      %v1074 = vpop.f32.mrf.mxu0
      %1075 = vdwg.mxu0
      %v1076 = vadd.f32 %v974, %v1046
      %v1077 = vadd.f32 %v975, %v1049
      %v1078 = vadd.f32 %v976, %v1054
      %v1079 = vadd.f32 %v977, %v1057
      %v1080 = vadd.f32 %v978, %v1062
      %v1081 = vadd.f32 %v979, %v1065
      %v1082 = vadd.f32 %v980, %v1070
      %v1083 = vadd.f32 %v981, %v1073
      %v1084 = vld [vmem:[%s879 + $0x2] sm:$0xff]
      %v1085 = vld [vmem:[%s879 + $0x12] sm:$0xff]
      %v1086 = vld [vmem:[%s879 + $0x22] sm:$0xff]
      %v1087 = vld [vmem:[%s879 + $0x32] sm:$0xff]
      %v1088 = vld [vmem:[%s879 + $0x42] sm:$0xff]
      %v1089 = vld [vmem:[%s879 + $0x52] sm:$0xff]
      %v1090 = vld [vmem:[%s879 + $0x62] sm:$0xff]
      %v1091 = vld [vmem:[%s879 + $0x72] sm:$0xff]
      %v1092 = vpack.c.bf16 %v1085, %v1084
      %v1093 = vpack.c.bf16 %v1087, %v1086
      %v1094 = vpack.c.bf16 %v1089, %v1088
      %v1095 = vpack.c.bf16 %v1091, %v1090
      %s1096 = scalar_lea.vmem %s1, 8
      %v1097 = vld [vmem:[%s1096] sm:$0x1]
      %v1099 = vsel %vm307, %v1092, 0
      %v1102 = vsel %vm307, %v1093, 0
      %v1105 = vsel %vm307, %v1094, 0
      %v1108 = vsel %vm307, %v1095, 0
      %v1111 = vsel %vm320, %v1097, 0
      %1113 = vmatprep.subr.bf16.mxu0 0
      %1114 = vmatpush1.bf16.msra.mxu0 0
      %1115 = vmatprep.subr.bf16.mxu0 0
      %1116 = vmatpush1.bf16.msra.mxu0 0
      %1117 = vmatprep.subr.bf16.mxu0 0
      %1118 = vmatpush1.bf16.msra.mxu0 0
      %1119 = vmatprep.subr.bf16.mxu0 0
      %1120 = vmatpush1.bf16.msra.mxu0 0
      %1121 = vmatprep.subr.bf16.mxu0 0
      %1122 = vmatpush1.bf16.msra.mxu0 0
      %1123 = vmatprep.subr.bf16.mxu0 0
      %1124 = vmatpush1.bf16.msra.mxu0 0
      %1125 = vmatprep.subr.bf16.mxu0 0
      %1126 = vmatpush1.bf16.msra.mxu0 0
      %1127 = vmatprep.subr.bf16.mxu0 0
      %1128 = vmatpush1.bf16.msra.mxu0 %v1111
      %1129 = vmatprep.subr.bf16.mxu0 0
      %1130 = vmatpush2.bf16.msra.mxu0 0
      %1131 = vmatprep.subr.bf16.mxu0 0
      %1132 = vmatpush2.bf16.msra.mxu0 0
      %1133 = vmatprep.subr.bf16.mxu0 0
      %1134 = vmatpush2.bf16.msra.mxu0 0
      %1135 = vmatprep.subr.bf16.mxu0 0
      %1136 = vmatpush2.bf16.msra.mxu0 0
      %1137 = vmatprep.subr.bf16.mxu0 0
      %1138 = vmatpush2.bf16.msra.mxu0 0
      %1139 = vmatprep.subr.bf16.mxu0 0
      %1140 = vmatpush2.bf16.msra.mxu0 0
      %1141 = vmatprep.subr.bf16.mxu0 0
      %1142 = vmatpush2.bf16.msra.mxu0 0
      %1143 = vmatprep.subr.bf16.mxu0 0
      %1144 = vmatpush2.bf16.msra.mxu0 0
      %1145 = vmatprep.mubr.bf16.mxu0 0
      %1146 = vmatmul.mubr.bf16.gmra.mxu0 %v1099
      %v1147 = vpop.f32.mrf.mxu0
      %v1148 = vadd.f32 0.0, %v1147
      %v1149 = vpop.f32.mrf.mxu0
      %v1150 = vpop.f32.mrf.mxu0
      %v1151 = vadd.f32 0.0, %v1150
      %v1152 = vpop.f32.mrf.mxu0
      %1153 = vmatprep.mubr.bf16.mxu0 0
      %1154 = vmatmul.mubr.bf16.gmra.mxu0 %v1102
      %v1155 = vpop.f32.mrf.mxu0
      %v1156 = vadd.f32 0.0, %v1155
      %v1157 = vpop.f32.mrf.mxu0
      %v1158 = vpop.f32.mrf.mxu0
      %v1159 = vadd.f32 0.0, %v1158
      %v1160 = vpop.f32.mrf.mxu0
      %1161 = vmatprep.mubr.bf16.mxu0 0
      %1162 = vmatmul.mubr.bf16.gmra.mxu0 %v1105
      %v1163 = vpop.f32.mrf.mxu0
      %v1164 = vadd.f32 0.0, %v1163
      %v1165 = vpop.f32.mrf.mxu0
      %v1166 = vpop.f32.mrf.mxu0
      %v1167 = vadd.f32 0.0, %v1166
      %v1168 = vpop.f32.mrf.mxu0
      %1169 = vmatprep.mubr.bf16.mxu0 0
      %1170 = vmatmul.mubr.bf16.gmra.mxu0 %v1108
      %v1171 = vpop.f32.mrf.mxu0
      %v1172 = vadd.f32 0.0, %v1171
      %v1173 = vpop.f32.mrf.mxu0
      %v1174 = vpop.f32.mrf.mxu0
      %v1175 = vadd.f32 0.0, %v1174
      %v1176 = vpop.f32.mrf.mxu0
      %1177 = vdwg.mxu0
      %v1178 = vadd.f32 %v1076, %v1148
      %v1179 = vadd.f32 %v1077, %v1151
      %v1180 = vadd.f32 %v1078, %v1156
      %v1181 = vadd.f32 %v1079, %v1159
      %v1182 = vadd.f32 %v1080, %v1164
      %v1183 = vadd.f32 %v1081, %v1167
      %v1184 = vadd.f32 %v1082, %v1172
      %v1185 = vadd.f32 %v1083, %v1175
      %v1186 = vld [vmem:[%s3] sm:$0x1]
      %v1188 = vlaneseq
      %v1189 = vshrl.u32 %v1188, 7
      %v1190 = vsub.s32 0, %v1189
      %v1191 = vrot.slane %v1186, %v1190
      %v1193 = vadd.f32 %v1178, %v1191
      %v1194 = vadd.f32 %v1179, %v1191
      %v1195 = vadd.f32 %v1180, %v1191
      %v1196 = vadd.f32 %v1181, %v1191
      %v1197 = vadd.f32 %v1182, %v1191
      %v1198 = vadd.f32 %v1183, %v1191
      %v1199 = vadd.f32 %v1184, %v1191
      %v1200 = vadd.f32 %v1185, %v1191
      %v1201 = vmax.f32 %v1193, 0.0
      %v1202 = vmax.f32 %v1194, 0.0
      %v1203 = vmax.f32 %v1195, 0.0
      %v1204 = vmax.f32 %v1196, 0.0
      %v1205 = vmax.f32 %v1197, 0.0
      %v1206 = vmax.f32 %v1198, 0.0
      %v1207 = vmax.f32 %v1199, 0.0
      %v1208 = vmax.f32 %v1200, 0.0
      %vm1209 = vcmask 31744
      %1210 = vst.msk [vmem:[#allocation2] sm:$0xff] %vm1209, 0.0
      %vm1211 = vcmask 25600
      %1212 = vst.msk [vmem:[#allocation2 + $0x8] sm:$0x3] %vm1211, 0.0
      %1213 = vst.msk [vmem:[#allocation2 + $0x10] sm:$0xff] %vm1209, 0.0
      %1214 = vst.msk [vmem:[#allocation2 + $0x18] sm:$0x3] %vm1211, 0.0
      %1215 = vst.msk [vmem:[#allocation2 + $0x20] sm:$0xff] %vm1209, 0.0
      %1216 = vst.msk [vmem:[#allocation2 + $0x28] sm:$0x3] %vm1211, 0.0
      %1217 = vst.msk [vmem:[#allocation2 + $0x30] sm:$0xff] %vm1209, 0.0
      %1218 = vst.msk [vmem:[#allocation2 + $0x38] sm:$0x3] %vm1211, 0.0
      %1219 = vst.msk [vmem:[#allocation2 + $0x40] sm:$0xff] %vm1209, 0.0
      %1220 = vst.msk [vmem:[#allocation2 + $0x48] sm:$0x3] %vm1211, 0.0
      %1221 = vst.msk [vmem:[#allocation2 + $0x50] sm:$0xff] %vm1209, 0.0
      %1222 = vst.msk [vmem:[#allocation2 + $0x58] sm:$0x3] %vm1211, 0.0
      %1223 = vst.msk [vmem:[#allocation2 + $0x60] sm:$0xff] %vm1209, 0.0
      %1224 = vst.msk [vmem:[#allocation2 + $0x68] sm:$0x3] %vm1211, 0.0
      %1225 = vst.msk [vmem:[#allocation2 + $0x70] sm:$0xff] %vm1209, 0.0
      %1226 = vst.msk [vmem:[#allocation2 + $0x78] sm:$0x3] %vm1211, 0.0
      %1227 = vst.msk [vmem:[#allocation2 + $0x80] sm:$0xff] %vm1209, 0.0
      %1228 = vst.msk [vmem:[#allocation2 + $0x88] sm:$0x3] %vm1211, 0.0
      %1229 = vst.msk [vmem:[#allocation2 + $0x90] sm:$0xff] %vm1209, 0.0
      %1230 = vst.msk [vmem:[#allocation2 + $0x98] sm:$0x3] %vm1211, 0.0
      %s1231 = scalar_lea.vmem [#allocation2], 16
      %1232 = vst.msk [vmem:[%s1231 + $0x1] sm:$0xff] %vm1209, %v1201
      %1233 = vst.msk [vmem:[%s1231 + $0x11] sm:$0xff] %vm1209, %v1202
      %1234 = vst.msk [vmem:[%s1231 + $0x21] sm:$0xff] %vm1209, %v1203
      %1235 = vst.msk [vmem:[%s1231 + $0x31] sm:$0xff] %vm1209, %v1204
      %1236 = vst.msk [vmem:[%s1231 + $0x41] sm:$0xff] %vm1209, %v1205
      %1237 = vst.msk [vmem:[%s1231 + $0x51] sm:$0xff] %vm1209, %v1206
      %1238 = vst.msk [vmem:[%s1231 + $0x61] sm:$0xff] %vm1209, %v1207
      %1239 = vst.msk [vmem:[%s1231 + $0x71] sm:$0xff] %vm1209, %v1208
      %v1240 = vld [vmem:[%s4] sm:$0x1]
      %v1242 = vlaneseq
      %v1243 = vshrl.u32 %v1242, 7
      %v1244 = vsub.s32 0, %v1243
      %v1245 = vrot.slane %v1240, %v1244
      %v1248 = vsel %vm320, %v776, 0
      %1250 = vmatprep.subr.bf16.mxu0 0
      %1251 = vmatpush1.bf16.msra.mxu0 0
      %1252 = vmatprep.subr.bf16.mxu0 0
      %1253 = vmatpush1.bf16.msra.mxu0 0
      %1254 = vmatprep.subr.bf16.mxu0 0
      %1255 = vmatpush1.bf16.msra.mxu0 0
      %1256 = vmatprep.subr.bf16.mxu0 0
      %1257 = vmatpush1.bf16.msra.mxu0 0
      %1258 = vmatprep.subr.bf16.mxu0 0
      %1259 = vmatpush1.bf16.msra.mxu0 0
      %1260 = vmatprep.subr.bf16.mxu0 0
      %1261 = vmatpush1.bf16.msra.mxu0 0
      %1262 = vmatprep.subr.bf16.mxu0 0
      %1263 = vmatpush1.bf16.msra.mxu0 0
      %1264 = vmatprep.subr.bf16.mxu0 0
      %1265 = vmatpush1.bf16.msra.mxu0 %v1248
      %1266 = vmatprep.subr.bf16.mxu0 0
      %1267 = vmatpush2.bf16.msra.mxu0 0
      %1268 = vmatprep.subr.bf16.mxu0 0
      %1269 = vmatpush2.bf16.msra.mxu0 0
      %1270 = vmatprep.subr.bf16.mxu0 0
      %1271 = vmatpush2.bf16.msra.mxu0 0
      %1272 = vmatprep.subr.bf16.mxu0 0
      %1273 = vmatpush2.bf16.msra.mxu0 0
      %1274 = vmatprep.subr.bf16.mxu0 0
      %1275 = vmatpush2.bf16.msra.mxu0 0
      %1276 = vmatprep.subr.bf16.mxu0 0
      %1277 = vmatpush2.bf16.msra.mxu0 0
      %1278 = vmatprep.subr.bf16.mxu0 0
      %1279 = vmatpush2.bf16.msra.mxu0 0
      %1280 = vmatprep.subr.bf16.mxu0 0
      %1281 = vmatpush2.bf16.msra.mxu0 0
      %1282 = vmatprep.mubr.bf16.mxu0 0
      %1283 = vmatmul.mubr.bf16.gmra.mxu0 %v689
      %v1284 = vpop.f32.mrf.mxu0
      %v1285 = vadd.f32 %v1245, %v1284
      %v1286 = vpop.f32.mrf.mxu0
      %v1287 = vpop.f32.mrf.mxu0
      %v1288 = vadd.f32 %v1245, %v1287
      %v1289 = vpop.f32.mrf.mxu0
      %1290 = vmatprep.mubr.bf16.mxu0 0
      %1291 = vmatmul.mubr.bf16.gmra.mxu0 %v692
      %v1292 = vpop.f32.mrf.mxu0
      %v1293 = vadd.f32 %v1245, %v1292
      %v1294 = vpop.f32.mrf.mxu0
      %v1295 = vpop.f32.mrf.mxu0
      %v1296 = vadd.f32 %v1245, %v1295
      %v1297 = vpop.f32.mrf.mxu0
      %1298 = vmatprep.mubr.bf16.mxu0 0
      %1299 = vmatmul.mubr.bf16.gmra.mxu0 %v695
      %v1300 = vpop.f32.mrf.mxu0
      %v1301 = vadd.f32 %v1245, %v1300
      %v1302 = vpop.f32.mrf.mxu0
      %v1303 = vpop.f32.mrf.mxu0
      %v1304 = vadd.f32 %v1245, %v1303
      %v1305 = vpop.f32.mrf.mxu0
      %1306 = vmatprep.mubr.bf16.mxu0 0
      %1307 = vmatmul.mubr.bf16.gmra.mxu0 %v698
      %v1308 = vpop.f32.mrf.mxu0
      %v1309 = vadd.f32 %v1245, %v1308
      %v1310 = vpop.f32.mrf.mxu0
      %v1311 = vpop.f32.mrf.mxu0
      %v1312 = vadd.f32 %v1245, %v1311
      %v1313 = vpop.f32.mrf.mxu0
      %1314 = vdwg.mxu0
      %v1315 = vld [vmem:[%s6] sm:$0x1]
      %v1317 = vlaneseq
      %v1318 = vshrl.u32 %v1317, 7
      %v1319 = vsub.s32 0, %v1318
      %v1320 = vrot.slane %v1315, %v1319
      %v1322 = vadd.f32 %v1285, %v1320
      %v1323 = vadd.f32 %v1288, %v1320
      %v1324 = vadd.f32 %v1293, %v1320
      %v1325 = vadd.f32 %v1296, %v1320
      %v1326 = vadd.f32 %v1301, %v1320
      %v1327 = vadd.f32 %v1304, %v1320
      %v1328 = vadd.f32 %v1309, %v1320
      %v1329 = vadd.f32 %v1312, %v1320
      %v1330 = vld [vmem:[#allocation2] sm:$0xff]
      %v1331 = vld [vmem:[#allocation2 + $0x10] sm:$0xff]
      %v1332 = vld [vmem:[#allocation2 + $0x20] sm:$0xff]
      %v1333 = vld [vmem:[#allocation2 + $0x30] sm:$0xff]
      %v1334 = vld [vmem:[#allocation2 + $0x40] sm:$0xff]
      %v1335 = vld [vmem:[#allocation2 + $0x50] sm:$0xff]
      %v1336 = vld [vmem:[#allocation2 + $0x60] sm:$0xff]
      %v1337 = vld [vmem:[#allocation2 + $0x70] sm:$0xff]
      %v1338 = vpack.c.bf16 %v1331, %v1330
      %v1339 = vpack.c.bf16 %v1333, %v1332
      %v1340 = vpack.c.bf16 %v1335, %v1334
      %v1341 = vpack.c.bf16 %v1337, %v1336
      %v1342 = vld [vmem:[%s5] sm:$0x3]
      %v1344 = vsel %vm1209, %v1338, 0
      %v1347 = vsel %vm1209, %v1339, 0
      %v1350 = vsel %vm1209, %v1340, 0
      %v1353 = vsel %vm1209, %v1341, 0
      %vm1355 = vcmask 1041408
      %v1357 = vsel %vm1355, %v1342, 0
      %1359 = vmatprep.subr.bf16.mxu0 0
      %1360 = vmatpush1.bf16.msra.mxu0 0
      %1361 = vmatprep.subr.bf16.mxu0 0
      %1362 = vmatpush1.bf16.msra.mxu0 0
      %1363 = vmatprep.subr.bf16.mxu0 0
      %1364 = vmatpush1.bf16.msra.mxu0 0
      %1365 = vmatprep.subr.bf16.mxu0 0
      %1366 = vmatpush1.bf16.msra.mxu0 0
      %1367 = vmatprep.subr.bf16.mxu0 0
      %1368 = vmatpush1.bf16.msra.mxu0 0
      %1369 = vmatprep.subr.bf16.mxu0 0
      %1370 = vmatpush1.bf16.msra.mxu0 0
      %1371 = vmatprep.subr.bf16.mxu0 0
      %1372 = vmatpush1.bf16.msra.mxu0 0
      %1373 = vmatprep.subr.bf16.mxu0 0
      %1374 = vmatpush1.bf16.msra.mxu0 %v1357
      %1375 = vmatprep.subr.bf16.mxu0 0
      %1376 = vmatpush2.bf16.msra.mxu0 0
      %1377 = vmatprep.subr.bf16.mxu0 0
      %1378 = vmatpush2.bf16.msra.mxu0 0
      %1379 = vmatprep.subr.bf16.mxu0 0
      %1380 = vmatpush2.bf16.msra.mxu0 0
      %1381 = vmatprep.subr.bf16.mxu0 0
      %1382 = vmatpush2.bf16.msra.mxu0 0
      %1383 = vmatprep.subr.bf16.mxu0 0
      %1384 = vmatpush2.bf16.msra.mxu0 0
      %1385 = vmatprep.subr.bf16.mxu0 0
      %1386 = vmatpush2.bf16.msra.mxu0 0
      %1387 = vmatprep.subr.bf16.mxu0 0
      %1388 = vmatpush2.bf16.msra.mxu0 0
      %1389 = vmatprep.subr.bf16.mxu0 0
      %1390 = vmatpush2.bf16.msra.mxu0 0
      %1391 = vmatprep.mubr.bf16.mxu0 0
      %1392 = vmatmul.mubr.bf16.gmra.mxu0 %v1344
      %v1393 = vpop.f32.mrf.mxu0
      %v1394 = vadd.f32 0.0, %v1393
      %v1395 = vpop.f32.mrf.mxu0
      %v1396 = vpop.f32.mrf.mxu0
      %v1397 = vadd.f32 0.0, %v1396
      %v1398 = vpop.f32.mrf.mxu0
      %1399 = vmatprep.mubr.bf16.mxu0 0
      %1400 = vmatmul.mubr.bf16.gmra.mxu0 %v1347
      %v1401 = vpop.f32.mrf.mxu0
      %v1402 = vadd.f32 0.0, %v1401
      %v1403 = vpop.f32.mrf.mxu0
      %v1404 = vpop.f32.mrf.mxu0
      %v1405 = vadd.f32 0.0, %v1404
      %v1406 = vpop.f32.mrf.mxu0
      %1407 = vmatprep.mubr.bf16.mxu0 0
      %1408 = vmatmul.mubr.bf16.gmra.mxu0 %v1350
      %v1409 = vpop.f32.mrf.mxu0
      %v1410 = vadd.f32 0.0, %v1409
      %v1411 = vpop.f32.mrf.mxu0
      %v1412 = vpop.f32.mrf.mxu0
      %v1413 = vadd.f32 0.0, %v1412
      %v1414 = vpop.f32.mrf.mxu0
      %1415 = vmatprep.mubr.bf16.mxu0 0
      %1416 = vmatmul.mubr.bf16.gmra.mxu0 %v1353
      %v1417 = vpop.f32.mrf.mxu0
      %v1418 = vadd.f32 0.0, %v1417
      %v1419 = vpop.f32.mrf.mxu0
      %v1420 = vpop.f32.mrf.mxu0
      %v1421 = vadd.f32 0.0, %v1420
      %v1422 = vpop.f32.mrf.mxu0
      %1423 = vdwg.mxu0
      %v1424 = vadd.f32 %v1322, %v1394
      %v1425 = vadd.f32 %v1323, %v1397
      %v1426 = vadd.f32 %v1324, %v1402
      %v1427 = vadd.f32 %v1325, %v1405
      %v1428 = vadd.f32 %v1326, %v1410
      %v1429 = vadd.f32 %v1327, %v1413
      %v1430 = vadd.f32 %v1328, %v1418
      %v1431 = vadd.f32 %v1329, %v1421
      %v1432 = vld [vmem:[#allocation2 + $0x1] sm:$0xff]
      %v1433 = vld [vmem:[#allocation2 + $0x11] sm:$0xff]
      %v1434 = vld [vmem:[#allocation2 + $0x21] sm:$0xff]
      %v1435 = vld [vmem:[#allocation2 + $0x31] sm:$0xff]
      %v1436 = vld [vmem:[#allocation2 + $0x41] sm:$0xff]
      %v1437 = vld [vmem:[#allocation2 + $0x51] sm:$0xff]
      %v1438 = vld [vmem:[#allocation2 + $0x61] sm:$0xff]
      %v1439 = vld [vmem:[#allocation2 + $0x71] sm:$0xff]
      %v1440 = vpack.c.bf16 %v1433, %v1432
      %v1441 = vpack.c.bf16 %v1435, %v1434
      %v1442 = vpack.c.bf16 %v1437, %v1436
      %v1443 = vpack.c.bf16 %v1439, %v1438
      %s1444 = scalar_lea.vmem %s5, 2
      %v1445 = vld [vmem:[%s1444] sm:$0x3]
      %v1447 = vsel %vm1209, %v1440, 0
      %v1450 = vsel %vm1209, %v1441, 0
      %v1453 = vsel %vm1209, %v1442, 0
      %v1456 = vsel %vm1209, %v1443, 0
      %v1459 = vsel %vm1355, %v1445, 0
      %1461 = vmatprep.subr.bf16.mxu0 0
      %1462 = vmatpush1.bf16.msra.mxu0 0
      %1463 = vmatprep.subr.bf16.mxu0 0
      %1464 = vmatpush1.bf16.msra.mxu0 0
      %1465 = vmatprep.subr.bf16.mxu0 0
      %1466 = vmatpush1.bf16.msra.mxu0 0
      %1467 = vmatprep.subr.bf16.mxu0 0
      %1468 = vmatpush1.bf16.msra.mxu0 0
      %1469 = vmatprep.subr.bf16.mxu0 0
      %1470 = vmatpush1.bf16.msra.mxu0 0
      %1471 = vmatprep.subr.bf16.mxu0 0
      %1472 = vmatpush1.bf16.msra.mxu0 0
      %1473 = vmatprep.subr.bf16.mxu0 0
      %1474 = vmatpush1.bf16.msra.mxu0 0
      %1475 = vmatprep.subr.bf16.mxu0 0
      %1476 = vmatpush1.bf16.msra.mxu0 %v1459
      %1477 = vmatprep.subr.bf16.mxu0 0
      %1478 = vmatpush2.bf16.msra.mxu0 0
      %1479 = vmatprep.subr.bf16.mxu0 0
      %1480 = vmatpush2.bf16.msra.mxu0 0
      %1481 = vmatprep.subr.bf16.mxu0 0
      %1482 = vmatpush2.bf16.msra.mxu0 0
      %1483 = vmatprep.subr.bf16.mxu0 0
      %1484 = vmatpush2.bf16.msra.mxu0 0
      %1485 = vmatprep.subr.bf16.mxu0 0
      %1486 = vmatpush2.bf16.msra.mxu0 0
      %1487 = vmatprep.subr.bf16.mxu0 0
      %1488 = vmatpush2.bf16.msra.mxu0 0
      %1489 = vmatprep.subr.bf16.mxu0 0
      %1490 = vmatpush2.bf16.msra.mxu0 0
      %1491 = vmatprep.subr.bf16.mxu0 0
      %1492 = vmatpush2.bf16.msra.mxu0 0
      %1493 = vmatprep.mubr.bf16.mxu0 0
      %1494 = vmatmul.mubr.bf16.gmra.mxu0 %v1447
      %v1495 = vpop.f32.mrf.mxu0
      %v1496 = vadd.f32 0.0, %v1495
      %v1497 = vpop.f32.mrf.mxu0
      %v1498 = vpop.f32.mrf.mxu0
      %v1499 = vadd.f32 0.0, %v1498
      %v1500 = vpop.f32.mrf.mxu0
      %1501 = vmatprep.mubr.bf16.mxu0 0
      %1502 = vmatmul.mubr.bf16.gmra.mxu0 %v1450
      %v1503 = vpop.f32.mrf.mxu0
      %v1504 = vadd.f32 0.0, %v1503
      %v1505 = vpop.f32.mrf.mxu0
      %v1506 = vpop.f32.mrf.mxu0
      %v1507 = vadd.f32 0.0, %v1506
      %v1508 = vpop.f32.mrf.mxu0
      %1509 = vmatprep.mubr.bf16.mxu0 0
      %1510 = vmatmul.mubr.bf16.gmra.mxu0 %v1453
      %v1511 = vpop.f32.mrf.mxu0
      %v1512 = vadd.f32 0.0, %v1511
      %v1513 = vpop.f32.mrf.mxu0
      %v1514 = vpop.f32.mrf.mxu0
      %v1515 = vadd.f32 0.0, %v1514
      %v1516 = vpop.f32.mrf.mxu0
      %1517 = vmatprep.mubr.bf16.mxu0 0
      %1518 = vmatmul.mubr.bf16.gmra.mxu0 %v1456
      %v1519 = vpop.f32.mrf.mxu0
      %v1520 = vadd.f32 0.0, %v1519
      %v1521 = vpop.f32.mrf.mxu0
      %v1522 = vpop.f32.mrf.mxu0
      %v1523 = vadd.f32 0.0, %v1522
      %v1524 = vpop.f32.mrf.mxu0
      %1525 = vdwg.mxu0
      %v1526 = vadd.f32 %v1424, %v1496
      %v1527 = vadd.f32 %v1425, %v1499
      %v1528 = vadd.f32 %v1426, %v1504
      %v1529 = vadd.f32 %v1427, %v1507
      %v1530 = vadd.f32 %v1428, %v1512
      %v1531 = vadd.f32 %v1429, %v1515
      %v1532 = vadd.f32 %v1430, %v1520
      %v1533 = vadd.f32 %v1431, %v1523
      %v1534 = vld [vmem:[#allocation2 + $0x2] sm:$0xff]
      %v1535 = vld [vmem:[#allocation2 + $0x12] sm:$0xff]
      %v1536 = vld [vmem:[#allocation2 + $0x22] sm:$0xff]
      %v1537 = vld [vmem:[#allocation2 + $0x32] sm:$0xff]
      %v1538 = vld [vmem:[#allocation2 + $0x42] sm:$0xff]
      %v1539 = vld [vmem:[#allocation2 + $0x52] sm:$0xff]
      %v1540 = vld [vmem:[#allocation2 + $0x62] sm:$0xff]
      %v1541 = vld [vmem:[#allocation2 + $0x72] sm:$0xff]
      %v1542 = vpack.c.bf16 %v1535, %v1534
      %v1543 = vpack.c.bf16 %v1537, %v1536
      %v1544 = vpack.c.bf16 %v1539, %v1538
      %v1545 = vpack.c.bf16 %v1541, %v1540
      %s1546 = scalar_lea.vmem %s5, 4
      %v1547 = vld [vmem:[%s1546] sm:$0x3]
      %v1549 = vsel %vm1209, %v1542, 0
      %v1552 = vsel %vm1209, %v1543, 0
      %v1555 = vsel %vm1209, %v1544, 0
      %v1558 = vsel %vm1209, %v1545, 0
      %v1561 = vsel %vm1355, %v1547, 0
      %1563 = vmatprep.subr.bf16.mxu0 0
      %1564 = vmatpush1.bf16.msra.mxu0 0
      %1565 = vmatprep.subr.bf16.mxu0 0
      %1566 = vmatpush1.bf16.msra.mxu0 0
      %1567 = vmatprep.subr.bf16.mxu0 0
      %1568 = vmatpush1.bf16.msra.mxu0 0
      %1569 = vmatprep.subr.bf16.mxu0 0
      %1570 = vmatpush1.bf16.msra.mxu0 0
      %1571 = vmatprep.subr.bf16.mxu0 0
      %1572 = vmatpush1.bf16.msra.mxu0 0
      %1573 = vmatprep.subr.bf16.mxu0 0
      %1574 = vmatpush1.bf16.msra.mxu0 0
      %1575 = vmatprep.subr.bf16.mxu0 0
      %1576 = vmatpush1.bf16.msra.mxu0 0
      %1577 = vmatprep.subr.bf16.mxu0 0
      %1578 = vmatpush1.bf16.msra.mxu0 %v1561
      %1579 = vmatprep.subr.bf16.mxu0 0
      %1580 = vmatpush2.bf16.msra.mxu0 0
      %1581 = vmatprep.subr.bf16.mxu0 0
      %1582 = vmatpush2.bf16.msra.mxu0 0
      %1583 = vmatprep.subr.bf16.mxu0 0
      %1584 = vmatpush2.bf16.msra.mxu0 0
      %1585 = vmatprep.subr.bf16.mxu0 0
      %1586 = vmatpush2.bf16.msra.mxu0 0
      %1587 = vmatprep.subr.bf16.mxu0 0
      %1588 = vmatpush2.bf16.msra.mxu0 0
      %1589 = vmatprep.subr.bf16.mxu0 0
      %1590 = vmatpush2.bf16.msra.mxu0 0
      %1591 = vmatprep.subr.bf16.mxu0 0
      %1592 = vmatpush2.bf16.msra.mxu0 0
      %1593 = vmatprep.subr.bf16.mxu0 0
      %1594 = vmatpush2.bf16.msra.mxu0 0
      %1595 = vmatprep.mubr.bf16.mxu0 0
      %1596 = vmatmul.mubr.bf16.gmra.mxu0 %v1549
      %v1597 = vpop.f32.mrf.mxu0
      %v1598 = vadd.f32 0.0, %v1597
      %v1599 = vpop.f32.mrf.mxu0
      %v1600 = vpop.f32.mrf.mxu0
      %v1601 = vadd.f32 0.0, %v1600
      %v1602 = vpop.f32.mrf.mxu0
      %1603 = vmatprep.mubr.bf16.mxu0 0
      %1604 = vmatmul.mubr.bf16.gmra.mxu0 %v1552
      %v1605 = vpop.f32.mrf.mxu0
      %v1606 = vadd.f32 0.0, %v1605
      %v1607 = vpop.f32.mrf.mxu0
      %v1608 = vpop.f32.mrf.mxu0
      %v1609 = vadd.f32 0.0, %v1608
      %v1610 = vpop.f32.mrf.mxu0
      %1611 = vmatprep.mubr.bf16.mxu0 0
      %1612 = vmatmul.mubr.bf16.gmra.mxu0 %v1555
      %v1613 = vpop.f32.mrf.mxu0
      %v1614 = vadd.f32 0.0, %v1613
      %v1615 = vpop.f32.mrf.mxu0
      %v1616 = vpop.f32.mrf.mxu0
      %v1617 = vadd.f32 0.0, %v1616
      %v1618 = vpop.f32.mrf.mxu0
      %1619 = vmatprep.mubr.bf16.mxu0 0
      %1620 = vmatmul.mubr.bf16.gmra.mxu0 %v1558
      %v1621 = vpop.f32.mrf.mxu0
      %v1622 = vadd.f32 0.0, %v1621
      %v1623 = vpop.f32.mrf.mxu0
      %v1624 = vpop.f32.mrf.mxu0
      %v1625 = vadd.f32 0.0, %v1624
      %v1626 = vpop.f32.mrf.mxu0
      %1627 = vdwg.mxu0
      %v1628 = vadd.f32 %v1526, %v1598
      %v1629 = vadd.f32 %v1527, %v1601
      %v1630 = vadd.f32 %v1528, %v1606
      %v1631 = vadd.f32 %v1529, %v1609
      %v1632 = vadd.f32 %v1530, %v1614
      %v1633 = vadd.f32 %v1531, %v1617
      %v1634 = vadd.f32 %v1532, %v1622
      %v1635 = vadd.f32 %v1533, %v1625
      %v1636 = vld [vmem:[%s1231] sm:$0xff]
      %v1637 = vld [vmem:[%s1231 + $0x10] sm:$0xff]
      %v1638 = vld [vmem:[%s1231 + $0x20] sm:$0xff]
      %v1639 = vld [vmem:[%s1231 + $0x30] sm:$0xff]
      %v1640 = vld [vmem:[%s1231 + $0x40] sm:$0xff]
      %v1641 = vld [vmem:[%s1231 + $0x50] sm:$0xff]
      %v1642 = vld [vmem:[%s1231 + $0x60] sm:$0xff]
      %v1643 = vld [vmem:[%s1231 + $0x70] sm:$0xff]
      %v1644 = vpack.c.bf16 %v1637, %v1636
      %v1645 = vpack.c.bf16 %v1639, %v1638
      %v1646 = vpack.c.bf16 %v1641, %v1640
      %v1647 = vpack.c.bf16 %v1643, %v1642
      %s1648 = scalar_lea.vmem %s5, 6
      %v1649 = vld [vmem:[%s1648] sm:$0x3]
      %v1651 = vsel %vm1209, %v1644, 0
      %v1654 = vsel %vm1209, %v1645, 0
      %v1657 = vsel %vm1209, %v1646, 0
      %v1660 = vsel %vm1209, %v1647, 0
      %v1663 = vsel %vm1355, %v1649, 0
      %1665 = vmatprep.subr.bf16.mxu0 0
      %1666 = vmatpush1.bf16.msra.mxu0 0
      %1667 = vmatprep.subr.bf16.mxu0 0
      %1668 = vmatpush1.bf16.msra.mxu0 0
      %1669 = vmatprep.subr.bf16.mxu0 0
      %1670 = vmatpush1.bf16.msra.mxu0 0
      %1671 = vmatprep.subr.bf16.mxu0 0
      %1672 = vmatpush1.bf16.msra.mxu0 0
      %1673 = vmatprep.subr.bf16.mxu0 0
      %1674 = vmatpush1.bf16.msra.mxu0 0
      %1675 = vmatprep.subr.bf16.mxu0 0
      %1676 = vmatpush1.bf16.msra.mxu0 0
      %1677 = vmatprep.subr.bf16.mxu0 0
      %1678 = vmatpush1.bf16.msra.mxu0 0
      %1679 = vmatprep.subr.bf16.mxu0 0
      %1680 = vmatpush1.bf16.msra.mxu0 %v1663
      %1681 = vmatprep.subr.bf16.mxu0 0
      %1682 = vmatpush2.bf16.msra.mxu0 0
      %1683 = vmatprep.subr.bf16.mxu0 0
      %1684 = vmatpush2.bf16.msra.mxu0 0
      %1685 = vmatprep.subr.bf16.mxu0 0
      %1686 = vmatpush2.bf16.msra.mxu0 0
      %1687 = vmatprep.subr.bf16.mxu0 0
      %1688 = vmatpush2.bf16.msra.mxu0 0
      %1689 = vmatprep.subr.bf16.mxu0 0
      %1690 = vmatpush2.bf16.msra.mxu0 0
      %1691 = vmatprep.subr.bf16.mxu0 0
      %1692 = vmatpush2.bf16.msra.mxu0 0
      %1693 = vmatprep.subr.bf16.mxu0 0
      %1694 = vmatpush2.bf16.msra.mxu0 0
      %1695 = vmatprep.subr.bf16.mxu0 0
      %1696 = vmatpush2.bf16.msra.mxu0 0
      %1697 = vmatprep.mubr.bf16.mxu0 0
      %1698 = vmatmul.mubr.bf16.gmra.mxu0 %v1651
      %v1699 = vpop.f32.mrf.mxu0
      %v1700 = vadd.f32 0.0, %v1699
      %v1701 = vpop.f32.mrf.mxu0
      %v1702 = vpop.f32.mrf.mxu0
      %v1703 = vadd.f32 0.0, %v1702
      %v1704 = vpop.f32.mrf.mxu0
      %1705 = vmatprep.mubr.bf16.mxu0 0
      %1706 = vmatmul.mubr.bf16.gmra.mxu0 %v1654
      %v1707 = vpop.f32.mrf.mxu0
      %v1708 = vadd.f32 0.0, %v1707
      %v1709 = vpop.f32.mrf.mxu0
      %v1710 = vpop.f32.mrf.mxu0
      %v1711 = vadd.f32 0.0, %v1710
      %v1712 = vpop.f32.mrf.mxu0
      %1713 = vmatprep.mubr.bf16.mxu0 0
      %1714 = vmatmul.mubr.bf16.gmra.mxu0 %v1657
      %v1715 = vpop.f32.mrf.mxu0
      %v1716 = vadd.f32 0.0, %v1715
      %v1717 = vpop.f32.mrf.mxu0
      %v1718 = vpop.f32.mrf.mxu0
      %v1719 = vadd.f32 0.0, %v1718
      %v1720 = vpop.f32.mrf.mxu0
      %1721 = vmatprep.mubr.bf16.mxu0 0
      %1722 = vmatmul.mubr.bf16.gmra.mxu0 %v1660
      %v1723 = vpop.f32.mrf.mxu0
      %v1724 = vadd.f32 0.0, %v1723
      %v1725 = vpop.f32.mrf.mxu0
      %v1726 = vpop.f32.mrf.mxu0
      %v1727 = vadd.f32 0.0, %v1726
      %v1728 = vpop.f32.mrf.mxu0
      %1729 = vdwg.mxu0
      %v1730 = vadd.f32 %v1628, %v1700
      %v1731 = vadd.f32 %v1629, %v1703
      %v1732 = vadd.f32 %v1630, %v1708
      %v1733 = vadd.f32 %v1631, %v1711
      %v1734 = vadd.f32 %v1632, %v1716
      %v1735 = vadd.f32 %v1633, %v1719
      %v1736 = vadd.f32 %v1634, %v1724
      %v1737 = vadd.f32 %v1635, %v1727
      %v1738 = vld [vmem:[%s1231 + $0x1] sm:$0xff]
      %v1739 = vld [vmem:[%s1231 + $0x11] sm:$0xff]
      %v1740 = vld [vmem:[%s1231 + $0x21] sm:$0xff]
      %v1741 = vld [vmem:[%s1231 + $0x31] sm:$0xff]
      %v1742 = vld [vmem:[%s1231 + $0x41] sm:$0xff]
      %v1743 = vld [vmem:[%s1231 + $0x51] sm:$0xff]
      %v1744 = vld [vmem:[%s1231 + $0x61] sm:$0xff]
      %v1745 = vld [vmem:[%s1231 + $0x71] sm:$0xff]
      %v1746 = vpack.c.bf16 %v1739, %v1738
      %v1747 = vpack.c.bf16 %v1741, %v1740
      %v1748 = vpack.c.bf16 %v1743, %v1742
      %v1749 = vpack.c.bf16 %v1745, %v1744
      %s1750 = scalar_lea.vmem %s5, 8
      %v1751 = vld [vmem:[%s1750] sm:$0x3]
      %v1753 = vsel %vm1209, %v1746, 0
      %v1756 = vsel %vm1209, %v1747, 0
      %v1759 = vsel %vm1209, %v1748, 0
      %v1762 = vsel %vm1209, %v1749, 0
      %v1765 = vsel %vm1355, %v1751, 0
      %1767 = vmatprep.subr.bf16.mxu0 0
      %1768 = vmatpush1.bf16.msra.mxu0 0
      %1769 = vmatprep.subr.bf16.mxu0 0
      %1770 = vmatpush1.bf16.msra.mxu0 0
      %1771 = vmatprep.subr.bf16.mxu0 0
      %1772 = vmatpush1.bf16.msra.mxu0 0
      %1773 = vmatprep.subr.bf16.mxu0 0
      %1774 = vmatpush1.bf16.msra.mxu0 0
      %1775 = vmatprep.subr.bf16.mxu0 0
      %1776 = vmatpush1.bf16.msra.mxu0 0
      %1777 = vmatprep.subr.bf16.mxu0 0
      %1778 = vmatpush1.bf16.msra.mxu0 0
      %1779 = vmatprep.subr.bf16.mxu0 0
      %1780 = vmatpush1.bf16.msra.mxu0 0
      %1781 = vmatprep.subr.bf16.mxu0 0
      %1782 = vmatpush1.bf16.msra.mxu0 %v1765
      %1783 = vmatprep.subr.bf16.mxu0 0
      %1784 = vmatpush2.bf16.msra.mxu0 0
      %1785 = vmatprep.subr.bf16.mxu0 0
      %1786 = vmatpush2.bf16.msra.mxu0 0
      %1787 = vmatprep.subr.bf16.mxu0 0
      %1788 = vmatpush2.bf16.msra.mxu0 0
      %1789 = vmatprep.subr.bf16.mxu0 0
      %1790 = vmatpush2.bf16.msra.mxu0 0
      %1791 = vmatprep.subr.bf16.mxu0 0
      %1792 = vmatpush2.bf16.msra.mxu0 0
      %1793 = vmatprep.subr.bf16.mxu0 0
      %1794 = vmatpush2.bf16.msra.mxu0 0
      %1795 = vmatprep.subr.bf16.mxu0 0
      %1796 = vmatpush2.bf16.msra.mxu0 0
      %1797 = vmatprep.subr.bf16.mxu0 0
      %1798 = vmatpush2.bf16.msra.mxu0 0
      %1799 = vmatprep.mubr.bf16.mxu0 0
      %1800 = vmatmul.mubr.bf16.gmra.mxu0 %v1753
      %v1801 = vpop.f32.mrf.mxu0
      %v1802 = vadd.f32 0.0, %v1801
      %v1803 = vpop.f32.mrf.mxu0
      %v1804 = vpop.f32.mrf.mxu0
      %v1805 = vadd.f32 0.0, %v1804
      %v1806 = vpop.f32.mrf.mxu0
      %1807 = vmatprep.mubr.bf16.mxu0 0
      %1808 = vmatmul.mubr.bf16.gmra.mxu0 %v1756
      %v1809 = vpop.f32.mrf.mxu0
      %v1810 = vadd.f32 0.0, %v1809
      %v1811 = vpop.f32.mrf.mxu0
      %v1812 = vpop.f32.mrf.mxu0
      %v1813 = vadd.f32 0.0, %v1812
      %v1814 = vpop.f32.mrf.mxu0
      %1815 = vmatprep.mubr.bf16.mxu0 0
      %1816 = vmatmul.mubr.bf16.gmra.mxu0 %v1759
      %v1817 = vpop.f32.mrf.mxu0
      %v1818 = vadd.f32 0.0, %v1817
      %v1819 = vpop.f32.mrf.mxu0
      %v1820 = vpop.f32.mrf.mxu0
      %v1821 = vadd.f32 0.0, %v1820
      %v1822 = vpop.f32.mrf.mxu0
      %1823 = vmatprep.mubr.bf16.mxu0 0
      %1824 = vmatmul.mubr.bf16.gmra.mxu0 %v1762
      %v1825 = vpop.f32.mrf.mxu0
      %v1826 = vadd.f32 0.0, %v1825
      %v1827 = vpop.f32.mrf.mxu0
      %v1828 = vpop.f32.mrf.mxu0
      %v1829 = vadd.f32 0.0, %v1828
      %v1830 = vpop.f32.mrf.mxu0
      %1831 = vdwg.mxu0
      %v1832 = vadd.f32 %v1730, %v1802
      %v1833 = vadd.f32 %v1731, %v1805
      %v1834 = vadd.f32 %v1732, %v1810
      %v1835 = vadd.f32 %v1733, %v1813
      %v1836 = vadd.f32 %v1734, %v1818
      %v1837 = vadd.f32 %v1735, %v1821
      %v1838 = vadd.f32 %v1736, %v1826
      %v1839 = vadd.f32 %v1737, %v1829
      %v1840 = vld [vmem:[%s1231 + $0x2] sm:$0xff]
      %v1841 = vld [vmem:[%s1231 + $0x12] sm:$0xff]
      %v1842 = vld [vmem:[%s1231 + $0x22] sm:$0xff]
      %v1843 = vld [vmem:[%s1231 + $0x32] sm:$0xff]
      %v1844 = vld [vmem:[%s1231 + $0x42] sm:$0xff]
      %v1845 = vld [vmem:[%s1231 + $0x52] sm:$0xff]
      %v1846 = vld [vmem:[%s1231 + $0x62] sm:$0xff]
      %v1847 = vld [vmem:[%s1231 + $0x72] sm:$0xff]
      %v1848 = vpack.c.bf16 %v1841, %v1840
      %v1849 = vpack.c.bf16 %v1843, %v1842
      %v1850 = vpack.c.bf16 %v1845, %v1844
      %v1851 = vpack.c.bf16 %v1847, %v1846
      %s1852 = scalar_lea.vmem %s5, 10
      %v1853 = vld [vmem:[%s1852] sm:$0x3]
      %v1855 = vsel %vm1209, %v1848, 0
      %v1858 = vsel %vm1209, %v1849, 0
      %v1861 = vsel %vm1209, %v1850, 0
      %v1864 = vsel %vm1209, %v1851, 0
      %v1867 = vsel %vm1355, %v1853, 0
      %1869 = vmatprep.subr.bf16.mxu0 0
      %1870 = vmatpush1.bf16.msra.mxu0 0
      %1871 = vmatprep.subr.bf16.mxu0 0
      %1872 = vmatpush1.bf16.msra.mxu0 0
      %1873 = vmatprep.subr.bf16.mxu0 0
      %1874 = vmatpush1.bf16.msra.mxu0 0
      %1875 = vmatprep.subr.bf16.mxu0 0
      %1876 = vmatpush1.bf16.msra.mxu0 0
      %1877 = vmatprep.subr.bf16.mxu0 0
      %1878 = vmatpush1.bf16.msra.mxu0 0
      %1879 = vmatprep.subr.bf16.mxu0 0
      %1880 = vmatpush1.bf16.msra.mxu0 0
      %1881 = vmatprep.subr.bf16.mxu0 0
      %1882 = vmatpush1.bf16.msra.mxu0 0
      %1883 = vmatprep.subr.bf16.mxu0 0
      %1884 = vmatpush1.bf16.msra.mxu0 %v1867
      %1885 = vmatprep.subr.bf16.mxu0 0
      %1886 = vmatpush2.bf16.msra.mxu0 0
      %1887 = vmatprep.subr.bf16.mxu0 0
      %1888 = vmatpush2.bf16.msra.mxu0 0
      %1889 = vmatprep.subr.bf16.mxu0 0
      %1890 = vmatpush2.bf16.msra.mxu0 0
      %1891 = vmatprep.subr.bf16.mxu0 0
      %1892 = vmatpush2.bf16.msra.mxu0 0
      %1893 = vmatprep.subr.bf16.mxu0 0
      %1894 = vmatpush2.bf16.msra.mxu0 0
      %1895 = vmatprep.subr.bf16.mxu0 0
      %1896 = vmatpush2.bf16.msra.mxu0 0
      %1897 = vmatprep.subr.bf16.mxu0 0
      %1898 = vmatpush2.bf16.msra.mxu0 0
      %1899 = vmatprep.subr.bf16.mxu0 0
      %1900 = vmatpush2.bf16.msra.mxu0 0
      %1901 = vmatprep.mubr.bf16.mxu0 0
      %1902 = vmatmul.mubr.bf16.gmra.mxu0 %v1855
      %v1903 = vpop.f32.mrf.mxu0
      %v1904 = vadd.f32 0.0, %v1903
      %v1905 = vpop.f32.mrf.mxu0
      %v1906 = vpop.f32.mrf.mxu0
      %v1907 = vadd.f32 0.0, %v1906
      %v1908 = vpop.f32.mrf.mxu0
      %1909 = vmatprep.mubr.bf16.mxu0 0
      %1910 = vmatmul.mubr.bf16.gmra.mxu0 %v1858
      %v1911 = vpop.f32.mrf.mxu0
      %v1912 = vadd.f32 0.0, %v1911
      %v1913 = vpop.f32.mrf.mxu0
      %v1914 = vpop.f32.mrf.mxu0
      %v1915 = vadd.f32 0.0, %v1914
      %v1916 = vpop.f32.mrf.mxu0
      %1917 = vmatprep.mubr.bf16.mxu0 0
      %1918 = vmatmul.mubr.bf16.gmra.mxu0 %v1861
      %v1919 = vpop.f32.mrf.mxu0
      %v1920 = vadd.f32 0.0, %v1919
      %v1921 = vpop.f32.mrf.mxu0
      %v1922 = vpop.f32.mrf.mxu0
      %v1923 = vadd.f32 0.0, %v1922
      %v1924 = vpop.f32.mrf.mxu0
      %1925 = vmatprep.mubr.bf16.mxu0 0
      %1926 = vmatmul.mubr.bf16.gmra.mxu0 %v1864
      %v1927 = vpop.f32.mrf.mxu0
      %v1928 = vadd.f32 0.0, %v1927
      %v1929 = vpop.f32.mrf.mxu0
      %v1930 = vpop.f32.mrf.mxu0
      %v1931 = vadd.f32 0.0, %v1930
      %v1932 = vpop.f32.mrf.mxu0
      %1933 = vdwg.mxu0
      %v1934 = vadd.f32 %v1832, %v1904
      %v1935 = vadd.f32 %v1833, %v1907
      %v1936 = vadd.f32 %v1834, %v1912
      %v1937 = vadd.f32 %v1835, %v1915
      %v1938 = vadd.f32 %v1836, %v1920
      %v1939 = vadd.f32 %v1837, %v1923
      %v1940 = vadd.f32 %v1838, %v1928
      %v1941 = vadd.f32 %v1839, %v1931
      %s1942 = scalar_lea.vmem [#allocation2], 32
      %v1943 = vld [vmem:[%s1942] sm:$0xff]
      %v1944 = vld [vmem:[%s1942 + $0x10] sm:$0xff]
      %v1945 = vld [vmem:[%s1942 + $0x20] sm:$0xff]
      %v1946 = vld [vmem:[%s1942 + $0x30] sm:$0xff]
      %v1947 = vld [vmem:[%s1942 + $0x40] sm:$0xff]
      %v1948 = vld [vmem:[%s1942 + $0x50] sm:$0xff]
      %v1949 = vld [vmem:[%s1942 + $0x60] sm:$0xff]
      %v1950 = vld [vmem:[%s1942 + $0x70] sm:$0xff]
      %v1951 = vpack.c.bf16 %v1944, %v1943
      %v1952 = vpack.c.bf16 %v1946, %v1945
      %v1953 = vpack.c.bf16 %v1948, %v1947
      %v1954 = vpack.c.bf16 %v1950, %v1949
      %s1955 = scalar_lea.vmem %s5, 12
      %v1956 = vld [vmem:[%s1955] sm:$0x3]
      %v1958 = vsel %vm1209, %v1951, 0
      %v1961 = vsel %vm1209, %v1952, 0
      %v1964 = vsel %vm1209, %v1953, 0
      %v1967 = vsel %vm1209, %v1954, 0
      %v1970 = vsel %vm1355, %v1956, 0
      %1972 = vmatprep.subr.bf16.mxu0 0
      %1973 = vmatpush1.bf16.msra.mxu0 0
      %1974 = vmatprep.subr.bf16.mxu0 0
      %1975 = vmatpush1.bf16.msra.mxu0 0
      %1976 = vmatprep.subr.bf16.mxu0 0
      %1977 = vmatpush1.bf16.msra.mxu0 0
      %1978 = vmatprep.subr.bf16.mxu0 0
      %1979 = vmatpush1.bf16.msra.mxu0 0
      %1980 = vmatprep.subr.bf16.mxu0 0
      %1981 = vmatpush1.bf16.msra.mxu0 0
      %1982 = vmatprep.subr.bf16.mxu0 0
      %1983 = vmatpush1.bf16.msra.mxu0 0
      %1984 = vmatprep.subr.bf16.mxu0 0
      %1985 = vmatpush1.bf16.msra.mxu0 0
      %1986 = vmatprep.subr.bf16.mxu0 0
      %1987 = vmatpush1.bf16.msra.mxu0 %v1970
      %1988 = vmatprep.subr.bf16.mxu0 0
      %1989 = vmatpush2.bf16.msra.mxu0 0
      %1990 = vmatprep.subr.bf16.mxu0 0
      %1991 = vmatpush2.bf16.msra.mxu0 0
      %1992 = vmatprep.subr.bf16.mxu0 0
      %1993 = vmatpush2.bf16.msra.mxu0 0
      %1994 = vmatprep.subr.bf16.mxu0 0
      %1995 = vmatpush2.bf16.msra.mxu0 0
      %1996 = vmatprep.subr.bf16.mxu0 0
      %1997 = vmatpush2.bf16.msra.mxu0 0
      %1998 = vmatprep.subr.bf16.mxu0 0
      %1999 = vmatpush2.bf16.msra.mxu0 0
      %2000 = vmatprep.subr.bf16.mxu0 0
      %2001 = vmatpush2.bf16.msra.mxu0 0
      %2002 = vmatprep.subr.bf16.mxu0 0
      %2003 = vmatpush2.bf16.msra.mxu0 0
      %2004 = vmatprep.mubr.bf16.mxu0 0
      %2005 = vmatmul.mubr.bf16.gmra.mxu0 %v1958
      %v2006 = vpop.f32.mrf.mxu0
      %v2007 = vadd.f32 0.0, %v2006
      %v2008 = vpop.f32.mrf.mxu0
      %v2009 = vpop.f32.mrf.mxu0
      %v2010 = vadd.f32 0.0, %v2009
      %v2011 = vpop.f32.mrf.mxu0
      %2012 = vmatprep.mubr.bf16.mxu0 0
      %2013 = vmatmul.mubr.bf16.gmra.mxu0 %v1961
      %v2014 = vpop.f32.mrf.mxu0
      %v2015 = vadd.f32 0.0, %v2014
      %v2016 = vpop.f32.mrf.mxu0
      %v2017 = vpop.f32.mrf.mxu0
      %v2018 = vadd.f32 0.0, %v2017
      %v2019 = vpop.f32.mrf.mxu0
      %2020 = vmatprep.mubr.bf16.mxu0 0
      %2021 = vmatmul.mubr.bf16.gmra.mxu0 %v1964
      %v2022 = vpop.f32.mrf.mxu0
      %v2023 = vadd.f32 0.0, %v2022
      %v2024 = vpop.f32.mrf.mxu0
      %v2025 = vpop.f32.mrf.mxu0
      %v2026 = vadd.f32 0.0, %v2025
      %v2027 = vpop.f32.mrf.mxu0
      %2028 = vmatprep.mubr.bf16.mxu0 0
      %2029 = vmatmul.mubr.bf16.gmra.mxu0 %v1967
      %v2030 = vpop.f32.mrf.mxu0
      %v2031 = vadd.f32 0.0, %v2030
      %v2032 = vpop.f32.mrf.mxu0
      %v2033 = vpop.f32.mrf.mxu0
      %v2034 = vadd.f32 0.0, %v2033
      %v2035 = vpop.f32.mrf.mxu0
      %2036 = vdwg.mxu0
      %v2037 = vadd.f32 %v1934, %v2007
      %v2038 = vadd.f32 %v1935, %v2010
      %v2039 = vadd.f32 %v1936, %v2015
      %v2040 = vadd.f32 %v1937, %v2018
      %v2041 = vadd.f32 %v1938, %v2023
      %v2042 = vadd.f32 %v1939, %v2026
      %v2043 = vadd.f32 %v1940, %v2031
      %v2044 = vadd.f32 %v1941, %v2034
      %v2045 = vld [vmem:[%s1942 + $0x1] sm:$0xff]
      %v2046 = vld [vmem:[%s1942 + $0x11] sm:$0xff]
      %v2047 = vld [vmem:[%s1942 + $0x21] sm:$0xff]
      %v2048 = vld [vmem:[%s1942 + $0x31] sm:$0xff]
      %v2049 = vld [vmem:[%s1942 + $0x41] sm:$0xff]
      %v2050 = vld [vmem:[%s1942 + $0x51] sm:$0xff]
      %v2051 = vld [vmem:[%s1942 + $0x61] sm:$0xff]
      %v2052 = vld [vmem:[%s1942 + $0x71] sm:$0xff]
      %v2053 = vpack.c.bf16 %v2046, %v2045
      %v2054 = vpack.c.bf16 %v2048, %v2047
      %v2055 = vpack.c.bf16 %v2050, %v2049
      %v2056 = vpack.c.bf16 %v2052, %v2051
      %s2057 = scalar_lea.vmem %s5, 14
      %v2058 = vld [vmem:[%s2057] sm:$0x3]
      %v2060 = vsel %vm1209, %v2053, 0
      %v2063 = vsel %vm1209, %v2054, 0
      %v2066 = vsel %vm1209, %v2055, 0
      %v2069 = vsel %vm1209, %v2056, 0
      %v2072 = vsel %vm1355, %v2058, 0
      %2074 = vmatprep.subr.bf16.mxu0 0
      %2075 = vmatpush1.bf16.msra.mxu0 0
      %2076 = vmatprep.subr.bf16.mxu0 0
      %2077 = vmatpush1.bf16.msra.mxu0 0
      %2078 = vmatprep.subr.bf16.mxu0 0
      %2079 = vmatpush1.bf16.msra.mxu0 0
      %2080 = vmatprep.subr.bf16.mxu0 0
      %2081 = vmatpush1.bf16.msra.mxu0 0
      %2082 = vmatprep.subr.bf16.mxu0 0
      %2083 = vmatpush1.bf16.msra.mxu0 0
      %2084 = vmatprep.subr.bf16.mxu0 0
      %2085 = vmatpush1.bf16.msra.mxu0 0
      %2086 = vmatprep.subr.bf16.mxu0 0
      %2087 = vmatpush1.bf16.msra.mxu0 0
      %2088 = vmatprep.subr.bf16.mxu0 0
      %2089 = vmatpush1.bf16.msra.mxu0 %v2072
      %2090 = vmatprep.subr.bf16.mxu0 0
      %2091 = vmatpush2.bf16.msra.mxu0 0
      %2092 = vmatprep.subr.bf16.mxu0 0
      %2093 = vmatpush2.bf16.msra.mxu0 0
      %2094 = vmatprep.subr.bf16.mxu0 0
      %2095 = vmatpush2.bf16.msra.mxu0 0
      %2096 = vmatprep.subr.bf16.mxu0 0
      %2097 = vmatpush2.bf16.msra.mxu0 0
      %2098 = vmatprep.subr.bf16.mxu0 0
      %2099 = vmatpush2.bf16.msra.mxu0 0
      %2100 = vmatprep.subr.bf16.mxu0 0
      %2101 = vmatpush2.bf16.msra.mxu0 0
      %2102 = vmatprep.subr.bf16.mxu0 0
      %2103 = vmatpush2.bf16.msra.mxu0 0
      %2104 = vmatprep.subr.bf16.mxu0 0
      %2105 = vmatpush2.bf16.msra.mxu0 0
      %2106 = vmatprep.mubr.bf16.mxu0 0
      %2107 = vmatmul.mubr.bf16.gmra.mxu0 %v2060
      %v2108 = vpop.f32.mrf.mxu0
      %v2109 = vadd.f32 0.0, %v2108
      %v2110 = vpop.f32.mrf.mxu0
      %v2111 = vpop.f32.mrf.mxu0
      %v2112 = vadd.f32 0.0, %v2111
      %v2113 = vpop.f32.mrf.mxu0
      %2114 = vmatprep.mubr.bf16.mxu0 0
      %2115 = vmatmul.mubr.bf16.gmra.mxu0 %v2063
      %v2116 = vpop.f32.mrf.mxu0
      %v2117 = vadd.f32 0.0, %v2116
      %v2118 = vpop.f32.mrf.mxu0
      %v2119 = vpop.f32.mrf.mxu0
      %v2120 = vadd.f32 0.0, %v2119
      %v2121 = vpop.f32.mrf.mxu0
      %2122 = vmatprep.mubr.bf16.mxu0 0
      %2123 = vmatmul.mubr.bf16.gmra.mxu0 %v2066
      %v2124 = vpop.f32.mrf.mxu0
      %v2125 = vadd.f32 0.0, %v2124
      %v2126 = vpop.f32.mrf.mxu0
      %v2127 = vpop.f32.mrf.mxu0
      %v2128 = vadd.f32 0.0, %v2127
      %v2129 = vpop.f32.mrf.mxu0
      %2130 = vmatprep.mubr.bf16.mxu0 0
      %2131 = vmatmul.mubr.bf16.gmra.mxu0 %v2069
      %v2132 = vpop.f32.mrf.mxu0
      %v2133 = vadd.f32 0.0, %v2132
      %v2134 = vpop.f32.mrf.mxu0
      %v2135 = vpop.f32.mrf.mxu0
      %v2136 = vadd.f32 0.0, %v2135
      %v2137 = vpop.f32.mrf.mxu0
      %2138 = vdwg.mxu0
      %v2139 = vadd.f32 %v2037, %v2109
      %v2140 = vadd.f32 %v2038, %v2112
      %v2141 = vadd.f32 %v2039, %v2117
      %v2142 = vadd.f32 %v2040, %v2120
      %v2143 = vadd.f32 %v2041, %v2125
      %v2144 = vadd.f32 %v2042, %v2128
      %v2145 = vadd.f32 %v2043, %v2133
      %v2146 = vadd.f32 %v2044, %v2136
      %v2147 = vld [vmem:[%s1942 + $0x2] sm:$0xff]
      %v2148 = vld [vmem:[%s1942 + $0x12] sm:$0xff]
      %v2149 = vld [vmem:[%s1942 + $0x22] sm:$0xff]
      %v2150 = vld [vmem:[%s1942 + $0x32] sm:$0xff]
      %v2151 = vld [vmem:[%s1942 + $0x42] sm:$0xff]
      %v2152 = vld [vmem:[%s1942 + $0x52] sm:$0xff]
      %v2153 = vld [vmem:[%s1942 + $0x62] sm:$0xff]
      %v2154 = vld [vmem:[%s1942 + $0x72] sm:$0xff]
      %v2155 = vpack.c.bf16 %v2148, %v2147
      %v2156 = vpack.c.bf16 %v2150, %v2149
      %v2157 = vpack.c.bf16 %v2152, %v2151
      %v2158 = vpack.c.bf16 %v2154, %v2153
      %s2159 = scalar_lea.vmem %s5, 16
      %v2160 = vld [vmem:[%s2159] sm:$0x3]
      %v2162 = vsel %vm1209, %v2155, 0
      %v2165 = vsel %vm1209, %v2156, 0
      %v2168 = vsel %vm1209, %v2157, 0
      %v2171 = vsel %vm1209, %v2158, 0
      %v2174 = vsel %vm1355, %v2160, 0
      %2176 = vmatprep.subr.bf16.mxu0 0
      %2177 = vmatpush1.bf16.msra.mxu0 0
      %2178 = vmatprep.subr.bf16.mxu0 0
      %2179 = vmatpush1.bf16.msra.mxu0 0
      %2180 = vmatprep.subr.bf16.mxu0 0
      %2181 = vmatpush1.bf16.msra.mxu0 0
      %2182 = vmatprep.subr.bf16.mxu0 0
      %2183 = vmatpush1.bf16.msra.mxu0 0
      %2184 = vmatprep.subr.bf16.mxu0 0
      %2185 = vmatpush1.bf16.msra.mxu0 0
      %2186 = vmatprep.subr.bf16.mxu0 0
      %2187 = vmatpush1.bf16.msra.mxu0 0
      %2188 = vmatprep.subr.bf16.mxu0 0
      %2189 = vmatpush1.bf16.msra.mxu0 0
      %2190 = vmatprep.subr.bf16.mxu0 0
      %2191 = vmatpush1.bf16.msra.mxu0 %v2174
      %2192 = vmatprep.subr.bf16.mxu0 0
      %2193 = vmatpush2.bf16.msra.mxu0 0
      %2194 = vmatprep.subr.bf16.mxu0 0
      %2195 = vmatpush2.bf16.msra.mxu0 0
      %2196 = vmatprep.subr.bf16.mxu0 0
      %2197 = vmatpush2.bf16.msra.mxu0 0
      %2198 = vmatprep.subr.bf16.mxu0 0
      %2199 = vmatpush2.bf16.msra.mxu0 0
      %2200 = vmatprep.subr.bf16.mxu0 0
      %2201 = vmatpush2.bf16.msra.mxu0 0
      %2202 = vmatprep.subr.bf16.mxu0 0
      %2203 = vmatpush2.bf16.msra.mxu0 0
      %2204 = vmatprep.subr.bf16.mxu0 0
      %2205 = vmatpush2.bf16.msra.mxu0 0
      %2206 = vmatprep.subr.bf16.mxu0 0
      %2207 = vmatpush2.bf16.msra.mxu0 0
      %2208 = vmatprep.mubr.bf16.mxu0 0
      %2209 = vmatmul.mubr.bf16.gmra.mxu0 %v2162
      %v2210 = vpop.f32.mrf.mxu0
      %v2211 = vadd.f32 0.0, %v2210
      %v2212 = vpop.f32.mrf.mxu0
      %v2213 = vpop.f32.mrf.mxu0
      %v2214 = vadd.f32 0.0, %v2213
      %v2215 = vpop.f32.mrf.mxu0
      %2216 = vmatprep.mubr.bf16.mxu0 0
      %2217 = vmatmul.mubr.bf16.gmra.mxu0 %v2165
      %v2218 = vpop.f32.mrf.mxu0
      %v2219 = vadd.f32 0.0, %v2218
      %v2220 = vpop.f32.mrf.mxu0
      %v2221 = vpop.f32.mrf.mxu0
      %v2222 = vadd.f32 0.0, %v2221
      %v2223 = vpop.f32.mrf.mxu0
      %2224 = vmatprep.mubr.bf16.mxu0 0
      %2225 = vmatmul.mubr.bf16.gmra.mxu0 %v2168
      %v2226 = vpop.f32.mrf.mxu0
      %v2227 = vadd.f32 0.0, %v2226
      %v2228 = vpop.f32.mrf.mxu0
      %v2229 = vpop.f32.mrf.mxu0
      %v2230 = vadd.f32 0.0, %v2229
      %v2231 = vpop.f32.mrf.mxu0
      %2232 = vmatprep.mubr.bf16.mxu0 0
      %2233 = vmatmul.mubr.bf16.gmra.mxu0 %v2171
      %v2234 = vpop.f32.mrf.mxu0
      %v2235 = vadd.f32 0.0, %v2234
      %v2236 = vpop.f32.mrf.mxu0
      %v2237 = vpop.f32.mrf.mxu0
      %v2238 = vadd.f32 0.0, %v2237
      %v2239 = vpop.f32.mrf.mxu0
      %2240 = vdwg.mxu0
      %v2241 = vadd.f32 %v2139, %v2211
      %v2242 = vadd.f32 %v2140, %v2214
      %v2243 = vadd.f32 %v2141, %v2219
      %v2244 = vadd.f32 %v2142, %v2222
      %v2245 = vadd.f32 %v2143, %v2227
      %v2246 = vadd.f32 %v2144, %v2230
      %v2247 = vadd.f32 %v2145, %v2235
      %v2248 = vadd.f32 %v2146, %v2238
      %v2249 = vmax.f32 %v2241, 0.0
      %v2250 = vmax.f32 %v2242, 0.0
      %v2251 = vmax.f32 %v2243, 0.0
      %v2252 = vmax.f32 %v2244, 0.0
      %v2253 = vmax.f32 %v2245, 0.0
      %v2254 = vmax.f32 %v2246, 0.0
      %v2255 = vmax.f32 %v2247, 0.0
      %v2256 = vmax.f32 %v2248, 0.0
      %2257 = vst.msk [vmem:[%s278] sm:$0xff] %vm1209, %v2249
      %2258 = vst.msk [vmem:[%s278 + $0x8] sm:$0xff] %vm1209, %v2250
      %2259 = vst.msk [vmem:[%s278 + $0x10] sm:$0xff] %vm1209, %v2251
      %2260 = vst.msk [vmem:[%s278 + $0x18] sm:$0xff] %vm1209, %v2252
      %2261 = vst.msk [vmem:[%s278 + $0x20] sm:$0xff] %vm1209, %v2253
      %2262 = vst.msk [vmem:[%s278 + $0x28] sm:$0xff] %vm1209, %v2254
      %2263 = vst.msk [vmem:[%s278 + $0x30] sm:$0xff] %vm1209, %v2255
      %2264 = vst.msk [vmem:[%s278 + $0x38] sm:$0xff] %vm1209, %v2256
      %p2265 = scmp.lt.s32.totalorder %s18, 7
      %s2266 = scalar_select %p2265, %s18, 7
      %s2267 = smul.addr %s2266, 8
      %s2268 = smul.addr %s2267, 8
      %s2269 = scalar_lea.vmem %s7, %s2268
      // Predicated region
      $region49: #{_lambda_.5} parent=47 // pred_check
        %p2270 = pneg %p188
      $region50: #{_lambda_.5} parent=47 // pred_check_branch
        %2272 = sbr.rel (%p2270) target = $region52
      $region51: #{_lambda_.5} parent=47 // pred_region
        _
      $region52: #{_lambda_.5} parent=47 // pred_fallthru
        _
    $region48: #{_lambda_.5} parent=5 // pred_fallthru
      _
    %p2273 = scmp.le.s32.totalorder 2, %s13
    // Predicated region
    $region53: #{_lambda_.5} parent=5 // pred_check
      %p2274 = pneg %p2273
    $region54: #{_lambda_.5} parent=5 // pred_check_branch
      %2276 = sbr.rel (%p2274) target = $region56
    $region55: #{_lambda_.5} parent=5 // pred_region
      %s2277 = ssub.s32 %s13, 2
      // Predicated region
      $region57: #{_lambda_.5} parent=55 // pred_check
        %p2278 = pneg %p194
      $region58: #{_lambda_.5} parent=55 // pred_check_branch
        %2280 = sbr.rel (%p2278) target = $region60
      $region59: #{_lambda_.5} parent=55 // pred_region
        %p2281 = scmp.lt.s32.totalorder %s19, 7
        %s2282 = scalar_select %p2281, %s19, 7
        %s2283 = smul.addr %s2282, 8
        %s2284 = smul.addr %s2283, 8
        %s2285 = scalar_lea.vmem %s7, %s2284
      $region60: #{_lambda_.5} parent=55 // pred_fallthru
        _
    $region56: #{_lambda_.5} parent=5 // pred_fallthru
      _
  $region6: #{_lambda_.5} parent=0 // loop_footer
    %s17 = sadd.s32 1, %s13
  $region7: #{_lambda_.5} parent=0 // loop_footer_branch
    %12 = sbr.rel target = $region3
  $region8: #{_lambda_.5} parent=0 // loop_exit
    _

// kernel: _lambda_.6
$region0: #{_lambda_.6}
  #allocation0 [shape = 'u32[]', space=smem, size = 0x4, offset = 0x4, fixed_abs, tag = 'smem constant byte address 0x4 - core index']
  #allocation1 [shape = 'u32[144,128]{1,0:T(1,128)}', space=vmem, size = 0x12000, scoped, tag = 'internal scratch']
  #allocation2 [shape = 'f32[6,6,8]{2,1,0:T(8,128)}', space=vmem, size = 0x6000, scoped, tag = 'scratch operand']
  %s0 = inlined_call_operand.vmem [shape: f32[32,5,5,4], index: 0, kind: input, shape index: {}]
  %s1 = inlined_call_operand.vmem [shape: bf16[9,4,8], index: 1, kind: input, shape index: {}]
  %s2 = inlined_call_operand.vmem [shape: bf16[4,8], index: 2, kind: input, shape index: {}]
  %s3 = inlined_call_operand.vmem [shape: f32[1,8], index: 3, kind: input, shape index: {}]
  %s4 = inlined_call_operand.vmem [shape: f32[1,8], index: 4, kind: input, shape index: {}]
  %s5 = inlined_call_operand.vmem [shape: bf16[9,8,8], index: 5, kind: input, shape index: {}]
  %s6 = inlined_call_operand.vmem [shape: f32[1,8], index: 6, kind: input, shape index: {}]
  %s7 = inlined_call_operand.vmem [shape: f32[8,16,8], index: 7, kind: output, shape index: {}]
  %s8 = sld [smem:[#allocation0]]
  $region61: #{_lambda_.6} parent=0
    _
  %s10 = ssub.s32 1, %s8
  %s11 = scalar_select 0, %s10, %s8
  loop: start=0, step=1, limit=10
  $region2: #{_lambda_.6} parent=0 // loop_pre_header
    _
  $region3: #{_lambda_.6} parent=0 // loop_header
    %s13 = sphi 0, %s17
    %p14 = scmp.ge.s32.totalorder %s13, 10
    %s23 = sphi 0, %s25
    %s26 = sphi 0, %s23
    %s27 = sphi 0, %s26
    %s43 = sphi 0, %s27
    %s47 = sphi 0, %s47
    %s49 = sphi 0, %s47
    %s50 = sphi 0, %s49
    %s64 = sphi 0, %s50
    %s68 = sphi 0, %s68
    %s70 = sphi 0, %s68
    %s71 = sphi 0, %s70
    %s85 = sphi 0, %s71
    %s89 = sphi 0, %s89
    %s91 = sphi 0, %s89
    %s92 = sphi 0, %s91
    %s106 = sphi 0, %s92
    %s110 = sphi 0, %s110
    %s112 = sphi 0, %s110
    %s113 = sphi 0, %s112
    %s127 = sphi 0, %s113
    %s131 = sphi 0, %s131
    %s133 = sphi 0, %s131
    %s134 = sphi 0, %s133
    %s148 = sphi 0, %s134
    %s152 = sphi 0, %s152
    %s154 = sphi 0, %s152
    %s155 = sphi 0, %s154
    %s169 = sphi 0, %s155
    %s175 = sphi 0, %s177
    %s178 = sphi 0, %s175
    %s179 = sphi 0, %s178
    %s195 = sphi 0, %s179
  $region4: #{_lambda_.6} parent=0 // loop_header_branch
    %16 = sbr.rel (%p14) target = $region8
  $region5: #{_lambda_.6} parent=0 // loop_body
    %s18 = ssub.s32 %s13, 1
    %s19 = ssub.s32 %s13, 2
    %s20 = sadd.s32 %s13, 1
    %s21 = ssub.s32 %s13, %s20
    %p22 = scmp.eq.s32.totalorder %s21, 0
    %s24 = sadd.s32 %s23, 1
    %s25 = scalar_select %p22, %s23, %s24
    %p28 = pneg %p22
    %p29 = scmp.eq.s32.totalorder %s13, 7
    %p30 = por %p28, %p29
    %p31 = scmp.ne.s32.totalorder %s23, %s26
    %p32 = scmp.eq.s32.totalorder %s13, 0
    %p33 = por %p31, %p32
    %p34 = scmp.ne.s32.totalorder %s23, %s26
    %p35 = scmp.eq.s32.totalorder %s18, 7
    %p36 = por %p34, %p35
    %p37 = scmp.ne.s32.totalorder %s26, %s27
    %p38 = scmp.eq.s32.totalorder %s18, 0
    %p39 = por %p37, %p38
    %p40 = scmp.ne.s32.totalorder %s26, %s27
    %p41 = scmp.eq.s32.totalorder %s19, 7
    %p42 = por %p40, %p41
    %p44 = scmp.ne.s32.totalorder %s27, %s43
    %p45 = scmp.eq.s32.totalorder %s19, 0
    %p46 = por %p44, %p45
    %s48 = sadd.s32 %s47, 1
    %p51 = scmp.eq.s32.totalorder %s13, 7
    %p52 = scmp.ne.s32.totalorder %s47, %s49
    %p53 = scmp.eq.s32.totalorder %s13, 0
    %p54 = por %p52, %p53
    %p55 = scmp.ne.s32.totalorder %s47, %s49
    %p56 = scmp.eq.s32.totalorder %s18, 7
    %p57 = por %p55, %p56
    %p58 = scmp.ne.s32.totalorder %s49, %s50
    %p59 = scmp.eq.s32.totalorder %s18, 0
    %p60 = por %p58, %p59
    %p61 = scmp.ne.s32.totalorder %s49, %s50
    %p62 = scmp.eq.s32.totalorder %s19, 7
    %p63 = por %p61, %p62
    %p65 = scmp.ne.s32.totalorder %s50, %s64
    %p66 = scmp.eq.s32.totalorder %s19, 0
    %p67 = por %p65, %p66
    %s69 = sadd.s32 %s68, 1
    %p72 = scmp.eq.s32.totalorder %s13, 7
    %p73 = scmp.ne.s32.totalorder %s68, %s70
    %p74 = scmp.eq.s32.totalorder %s13, 0
    %p75 = por %p73, %p74
    %p76 = scmp.ne.s32.totalorder %s68, %s70
    %p77 = scmp.eq.s32.totalorder %s18, 7
    %p78 = por %p76, %p77
    %p79 = scmp.ne.s32.totalorder %s70, %s71
    %p80 = scmp.eq.s32.totalorder %s18, 0
    %p81 = por %p79, %p80
    %p82 = scmp.ne.s32.totalorder %s70, %s71
    %p83 = scmp.eq.s32.totalorder %s19, 7
    %p84 = por %p82, %p83
    %p86 = scmp.ne.s32.totalorder %s71, %s85
    %p87 = scmp.eq.s32.totalorder %s19, 0
    %p88 = por %p86, %p87
    %s90 = sadd.s32 %s89, 1
    %p93 = scmp.eq.s32.totalorder %s13, 7
    %p94 = scmp.ne.s32.totalorder %s89, %s91
    %p95 = scmp.eq.s32.totalorder %s13, 0
    %p96 = por %p94, %p95
    %p97 = scmp.ne.s32.totalorder %s89, %s91
    %p98 = scmp.eq.s32.totalorder %s18, 7
    %p99 = por %p97, %p98
    %p100 = scmp.ne.s32.totalorder %s91, %s92
    %p101 = scmp.eq.s32.totalorder %s18, 0
    %p102 = por %p100, %p101
    %p103 = scmp.ne.s32.totalorder %s91, %s92
    %p104 = scmp.eq.s32.totalorder %s19, 7
    %p105 = por %p103, %p104
    %p107 = scmp.ne.s32.totalorder %s92, %s106
    %p108 = scmp.eq.s32.totalorder %s19, 0
    %p109 = por %p107, %p108
    %s111 = sadd.s32 %s110, 1
    %p114 = scmp.eq.s32.totalorder %s13, 7
    %p115 = scmp.ne.s32.totalorder %s110, %s112
    %p116 = scmp.eq.s32.totalorder %s13, 0
    %p117 = por %p115, %p116
    %p118 = scmp.ne.s32.totalorder %s110, %s112
    %p119 = scmp.eq.s32.totalorder %s18, 7
    %p120 = por %p118, %p119
    %p121 = scmp.ne.s32.totalorder %s112, %s113
    %p122 = scmp.eq.s32.totalorder %s18, 0
    %p123 = por %p121, %p122
    %p124 = scmp.ne.s32.totalorder %s112, %s113
    %p125 = scmp.eq.s32.totalorder %s19, 7
    %p126 = por %p124, %p125
    %p128 = scmp.ne.s32.totalorder %s113, %s127
    %p129 = scmp.eq.s32.totalorder %s19, 0
    %p130 = por %p128, %p129
    %s132 = sadd.s32 %s131, 1
    %p135 = scmp.eq.s32.totalorder %s13, 7
    %p136 = scmp.ne.s32.totalorder %s131, %s133
    %p137 = scmp.eq.s32.totalorder %s13, 0
    %p138 = por %p136, %p137
    %p139 = scmp.ne.s32.totalorder %s131, %s133
    %p140 = scmp.eq.s32.totalorder %s18, 7
    %p141 = por %p139, %p140
    %p142 = scmp.ne.s32.totalorder %s133, %s134
    %p143 = scmp.eq.s32.totalorder %s18, 0
    %p144 = por %p142, %p143
    %p145 = scmp.ne.s32.totalorder %s133, %s134
    %p146 = scmp.eq.s32.totalorder %s19, 7
    %p147 = por %p145, %p146
    %p149 = scmp.ne.s32.totalorder %s134, %s148
    %p150 = scmp.eq.s32.totalorder %s19, 0
    %p151 = por %p149, %p150
    %s153 = sadd.s32 %s152, 1
    %p156 = scmp.eq.s32.totalorder %s13, 7
    %p157 = scmp.ne.s32.totalorder %s152, %s154
    %p158 = scmp.eq.s32.totalorder %s13, 0
    %p159 = por %p157, %p158
    %p160 = scmp.ne.s32.totalorder %s152, %s154
    %p161 = scmp.eq.s32.totalorder %s18, 7
    %p162 = por %p160, %p161
    %p163 = scmp.ne.s32.totalorder %s154, %s155
    %p164 = scmp.eq.s32.totalorder %s18, 0
    %p165 = por %p163, %p164
    %p166 = scmp.ne.s32.totalorder %s154, %s155
    %p167 = scmp.eq.s32.totalorder %s19, 7
    %p168 = por %p166, %p167
    %p170 = scmp.ne.s32.totalorder %s155, %s169
    %p171 = scmp.eq.s32.totalorder %s19, 0
    %p172 = por %p170, %p171
    %s173 = ssub.s32 %s13, %s20
    %p174 = scmp.eq.s32.totalorder %s173, 0
    %s176 = sadd.s32 %s175, 1
    %s177 = scalar_select %p174, %s175, %s176
    %p180 = pneg %p174
    %p181 = scmp.eq.s32.totalorder %s13, 7
    %p182 = por %p180, %p181
    %p183 = scmp.ne.s32.totalorder %s175, %s178
    %p184 = scmp.eq.s32.totalorder %s13, 0
    %p185 = por %p183, %p184
    %p186 = scmp.ne.s32.totalorder %s175, %s178
    %p187 = scmp.eq.s32.totalorder %s18, 7
    %p188 = por %p186, %p187
    %p189 = scmp.ne.s32.totalorder %s178, %s179
    %p190 = scmp.eq.s32.totalorder %s18, 0
    %p191 = por %p189, %p190
    %p192 = scmp.ne.s32.totalorder %s178, %s179
    %p193 = scmp.eq.s32.totalorder %s19, 7
    %p194 = por %p192, %p193
    %p196 = scmp.ne.s32.totalorder %s179, %s195
    %p197 = scmp.eq.s32.totalorder %s19, 0
    %p198 = por %p196, %p197
    %p199 = scmp.le.s32.totalorder 1, %s13
    %p200 = scmp.lt.s32.totalorder %s13, 9
    %p201 = pnand %p199, %p200
    %p202 = pneg %p201
    // Predicated region
    $region9: #{_lambda_.6} parent=5 // pred_check
      _
    $region10: #{_lambda_.6} parent=5 // pred_check_branch
      %204 = sbr.rel (%p201) target = $region12
    $region11: #{_lambda_.6} parent=5 // pred_region
      %s205 = ssub.s32 %s13, 1
      // Predicated region
      $region13: #{_lambda_.6} parent=11 // pred_check
        %p206 = pneg %p60
      $region14: #{_lambda_.6} parent=11 // pred_check_branch
        %208 = sbr.rel (%p206) target = $region16
      $region15: #{_lambda_.6} parent=11 // pred_region
        _
      $region16: #{_lambda_.6} parent=11 // pred_fallthru
        _
      // Predicated region
      $region17: #{_lambda_.6} parent=11 // pred_check
        %p209 = pneg %p81
      $region18: #{_lambda_.6} parent=11 // pred_check_branch
        %211 = sbr.rel (%p209) target = $region20
      $region19: #{_lambda_.6} parent=11 // pred_region
        _
      $region20: #{_lambda_.6} parent=11 // pred_fallthru
        _
      // Predicated region
      $region21: #{_lambda_.6} parent=11 // pred_check
        %p212 = pneg %p102
      $region22: #{_lambda_.6} parent=11 // pred_check_branch
        %214 = sbr.rel (%p212) target = $region24
      $region23: #{_lambda_.6} parent=11 // pred_region
        _
      $region24: #{_lambda_.6} parent=11 // pred_fallthru
        _
      // Predicated region
      $region25: #{_lambda_.6} parent=11 // pred_check
        %p215 = pneg %p123
      $region26: #{_lambda_.6} parent=11 // pred_check_branch
        %217 = sbr.rel (%p215) target = $region28
      $region27: #{_lambda_.6} parent=11 // pred_region
        _
      $region28: #{_lambda_.6} parent=11 // pred_fallthru
        _
      // Predicated region
      $region29: #{_lambda_.6} parent=11 // pred_check
        %p218 = pneg %p144
      $region30: #{_lambda_.6} parent=11 // pred_check_branch
        %220 = sbr.rel (%p218) target = $region32
      $region31: #{_lambda_.6} parent=11 // pred_region
        _
      $region32: #{_lambda_.6} parent=11 // pred_fallthru
        _
      // Predicated region
      $region33: #{_lambda_.6} parent=11 // pred_check
        %p221 = pneg %p165
      $region34: #{_lambda_.6} parent=11 // pred_check_branch
        %223 = sbr.rel (%p221) target = $region36
      $region35: #{_lambda_.6} parent=11 // pred_region
        _
      $region36: #{_lambda_.6} parent=11 // pred_fallthru
        _
    $region12: #{_lambda_.6} parent=5 // pred_fallthru
      _
    %p224 = scmp.lt.s32.totalorder %s13, 8
    // Predicated region
    $region37: #{_lambda_.6} parent=5 // pred_check
      %p225 = pneg %p224
    $region38: #{_lambda_.6} parent=5 // pred_check_branch
      %227 = sbr.rel (%p225) target = $region40
    $region39: #{_lambda_.6} parent=5 // pred_region
      // Predicated region
      $region41: #{_lambda_.6} parent=39 // pred_check
        %p228 = pneg %p33
      $region42: #{_lambda_.6} parent=39 // pred_check_branch
        %230 = sbr.rel (%p228) target = $region44
      $region43: #{_lambda_.6} parent=39 // pred_region
        %s231 = smul.u32 4, %s13
        %p232 = scmp.lt.s32.totalorder %s231, 31
        %s233 = scalar_select %p232, %s231, 31
        %s234 = smul.addr %s233, 5
        %s235 = smul.addr %s234, 8
        %s236 = scalar_lea.vmem %s0, %s235
        %s237 = smul.u32 4, %s13
      $region44: #{_lambda_.6} parent=39 // pred_fallthru
        _
    $region40: #{_lambda_.6} parent=5 // pred_fallthru
      _
    %p238 = scmp.le.s32.totalorder 1, %s13
    %p239 = scmp.lt.s32.totalorder %s13, 9
    %p240 = pnand %p238, %p239
    %p241 = pneg %p240
    // Predicated region
    $region45: #{_lambda_.6} parent=5 // pred_check
      _
    $region46: #{_lambda_.6} parent=5 // pred_check_branch
      %243 = sbr.rel (%p240) target = $region48
    $region47: #{_lambda_.6} parent=5 // pred_region
      %s244 = ssub.s32 %s13, 1
      %s245 = smul.u32 4, %s18
      %p246 = scmp.lt.s32.totalorder %s245, 31
      %s247 = scalar_select %p246, %s245, 31
      %s248 = smul.addr %s247, 5
      %s249 = smul.addr %s248, 8
      %s250 = scalar_lea.vmem %s0, %s249
      %p251 = pneg %p39
      %p252 = pneg %p36
      %p253 = pneg %p60
      %p254 = pneg %p57
      %p255 = pneg %p81
      %p256 = pneg %p78
      %p257 = pneg %p102
      %p258 = pneg %p99
      %p259 = pneg %p123
      %p260 = pneg %p120
      %p261 = pneg %p144
      %p262 = pneg %p141
      %p263 = pneg %p165
      %p264 = pneg %p162
      %p265 = pneg %p191
      %p266 = pneg %p188
      %p267 = scmp.lt.s32.totalorder %s18, 7
      %s268 = scalar_select %p267, %s18, 7
      %s269 = smul.addr %s268, 2
      %s270 = smul.addr %s269, 8
      %s271 = scalar_lea.vmem %s7, %s270
      %s272 = smul.u32 4, %s18
      %p273 = scmp.lt.s32.totalorder %s272, 31
      %s274 = scalar_select %p273, %s272, 31
      %s275 = smul.addr %s274, 5
      %s276 = smul.addr %s275, 8
      %s277 = scalar_lea.vmem %s0, %s276
      %s278 = smul.u32 4, %s18
      %p279 = scmp.lt.s32.totalorder %s18, 7
      %s280 = scalar_select %p279, %s18, 7
      %s281 = smul.addr %s280, 2
      %s282 = smul.addr %s281, 8
      %s283 = scalar_lea.vmem %s7, %s282
      %v285 = vld [vmem:[%s277] sm:$0xf]
      %v286 = vld [vmem:[%s277 + $0x8] sm:$0xf]
      %v287 = vld [vmem:[%s277 + $0x10] sm:$0xf]
      %v288 = vld [vmem:[%s277 + $0x18] sm:$0xf]
      %v293 = vcombine.low %v285, %v286
      %v294 = vcombine.low %v287, %v288
      %v297 = vpack.c.bf16 %v294, %v293
      %v298 = vld [vmem:[%s1] sm:$0x3]
      %s299 = scalar_lea.vmem %s277, 40
      %v300 = vld [vmem:[%s299] sm:$0xf]
      %v301 = vld [vmem:[%s299 + $0x8] sm:$0xf]
      %v302 = vld [vmem:[%s299 + $0x10] sm:$0xf]
      %v303 = vld [vmem:[%s299 + $0x18] sm:$0xf]
      %v308 = vcombine.low %v300, %v301
      %v309 = vcombine.low %v302, %v303
      %v312 = vpack.c.bf16 %v309, %v308
      %s313 = scalar_lea.vmem %s1, 2
      %v314 = vld [vmem:[%s313] sm:$0x3]
      %vm315 = vcmask 31744
      %v317 = vsel %vm315, %v312, 0
      %vm319 = vcmask 1041408
      %v321 = vsel %vm319, %v314, 0
      %323 = vmatprep.subr.bf16.mxu0 0
      %324 = vmatpush1.bf16.msra.mxu0 0
      %325 = vmatprep.subr.bf16.mxu0 0
      %326 = vmatpush1.bf16.msra.mxu0 0
      %327 = vmatprep.subr.bf16.mxu0 0
      %328 = vmatpush1.bf16.msra.mxu0 0
      %329 = vmatprep.subr.bf16.mxu0 0
      %330 = vmatpush1.bf16.msra.mxu0 0
      %331 = vmatprep.subr.bf16.mxu0 0
      %332 = vmatpush1.bf16.msra.mxu0 0
      %333 = vmatprep.subr.bf16.mxu0 0
      %334 = vmatpush1.bf16.msra.mxu0 0
      %335 = vmatprep.subr.bf16.mxu0 0
      %336 = vmatpush1.bf16.msra.mxu0 0
      %337 = vmatprep.subr.bf16.mxu0 0
      %338 = vmatpush1.bf16.msra.mxu0 %v321
      %339 = vmatprep.subr.bf16.mxu0 0
      %340 = vmatpush2.bf16.msra.mxu0 0
      %341 = vmatprep.subr.bf16.mxu0 0
      %342 = vmatpush2.bf16.msra.mxu0 0
      %343 = vmatprep.subr.bf16.mxu0 0
      %344 = vmatpush2.bf16.msra.mxu0 0
      %345 = vmatprep.subr.bf16.mxu0 0
      %346 = vmatpush2.bf16.msra.mxu0 0
      %347 = vmatprep.subr.bf16.mxu0 0
      %348 = vmatpush2.bf16.msra.mxu0 0
      %349 = vmatprep.subr.bf16.mxu0 0
      %350 = vmatpush2.bf16.msra.mxu0 0
      %351 = vmatprep.subr.bf16.mxu0 0
      %352 = vmatpush2.bf16.msra.mxu0 0
      %353 = vmatprep.subr.bf16.mxu0 0
      %354 = vmatpush2.bf16.msra.mxu0 0
      %355 = vmatprep.mubr.bf16.mxu0 0
      %356 = vmatmul.mubr.bf16.gmra.mxu0 %v317
      %v357 = vpop.f32.mrf.mxu0
      %v358 = vadd.f32 0.0, %v357
      %v359 = vpop.f32.mrf.mxu0
      %v360 = vpop.f32.mrf.mxu0
      %v361 = vadd.f32 0.0, %v360
      %v362 = vpop.f32.mrf.mxu0
      %363 = vdwg.mxu0
      %v365 = vsel %vm315, %v297, 0
      %v368 = vsel %vm319, %v298, 0
      %370 = vmatprep.subr.bf16.mxu0 0
      %371 = vmatpush1.bf16.msra.mxu0 0
      %372 = vmatprep.subr.bf16.mxu0 0
      %373 = vmatpush1.bf16.msra.mxu0 0
      %374 = vmatprep.subr.bf16.mxu0 0
      %375 = vmatpush1.bf16.msra.mxu0 0
      %376 = vmatprep.subr.bf16.mxu0 0
      %377 = vmatpush1.bf16.msra.mxu0 0
      %378 = vmatprep.subr.bf16.mxu0 0
      %379 = vmatpush1.bf16.msra.mxu0 0
      %380 = vmatprep.subr.bf16.mxu0 0
      %381 = vmatpush1.bf16.msra.mxu0 0
      %382 = vmatprep.subr.bf16.mxu0 0
      %383 = vmatpush1.bf16.msra.mxu0 0
      %384 = vmatprep.subr.bf16.mxu0 0
      %385 = vmatpush1.bf16.msra.mxu0 %v368
      %386 = vmatprep.subr.bf16.mxu0 0
      %387 = vmatpush2.bf16.msra.mxu0 0
      %388 = vmatprep.subr.bf16.mxu0 0
      %389 = vmatpush2.bf16.msra.mxu0 0
      %390 = vmatprep.subr.bf16.mxu0 0
      %391 = vmatpush2.bf16.msra.mxu0 0
      %392 = vmatprep.subr.bf16.mxu0 0
      %393 = vmatpush2.bf16.msra.mxu0 0
      %394 = vmatprep.subr.bf16.mxu0 0
      %395 = vmatpush2.bf16.msra.mxu0 0
      %396 = vmatprep.subr.bf16.mxu0 0
      %397 = vmatpush2.bf16.msra.mxu0 0
      %398 = vmatprep.subr.bf16.mxu0 0
      %399 = vmatpush2.bf16.msra.mxu0 0
      %400 = vmatprep.subr.bf16.mxu0 0
      %401 = vmatpush2.bf16.msra.mxu0 0
      %402 = vmatprep.mubr.bf16.mxu0 0
      %403 = vmatmul.mubr.bf16.gmra.mxu0 %v365
      %v404 = vpop.f32.mrf.mxu0
      %v405 = vadd.f32 %v358, %v404
      %v406 = vpop.f32.mrf.mxu0
      %v407 = vpop.f32.mrf.mxu0
      %v408 = vadd.f32 %v361, %v407
      %v409 = vpop.f32.mrf.mxu0
      %410 = vdwg.mxu0
      %v411 = vld [vmem:[%s277 + $0x1] sm:$0xf]
      %v412 = vld [vmem:[%s277 + $0x9] sm:$0xf]
      %v413 = vld [vmem:[%s277 + $0x11] sm:$0xf]
      %v414 = vld [vmem:[%s277 + $0x19] sm:$0xf]
      %v419 = vcombine.low %v411, %v412
      %v420 = vcombine.low %v413, %v414
      %v423 = vpack.c.bf16 %v420, %v419
      %s424 = scalar_lea.vmem %s1, 4
      %v425 = vld [vmem:[%s424] sm:$0x3]
      %v427 = vsel %vm315, %v423, 0
      %v430 = vsel %vm319, %v425, 0
      %432 = vmatprep.subr.bf16.mxu0 0
      %433 = vmatpush1.bf16.msra.mxu0 0
      %434 = vmatprep.subr.bf16.mxu0 0
      %435 = vmatpush1.bf16.msra.mxu0 0
      %436 = vmatprep.subr.bf16.mxu0 0
      %437 = vmatpush1.bf16.msra.mxu0 0
      %438 = vmatprep.subr.bf16.mxu0 0
      %439 = vmatpush1.bf16.msra.mxu0 0
      %440 = vmatprep.subr.bf16.mxu0 0
      %441 = vmatpush1.bf16.msra.mxu0 0
      %442 = vmatprep.subr.bf16.mxu0 0
      %443 = vmatpush1.bf16.msra.mxu0 0
      %444 = vmatprep.subr.bf16.mxu0 0
      %445 = vmatpush1.bf16.msra.mxu0 0
      %446 = vmatprep.subr.bf16.mxu0 0
      %447 = vmatpush1.bf16.msra.mxu0 %v430
      %448 = vmatprep.subr.bf16.mxu0 0
      %449 = vmatpush2.bf16.msra.mxu0 0
      %450 = vmatprep.subr.bf16.mxu0 0
      %451 = vmatpush2.bf16.msra.mxu0 0
      %452 = vmatprep.subr.bf16.mxu0 0
      %453 = vmatpush2.bf16.msra.mxu0 0
      %454 = vmatprep.subr.bf16.mxu0 0
      %455 = vmatpush2.bf16.msra.mxu0 0
      %456 = vmatprep.subr.bf16.mxu0 0
      %457 = vmatpush2.bf16.msra.mxu0 0
      %458 = vmatprep.subr.bf16.mxu0 0
      %459 = vmatpush2.bf16.msra.mxu0 0
      %460 = vmatprep.subr.bf16.mxu0 0
      %461 = vmatpush2.bf16.msra.mxu0 0
      %462 = vmatprep.subr.bf16.mxu0 0
      %463 = vmatpush2.bf16.msra.mxu0 0
      %464 = vmatprep.mubr.bf16.mxu0 0
      %465 = vmatmul.mubr.bf16.gmra.mxu0 %v427
      %v466 = vpop.f32.mrf.mxu0
      %v467 = vadd.f32 0.0, %v466
      %v468 = vpop.f32.mrf.mxu0
      %v469 = vpop.f32.mrf.mxu0
      %v470 = vadd.f32 0.0, %v469
      %v471 = vpop.f32.mrf.mxu0
      %472 = vdwg.mxu0
      %v473 = vadd.f32 %v405, %v467
      %v474 = vadd.f32 %v408, %v470
      %s475 = scalar_lea.vmem %s277, 80
      %v476 = vld [vmem:[%s475] sm:$0xf]
      %v477 = vld [vmem:[%s475 + $0x8] sm:$0xf]
      %v478 = vld [vmem:[%s475 + $0x10] sm:$0xf]
      %v479 = vld [vmem:[%s475 + $0x18] sm:$0xf]
      %v484 = vcombine.low %v476, %v477
      %v485 = vcombine.low %v478, %v479
      %v488 = vpack.c.bf16 %v485, %v484
      %s489 = scalar_lea.vmem %s1, 6
      %v490 = vld [vmem:[%s489] sm:$0x3]
      %v492 = vsel %vm315, %v488, 0
      %v495 = vsel %vm319, %v490, 0
      %497 = vmatprep.subr.bf16.mxu0 0
      %498 = vmatpush1.bf16.msra.mxu0 0
      %499 = vmatprep.subr.bf16.mxu0 0
      %500 = vmatpush1.bf16.msra.mxu0 0
      %501 = vmatprep.subr.bf16.mxu0 0
      %502 = vmatpush1.bf16.msra.mxu0 0
      %503 = vmatprep.subr.bf16.mxu0 0
      %504 = vmatpush1.bf16.msra.mxu0 0
      %505 = vmatprep.subr.bf16.mxu0 0
      %506 = vmatpush1.bf16.msra.mxu0 0
      %507 = vmatprep.subr.bf16.mxu0 0
      %508 = vmatpush1.bf16.msra.mxu0 0
      %509 = vmatprep.subr.bf16.mxu0 0
      %510 = vmatpush1.bf16.msra.mxu0 0
      %511 = vmatprep.subr.bf16.mxu0 0
      %512 = vmatpush1.bf16.msra.mxu0 %v495
      %513 = vmatprep.subr.bf16.mxu0 0
      %514 = vmatpush2.bf16.msra.mxu0 0
      %515 = vmatprep.subr.bf16.mxu0 0
      %516 = vmatpush2.bf16.msra.mxu0 0
      %517 = vmatprep.subr.bf16.mxu0 0
      %518 = vmatpush2.bf16.msra.mxu0 0
      %519 = vmatprep.subr.bf16.mxu0 0
      %520 = vmatpush2.bf16.msra.mxu0 0
      %521 = vmatprep.subr.bf16.mxu0 0
      %522 = vmatpush2.bf16.msra.mxu0 0
      %523 = vmatprep.subr.bf16.mxu0 0
      %524 = vmatpush2.bf16.msra.mxu0 0
      %525 = vmatprep.subr.bf16.mxu0 0
      %526 = vmatpush2.bf16.msra.mxu0 0
      %527 = vmatprep.subr.bf16.mxu0 0
      %528 = vmatpush2.bf16.msra.mxu0 0
      %529 = vmatprep.mubr.bf16.mxu0 0
      %530 = vmatmul.mubr.bf16.gmra.mxu0 %v492
      %v531 = vpop.f32.mrf.mxu0
      %v532 = vadd.f32 0.0, %v531
      %v533 = vpop.f32.mrf.mxu0
      %v534 = vpop.f32.mrf.mxu0
      %v535 = vadd.f32 0.0, %v534
      %v536 = vpop.f32.mrf.mxu0
      %537 = vdwg.mxu0
      %v538 = vadd.f32 %v473, %v532
      %v539 = vadd.f32 %v474, %v535
      %s540 = scalar_lea.vmem %s277, 120
      %v541 = vld [vmem:[%s540] sm:$0xf]
      %v542 = vld [vmem:[%s540 + $0x8] sm:$0xf]
      %v543 = vld [vmem:[%s540 + $0x10] sm:$0xf]
      %v544 = vld [vmem:[%s540 + $0x18] sm:$0xf]
      %v549 = vcombine.low %v541, %v542
      %v550 = vcombine.low %v543, %v544
      %v553 = vpack.c.bf16 %v550, %v549
      %s554 = scalar_lea.vmem %s1, 8
      %v555 = vld [vmem:[%s554] sm:$0x3]
      %v557 = vsel %vm315, %v553, 0
      %v560 = vsel %vm319, %v555, 0
      %562 = vmatprep.subr.bf16.mxu0 0
      %563 = vmatpush1.bf16.msra.mxu0 0
      %564 = vmatprep.subr.bf16.mxu0 0
      %565 = vmatpush1.bf16.msra.mxu0 0
      %566 = vmatprep.subr.bf16.mxu0 0
      %567 = vmatpush1.bf16.msra.mxu0 0
      %568 = vmatprep.subr.bf16.mxu0 0
      %569 = vmatpush1.bf16.msra.mxu0 0
      %570 = vmatprep.subr.bf16.mxu0 0
      %571 = vmatpush1.bf16.msra.mxu0 0
      %572 = vmatprep.subr.bf16.mxu0 0
      %573 = vmatpush1.bf16.msra.mxu0 0
      %574 = vmatprep.subr.bf16.mxu0 0
      %575 = vmatpush1.bf16.msra.mxu0 0
      %576 = vmatprep.subr.bf16.mxu0 0
      %577 = vmatpush1.bf16.msra.mxu0 %v560
      %578 = vmatprep.subr.bf16.mxu0 0
      %579 = vmatpush2.bf16.msra.mxu0 0
      %580 = vmatprep.subr.bf16.mxu0 0
      %581 = vmatpush2.bf16.msra.mxu0 0
      %582 = vmatprep.subr.bf16.mxu0 0
      %583 = vmatpush2.bf16.msra.mxu0 0
      %584 = vmatprep.subr.bf16.mxu0 0
      %585 = vmatpush2.bf16.msra.mxu0 0
      %586 = vmatprep.subr.bf16.mxu0 0
      %587 = vmatpush2.bf16.msra.mxu0 0
      %588 = vmatprep.subr.bf16.mxu0 0
      %589 = vmatpush2.bf16.msra.mxu0 0
      %590 = vmatprep.subr.bf16.mxu0 0
      %591 = vmatpush2.bf16.msra.mxu0 0
      %592 = vmatprep.subr.bf16.mxu0 0
      %593 = vmatpush2.bf16.msra.mxu0 0
      %594 = vmatprep.mubr.bf16.mxu0 0
      %595 = vmatmul.mubr.bf16.gmra.mxu0 %v557
      %v596 = vpop.f32.mrf.mxu0
      %v597 = vadd.f32 0.0, %v596
      %v598 = vpop.f32.mrf.mxu0
      %v599 = vpop.f32.mrf.mxu0
      %v600 = vadd.f32 0.0, %v599
      %v601 = vpop.f32.mrf.mxu0
      %602 = vdwg.mxu0
      %v603 = vadd.f32 %v538, %v597
      %v604 = vadd.f32 %v539, %v600
      %v605 = vld [vmem:[%s2] sm:$0x3]
      %v606 = vld [vmem:[%s475 + $0x1] sm:$0xf]
      %v607 = vld [vmem:[%s475 + $0x9] sm:$0xf]
      %v608 = vld [vmem:[%s475 + $0x11] sm:$0xf]
      %v609 = vld [vmem:[%s475 + $0x19] sm:$0xf]
      %v614 = vcombine.low %v606, %v607
      %v615 = vcombine.low %v608, %v609
      %v618 = vpack.c.bf16 %v615, %v614
      %s619 = scalar_lea.vmem %s1, 10
      %v620 = vld [vmem:[%s619] sm:$0x3]
      %v622 = vsel %vm315, %v618, 0
      %v625 = vsel %vm319, %v620, 0
      %627 = vmatprep.subr.bf16.mxu0 0
      %628 = vmatpush1.bf16.msra.mxu0 0
      %629 = vmatprep.subr.bf16.mxu0 0
      %630 = vmatpush1.bf16.msra.mxu0 0
      %631 = vmatprep.subr.bf16.mxu0 0
      %632 = vmatpush1.bf16.msra.mxu0 0
      %633 = vmatprep.subr.bf16.mxu0 0
      %634 = vmatpush1.bf16.msra.mxu0 0
      %635 = vmatprep.subr.bf16.mxu0 0
      %636 = vmatpush1.bf16.msra.mxu0 0
      %637 = vmatprep.subr.bf16.mxu0 0
      %638 = vmatpush1.bf16.msra.mxu0 0
      %639 = vmatprep.subr.bf16.mxu0 0
      %640 = vmatpush1.bf16.msra.mxu0 0
      %641 = vmatprep.subr.bf16.mxu0 0
      %642 = vmatpush1.bf16.msra.mxu0 %v625
      %643 = vmatprep.subr.bf16.mxu0 0
      %644 = vmatpush2.bf16.msra.mxu0 0
      %645 = vmatprep.subr.bf16.mxu0 0
      %646 = vmatpush2.bf16.msra.mxu0 0
      %647 = vmatprep.subr.bf16.mxu0 0
      %648 = vmatpush2.bf16.msra.mxu0 0
      %649 = vmatprep.subr.bf16.mxu0 0
      %650 = vmatpush2.bf16.msra.mxu0 0
      %651 = vmatprep.subr.bf16.mxu0 0
      %652 = vmatpush2.bf16.msra.mxu0 0
      %653 = vmatprep.subr.bf16.mxu0 0
      %654 = vmatpush2.bf16.msra.mxu0 0
      %655 = vmatprep.subr.bf16.mxu0 0
      %656 = vmatpush2.bf16.msra.mxu0 0
      %657 = vmatprep.subr.bf16.mxu0 0
      %658 = vmatpush2.bf16.msra.mxu0 0
      %659 = vmatprep.mubr.bf16.mxu0 0
      %660 = vmatmul.mubr.bf16.gmra.mxu0 %v622
      %v661 = vpop.f32.mrf.mxu0
      %v662 = vadd.f32 0.0, %v661
      %v663 = vpop.f32.mrf.mxu0
      %v664 = vpop.f32.mrf.mxu0
      %v665 = vadd.f32 0.0, %v664
      %v666 = vpop.f32.mrf.mxu0
      %667 = vdwg.mxu0
      %v668 = vadd.f32 %v603, %v662
      %v669 = vadd.f32 %v604, %v665
      %s670 = scalar_lea.vmem %s277, 8
      %v671 = vld [vmem:[%s670] sm:$0xf]
      %v672 = vld [vmem:[%s670 + $0x8] sm:$0xf]
      %v673 = vld [vmem:[%s670 + $0x10] sm:$0xf]
      %v674 = vld [vmem:[%s670 + $0x18] sm:$0xf]
      %v679 = vcombine.low %v671, %v672
      %v680 = vcombine.low %v673, %v674
      %v683 = vpack.c.bf16 %v680, %v679
      %s684 = scalar_lea.vmem %s1, 12
      %v685 = vld [vmem:[%s684] sm:$0x3]
      %v687 = vsel %vm315, %v683, 0
      %v690 = vsel %vm319, %v685, 0
      %692 = vmatprep.subr.bf16.mxu0 0
      %693 = vmatpush1.bf16.msra.mxu0 0
      %694 = vmatprep.subr.bf16.mxu0 0
      %695 = vmatpush1.bf16.msra.mxu0 0
      %696 = vmatprep.subr.bf16.mxu0 0
      %697 = vmatpush1.bf16.msra.mxu0 0
      %698 = vmatprep.subr.bf16.mxu0 0
      %699 = vmatpush1.bf16.msra.mxu0 0
      %700 = vmatprep.subr.bf16.mxu0 0
      %701 = vmatpush1.bf16.msra.mxu0 0
      %702 = vmatprep.subr.bf16.mxu0 0
      %703 = vmatpush1.bf16.msra.mxu0 0
      %704 = vmatprep.subr.bf16.mxu0 0
      %705 = vmatpush1.bf16.msra.mxu0 0
      %706 = vmatprep.subr.bf16.mxu0 0
      %707 = vmatpush1.bf16.msra.mxu0 %v690
      %708 = vmatprep.subr.bf16.mxu0 0
      %709 = vmatpush2.bf16.msra.mxu0 0
      %710 = vmatprep.subr.bf16.mxu0 0
      %711 = vmatpush2.bf16.msra.mxu0 0
      %712 = vmatprep.subr.bf16.mxu0 0
      %713 = vmatpush2.bf16.msra.mxu0 0
      %714 = vmatprep.subr.bf16.mxu0 0
      %715 = vmatpush2.bf16.msra.mxu0 0
      %716 = vmatprep.subr.bf16.mxu0 0
      %717 = vmatpush2.bf16.msra.mxu0 0
      %718 = vmatprep.subr.bf16.mxu0 0
      %719 = vmatpush2.bf16.msra.mxu0 0
      %720 = vmatprep.subr.bf16.mxu0 0
      %721 = vmatpush2.bf16.msra.mxu0 0
      %722 = vmatprep.subr.bf16.mxu0 0
      %723 = vmatpush2.bf16.msra.mxu0 0
      %724 = vmatprep.mubr.bf16.mxu0 0
      %725 = vmatmul.mubr.bf16.gmra.mxu0 %v687
      %v726 = vpop.f32.mrf.mxu0
      %v727 = vadd.f32 0.0, %v726
      %v728 = vpop.f32.mrf.mxu0
      %v729 = vpop.f32.mrf.mxu0
      %v730 = vadd.f32 0.0, %v729
      %v731 = vpop.f32.mrf.mxu0
      %732 = vdwg.mxu0
      %v733 = vadd.f32 %v668, %v727
      %v734 = vadd.f32 %v669, %v730
      %s735 = scalar_lea.vmem %s277, 48
      %v736 = vld [vmem:[%s735] sm:$0xf]
      %v737 = vld [vmem:[%s735 + $0x8] sm:$0xf]
      %v738 = vld [vmem:[%s735 + $0x10] sm:$0xf]
      %v739 = vld [vmem:[%s735 + $0x18] sm:$0xf]
      %v744 = vcombine.low %v736, %v737
      %v745 = vcombine.low %v738, %v739
      %v748 = vpack.c.bf16 %v745, %v744
      %s749 = scalar_lea.vmem %s1, 14
      %v750 = vld [vmem:[%s749] sm:$0x3]
      %v752 = vsel %vm315, %v748, 0
      %v755 = vsel %vm319, %v750, 0
      %757 = vmatprep.subr.bf16.mxu0 0
      %758 = vmatpush1.bf16.msra.mxu0 0
      %759 = vmatprep.subr.bf16.mxu0 0
      %760 = vmatpush1.bf16.msra.mxu0 0
      %761 = vmatprep.subr.bf16.mxu0 0
      %762 = vmatpush1.bf16.msra.mxu0 0
      %763 = vmatprep.subr.bf16.mxu0 0
      %764 = vmatpush1.bf16.msra.mxu0 0
      %765 = vmatprep.subr.bf16.mxu0 0
      %766 = vmatpush1.bf16.msra.mxu0 0
      %767 = vmatprep.subr.bf16.mxu0 0
      %768 = vmatpush1.bf16.msra.mxu0 0
      %769 = vmatprep.subr.bf16.mxu0 0
      %770 = vmatpush1.bf16.msra.mxu0 0
      %771 = vmatprep.subr.bf16.mxu0 0
      %772 = vmatpush1.bf16.msra.mxu0 %v755
      %773 = vmatprep.subr.bf16.mxu0 0
      %774 = vmatpush2.bf16.msra.mxu0 0
      %775 = vmatprep.subr.bf16.mxu0 0
      %776 = vmatpush2.bf16.msra.mxu0 0
      %777 = vmatprep.subr.bf16.mxu0 0
      %778 = vmatpush2.bf16.msra.mxu0 0
      %779 = vmatprep.subr.bf16.mxu0 0
      %780 = vmatpush2.bf16.msra.mxu0 0
      %781 = vmatprep.subr.bf16.mxu0 0
      %782 = vmatpush2.bf16.msra.mxu0 0
      %783 = vmatprep.subr.bf16.mxu0 0
      %784 = vmatpush2.bf16.msra.mxu0 0
      %785 = vmatprep.subr.bf16.mxu0 0
      %786 = vmatpush2.bf16.msra.mxu0 0
      %787 = vmatprep.subr.bf16.mxu0 0
      %788 = vmatpush2.bf16.msra.mxu0 0
      %789 = vmatprep.mubr.bf16.mxu0 0
      %790 = vmatmul.mubr.bf16.gmra.mxu0 %v752
      %v791 = vpop.f32.mrf.mxu0
      %v792 = vadd.f32 0.0, %v791
      %v793 = vpop.f32.mrf.mxu0
      %v794 = vpop.f32.mrf.mxu0
      %v795 = vadd.f32 0.0, %v794
      %v796 = vpop.f32.mrf.mxu0
      %797 = vdwg.mxu0
      %v798 = vadd.f32 %v733, %v792
      %v799 = vadd.f32 %v734, %v795
      %v800 = vld [vmem:[%s670 + $0x1] sm:$0xf]
      %v801 = vld [vmem:[%s670 + $0x9] sm:$0xf]
      %v802 = vld [vmem:[%s670 + $0x11] sm:$0xf]
      %v803 = vld [vmem:[%s670 + $0x19] sm:$0xf]
      %v808 = vcombine.low %v800, %v801
      %v809 = vcombine.low %v802, %v803
      %v812 = vpack.c.bf16 %v809, %v808
      %s813 = scalar_lea.vmem %s1, 16
      %v814 = vld [vmem:[%s813] sm:$0x3]
      %v816 = vsel %vm315, %v812, 0
      %v819 = vsel %vm319, %v814, 0
      %821 = vmatprep.subr.bf16.mxu0 0
      %822 = vmatpush1.bf16.msra.mxu0 0
      %823 = vmatprep.subr.bf16.mxu0 0
      %824 = vmatpush1.bf16.msra.mxu0 0
      %825 = vmatprep.subr.bf16.mxu0 0
      %826 = vmatpush1.bf16.msra.mxu0 0
      %827 = vmatprep.subr.bf16.mxu0 0
      %828 = vmatpush1.bf16.msra.mxu0 0
      %829 = vmatprep.subr.bf16.mxu0 0
      %830 = vmatpush1.bf16.msra.mxu0 0
      %831 = vmatprep.subr.bf16.mxu0 0
      %832 = vmatpush1.bf16.msra.mxu0 0
      %833 = vmatprep.subr.bf16.mxu0 0
      %834 = vmatpush1.bf16.msra.mxu0 0
      %835 = vmatprep.subr.bf16.mxu0 0
      %836 = vmatpush1.bf16.msra.mxu0 %v819
      %837 = vmatprep.subr.bf16.mxu0 0
      %838 = vmatpush2.bf16.msra.mxu0 0
      %839 = vmatprep.subr.bf16.mxu0 0
      %840 = vmatpush2.bf16.msra.mxu0 0
      %841 = vmatprep.subr.bf16.mxu0 0
      %842 = vmatpush2.bf16.msra.mxu0 0
      %843 = vmatprep.subr.bf16.mxu0 0
      %844 = vmatpush2.bf16.msra.mxu0 0
      %845 = vmatprep.subr.bf16.mxu0 0
      %846 = vmatpush2.bf16.msra.mxu0 0
      %847 = vmatprep.subr.bf16.mxu0 0
      %848 = vmatpush2.bf16.msra.mxu0 0
      %849 = vmatprep.subr.bf16.mxu0 0
      %850 = vmatpush2.bf16.msra.mxu0 0
      %851 = vmatprep.subr.bf16.mxu0 0
      %852 = vmatpush2.bf16.msra.mxu0 0
      %853 = vmatprep.mubr.bf16.mxu0 0
      %854 = vmatmul.mubr.bf16.gmra.mxu0 %v816
      %v855 = vpop.f32.mrf.mxu0
      %v856 = vadd.f32 0.0, %v855
      %v857 = vpop.f32.mrf.mxu0
      %v858 = vpop.f32.mrf.mxu0
      %v859 = vadd.f32 0.0, %v858
      %v860 = vpop.f32.mrf.mxu0
      %861 = vdwg.mxu0
      %v862 = vadd.f32 %v798, %v856
      %v863 = vadd.f32 %v799, %v859
      %v864 = vld [vmem:[%s3] sm:$0x1]
      %v866 = vlaneseq
      %v867 = vshrl.u32 %v866, 7
      %v868 = vsub.s32 0, %v867
      %v869 = vrot.slane %v864, %v868
      %v871 = vadd.f32 %v862, %v869
      %v872 = vadd.f32 %v863, %v869
      %v873 = vmax.f32 %v871, 0.0
      %v874 = vmax.f32 %v872, 0.0
      %vm875 = vcmask 62464
      %876 = vst.msk [vmem:[#allocation2] sm:$0x3f] %vm875, 0.0
      %877 = vst.msk [vmem:[#allocation2 + $0x8] sm:$0x3f] %vm875, 0.0
      %878 = vst.msk [vmem:[#allocation2 + $0x10] sm:$0x3f] %vm875, 0.0
      %879 = vst.msk [vmem:[#allocation2 + $0x18] sm:$0x3f] %vm875, 0.0
      %880 = vst.msk [vmem:[#allocation2 + $0x20] sm:$0x3f] %vm875, 0.0
      %881 = vst.msk [vmem:[#allocation2 + $0x28] sm:$0x3f] %vm875, 0.0
      %v884 = vcombine.high %v873, %v873
      %v885 = vcombine.high %v874, %v874
      %s888 = scalar_lea.vmem [#allocation2], 8
      %vm889 = vcmask 60416
      %890 = vst.msk [vmem:[%s888 + $0x1] sm:$0xf] %vm889, %v873
      %891 = vst.msk [vmem:[%s888 + $0x9] sm:$0xf] %vm889, %v884
      %892 = vst.msk [vmem:[%s888 + $0x11] sm:$0xf] %vm889, %v874
      %893 = vst.msk [vmem:[%s888 + $0x19] sm:$0xf] %vm889, %v885
      %v894 = vld [vmem:[%s4] sm:$0x1]
      %v896 = vlaneseq
      %v897 = vshrl.u32 %v896, 7
      %v898 = vsub.s32 0, %v897
      %v899 = vrot.slane %v894, %v898
      %v902 = vsel %vm319, %v605, 0
      %904 = vmatprep.subr.bf16.mxu0 0
      %905 = vmatpush1.bf16.msra.mxu0 0
      %906 = vmatprep.subr.bf16.mxu0 0
      %907 = vmatpush1.bf16.msra.mxu0 0
      %908 = vmatprep.subr.bf16.mxu0 0
      %909 = vmatpush1.bf16.msra.mxu0 0
      %910 = vmatprep.subr.bf16.mxu0 0
      %911 = vmatpush1.bf16.msra.mxu0 0
      %912 = vmatprep.subr.bf16.mxu0 0
      %913 = vmatpush1.bf16.msra.mxu0 0
      %914 = vmatprep.subr.bf16.mxu0 0
      %915 = vmatpush1.bf16.msra.mxu0 0
      %916 = vmatprep.subr.bf16.mxu0 0
      %917 = vmatpush1.bf16.msra.mxu0 0
      %918 = vmatprep.subr.bf16.mxu0 0
      %919 = vmatpush1.bf16.msra.mxu0 %v902
      %920 = vmatprep.subr.bf16.mxu0 0
      %921 = vmatpush2.bf16.msra.mxu0 0
      %922 = vmatprep.subr.bf16.mxu0 0
      %923 = vmatpush2.bf16.msra.mxu0 0
      %924 = vmatprep.subr.bf16.mxu0 0
      %925 = vmatpush2.bf16.msra.mxu0 0
      %926 = vmatprep.subr.bf16.mxu0 0
      %927 = vmatpush2.bf16.msra.mxu0 0
      %928 = vmatprep.subr.bf16.mxu0 0
      %929 = vmatpush2.bf16.msra.mxu0 0
      %930 = vmatprep.subr.bf16.mxu0 0
      %931 = vmatpush2.bf16.msra.mxu0 0
      %932 = vmatprep.subr.bf16.mxu0 0
      %933 = vmatpush2.bf16.msra.mxu0 0
      %934 = vmatprep.subr.bf16.mxu0 0
      %935 = vmatpush2.bf16.msra.mxu0 0
      %936 = vmatprep.mubr.bf16.mxu0 0
      %937 = vmatmul.mubr.bf16.gmra.mxu0 %v557
      %v938 = vpop.f32.mrf.mxu0
      %v939 = vadd.f32 %v899, %v938
      %v940 = vpop.f32.mrf.mxu0
      %v941 = vpop.f32.mrf.mxu0
      %v942 = vadd.f32 %v899, %v941
      %v943 = vpop.f32.mrf.mxu0
      %944 = vdwg.mxu0
      %v945 = vld [vmem:[%s6] sm:$0x1]
      %v947 = vlaneseq
      %v948 = vshrl.u32 %v947, 7
      %v949 = vsub.s32 0, %v948
      %v950 = vrot.slane %v945, %v949
      %v952 = vadd.f32 %v939, %v950
      %v953 = vadd.f32 %v942, %v950
      %v954 = vld [vmem:[#allocation2] sm:$0xf]
      %v955 = vld [vmem:[#allocation2 + $0x8] sm:$0xf]
      %v956 = vld [vmem:[#allocation2 + $0x10] sm:$0xf]
      %v957 = vld [vmem:[#allocation2 + $0x18] sm:$0xf]
      %v962 = vcombine.low %v954, %v955
      %v963 = vcombine.low %v956, %v957
      %v966 = vpack.c.bf16 %v963, %v962
      %v967 = vld [vmem:[%s5] sm:$0xf]
      %vm968 = vcmask 64512
      %v970 = vsel %vm968, %v966, 0
      %vm972 = vcmask 1043456
      %v974 = vsel %vm972, %v967, 0
      %976 = vmatprep.subr.bf16.mxu0 0
      %977 = vmatpush1.bf16.msra.mxu0 0
      %978 = vmatprep.subr.bf16.mxu0 0
      %979 = vmatpush1.bf16.msra.mxu0 0
      %980 = vmatprep.subr.bf16.mxu0 0
      %981 = vmatpush1.bf16.msra.mxu0 0
      %982 = vmatprep.subr.bf16.mxu0 0
      %983 = vmatpush1.bf16.msra.mxu0 0
      %984 = vmatprep.subr.bf16.mxu0 0
      %985 = vmatpush1.bf16.msra.mxu0 0
      %986 = vmatprep.subr.bf16.mxu0 0
      %987 = vmatpush1.bf16.msra.mxu0 0
      %988 = vmatprep.subr.bf16.mxu0 0
      %989 = vmatpush1.bf16.msra.mxu0 0
      %990 = vmatprep.subr.bf16.mxu0 0
      %991 = vmatpush1.bf16.msra.mxu0 %v974
      %992 = vmatprep.subr.bf16.mxu0 0
      %993 = vmatpush2.bf16.msra.mxu0 0
      %994 = vmatprep.subr.bf16.mxu0 0
      %995 = vmatpush2.bf16.msra.mxu0 0
      %996 = vmatprep.subr.bf16.mxu0 0
      %997 = vmatpush2.bf16.msra.mxu0 0
      %998 = vmatprep.subr.bf16.mxu0 0
      %999 = vmatpush2.bf16.msra.mxu0 0
      %1000 = vmatprep.subr.bf16.mxu0 0
      %1001 = vmatpush2.bf16.msra.mxu0 0
      %1002 = vmatprep.subr.bf16.mxu0 0
      %1003 = vmatpush2.bf16.msra.mxu0 0
      %1004 = vmatprep.subr.bf16.mxu0 0
      %1005 = vmatpush2.bf16.msra.mxu0 0
      %1006 = vmatprep.subr.bf16.mxu0 0
      %1007 = vmatpush2.bf16.msra.mxu0 0
      %1008 = vmatprep.mubr.bf16.mxu0 0
      %1009 = vmatmul.mubr.bf16.gmra.mxu0 %v970
      %v1010 = vpop.f32.mrf.mxu0
      %v1011 = vadd.f32 0.0, %v1010
      %v1012 = vpop.f32.mrf.mxu0
      %v1013 = vpop.f32.mrf.mxu0
      %v1014 = vadd.f32 0.0, %v1013
      %v1015 = vpop.f32.mrf.mxu0
      %1016 = vdwg.mxu0
      %v1017 = vadd.f32 %v952, %v1011
      %v1018 = vadd.f32 %v953, %v1014
      %v1019 = vld [vmem:[#allocation2 + $0x1] sm:$0xf]
      %v1020 = vld [vmem:[#allocation2 + $0x9] sm:$0xf]
      %v1021 = vld [vmem:[#allocation2 + $0x11] sm:$0xf]
      %v1022 = vld [vmem:[#allocation2 + $0x19] sm:$0xf]
      %v1027 = vcombine.low %v1019, %v1020
      %v1028 = vcombine.low %v1021, %v1022
      %v1031 = vpack.c.bf16 %v1028, %v1027
      %s1032 = scalar_lea.vmem %s5, 4
      %v1033 = vld [vmem:[%s1032] sm:$0xf]
      %v1035 = vsel %vm968, %v1031, 0
      %v1038 = vsel %vm972, %v1033, 0
      %1040 = vmatprep.subr.bf16.mxu0 0
      %1041 = vmatpush1.bf16.msra.mxu0 0
      %1042 = vmatprep.subr.bf16.mxu0 0
      %1043 = vmatpush1.bf16.msra.mxu0 0
      %1044 = vmatprep.subr.bf16.mxu0 0
      %1045 = vmatpush1.bf16.msra.mxu0 0
      %1046 = vmatprep.subr.bf16.mxu0 0
      %1047 = vmatpush1.bf16.msra.mxu0 0
      %1048 = vmatprep.subr.bf16.mxu0 0
      %1049 = vmatpush1.bf16.msra.mxu0 0
      %1050 = vmatprep.subr.bf16.mxu0 0
      %1051 = vmatpush1.bf16.msra.mxu0 0
      %1052 = vmatprep.subr.bf16.mxu0 0
      %1053 = vmatpush1.bf16.msra.mxu0 0
      %1054 = vmatprep.subr.bf16.mxu0 0
      %1055 = vmatpush1.bf16.msra.mxu0 %v1038
      %1056 = vmatprep.subr.bf16.mxu0 0
      %1057 = vmatpush2.bf16.msra.mxu0 0
      %1058 = vmatprep.subr.bf16.mxu0 0
      %1059 = vmatpush2.bf16.msra.mxu0 0
      %1060 = vmatprep.subr.bf16.mxu0 0
      %1061 = vmatpush2.bf16.msra.mxu0 0
      %1062 = vmatprep.subr.bf16.mxu0 0
      %1063 = vmatpush2.bf16.msra.mxu0 0
      %1064 = vmatprep.subr.bf16.mxu0 0
      %1065 = vmatpush2.bf16.msra.mxu0 0
      %1066 = vmatprep.subr.bf16.mxu0 0
      %1067 = vmatpush2.bf16.msra.mxu0 0
      %1068 = vmatprep.subr.bf16.mxu0 0
      %1069 = vmatpush2.bf16.msra.mxu0 0
      %1070 = vmatprep.subr.bf16.mxu0 0
      %1071 = vmatpush2.bf16.msra.mxu0 0
      %1072 = vmatprep.mubr.bf16.mxu0 0
      %1073 = vmatmul.mubr.bf16.gmra.mxu0 %v1035
      %v1074 = vpop.f32.mrf.mxu0
      %v1075 = vadd.f32 0.0, %v1074
      %v1076 = vpop.f32.mrf.mxu0
      %v1077 = vpop.f32.mrf.mxu0
      %v1078 = vadd.f32 0.0, %v1077
      %v1079 = vpop.f32.mrf.mxu0
      %1080 = vdwg.mxu0
      %v1081 = vadd.f32 %v1017, %v1075
      %v1082 = vadd.f32 %v1018, %v1078
      %v1083 = vld [vmem:[#allocation2 + $0x2] sm:$0xf]
      %v1084 = vld [vmem:[#allocation2 + $0xa] sm:$0xf]
      %v1085 = vld [vmem:[#allocation2 + $0x12] sm:$0xf]
      %v1086 = vld [vmem:[#allocation2 + $0x1a] sm:$0xf]
      %v1091 = vcombine.low %v1083, %v1084
      %v1092 = vcombine.low %v1085, %v1086
      %v1095 = vpack.c.bf16 %v1092, %v1091
      %s1096 = scalar_lea.vmem %s5, 8
      %v1097 = vld [vmem:[%s1096] sm:$0xf]
      %v1099 = vsel %vm968, %v1095, 0
      %v1102 = vsel %vm972, %v1097, 0
      %1104 = vmatprep.subr.bf16.mxu0 0
      %1105 = vmatpush1.bf16.msra.mxu0 0
      %1106 = vmatprep.subr.bf16.mxu0 0
      %1107 = vmatpush1.bf16.msra.mxu0 0
      %1108 = vmatprep.subr.bf16.mxu0 0
      %1109 = vmatpush1.bf16.msra.mxu0 0
      %1110 = vmatprep.subr.bf16.mxu0 0
      %1111 = vmatpush1.bf16.msra.mxu0 0
      %1112 = vmatprep.subr.bf16.mxu0 0
      %1113 = vmatpush1.bf16.msra.mxu0 0
      %1114 = vmatprep.subr.bf16.mxu0 0
      %1115 = vmatpush1.bf16.msra.mxu0 0
      %1116 = vmatprep.subr.bf16.mxu0 0
      %1117 = vmatpush1.bf16.msra.mxu0 0
      %1118 = vmatprep.subr.bf16.mxu0 0
      %1119 = vmatpush1.bf16.msra.mxu0 %v1102
      %1120 = vmatprep.subr.bf16.mxu0 0
      %1121 = vmatpush2.bf16.msra.mxu0 0
      %1122 = vmatprep.subr.bf16.mxu0 0
      %1123 = vmatpush2.bf16.msra.mxu0 0
      %1124 = vmatprep.subr.bf16.mxu0 0
      %1125 = vmatpush2.bf16.msra.mxu0 0
      %1126 = vmatprep.subr.bf16.mxu0 0
      %1127 = vmatpush2.bf16.msra.mxu0 0
      %1128 = vmatprep.subr.bf16.mxu0 0
      %1129 = vmatpush2.bf16.msra.mxu0 0
      %1130 = vmatprep.subr.bf16.mxu0 0
      %1131 = vmatpush2.bf16.msra.mxu0 0
      %1132 = vmatprep.subr.bf16.mxu0 0
      %1133 = vmatpush2.bf16.msra.mxu0 0
      %1134 = vmatprep.subr.bf16.mxu0 0
      %1135 = vmatpush2.bf16.msra.mxu0 0
      %1136 = vmatprep.mubr.bf16.mxu0 0
      %1137 = vmatmul.mubr.bf16.gmra.mxu0 %v1099
      %v1138 = vpop.f32.mrf.mxu0
      %v1139 = vadd.f32 0.0, %v1138
      %v1140 = vpop.f32.mrf.mxu0
      %v1141 = vpop.f32.mrf.mxu0
      %v1142 = vadd.f32 0.0, %v1141
      %v1143 = vpop.f32.mrf.mxu0
      %1144 = vdwg.mxu0
      %v1145 = vadd.f32 %v1081, %v1139
      %v1146 = vadd.f32 %v1082, %v1142
      %v1147 = vld [vmem:[%s888] sm:$0xf]
      %v1148 = vld [vmem:[%s888 + $0x8] sm:$0xf]
      %v1149 = vld [vmem:[%s888 + $0x10] sm:$0xf]
      %v1150 = vld [vmem:[%s888 + $0x18] sm:$0xf]
      %v1155 = vcombine.low %v1147, %v1148
      %v1156 = vcombine.low %v1149, %v1150
      %v1159 = vpack.c.bf16 %v1156, %v1155
      %s1160 = scalar_lea.vmem %s5, 12
      %v1161 = vld [vmem:[%s1160] sm:$0xf]
      %v1163 = vsel %vm968, %v1159, 0
      %v1166 = vsel %vm972, %v1161, 0
      %1168 = vmatprep.subr.bf16.mxu0 0
      %1169 = vmatpush1.bf16.msra.mxu0 0
      %1170 = vmatprep.subr.bf16.mxu0 0
      %1171 = vmatpush1.bf16.msra.mxu0 0
      %1172 = vmatprep.subr.bf16.mxu0 0
      %1173 = vmatpush1.bf16.msra.mxu0 0
      %1174 = vmatprep.subr.bf16.mxu0 0
      %1175 = vmatpush1.bf16.msra.mxu0 0
      %1176 = vmatprep.subr.bf16.mxu0 0
      %1177 = vmatpush1.bf16.msra.mxu0 0
      %1178 = vmatprep.subr.bf16.mxu0 0
      %1179 = vmatpush1.bf16.msra.mxu0 0
      %1180 = vmatprep.subr.bf16.mxu0 0
      %1181 = vmatpush1.bf16.msra.mxu0 0
      %1182 = vmatprep.subr.bf16.mxu0 0
      %1183 = vmatpush1.bf16.msra.mxu0 %v1166
      %1184 = vmatprep.subr.bf16.mxu0 0
      %1185 = vmatpush2.bf16.msra.mxu0 0
      %1186 = vmatprep.subr.bf16.mxu0 0
      %1187 = vmatpush2.bf16.msra.mxu0 0
      %1188 = vmatprep.subr.bf16.mxu0 0
      %1189 = vmatpush2.bf16.msra.mxu0 0
      %1190 = vmatprep.subr.bf16.mxu0 0
      %1191 = vmatpush2.bf16.msra.mxu0 0
      %1192 = vmatprep.subr.bf16.mxu0 0
      %1193 = vmatpush2.bf16.msra.mxu0 0
      %1194 = vmatprep.subr.bf16.mxu0 0
      %1195 = vmatpush2.bf16.msra.mxu0 0
      %1196 = vmatprep.subr.bf16.mxu0 0
      %1197 = vmatpush2.bf16.msra.mxu0 0
      %1198 = vmatprep.subr.bf16.mxu0 0
      %1199 = vmatpush2.bf16.msra.mxu0 0
      %1200 = vmatprep.mubr.bf16.mxu0 0
      %1201 = vmatmul.mubr.bf16.gmra.mxu0 %v1163
      %v1202 = vpop.f32.mrf.mxu0
      %v1203 = vadd.f32 0.0, %v1202
      %v1204 = vpop.f32.mrf.mxu0
      %v1205 = vpop.f32.mrf.mxu0
      %v1206 = vadd.f32 0.0, %v1205
      %v1207 = vpop.f32.mrf.mxu0
      %1208 = vdwg.mxu0
      %v1209 = vadd.f32 %v1145, %v1203
      %v1210 = vadd.f32 %v1146, %v1206
      %v1211 = vld [vmem:[%s888 + $0x1] sm:$0xf]
      %v1212 = vld [vmem:[%s888 + $0x9] sm:$0xf]
      %v1213 = vld [vmem:[%s888 + $0x11] sm:$0xf]
      %v1214 = vld [vmem:[%s888 + $0x19] sm:$0xf]
      %v1219 = vcombine.low %v1211, %v1212
      %v1220 = vcombine.low %v1213, %v1214
      %v1223 = vpack.c.bf16 %v1220, %v1219
      %s1224 = scalar_lea.vmem %s5, 16
      %v1225 = vld [vmem:[%s1224] sm:$0xf]
      %v1227 = vsel %vm968, %v1223, 0
      %v1230 = vsel %vm972, %v1225, 0
      %1232 = vmatprep.subr.bf16.mxu0 0
      %1233 = vmatpush1.bf16.msra.mxu0 0
      %1234 = vmatprep.subr.bf16.mxu0 0
      %1235 = vmatpush1.bf16.msra.mxu0 0
      %1236 = vmatprep.subr.bf16.mxu0 0
      %1237 = vmatpush1.bf16.msra.mxu0 0
      %1238 = vmatprep.subr.bf16.mxu0 0
      %1239 = vmatpush1.bf16.msra.mxu0 0
      %1240 = vmatprep.subr.bf16.mxu0 0
      %1241 = vmatpush1.bf16.msra.mxu0 0
      %1242 = vmatprep.subr.bf16.mxu0 0
      %1243 = vmatpush1.bf16.msra.mxu0 0
      %1244 = vmatprep.subr.bf16.mxu0 0
      %1245 = vmatpush1.bf16.msra.mxu0 0
      %1246 = vmatprep.subr.bf16.mxu0 0
      %1247 = vmatpush1.bf16.msra.mxu0 %v1230
      %1248 = vmatprep.subr.bf16.mxu0 0
      %1249 = vmatpush2.bf16.msra.mxu0 0
      %1250 = vmatprep.subr.bf16.mxu0 0
      %1251 = vmatpush2.bf16.msra.mxu0 0
      %1252 = vmatprep.subr.bf16.mxu0 0
      %1253 = vmatpush2.bf16.msra.mxu0 0
      %1254 = vmatprep.subr.bf16.mxu0 0
      %1255 = vmatpush2.bf16.msra.mxu0 0
      %1256 = vmatprep.subr.bf16.mxu0 0
      %1257 = vmatpush2.bf16.msra.mxu0 0
      %1258 = vmatprep.subr.bf16.mxu0 0
      %1259 = vmatpush2.bf16.msra.mxu0 0
      %1260 = vmatprep.subr.bf16.mxu0 0
      %1261 = vmatpush2.bf16.msra.mxu0 0
      %1262 = vmatprep.subr.bf16.mxu0 0
      %1263 = vmatpush2.bf16.msra.mxu0 0
      %1264 = vmatprep.mubr.bf16.mxu0 0
      %1265 = vmatmul.mubr.bf16.gmra.mxu0 %v1227
      %v1266 = vpop.f32.mrf.mxu0
      %v1267 = vadd.f32 0.0, %v1266
      %v1268 = vpop.f32.mrf.mxu0
      %v1269 = vpop.f32.mrf.mxu0
      %v1270 = vadd.f32 0.0, %v1269
      %v1271 = vpop.f32.mrf.mxu0
      %1272 = vdwg.mxu0
      %v1273 = vadd.f32 %v1209, %v1267
      %v1274 = vadd.f32 %v1210, %v1270
      %v1275 = vld [vmem:[%s888 + $0x2] sm:$0xf]
      %v1276 = vld [vmem:[%s888 + $0xa] sm:$0xf]
      %v1277 = vld [vmem:[%s888 + $0x12] sm:$0xf]
      %v1278 = vld [vmem:[%s888 + $0x1a] sm:$0xf]
      %v1283 = vcombine.low %v1275, %v1276
      %v1284 = vcombine.low %v1277, %v1278
      %v1287 = vpack.c.bf16 %v1284, %v1283
      %s1288 = scalar_lea.vmem %s5, 20
      %v1289 = vld [vmem:[%s1288] sm:$0xf]
      %v1291 = vsel %vm968, %v1287, 0
      %v1294 = vsel %vm972, %v1289, 0
      %1296 = vmatprep.subr.bf16.mxu0 0
      %1297 = vmatpush1.bf16.msra.mxu0 0
      %1298 = vmatprep.subr.bf16.mxu0 0
      %1299 = vmatpush1.bf16.msra.mxu0 0
      %1300 = vmatprep.subr.bf16.mxu0 0
      %1301 = vmatpush1.bf16.msra.mxu0 0
      %1302 = vmatprep.subr.bf16.mxu0 0
      %1303 = vmatpush1.bf16.msra.mxu0 0
      %1304 = vmatprep.subr.bf16.mxu0 0
      %1305 = vmatpush1.bf16.msra.mxu0 0
      %1306 = vmatprep.subr.bf16.mxu0 0
      %1307 = vmatpush1.bf16.msra.mxu0 0
      %1308 = vmatprep.subr.bf16.mxu0 0
      %1309 = vmatpush1.bf16.msra.mxu0 0
      %1310 = vmatprep.subr.bf16.mxu0 0
      %1311 = vmatpush1.bf16.msra.mxu0 %v1294
      %1312 = vmatprep.subr.bf16.mxu0 0
      %1313 = vmatpush2.bf16.msra.mxu0 0
      %1314 = vmatprep.subr.bf16.mxu0 0
      %1315 = vmatpush2.bf16.msra.mxu0 0
      %1316 = vmatprep.subr.bf16.mxu0 0
      %1317 = vmatpush2.bf16.msra.mxu0 0
      %1318 = vmatprep.subr.bf16.mxu0 0
      %1319 = vmatpush2.bf16.msra.mxu0 0
      %1320 = vmatprep.subr.bf16.mxu0 0
      %1321 = vmatpush2.bf16.msra.mxu0 0
      %1322 = vmatprep.subr.bf16.mxu0 0
      %1323 = vmatpush2.bf16.msra.mxu0 0
      %1324 = vmatprep.subr.bf16.mxu0 0
      %1325 = vmatpush2.bf16.msra.mxu0 0
      %1326 = vmatprep.subr.bf16.mxu0 0
      %1327 = vmatpush2.bf16.msra.mxu0 0
      %1328 = vmatprep.mubr.bf16.mxu0 0
      %1329 = vmatmul.mubr.bf16.gmra.mxu0 %v1291
      %v1330 = vpop.f32.mrf.mxu0
      %v1331 = vadd.f32 0.0, %v1330
      %v1332 = vpop.f32.mrf.mxu0
      %v1333 = vpop.f32.mrf.mxu0
      %v1334 = vadd.f32 0.0, %v1333
      %v1335 = vpop.f32.mrf.mxu0
      %1336 = vdwg.mxu0
      %v1337 = vadd.f32 %v1273, %v1331
      %v1338 = vadd.f32 %v1274, %v1334
      %s1339 = scalar_lea.vmem [#allocation2], 16
      %v1340 = vld [vmem:[%s1339] sm:$0xf]
      %v1341 = vld [vmem:[%s1339 + $0x8] sm:$0xf]
      %v1342 = vld [vmem:[%s1339 + $0x10] sm:$0xf]
      %v1343 = vld [vmem:[%s1339 + $0x18] sm:$0xf]
      %v1348 = vcombine.low %v1340, %v1341
      %v1349 = vcombine.low %v1342, %v1343
      %v1352 = vpack.c.bf16 %v1349, %v1348
      %s1353 = scalar_lea.vmem %s5, 24
      %v1354 = vld [vmem:[%s1353] sm:$0xf]
      %v1356 = vsel %vm968, %v1352, 0
      %v1359 = vsel %vm972, %v1354, 0
      %1361 = vmatprep.subr.bf16.mxu0 0
      %1362 = vmatpush1.bf16.msra.mxu0 0
      %1363 = vmatprep.subr.bf16.mxu0 0
      %1364 = vmatpush1.bf16.msra.mxu0 0
      %1365 = vmatprep.subr.bf16.mxu0 0
      %1366 = vmatpush1.bf16.msra.mxu0 0
      %1367 = vmatprep.subr.bf16.mxu0 0
      %1368 = vmatpush1.bf16.msra.mxu0 0
      %1369 = vmatprep.subr.bf16.mxu0 0
      %1370 = vmatpush1.bf16.msra.mxu0 0
      %1371 = vmatprep.subr.bf16.mxu0 0
      %1372 = vmatpush1.bf16.msra.mxu0 0
      %1373 = vmatprep.subr.bf16.mxu0 0
      %1374 = vmatpush1.bf16.msra.mxu0 0
      %1375 = vmatprep.subr.bf16.mxu0 0
      %1376 = vmatpush1.bf16.msra.mxu0 %v1359
      %1377 = vmatprep.subr.bf16.mxu0 0
      %1378 = vmatpush2.bf16.msra.mxu0 0
      %1379 = vmatprep.subr.bf16.mxu0 0
      %1380 = vmatpush2.bf16.msra.mxu0 0
      %1381 = vmatprep.subr.bf16.mxu0 0
      %1382 = vmatpush2.bf16.msra.mxu0 0
      %1383 = vmatprep.subr.bf16.mxu0 0
      %1384 = vmatpush2.bf16.msra.mxu0 0
      %1385 = vmatprep.subr.bf16.mxu0 0
      %1386 = vmatpush2.bf16.msra.mxu0 0
      %1387 = vmatprep.subr.bf16.mxu0 0
      %1388 = vmatpush2.bf16.msra.mxu0 0
      %1389 = vmatprep.subr.bf16.mxu0 0
      %1390 = vmatpush2.bf16.msra.mxu0 0
      %1391 = vmatprep.subr.bf16.mxu0 0
      %1392 = vmatpush2.bf16.msra.mxu0 0
      %1393 = vmatprep.mubr.bf16.mxu0 0
      %1394 = vmatmul.mubr.bf16.gmra.mxu0 %v1356
      %v1395 = vpop.f32.mrf.mxu0
      %v1396 = vadd.f32 0.0, %v1395
      %v1397 = vpop.f32.mrf.mxu0
      %v1398 = vpop.f32.mrf.mxu0
      %v1399 = vadd.f32 0.0, %v1398
      %v1400 = vpop.f32.mrf.mxu0
      %1401 = vdwg.mxu0
      %v1402 = vadd.f32 %v1337, %v1396
      %v1403 = vadd.f32 %v1338, %v1399
      %v1404 = vld [vmem:[%s1339 + $0x1] sm:$0xf]
      %v1405 = vld [vmem:[%s1339 + $0x9] sm:$0xf]
      %v1406 = vld [vmem:[%s1339 + $0x11] sm:$0xf]
      %v1407 = vld [vmem:[%s1339 + $0x19] sm:$0xf]
      %v1412 = vcombine.low %v1404, %v1405
      %v1413 = vcombine.low %v1406, %v1407
      %v1416 = vpack.c.bf16 %v1413, %v1412
      %s1417 = scalar_lea.vmem %s5, 28
      %v1418 = vld [vmem:[%s1417] sm:$0xf]
      %v1420 = vsel %vm968, %v1416, 0
      %v1423 = vsel %vm972, %v1418, 0
      %1425 = vmatprep.subr.bf16.mxu0 0
      %1426 = vmatpush1.bf16.msra.mxu0 0
      %1427 = vmatprep.subr.bf16.mxu0 0
      %1428 = vmatpush1.bf16.msra.mxu0 0
      %1429 = vmatprep.subr.bf16.mxu0 0
      %1430 = vmatpush1.bf16.msra.mxu0 0
      %1431 = vmatprep.subr.bf16.mxu0 0
      %1432 = vmatpush1.bf16.msra.mxu0 0
      %1433 = vmatprep.subr.bf16.mxu0 0
      %1434 = vmatpush1.bf16.msra.mxu0 0
      %1435 = vmatprep.subr.bf16.mxu0 0
      %1436 = vmatpush1.bf16.msra.mxu0 0
      %1437 = vmatprep.subr.bf16.mxu0 0
      %1438 = vmatpush1.bf16.msra.mxu0 0
      %1439 = vmatprep.subr.bf16.mxu0 0
      %1440 = vmatpush1.bf16.msra.mxu0 %v1423
      %1441 = vmatprep.subr.bf16.mxu0 0
      %1442 = vmatpush2.bf16.msra.mxu0 0
      %1443 = vmatprep.subr.bf16.mxu0 0
      %1444 = vmatpush2.bf16.msra.mxu0 0
      %1445 = vmatprep.subr.bf16.mxu0 0
      %1446 = vmatpush2.bf16.msra.mxu0 0
      %1447 = vmatprep.subr.bf16.mxu0 0
      %1448 = vmatpush2.bf16.msra.mxu0 0
      %1449 = vmatprep.subr.bf16.mxu0 0
      %1450 = vmatpush2.bf16.msra.mxu0 0
      %1451 = vmatprep.subr.bf16.mxu0 0
      %1452 = vmatpush2.bf16.msra.mxu0 0
      %1453 = vmatprep.subr.bf16.mxu0 0
      %1454 = vmatpush2.bf16.msra.mxu0 0
      %1455 = vmatprep.subr.bf16.mxu0 0
      %1456 = vmatpush2.bf16.msra.mxu0 0
      %1457 = vmatprep.mubr.bf16.mxu0 0
      %1458 = vmatmul.mubr.bf16.gmra.mxu0 %v1420
      %v1459 = vpop.f32.mrf.mxu0
      %v1460 = vadd.f32 0.0, %v1459
      %v1461 = vpop.f32.mrf.mxu0
      %v1462 = vpop.f32.mrf.mxu0
      %v1463 = vadd.f32 0.0, %v1462
      %v1464 = vpop.f32.mrf.mxu0
      %1465 = vdwg.mxu0
      %v1466 = vadd.f32 %v1402, %v1460
      %v1467 = vadd.f32 %v1403, %v1463
      %v1468 = vld [vmem:[%s1339 + $0x2] sm:$0xf]
      %v1469 = vld [vmem:[%s1339 + $0xa] sm:$0xf]
      %v1470 = vld [vmem:[%s1339 + $0x12] sm:$0xf]
      %v1471 = vld [vmem:[%s1339 + $0x1a] sm:$0xf]
      %v1476 = vcombine.low %v1468, %v1469
      %v1477 = vcombine.low %v1470, %v1471
      %v1480 = vpack.c.bf16 %v1477, %v1476
      %s1481 = scalar_lea.vmem %s5, 32
      %v1482 = vld [vmem:[%s1481] sm:$0xf]
      %v1484 = vsel %vm968, %v1480, 0
      %v1487 = vsel %vm972, %v1482, 0
      %1489 = vmatprep.subr.bf16.mxu0 0
      %1490 = vmatpush1.bf16.msra.mxu0 0
      %1491 = vmatprep.subr.bf16.mxu0 0
      %1492 = vmatpush1.bf16.msra.mxu0 0
      %1493 = vmatprep.subr.bf16.mxu0 0
      %1494 = vmatpush1.bf16.msra.mxu0 0
      %1495 = vmatprep.subr.bf16.mxu0 0
      %1496 = vmatpush1.bf16.msra.mxu0 0
      %1497 = vmatprep.subr.bf16.mxu0 0
      %1498 = vmatpush1.bf16.msra.mxu0 0
      %1499 = vmatprep.subr.bf16.mxu0 0
      %1500 = vmatpush1.bf16.msra.mxu0 0
      %1501 = vmatprep.subr.bf16.mxu0 0
      %1502 = vmatpush1.bf16.msra.mxu0 0
      %1503 = vmatprep.subr.bf16.mxu0 0
      %1504 = vmatpush1.bf16.msra.mxu0 %v1487
      %1505 = vmatprep.subr.bf16.mxu0 0
      %1506 = vmatpush2.bf16.msra.mxu0 0
      %1507 = vmatprep.subr.bf16.mxu0 0
      %1508 = vmatpush2.bf16.msra.mxu0 0
      %1509 = vmatprep.subr.bf16.mxu0 0
      %1510 = vmatpush2.bf16.msra.mxu0 0
      %1511 = vmatprep.subr.bf16.mxu0 0
      %1512 = vmatpush2.bf16.msra.mxu0 0
      %1513 = vmatprep.subr.bf16.mxu0 0
      %1514 = vmatpush2.bf16.msra.mxu0 0
      %1515 = vmatprep.subr.bf16.mxu0 0
      %1516 = vmatpush2.bf16.msra.mxu0 0
      %1517 = vmatprep.subr.bf16.mxu0 0
      %1518 = vmatpush2.bf16.msra.mxu0 0
      %1519 = vmatprep.subr.bf16.mxu0 0
      %1520 = vmatpush2.bf16.msra.mxu0 0
      %1521 = vmatprep.mubr.bf16.mxu0 0
      %1522 = vmatmul.mubr.bf16.gmra.mxu0 %v1484
      %v1523 = vpop.f32.mrf.mxu0
      %v1524 = vadd.f32 0.0, %v1523
      %v1525 = vpop.f32.mrf.mxu0
      %v1526 = vpop.f32.mrf.mxu0
      %v1527 = vadd.f32 0.0, %v1526
      %v1528 = vpop.f32.mrf.mxu0
      %1529 = vdwg.mxu0
      %v1530 = vadd.f32 %v1466, %v1524
      %v1531 = vadd.f32 %v1467, %v1527
      %v1532 = vmax.f32 %v1530, 0.0
      %v1533 = vmax.f32 %v1531, 0.0
      %1534 = vst.msk [vmem:[%s283] sm:$0xff] %vm968, %v1532
      %1535 = vst.msk [vmem:[%s283 + $0x8] sm:$0xff] %vm968, %v1533
      %p1536 = scmp.lt.s32.totalorder %s18, 7
      %s1537 = scalar_select %p1536, %s18, 7
      %s1538 = smul.addr %s1537, 2
      %s1539 = smul.addr %s1538, 8
      %s1540 = scalar_lea.vmem %s7, %s1539
      // Predicated region
      $region49: #{_lambda_.6} parent=47 // pred_check
        %p1541 = pneg %p188
      $region50: #{_lambda_.6} parent=47 // pred_check_branch
        %1543 = sbr.rel (%p1541) target = $region52
      $region51: #{_lambda_.6} parent=47 // pred_region
        _
      $region52: #{_lambda_.6} parent=47 // pred_fallthru
        _
    $region48: #{_lambda_.6} parent=5 // pred_fallthru
      _
    %p1544 = scmp.le.s32.totalorder 2, %s13
    // Predicated region
    $region53: #{_lambda_.6} parent=5 // pred_check
      %p1545 = pneg %p1544
    $region54: #{_lambda_.6} parent=5 // pred_check_branch
      %1547 = sbr.rel (%p1545) target = $region56
    $region55: #{_lambda_.6} parent=5 // pred_region
      %s1548 = ssub.s32 %s13, 2
      // Predicated region
      $region57: #{_lambda_.6} parent=55 // pred_check
        %p1549 = pneg %p194
      $region58: #{_lambda_.6} parent=55 // pred_check_branch
        %1551 = sbr.rel (%p1549) target = $region60
      $region59: #{_lambda_.6} parent=55 // pred_region
        %p1552 = scmp.lt.s32.totalorder %s19, 7
        %s1553 = scalar_select %p1552, %s19, 7
        %s1554 = smul.addr %s1553, 2
        %s1555 = smul.addr %s1554, 8
        %s1556 = scalar_lea.vmem %s7, %s1555
      $region60: #{_lambda_.6} parent=55 // pred_fallthru
        _
    $region56: #{_lambda_.6} parent=5 // pred_fallthru
      _
  $region6: #{_lambda_.6} parent=0 // loop_footer
    %s17 = sadd.s32 1, %s13
  $region7: #{_lambda_.6} parent=0 // loop_footer_branch
    %12 = sbr.rel target = $region3
  $region8: #{_lambda_.6} parent=0 // loop_exit
    _

// kernel: _lambda_.8
$region0: #{_lambda_.8}
  #allocation0 [shape = 'u32[]', space=smem, size = 0x4, offset = 0x4, fixed_abs, tag = 'smem constant byte address 0x4 - core index']
  #allocation1 [shape = 'u32[144,128]{1,0:T(1,128)}', space=vmem, size = 0x12000, scoped, tag = 'internal scratch']
  %s0 = inlined_call_operand.vmem [shape: f32[8,64], index: 0, kind: input, shape index: {}]
  %s1 = inlined_call_operand.vmem [shape: bf16[64,128], index: 1, kind: input, shape index: {}]
  %s2 = inlined_call_operand.vmem [shape: f32[1,128], index: 2, kind: input, shape index: {}]
  %s3 = inlined_call_operand.vmem [shape: f32[8,128], index: 3, kind: output, shape index: {}]
  %s4 = sld [smem:[#allocation0]]
  $region22: #{_lambda_.8} parent=0
    _
  %s6 = ssub.s32 1, %s4
  %s7 = scalar_select 0, %s6, %s4
  // Predicated region
  $region2: #{_lambda_.8} parent=0 // pred_check
    _
  $region3: #{_lambda_.8} parent=0 // pred_check_branch
    %9 = sbr.rel (0) target = $region5
  $region4: #{_lambda_.8} parent=0 // pred_region
    _
  $region5: #{_lambda_.8} parent=0 // pred_fallthru
    _
  // Predicated region
  $region6: #{_lambda_.8} parent=0 // pred_check
    _
  $region7: #{_lambda_.8} parent=0 // pred_check_branch
    %11 = sbr.rel (0) target = $region9
  $region8: #{_lambda_.8} parent=0 // pred_region
    _
  $region9: #{_lambda_.8} parent=0 // pred_fallthru
    _
  // Predicated region
  $region10: #{_lambda_.8} parent=0 // pred_check
    _
  $region11: #{_lambda_.8} parent=0 // pred_check_branch
    %13 = sbr.rel (0) target = $region13
  $region12: #{_lambda_.8} parent=0 // pred_region
    _
  $region13: #{_lambda_.8} parent=0 // pred_fallthru
    _
  %v15 = vld [vmem:[%s0] sm:$0xff]
  %v16 = vpack.c.bf16 %v15, %v15
  %v17 = vld [vmem:[%s1] sm:$0xf]
  %v18 = vld [vmem:[%s1 + $0x4] sm:$0xf]
  %v19 = vld [vmem:[%s1 + $0x8] sm:$0xf]
  %v20 = vld [vmem:[%s1 + $0xc] sm:$0xf]
  %v21 = vld [vmem:[%s1 + $0x10] sm:$0xf]
  %v22 = vld [vmem:[%s1 + $0x14] sm:$0xf]
  %v23 = vld [vmem:[%s1 + $0x18] sm:$0xf]
  %v24 = vld [vmem:[%s1 + $0x1c] sm:$0xf]
  %v25 = vld [vmem:[%s2] sm:$0x1]
  %v27 = vlaneseq
  %v28 = vshrl.u32 %v27, 7
  %v29 = vsub.s32 0, %v28
  %v30 = vrot.slane %v25, %v29
  %v40 = vunpack.c.l.b16 %v17
  %v41 = vunpack.c.l.b16 %v18
  %v42 = vunpack.c.l.b16 %v19
  %v43 = vunpack.c.l.b16 %v20
  %v44 = vunpack.c.l.b16 %v21
  %v45 = vunpack.c.l.b16 %v22
  %v46 = vunpack.c.l.b16 %v23
  %v47 = vunpack.c.l.b16 %v24
  %v48 = vpack.c.b16 %v41, %v40
  %v49 = vpack.c.b16 %v43, %v42
  %v50 = vpack.c.b16 %v45, %v44
  %v51 = vpack.c.b16 %v47, %v46
  %vm56 = vcmask 523264
  %v58 = vsel %vm56, %v16, 0
  %60 = vmatprep.subr.bf16.mxu0 0
  %61 = vmatpush1.bf16.msra.mxu0 0
  %62 = vmatprep.subr.bf16.mxu0 0
  %63 = vmatpush1.bf16.msra.mxu0 0
  %64 = vmatprep.subr.bf16.mxu0 0
  %65 = vmatpush1.bf16.msra.mxu0 0
  %66 = vmatprep.subr.bf16.mxu0 0
  %67 = vmatpush1.bf16.msra.mxu0 0
  %68 = vmatprep.subr.bf16.mxu0 0
  %69 = vmatpush1.bf16.msra.mxu0 %v51
  %70 = vmatprep.subr.bf16.mxu0 0
  %71 = vmatpush1.bf16.msra.mxu0 %v50
  %72 = vmatprep.subr.bf16.mxu0 0
  %73 = vmatpush1.bf16.msra.mxu0 %v49
  %74 = vmatprep.subr.bf16.mxu0 0
  %75 = vmatpush1.bf16.msra.mxu0 %v48
  %76 = vmatprep.subr.bf16.mxu0 0
  %77 = vmatpush2.bf16.msra.mxu0 0
  %78 = vmatprep.subr.bf16.mxu0 0
  %79 = vmatpush2.bf16.msra.mxu0 0
  %80 = vmatprep.subr.bf16.mxu0 0
  %81 = vmatpush2.bf16.msra.mxu0 0
  %82 = vmatprep.subr.bf16.mxu0 0
  %83 = vmatpush2.bf16.msra.mxu0 0
  %84 = vmatprep.subr.bf16.mxu0 0
  %85 = vmatpush2.bf16.msra.mxu0 0
  %86 = vmatprep.subr.bf16.mxu0 0
  %87 = vmatpush2.bf16.msra.mxu0 0
  %88 = vmatprep.subr.bf16.mxu0 0
  %89 = vmatpush2.bf16.msra.mxu0 0
  %90 = vmatprep.subr.bf16.mxu0 0
  %91 = vmatpush2.bf16.msra.mxu0 0
  %92 = vmatprep.mubr.bf16.mxu0 0
  %93 = vmatmul.mubr.bf16.gmra.mxu0 %v58
  %v94 = vpop.f32.mrf.mxu0
  %v95 = vadd.f32 %v30, %v94
  %v96 = vpop.f32.mrf.mxu0
  %v97 = vpop.f32.mrf.mxu0
  %v98 = vpop.f32.mrf.mxu0
  %99 = vdwg.mxu0
  %100 = vst [vmem:[%s3] sm:$0xff] %v95
  // Predicated region
  $region14: #{_lambda_.8} parent=0 // pred_check
    _
  $region15: #{_lambda_.8} parent=0 // pred_check_branch
    %102 = sbr.rel (0) target = $region17
  $region16: #{_lambda_.8} parent=0 // pred_region
    _
  $region17: #{_lambda_.8} parent=0 // pred_fallthru
    _
  // Predicated region
  $region18: #{_lambda_.8} parent=0 // pred_check
    _
  $region19: #{_lambda_.8} parent=0 // pred_check_branch
    %104 = sbr.rel (0) target = $region21
  $region20: #{_lambda_.8} parent=0 // pred_region
    _
  $region21: #{_lambda_.8} parent=0 // pred_fallthru
    _

// kernel: _lambda_.7
$region0: #{_lambda_.7}
  #allocation0 [shape = 'u32[]', space=smem, size = 0x4, offset = 0x4, fixed_abs, tag = 'smem constant byte address 0x4 - core index']
  #allocation1 [shape = 'u32[144,128]{1,0:T(1,128)}', space=vmem, size = 0x12000, scoped, tag = 'internal scratch']
  #allocation2 [shape = 'f32[4,4,16]{2,1,0:T(4,128)}', space=vmem, size = 0x2000, scoped, tag = 'scratch operand']
  %s0 = inlined_call_operand.vmem [shape: f32[32,3,3,8], index: 0, kind: input, shape index: {}]
  %s1 = inlined_call_operand.vmem [shape: bf16[9,8,16], index: 1, kind: input, shape index: {}]
  %s2 = inlined_call_operand.vmem [shape: bf16[8,16], index: 2, kind: input, shape index: {}]
  %s3 = inlined_call_operand.vmem [shape: f32[1,16], index: 3, kind: input, shape index: {}]
  %s4 = inlined_call_operand.vmem [shape: f32[1,16], index: 4, kind: input, shape index: {}]
  %s5 = inlined_call_operand.vmem [shape: bf16[9,16,16], index: 5, kind: input, shape index: {}]
  %s6 = inlined_call_operand.vmem [shape: f32[1,16], index: 6, kind: input, shape index: {}]
  %s7 = inlined_call_operand.vmem [shape: f32[8,4,16], index: 7, kind: output, shape index: {}]
  %s8 = sld [smem:[#allocation0]]
  $region61: #{_lambda_.7} parent=0
    _
  %s10 = ssub.s32 1, %s8
  %s11 = scalar_select 0, %s10, %s8
  loop: start=0, step=1, limit=10
  $region2: #{_lambda_.7} parent=0 // loop_pre_header
    _
  $region3: #{_lambda_.7} parent=0 // loop_header
    %s13 = sphi 0, %s17
    %p14 = scmp.ge.s32.totalorder %s13, 10
    %s23 = sphi 0, %s25
    %s26 = sphi 0, %s23
    %s27 = sphi 0, %s26
    %s43 = sphi 0, %s27
    %s47 = sphi 0, %s47
    %s49 = sphi 0, %s47
    %s50 = sphi 0, %s49
    %s64 = sphi 0, %s50
    %s68 = sphi 0, %s68
    %s70 = sphi 0, %s68
    %s71 = sphi 0, %s70
    %s85 = sphi 0, %s71
    %s89 = sphi 0, %s89
    %s91 = sphi 0, %s89
    %s92 = sphi 0, %s91
    %s106 = sphi 0, %s92
    %s110 = sphi 0, %s110
    %s112 = sphi 0, %s110
    %s113 = sphi 0, %s112
    %s127 = sphi 0, %s113
    %s131 = sphi 0, %s131
    %s133 = sphi 0, %s131
    %s134 = sphi 0, %s133
    %s148 = sphi 0, %s134
    %s152 = sphi 0, %s152
    %s154 = sphi 0, %s152
    %s155 = sphi 0, %s154
    %s169 = sphi 0, %s155
    %s175 = sphi 0, %s177
    %s178 = sphi 0, %s175
    %s179 = sphi 0, %s178
    %s195 = sphi 0, %s179
  $region4: #{_lambda_.7} parent=0 // loop_header_branch
    %16 = sbr.rel (%p14) target = $region8
  $region5: #{_lambda_.7} parent=0 // loop_body
    %s18 = ssub.s32 %s13, 1
    %s19 = ssub.s32 %s13, 2
    %s20 = sadd.s32 %s13, 1
    %s21 = ssub.s32 %s13, %s20
    %p22 = scmp.eq.s32.totalorder %s21, 0
    %s24 = sadd.s32 %s23, 1
    %s25 = scalar_select %p22, %s23, %s24
    %p28 = pneg %p22
    %p29 = scmp.eq.s32.totalorder %s13, 7
    %p30 = por %p28, %p29
    %p31 = scmp.ne.s32.totalorder %s23, %s26
    %p32 = scmp.eq.s32.totalorder %s13, 0
    %p33 = por %p31, %p32
    %p34 = scmp.ne.s32.totalorder %s23, %s26
    %p35 = scmp.eq.s32.totalorder %s18, 7
    %p36 = por %p34, %p35
    %p37 = scmp.ne.s32.totalorder %s26, %s27
    %p38 = scmp.eq.s32.totalorder %s18, 0
    %p39 = por %p37, %p38
    %p40 = scmp.ne.s32.totalorder %s26, %s27
    %p41 = scmp.eq.s32.totalorder %s19, 7
    %p42 = por %p40, %p41
    %p44 = scmp.ne.s32.totalorder %s27, %s43
    %p45 = scmp.eq.s32.totalorder %s19, 0
    %p46 = por %p44, %p45
    %s48 = sadd.s32 %s47, 1
    %p51 = scmp.eq.s32.totalorder %s13, 7
    %p52 = scmp.ne.s32.totalorder %s47, %s49
    %p53 = scmp.eq.s32.totalorder %s13, 0
    %p54 = por %p52, %p53
    %p55 = scmp.ne.s32.totalorder %s47, %s49
    %p56 = scmp.eq.s32.totalorder %s18, 7
    %p57 = por %p55, %p56
    %p58 = scmp.ne.s32.totalorder %s49, %s50
    %p59 = scmp.eq.s32.totalorder %s18, 0
    %p60 = por %p58, %p59
    %p61 = scmp.ne.s32.totalorder %s49, %s50
    %p62 = scmp.eq.s32.totalorder %s19, 7
    %p63 = por %p61, %p62
    %p65 = scmp.ne.s32.totalorder %s50, %s64
    %p66 = scmp.eq.s32.totalorder %s19, 0
    %p67 = por %p65, %p66
    %s69 = sadd.s32 %s68, 1
    %p72 = scmp.eq.s32.totalorder %s13, 7
    %p73 = scmp.ne.s32.totalorder %s68, %s70
    %p74 = scmp.eq.s32.totalorder %s13, 0
    %p75 = por %p73, %p74
    %p76 = scmp.ne.s32.totalorder %s68, %s70
    %p77 = scmp.eq.s32.totalorder %s18, 7
    %p78 = por %p76, %p77
    %p79 = scmp.ne.s32.totalorder %s70, %s71
    %p80 = scmp.eq.s32.totalorder %s18, 0
    %p81 = por %p79, %p80
    %p82 = scmp.ne.s32.totalorder %s70, %s71
    %p83 = scmp.eq.s32.totalorder %s19, 7
    %p84 = por %p82, %p83
    %p86 = scmp.ne.s32.totalorder %s71, %s85
    %p87 = scmp.eq.s32.totalorder %s19, 0
    %p88 = por %p86, %p87
    %s90 = sadd.s32 %s89, 1
    %p93 = scmp.eq.s32.totalorder %s13, 7
    %p94 = scmp.ne.s32.totalorder %s89, %s91
    %p95 = scmp.eq.s32.totalorder %s13, 0
    %p96 = por %p94, %p95
    %p97 = scmp.ne.s32.totalorder %s89, %s91
    %p98 = scmp.eq.s32.totalorder %s18, 7
    %p99 = por %p97, %p98
    %p100 = scmp.ne.s32.totalorder %s91, %s92
    %p101 = scmp.eq.s32.totalorder %s18, 0
    %p102 = por %p100, %p101
    %p103 = scmp.ne.s32.totalorder %s91, %s92
    %p104 = scmp.eq.s32.totalorder %s19, 7
    %p105 = por %p103, %p104
    %p107 = scmp.ne.s32.totalorder %s92, %s106
    %p108 = scmp.eq.s32.totalorder %s19, 0
    %p109 = por %p107, %p108
    %s111 = sadd.s32 %s110, 1
    %p114 = scmp.eq.s32.totalorder %s13, 7
    %p115 = scmp.ne.s32.totalorder %s110, %s112
    %p116 = scmp.eq.s32.totalorder %s13, 0
    %p117 = por %p115, %p116
    %p118 = scmp.ne.s32.totalorder %s110, %s112
    %p119 = scmp.eq.s32.totalorder %s18, 7
    %p120 = por %p118, %p119
    %p121 = scmp.ne.s32.totalorder %s112, %s113
    %p122 = scmp.eq.s32.totalorder %s18, 0
    %p123 = por %p121, %p122
    %p124 = scmp.ne.s32.totalorder %s112, %s113
    %p125 = scmp.eq.s32.totalorder %s19, 7
    %p126 = por %p124, %p125
    %p128 = scmp.ne.s32.totalorder %s113, %s127
    %p129 = scmp.eq.s32.totalorder %s19, 0
    %p130 = por %p128, %p129
    %s132 = sadd.s32 %s131, 1
    %p135 = scmp.eq.s32.totalorder %s13, 7
    %p136 = scmp.ne.s32.totalorder %s131, %s133
    %p137 = scmp.eq.s32.totalorder %s13, 0
    %p138 = por %p136, %p137
    %p139 = scmp.ne.s32.totalorder %s131, %s133
    %p140 = scmp.eq.s32.totalorder %s18, 7
    %p141 = por %p139, %p140
    %p142 = scmp.ne.s32.totalorder %s133, %s134
    %p143 = scmp.eq.s32.totalorder %s18, 0
    %p144 = por %p142, %p143
    %p145 = scmp.ne.s32.totalorder %s133, %s134
    %p146 = scmp.eq.s32.totalorder %s19, 7
    %p147 = por %p145, %p146
    %p149 = scmp.ne.s32.totalorder %s134, %s148
    %p150 = scmp.eq.s32.totalorder %s19, 0
    %p151 = por %p149, %p150
    %s153 = sadd.s32 %s152, 1
    %p156 = scmp.eq.s32.totalorder %s13, 7
    %p157 = scmp.ne.s32.totalorder %s152, %s154
    %p158 = scmp.eq.s32.totalorder %s13, 0
    %p159 = por %p157, %p158
    %p160 = scmp.ne.s32.totalorder %s152, %s154
    %p161 = scmp.eq.s32.totalorder %s18, 7
    %p162 = por %p160, %p161
    %p163 = scmp.ne.s32.totalorder %s154, %s155
    %p164 = scmp.eq.s32.totalorder %s18, 0
    %p165 = por %p163, %p164
    %p166 = scmp.ne.s32.totalorder %s154, %s155
    %p167 = scmp.eq.s32.totalorder %s19, 7
    %p168 = por %p166, %p167
    %p170 = scmp.ne.s32.totalorder %s155, %s169
    %p171 = scmp.eq.s32.totalorder %s19, 0
    %p172 = por %p170, %p171
    %s173 = ssub.s32 %s13, %s20
    %p174 = scmp.eq.s32.totalorder %s173, 0
    %s176 = sadd.s32 %s175, 1
    %s177 = scalar_select %p174, %s175, %s176
    %p180 = pneg %p174
    %p181 = scmp.eq.s32.totalorder %s13, 7
    %p182 = por %p180, %p181
    %p183 = scmp.ne.s32.totalorder %s175, %s178
    %p184 = scmp.eq.s32.totalorder %s13, 0
    %p185 = por %p183, %p184
    %p186 = scmp.ne.s32.totalorder %s175, %s178
    %p187 = scmp.eq.s32.totalorder %s18, 7
    %p188 = por %p186, %p187
    %p189 = scmp.ne.s32.totalorder %s178, %s179
    %p190 = scmp.eq.s32.totalorder %s18, 0
    %p191 = por %p189, %p190
    %p192 = scmp.ne.s32.totalorder %s178, %s179
    %p193 = scmp.eq.s32.totalorder %s19, 7
    %p194 = por %p192, %p193
    %p196 = scmp.ne.s32.totalorder %s179, %s195
    %p197 = scmp.eq.s32.totalorder %s19, 0
    %p198 = por %p196, %p197
    %p199 = scmp.le.s32.totalorder 1, %s13
    %p200 = scmp.lt.s32.totalorder %s13, 9
    %p201 = pnand %p199, %p200
    %p202 = pneg %p201
    // Predicated region
    $region9: #{_lambda_.7} parent=5 // pred_check
      _
    $region10: #{_lambda_.7} parent=5 // pred_check_branch
      %204 = sbr.rel (%p201) target = $region12
    $region11: #{_lambda_.7} parent=5 // pred_region
      %s205 = ssub.s32 %s13, 1
      // Predicated region
      $region13: #{_lambda_.7} parent=11 // pred_check
        %p206 = pneg %p60
      $region14: #{_lambda_.7} parent=11 // pred_check_branch
        %208 = sbr.rel (%p206) target = $region16
      $region15: #{_lambda_.7} parent=11 // pred_region
        _
      $region16: #{_lambda_.7} parent=11 // pred_fallthru
        _
      // Predicated region
      $region17: #{_lambda_.7} parent=11 // pred_check
        %p209 = pneg %p81
      $region18: #{_lambda_.7} parent=11 // pred_check_branch
        %211 = sbr.rel (%p209) target = $region20
      $region19: #{_lambda_.7} parent=11 // pred_region
        _
      $region20: #{_lambda_.7} parent=11 // pred_fallthru
        _
      // Predicated region
      $region21: #{_lambda_.7} parent=11 // pred_check
        %p212 = pneg %p102
      $region22: #{_lambda_.7} parent=11 // pred_check_branch
        %214 = sbr.rel (%p212) target = $region24
      $region23: #{_lambda_.7} parent=11 // pred_region
        _
      $region24: #{_lambda_.7} parent=11 // pred_fallthru
        _
      // Predicated region
      $region25: #{_lambda_.7} parent=11 // pred_check
        %p215 = pneg %p123
      $region26: #{_lambda_.7} parent=11 // pred_check_branch
        %217 = sbr.rel (%p215) target = $region28
      $region27: #{_lambda_.7} parent=11 // pred_region
        _
      $region28: #{_lambda_.7} parent=11 // pred_fallthru
        _
      // Predicated region
      $region29: #{_lambda_.7} parent=11 // pred_check
        %p218 = pneg %p144
      $region30: #{_lambda_.7} parent=11 // pred_check_branch
        %220 = sbr.rel (%p218) target = $region32
      $region31: #{_lambda_.7} parent=11 // pred_region
        _
      $region32: #{_lambda_.7} parent=11 // pred_fallthru
        _
      // Predicated region
      $region33: #{_lambda_.7} parent=11 // pred_check
        %p221 = pneg %p165
      $region34: #{_lambda_.7} parent=11 // pred_check_branch
        %223 = sbr.rel (%p221) target = $region36
      $region35: #{_lambda_.7} parent=11 // pred_region
        _
      $region36: #{_lambda_.7} parent=11 // pred_fallthru
        _
    $region12: #{_lambda_.7} parent=5 // pred_fallthru
      _
    %p224 = scmp.lt.s32.totalorder %s13, 8
    // Predicated region
    $region37: #{_lambda_.7} parent=5 // pred_check
      %p225 = pneg %p224
    $region38: #{_lambda_.7} parent=5 // pred_check_branch
      %227 = sbr.rel (%p225) target = $region40
    $region39: #{_lambda_.7} parent=5 // pred_region
      // Predicated region
      $region41: #{_lambda_.7} parent=39 // pred_check
        %p228 = pneg %p33
      $region42: #{_lambda_.7} parent=39 // pred_check_branch
        %230 = sbr.rel (%p228) target = $region44
      $region43: #{_lambda_.7} parent=39 // pred_region
        %s231 = smul.u32 4, %s13
        %p232 = scmp.lt.s32.totalorder %s231, 31
        %s233 = scalar_select %p232, %s231, 31
        %s234 = smul.addr %s233, 3
        %s235 = smul.addr %s234, 4
        %s236 = scalar_lea.vmem %s0, %s235
        %s237 = smul.u32 4, %s13
      $region44: #{_lambda_.7} parent=39 // pred_fallthru
        _
    $region40: #{_lambda_.7} parent=5 // pred_fallthru
      _
    %p238 = scmp.le.s32.totalorder 1, %s13
    %p239 = scmp.lt.s32.totalorder %s13, 9
    %p240 = pnand %p238, %p239
    %p241 = pneg %p240
    // Predicated region
    $region45: #{_lambda_.7} parent=5 // pred_check
      _
    $region46: #{_lambda_.7} parent=5 // pred_check_branch
      %243 = sbr.rel (%p240) target = $region48
    $region47: #{_lambda_.7} parent=5 // pred_region
      %s244 = ssub.s32 %s13, 1
      %s245 = smul.u32 4, %s18
      %p246 = scmp.lt.s32.totalorder %s245, 31
      %s247 = scalar_select %p246, %s245, 31
      %s248 = smul.addr %s247, 3
      %s249 = smul.addr %s248, 4
      %s250 = scalar_lea.vmem %s0, %s249
      %p251 = pneg %p39
      %p252 = pneg %p36
      %p253 = pneg %p60
      %p254 = pneg %p57
      %p255 = pneg %p81
      %p256 = pneg %p78
      %p257 = pneg %p102
      %p258 = pneg %p99
      %p259 = pneg %p123
      %p260 = pneg %p120
      %p261 = pneg %p144
      %p262 = pneg %p141
      %p263 = pneg %p165
      %p264 = pneg %p162
      %p265 = pneg %p191
      %p266 = pneg %p188
      %p267 = scmp.lt.s32.totalorder %s18, 7
      %s268 = scalar_select %p267, %s18, 7
      %s269 = smul.addr %s268, 4
      %s270 = scalar_lea.vmem %s7, %s269
      %s271 = smul.u32 4, %s18
      %p272 = scmp.lt.s32.totalorder %s271, 31
      %s273 = scalar_select %p272, %s271, 31
      %s274 = smul.addr %s273, 3
      %s275 = smul.addr %s274, 4
      %s276 = scalar_lea.vmem %s0, %s275
      %s277 = smul.u32 4, %s18
      %p278 = scmp.lt.s32.totalorder %s18, 7
      %s279 = scalar_select %p278, %s18, 7
      %s280 = smul.addr %s279, 4
      %s281 = scalar_lea.vmem %s7, %s280
      %v283 = vld [vmem:[%s276] sm:$0x3]
      %v284 = vld [vmem:[%s276 + $0x4] sm:$0x3]
      %v287 = vcombine.low %v283, %v284
      %v289 = vunpack.c.l.s4 1983009808
      %v290 = vunpack.c.0.s8 %v289
      %v291 = vlaneseq
      %v292 = vshrl.u32 %v291, 7
      %v293 = vsub.s32 %v290, %v292
      %v294 = vrot.slane %v287, %v293
      %v296 = vpack.c.bf16 %v294, %v294
      %v297 = vld [vmem:[%s1] sm:$0xf]
      %s298 = scalar_lea.vmem %s276, 12
      %v299 = vld [vmem:[%s298] sm:$0x3]
      %v300 = vld [vmem:[%s298 + $0x4] sm:$0x3]
      %v303 = vcombine.low %v299, %v300
      %v305 = vunpack.c.l.s4 1983009808
      %v306 = vunpack.c.0.s8 %v305
      %v307 = vlaneseq
      %v308 = vshrl.u32 %v307, 7
      %v309 = vsub.s32 %v306, %v308
      %v310 = vrot.slane %v303, %v309
      %v312 = vpack.c.bf16 %v310, %v310
      %s313 = scalar_lea.vmem %s1, 4
      %v314 = vld [vmem:[%s313] sm:$0xf]
      %vm315 = vcmask 64512
      %v317 = vsel %vm315, %v312, 0
      %vm319 = vcmask 1043456
      %v321 = vsel %vm319, %v314, 0
      %323 = vmatprep.subr.bf16.mxu0 0
      %324 = vmatpush1.bf16.msra.mxu0 0
      %325 = vmatprep.subr.bf16.mxu0 0
      %326 = vmatpush1.bf16.msra.mxu0 0
      %327 = vmatprep.subr.bf16.mxu0 0
      %328 = vmatpush1.bf16.msra.mxu0 0
      %329 = vmatprep.subr.bf16.mxu0 0
      %330 = vmatpush1.bf16.msra.mxu0 0
      %331 = vmatprep.subr.bf16.mxu0 0
      %332 = vmatpush1.bf16.msra.mxu0 0
      %333 = vmatprep.subr.bf16.mxu0 0
      %334 = vmatpush1.bf16.msra.mxu0 0
      %335 = vmatprep.subr.bf16.mxu0 0
      %336 = vmatpush1.bf16.msra.mxu0 0
      %337 = vmatprep.subr.bf16.mxu0 0
      %338 = vmatpush1.bf16.msra.mxu0 %v321
      %339 = vmatprep.subr.bf16.mxu0 0
      %340 = vmatpush2.bf16.msra.mxu0 0
      %341 = vmatprep.subr.bf16.mxu0 0
      %342 = vmatpush2.bf16.msra.mxu0 0
      %343 = vmatprep.subr.bf16.mxu0 0
      %344 = vmatpush2.bf16.msra.mxu0 0
      %345 = vmatprep.subr.bf16.mxu0 0
      %346 = vmatpush2.bf16.msra.mxu0 0
      %347 = vmatprep.subr.bf16.mxu0 0
      %348 = vmatpush2.bf16.msra.mxu0 0
      %349 = vmatprep.subr.bf16.mxu0 0
      %350 = vmatpush2.bf16.msra.mxu0 0
      %351 = vmatprep.subr.bf16.mxu0 0
      %352 = vmatpush2.bf16.msra.mxu0 0
      %353 = vmatprep.subr.bf16.mxu0 0
      %354 = vmatpush2.bf16.msra.mxu0 0
      %355 = vmatprep.mubr.bf16.mxu0 0
      %356 = vmatmul.mubr.bf16.gmra.mxu0 %v317
      %v357 = vpop.f32.mrf.mxu0
      %v358 = vadd.f32 0.0, %v357
      %v359 = vpop.f32.mrf.mxu0
      %v360 = vpop.f32.mrf.mxu0
      %v361 = vpop.f32.mrf.mxu0
      %362 = vdwg.mxu0
      %v364 = vsel %vm315, %v296, 0
      %v367 = vsel %vm319, %v297, 0
      %369 = vmatprep.subr.bf16.mxu0 0
      %370 = vmatpush1.bf16.msra.mxu0 0
      %371 = vmatprep.subr.bf16.mxu0 0
      %372 = vmatpush1.bf16.msra.mxu0 0
      %373 = vmatprep.subr.bf16.mxu0 0
      %374 = vmatpush1.bf16.msra.mxu0 0
      %375 = vmatprep.subr.bf16.mxu0 0
      %376 = vmatpush1.bf16.msra.mxu0 0
      %377 = vmatprep.subr.bf16.mxu0 0
      %378 = vmatpush1.bf16.msra.mxu0 0
      %379 = vmatprep.subr.bf16.mxu0 0
      %380 = vmatpush1.bf16.msra.mxu0 0
      %381 = vmatprep.subr.bf16.mxu0 0
      %382 = vmatpush1.bf16.msra.mxu0 0
      %383 = vmatprep.subr.bf16.mxu0 0
      %384 = vmatpush1.bf16.msra.mxu0 %v367
      %385 = vmatprep.subr.bf16.mxu0 0
      %386 = vmatpush2.bf16.msra.mxu0 0
      %387 = vmatprep.subr.bf16.mxu0 0
      %388 = vmatpush2.bf16.msra.mxu0 0
      %389 = vmatprep.subr.bf16.mxu0 0
      %390 = vmatpush2.bf16.msra.mxu0 0
      %391 = vmatprep.subr.bf16.mxu0 0
      %392 = vmatpush2.bf16.msra.mxu0 0
      %393 = vmatprep.subr.bf16.mxu0 0
      %394 = vmatpush2.bf16.msra.mxu0 0
      %395 = vmatprep.subr.bf16.mxu0 0
      %396 = vmatpush2.bf16.msra.mxu0 0
      %397 = vmatprep.subr.bf16.mxu0 0
      %398 = vmatpush2.bf16.msra.mxu0 0
      %399 = vmatprep.subr.bf16.mxu0 0
      %400 = vmatpush2.bf16.msra.mxu0 0
      %401 = vmatprep.mubr.bf16.mxu0 0
      %402 = vmatmul.mubr.bf16.gmra.mxu0 %v364
      %v403 = vpop.f32.mrf.mxu0
      %v404 = vadd.f32 %v358, %v403
      %v405 = vpop.f32.mrf.mxu0
      %v406 = vpop.f32.mrf.mxu0
      %v407 = vpop.f32.mrf.mxu0
      %408 = vdwg.mxu0
      %v409 = vld [vmem:[%s276 + $0x1] sm:$0x3]
      %v410 = vld [vmem:[%s276 + $0x5] sm:$0x3]
      %v413 = vcombine.low %v409, %v410
      %v415 = vunpack.c.l.s4 1983009808
      %v416 = vunpack.c.0.s8 %v415
      %v417 = vlaneseq
      %v418 = vshrl.u32 %v417, 7
      %v419 = vsub.s32 %v416, %v418
      %v420 = vrot.slane %v413, %v419
      %v422 = vpack.c.bf16 %v420, %v420
      %s423 = scalar_lea.vmem %s1, 8
      %v424 = vld [vmem:[%s423] sm:$0xf]
      %v426 = vsel %vm315, %v422, 0
      %v429 = vsel %vm319, %v424, 0
      %431 = vmatprep.subr.bf16.mxu0 0
      %432 = vmatpush1.bf16.msra.mxu0 0
      %433 = vmatprep.subr.bf16.mxu0 0
      %434 = vmatpush1.bf16.msra.mxu0 0
      %435 = vmatprep.subr.bf16.mxu0 0
      %436 = vmatpush1.bf16.msra.mxu0 0
      %437 = vmatprep.subr.bf16.mxu0 0
      %438 = vmatpush1.bf16.msra.mxu0 0
      %439 = vmatprep.subr.bf16.mxu0 0
      %440 = vmatpush1.bf16.msra.mxu0 0
      %441 = vmatprep.subr.bf16.mxu0 0
      %442 = vmatpush1.bf16.msra.mxu0 0
      %443 = vmatprep.subr.bf16.mxu0 0
      %444 = vmatpush1.bf16.msra.mxu0 0
      %445 = vmatprep.subr.bf16.mxu0 0
      %446 = vmatpush1.bf16.msra.mxu0 %v429
      %447 = vmatprep.subr.bf16.mxu0 0
      %448 = vmatpush2.bf16.msra.mxu0 0
      %449 = vmatprep.subr.bf16.mxu0 0
      %450 = vmatpush2.bf16.msra.mxu0 0
      %451 = vmatprep.subr.bf16.mxu0 0
      %452 = vmatpush2.bf16.msra.mxu0 0
      %453 = vmatprep.subr.bf16.mxu0 0
      %454 = vmatpush2.bf16.msra.mxu0 0
      %455 = vmatprep.subr.bf16.mxu0 0
      %456 = vmatpush2.bf16.msra.mxu0 0
      %457 = vmatprep.subr.bf16.mxu0 0
      %458 = vmatpush2.bf16.msra.mxu0 0
      %459 = vmatprep.subr.bf16.mxu0 0
      %460 = vmatpush2.bf16.msra.mxu0 0
      %461 = vmatprep.subr.bf16.mxu0 0
      %462 = vmatpush2.bf16.msra.mxu0 0
      %463 = vmatprep.mubr.bf16.mxu0 0
      %464 = vmatmul.mubr.bf16.gmra.mxu0 %v426
      %v465 = vpop.f32.mrf.mxu0
      %v466 = vadd.f32 0.0, %v465
      %v467 = vpop.f32.mrf.mxu0
      %v468 = vpop.f32.mrf.mxu0
      %v469 = vpop.f32.mrf.mxu0
      %470 = vdwg.mxu0
      %v471 = vadd.f32 %v404, %v466
      %s472 = scalar_lea.vmem %s276, 24
      %v473 = vld [vmem:[%s472] sm:$0x3]
      %v474 = vld [vmem:[%s472 + $0x4] sm:$0x3]
      %v477 = vcombine.low %v473, %v474
      %v479 = vunpack.c.l.s4 1983009808
      %v480 = vunpack.c.0.s8 %v479
      %v481 = vlaneseq
      %v482 = vshrl.u32 %v481, 7
      %v483 = vsub.s32 %v480, %v482
      %v484 = vrot.slane %v477, %v483
      %v486 = vpack.c.bf16 %v484, %v484
      %s487 = scalar_lea.vmem %s1, 12
      %v488 = vld [vmem:[%s487] sm:$0xf]
      %v490 = vsel %vm315, %v486, 0
      %v493 = vsel %vm319, %v488, 0
      %495 = vmatprep.subr.bf16.mxu0 0
      %496 = vmatpush1.bf16.msra.mxu0 0
      %497 = vmatprep.subr.bf16.mxu0 0
      %498 = vmatpush1.bf16.msra.mxu0 0
      %499 = vmatprep.subr.bf16.mxu0 0
      %500 = vmatpush1.bf16.msra.mxu0 0
      %501 = vmatprep.subr.bf16.mxu0 0
      %502 = vmatpush1.bf16.msra.mxu0 0
      %503 = vmatprep.subr.bf16.mxu0 0
      %504 = vmatpush1.bf16.msra.mxu0 0
      %505 = vmatprep.subr.bf16.mxu0 0
      %506 = vmatpush1.bf16.msra.mxu0 0
      %507 = vmatprep.subr.bf16.mxu0 0
      %508 = vmatpush1.bf16.msra.mxu0 0
      %509 = vmatprep.subr.bf16.mxu0 0
      %510 = vmatpush1.bf16.msra.mxu0 %v493
      %511 = vmatprep.subr.bf16.mxu0 0
      %512 = vmatpush2.bf16.msra.mxu0 0
      %513 = vmatprep.subr.bf16.mxu0 0
      %514 = vmatpush2.bf16.msra.mxu0 0
      %515 = vmatprep.subr.bf16.mxu0 0
      %516 = vmatpush2.bf16.msra.mxu0 0
      %517 = vmatprep.subr.bf16.mxu0 0
      %518 = vmatpush2.bf16.msra.mxu0 0
      %519 = vmatprep.subr.bf16.mxu0 0
      %520 = vmatpush2.bf16.msra.mxu0 0
      %521 = vmatprep.subr.bf16.mxu0 0
      %522 = vmatpush2.bf16.msra.mxu0 0
      %523 = vmatprep.subr.bf16.mxu0 0
      %524 = vmatpush2.bf16.msra.mxu0 0
      %525 = vmatprep.subr.bf16.mxu0 0
      %526 = vmatpush2.bf16.msra.mxu0 0
      %527 = vmatprep.mubr.bf16.mxu0 0
      %528 = vmatmul.mubr.bf16.gmra.mxu0 %v490
      %v529 = vpop.f32.mrf.mxu0
      %v530 = vadd.f32 0.0, %v529
      %v531 = vpop.f32.mrf.mxu0
      %v532 = vpop.f32.mrf.mxu0
      %v533 = vpop.f32.mrf.mxu0
      %534 = vdwg.mxu0
      %v535 = vadd.f32 %v471, %v530
      %s536 = scalar_lea.vmem %s276, 36
      %v537 = vld [vmem:[%s536] sm:$0x3]
      %v538 = vld [vmem:[%s536 + $0x4] sm:$0x3]
      %v541 = vcombine.low %v537, %v538
      %v543 = vunpack.c.l.s4 1983009808
      %v544 = vunpack.c.0.s8 %v543
      %v545 = vlaneseq
      %v546 = vshrl.u32 %v545, 7
      %v547 = vsub.s32 %v544, %v546
      %v548 = vrot.slane %v541, %v547
      %v550 = vpack.c.bf16 %v548, %v548
      %s551 = scalar_lea.vmem %s1, 16
      %v552 = vld [vmem:[%s551] sm:$0xf]
      %v554 = vsel %vm315, %v550, 0
      %v557 = vsel %vm319, %v552, 0
      %559 = vmatprep.subr.bf16.mxu0 0
      %560 = vmatpush1.bf16.msra.mxu0 0
      %561 = vmatprep.subr.bf16.mxu0 0
      %562 = vmatpush1.bf16.msra.mxu0 0
      %563 = vmatprep.subr.bf16.mxu0 0
      %564 = vmatpush1.bf16.msra.mxu0 0
      %565 = vmatprep.subr.bf16.mxu0 0
      %566 = vmatpush1.bf16.msra.mxu0 0
      %567 = vmatprep.subr.bf16.mxu0 0
      %568 = vmatpush1.bf16.msra.mxu0 0
      %569 = vmatprep.subr.bf16.mxu0 0
      %570 = vmatpush1.bf16.msra.mxu0 0
      %571 = vmatprep.subr.bf16.mxu0 0
      %572 = vmatpush1.bf16.msra.mxu0 0
      %573 = vmatprep.subr.bf16.mxu0 0
      %574 = vmatpush1.bf16.msra.mxu0 %v557
      %575 = vmatprep.subr.bf16.mxu0 0
      %576 = vmatpush2.bf16.msra.mxu0 0
      %577 = vmatprep.subr.bf16.mxu0 0
      %578 = vmatpush2.bf16.msra.mxu0 0
      %579 = vmatprep.subr.bf16.mxu0 0
      %580 = vmatpush2.bf16.msra.mxu0 0
      %581 = vmatprep.subr.bf16.mxu0 0
      %582 = vmatpush2.bf16.msra.mxu0 0
      %583 = vmatprep.subr.bf16.mxu0 0
      %584 = vmatpush2.bf16.msra.mxu0 0
      %585 = vmatprep.subr.bf16.mxu0 0
      %586 = vmatpush2.bf16.msra.mxu0 0
      %587 = vmatprep.subr.bf16.mxu0 0
      %588 = vmatpush2.bf16.msra.mxu0 0
      %589 = vmatprep.subr.bf16.mxu0 0
      %590 = vmatpush2.bf16.msra.mxu0 0
      %591 = vmatprep.mubr.bf16.mxu0 0
      %592 = vmatmul.mubr.bf16.gmra.mxu0 %v554
      %v593 = vpop.f32.mrf.mxu0
      %v594 = vadd.f32 0.0, %v593
      %v595 = vpop.f32.mrf.mxu0
      %v596 = vpop.f32.mrf.mxu0
      %v597 = vpop.f32.mrf.mxu0
      %598 = vdwg.mxu0
      %v599 = vadd.f32 %v535, %v594
      %v600 = vld [vmem:[%s2] sm:$0xf]
      %v601 = vld [vmem:[%s472 + $0x1] sm:$0x3]
      %v602 = vld [vmem:[%s472 + $0x5] sm:$0x3]
      %v605 = vcombine.low %v601, %v602
      %v607 = vunpack.c.l.s4 1983009808
      %v608 = vunpack.c.0.s8 %v607
      %v609 = vlaneseq
      %v610 = vshrl.u32 %v609, 7
      %v611 = vsub.s32 %v608, %v610
      %v612 = vrot.slane %v605, %v611
      %v614 = vpack.c.bf16 %v612, %v612
      %s615 = scalar_lea.vmem %s1, 20
      %v616 = vld [vmem:[%s615] sm:$0xf]
      %v618 = vsel %vm315, %v614, 0
      %v621 = vsel %vm319, %v616, 0
      %623 = vmatprep.subr.bf16.mxu0 0
      %624 = vmatpush1.bf16.msra.mxu0 0
      %625 = vmatprep.subr.bf16.mxu0 0
      %626 = vmatpush1.bf16.msra.mxu0 0
      %627 = vmatprep.subr.bf16.mxu0 0
      %628 = vmatpush1.bf16.msra.mxu0 0
      %629 = vmatprep.subr.bf16.mxu0 0
      %630 = vmatpush1.bf16.msra.mxu0 0
      %631 = vmatprep.subr.bf16.mxu0 0
      %632 = vmatpush1.bf16.msra.mxu0 0
      %633 = vmatprep.subr.bf16.mxu0 0
      %634 = vmatpush1.bf16.msra.mxu0 0
      %635 = vmatprep.subr.bf16.mxu0 0
      %636 = vmatpush1.bf16.msra.mxu0 0
      %637 = vmatprep.subr.bf16.mxu0 0
      %638 = vmatpush1.bf16.msra.mxu0 %v621
      %639 = vmatprep.subr.bf16.mxu0 0
      %640 = vmatpush2.bf16.msra.mxu0 0
      %641 = vmatprep.subr.bf16.mxu0 0
      %642 = vmatpush2.bf16.msra.mxu0 0
      %643 = vmatprep.subr.bf16.mxu0 0
      %644 = vmatpush2.bf16.msra.mxu0 0
      %645 = vmatprep.subr.bf16.mxu0 0
      %646 = vmatpush2.bf16.msra.mxu0 0
      %647 = vmatprep.subr.bf16.mxu0 0
      %648 = vmatpush2.bf16.msra.mxu0 0
      %649 = vmatprep.subr.bf16.mxu0 0
      %650 = vmatpush2.bf16.msra.mxu0 0
      %651 = vmatprep.subr.bf16.mxu0 0
      %652 = vmatpush2.bf16.msra.mxu0 0
      %653 = vmatprep.subr.bf16.mxu0 0
      %654 = vmatpush2.bf16.msra.mxu0 0
      %655 = vmatprep.mubr.bf16.mxu0 0
      %656 = vmatmul.mubr.bf16.gmra.mxu0 %v618
      %v657 = vpop.f32.mrf.mxu0
      %v658 = vadd.f32 0.0, %v657
      %v659 = vpop.f32.mrf.mxu0
      %v660 = vpop.f32.mrf.mxu0
      %v661 = vpop.f32.mrf.mxu0
      %662 = vdwg.mxu0
      %v663 = vadd.f32 %v599, %v658
      %s664 = scalar_lea.vmem %s276, 4
      %v665 = vld [vmem:[%s664] sm:$0x3]
      %v666 = vld [vmem:[%s664 + $0x4] sm:$0x3]
      %v669 = vcombine.low %v665, %v666
      %v671 = vunpack.c.l.s4 1983009808
      %v672 = vunpack.c.0.s8 %v671
      %v673 = vlaneseq
      %v674 = vshrl.u32 %v673, 7
      %v675 = vsub.s32 %v672, %v674
      %v676 = vrot.slane %v669, %v675
      %v678 = vpack.c.bf16 %v676, %v676
      %s679 = scalar_lea.vmem %s1, 24
      %v680 = vld [vmem:[%s679] sm:$0xf]
      %v682 = vsel %vm315, %v678, 0
      %v685 = vsel %vm319, %v680, 0
      %687 = vmatprep.subr.bf16.mxu0 0
      %688 = vmatpush1.bf16.msra.mxu0 0
      %689 = vmatprep.subr.bf16.mxu0 0
      %690 = vmatpush1.bf16.msra.mxu0 0
      %691 = vmatprep.subr.bf16.mxu0 0
      %692 = vmatpush1.bf16.msra.mxu0 0
      %693 = vmatprep.subr.bf16.mxu0 0
      %694 = vmatpush1.bf16.msra.mxu0 0
      %695 = vmatprep.subr.bf16.mxu0 0
      %696 = vmatpush1.bf16.msra.mxu0 0
      %697 = vmatprep.subr.bf16.mxu0 0
      %698 = vmatpush1.bf16.msra.mxu0 0
      %699 = vmatprep.subr.bf16.mxu0 0
      %700 = vmatpush1.bf16.msra.mxu0 0
      %701 = vmatprep.subr.bf16.mxu0 0
      %702 = vmatpush1.bf16.msra.mxu0 %v685
      %703 = vmatprep.subr.bf16.mxu0 0
      %704 = vmatpush2.bf16.msra.mxu0 0
      %705 = vmatprep.subr.bf16.mxu0 0
      %706 = vmatpush2.bf16.msra.mxu0 0
      %707 = vmatprep.subr.bf16.mxu0 0
      %708 = vmatpush2.bf16.msra.mxu0 0
      %709 = vmatprep.subr.bf16.mxu0 0
      %710 = vmatpush2.bf16.msra.mxu0 0
      %711 = vmatprep.subr.bf16.mxu0 0
      %712 = vmatpush2.bf16.msra.mxu0 0
      %713 = vmatprep.subr.bf16.mxu0 0
      %714 = vmatpush2.bf16.msra.mxu0 0
      %715 = vmatprep.subr.bf16.mxu0 0
      %716 = vmatpush2.bf16.msra.mxu0 0
      %717 = vmatprep.subr.bf16.mxu0 0
      %718 = vmatpush2.bf16.msra.mxu0 0
      %719 = vmatprep.mubr.bf16.mxu0 0
      %720 = vmatmul.mubr.bf16.gmra.mxu0 %v682
      %v721 = vpop.f32.mrf.mxu0
      %v722 = vadd.f32 0.0, %v721
      %v723 = vpop.f32.mrf.mxu0
      %v724 = vpop.f32.mrf.mxu0
      %v725 = vpop.f32.mrf.mxu0
      %726 = vdwg.mxu0
      %v727 = vadd.f32 %v663, %v722
      %s728 = scalar_lea.vmem %s276, 16
      %v729 = vld [vmem:[%s728] sm:$0x3]
      %v730 = vld [vmem:[%s728 + $0x4] sm:$0x3]
      %v733 = vcombine.low %v729, %v730
      %v735 = vunpack.c.l.s4 1983009808
      %v736 = vunpack.c.0.s8 %v735
      %v737 = vlaneseq
      %v738 = vshrl.u32 %v737, 7
      %v739 = vsub.s32 %v736, %v738
      %v740 = vrot.slane %v733, %v739
      %v742 = vpack.c.bf16 %v740, %v740
      %s743 = scalar_lea.vmem %s1, 28
      %v744 = vld [vmem:[%s743] sm:$0xf]
      %v746 = vsel %vm315, %v742, 0
      %v749 = vsel %vm319, %v744, 0
      %751 = vmatprep.subr.bf16.mxu0 0
      %752 = vmatpush1.bf16.msra.mxu0 0
      %753 = vmatprep.subr.bf16.mxu0 0
      %754 = vmatpush1.bf16.msra.mxu0 0
      %755 = vmatprep.subr.bf16.mxu0 0
      %756 = vmatpush1.bf16.msra.mxu0 0
      %757 = vmatprep.subr.bf16.mxu0 0
      %758 = vmatpush1.bf16.msra.mxu0 0
      %759 = vmatprep.subr.bf16.mxu0 0
      %760 = vmatpush1.bf16.msra.mxu0 0
      %761 = vmatprep.subr.bf16.mxu0 0
      %762 = vmatpush1.bf16.msra.mxu0 0
      %763 = vmatprep.subr.bf16.mxu0 0
      %764 = vmatpush1.bf16.msra.mxu0 0
      %765 = vmatprep.subr.bf16.mxu0 0
      %766 = vmatpush1.bf16.msra.mxu0 %v749
      %767 = vmatprep.subr.bf16.mxu0 0
      %768 = vmatpush2.bf16.msra.mxu0 0
      %769 = vmatprep.subr.bf16.mxu0 0
      %770 = vmatpush2.bf16.msra.mxu0 0
      %771 = vmatprep.subr.bf16.mxu0 0
      %772 = vmatpush2.bf16.msra.mxu0 0
      %773 = vmatprep.subr.bf16.mxu0 0
      %774 = vmatpush2.bf16.msra.mxu0 0
      %775 = vmatprep.subr.bf16.mxu0 0
      %776 = vmatpush2.bf16.msra.mxu0 0
      %777 = vmatprep.subr.bf16.mxu0 0
      %778 = vmatpush2.bf16.msra.mxu0 0
      %779 = vmatprep.subr.bf16.mxu0 0
      %780 = vmatpush2.bf16.msra.mxu0 0
      %781 = vmatprep.subr.bf16.mxu0 0
      %782 = vmatpush2.bf16.msra.mxu0 0
      %783 = vmatprep.mubr.bf16.mxu0 0
      %784 = vmatmul.mubr.bf16.gmra.mxu0 %v746
      %v785 = vpop.f32.mrf.mxu0
      %v786 = vadd.f32 0.0, %v785
      %v787 = vpop.f32.mrf.mxu0
      %v788 = vpop.f32.mrf.mxu0
      %v789 = vpop.f32.mrf.mxu0
      %790 = vdwg.mxu0
      %v791 = vadd.f32 %v727, %v786
      %v792 = vld [vmem:[%s664 + $0x1] sm:$0x3]
      %v793 = vld [vmem:[%s664 + $0x5] sm:$0x3]
      %v796 = vcombine.low %v792, %v793
      %v798 = vunpack.c.l.s4 1983009808
      %v799 = vunpack.c.0.s8 %v798
      %v800 = vlaneseq
      %v801 = vshrl.u32 %v800, 7
      %v802 = vsub.s32 %v799, %v801
      %v803 = vrot.slane %v796, %v802
      %v805 = vpack.c.bf16 %v803, %v803
      %s806 = scalar_lea.vmem %s1, 32
      %v807 = vld [vmem:[%s806] sm:$0xf]
      %v809 = vsel %vm315, %v805, 0
      %v812 = vsel %vm319, %v807, 0
      %814 = vmatprep.subr.bf16.mxu0 0
      %815 = vmatpush1.bf16.msra.mxu0 0
      %816 = vmatprep.subr.bf16.mxu0 0
      %817 = vmatpush1.bf16.msra.mxu0 0
      %818 = vmatprep.subr.bf16.mxu0 0
      %819 = vmatpush1.bf16.msra.mxu0 0
      %820 = vmatprep.subr.bf16.mxu0 0
      %821 = vmatpush1.bf16.msra.mxu0 0
      %822 = vmatprep.subr.bf16.mxu0 0
      %823 = vmatpush1.bf16.msra.mxu0 0
      %824 = vmatprep.subr.bf16.mxu0 0
      %825 = vmatpush1.bf16.msra.mxu0 0
      %826 = vmatprep.subr.bf16.mxu0 0
      %827 = vmatpush1.bf16.msra.mxu0 0
      %828 = vmatprep.subr.bf16.mxu0 0
      %829 = vmatpush1.bf16.msra.mxu0 %v812
      %830 = vmatprep.subr.bf16.mxu0 0
      %831 = vmatpush2.bf16.msra.mxu0 0
      %832 = vmatprep.subr.bf16.mxu0 0
      %833 = vmatpush2.bf16.msra.mxu0 0
      %834 = vmatprep.subr.bf16.mxu0 0
      %835 = vmatpush2.bf16.msra.mxu0 0
      %836 = vmatprep.subr.bf16.mxu0 0
      %837 = vmatpush2.bf16.msra.mxu0 0
      %838 = vmatprep.subr.bf16.mxu0 0
      %839 = vmatpush2.bf16.msra.mxu0 0
      %840 = vmatprep.subr.bf16.mxu0 0
      %841 = vmatpush2.bf16.msra.mxu0 0
      %842 = vmatprep.subr.bf16.mxu0 0
      %843 = vmatpush2.bf16.msra.mxu0 0
      %844 = vmatprep.subr.bf16.mxu0 0
      %845 = vmatpush2.bf16.msra.mxu0 0
      %846 = vmatprep.mubr.bf16.mxu0 0
      %847 = vmatmul.mubr.bf16.gmra.mxu0 %v809
      %v848 = vpop.f32.mrf.mxu0
      %v849 = vadd.f32 0.0, %v848
      %v850 = vpop.f32.mrf.mxu0
      %v851 = vpop.f32.mrf.mxu0
      %v852 = vpop.f32.mrf.mxu0
      %853 = vdwg.mxu0
      %v854 = vadd.f32 %v791, %v849
      %v855 = vld [vmem:[%s3] sm:$0x1]
      %v857 = vlaneseq
      %v858 = vshrl.u32 %v857, 7
      %v859 = vsub.s32 0, %v858
      %v860 = vrot.slane %v855, %v859
      %v862 = vadd.f32 %v854, %v860
      %v863 = vmax.f32 %v862, 0.0
      %vm864 = vcmask 125952
      %865 = vst.msk [vmem:[#allocation2] sm:$0xf] %vm864, 0.0
      %866 = vst.msk [vmem:[#allocation2 + $0x4] sm:$0xf] %vm864, 0.0
      %867 = vst.msk [vmem:[#allocation2 + $0x8] sm:$0xf] %vm864, 0.0
      %868 = vst.msk [vmem:[#allocation2 + $0xc] sm:$0xf] %vm864, 0.0
      %v871 = vunpack.c.l.s4 1983009808
      %v872 = vunpack.c.0.s8 %v871
      %v873 = vlaneseq
      %v874 = vshrl.u32 %v873, 7
      %v875 = vsub.s32 %v872, %v874
      %v876 = vrot.slane %v863, %v875
      %v877 = vcombine.high %v876, %v876
      %s880 = scalar_lea.vmem [#allocation2], 4
      %vm881 = vcmask 123904
      %882 = vst.msk [vmem:[%s880 + $0x1] sm:$0x3] %vm881, %v876
      %883 = vst.msk [vmem:[%s880 + $0x5] sm:$0x3] %vm881, %v877
      %v884 = vld [vmem:[%s4] sm:$0x1]
      %v886 = vlaneseq
      %v887 = vshrl.u32 %v886, 7
      %v888 = vsub.s32 0, %v887
      %v889 = vrot.slane %v884, %v888
      %v892 = vsel %vm319, %v600, 0
      %894 = vmatprep.subr.bf16.mxu0 0
      %895 = vmatpush1.bf16.msra.mxu0 0
      %896 = vmatprep.subr.bf16.mxu0 0
      %897 = vmatpush1.bf16.msra.mxu0 0
      %898 = vmatprep.subr.bf16.mxu0 0
      %899 = vmatpush1.bf16.msra.mxu0 0
      %900 = vmatprep.subr.bf16.mxu0 0
      %901 = vmatpush1.bf16.msra.mxu0 0
      %902 = vmatprep.subr.bf16.mxu0 0
      %903 = vmatpush1.bf16.msra.mxu0 0
      %904 = vmatprep.subr.bf16.mxu0 0
      %905 = vmatpush1.bf16.msra.mxu0 0
      %906 = vmatprep.subr.bf16.mxu0 0
      %907 = vmatpush1.bf16.msra.mxu0 0
      %908 = vmatprep.subr.bf16.mxu0 0
      %909 = vmatpush1.bf16.msra.mxu0 %v892
      %910 = vmatprep.subr.bf16.mxu0 0
      %911 = vmatpush2.bf16.msra.mxu0 0
      %912 = vmatprep.subr.bf16.mxu0 0
      %913 = vmatpush2.bf16.msra.mxu0 0
      %914 = vmatprep.subr.bf16.mxu0 0
      %915 = vmatpush2.bf16.msra.mxu0 0
      %916 = vmatprep.subr.bf16.mxu0 0
      %917 = vmatpush2.bf16.msra.mxu0 0
      %918 = vmatprep.subr.bf16.mxu0 0
      %919 = vmatpush2.bf16.msra.mxu0 0
      %920 = vmatprep.subr.bf16.mxu0 0
      %921 = vmatpush2.bf16.msra.mxu0 0
      %922 = vmatprep.subr.bf16.mxu0 0
      %923 = vmatpush2.bf16.msra.mxu0 0
      %924 = vmatprep.subr.bf16.mxu0 0
      %925 = vmatpush2.bf16.msra.mxu0 0
      %926 = vmatprep.mubr.bf16.mxu0 0
      %927 = vmatmul.mubr.bf16.gmra.mxu0 %v554
      %v928 = vpop.f32.mrf.mxu0
      %v929 = vadd.f32 %v889, %v928
      %v930 = vpop.f32.mrf.mxu0
      %v931 = vpop.f32.mrf.mxu0
      %v932 = vpop.f32.mrf.mxu0
      %933 = vdwg.mxu0
      %v934 = vld [vmem:[%s6] sm:$0x1]
      %v936 = vlaneseq
      %v937 = vshrl.u32 %v936, 7
      %v938 = vsub.s32 0, %v937
      %v939 = vrot.slane %v934, %v938
      %v941 = vadd.f32 %v929, %v939
      %v942 = vld [vmem:[#allocation2] sm:$0x3]
      %v943 = vld [vmem:[#allocation2 + $0x4] sm:$0x3]
      %v946 = vcombine.low %v942, %v943
      %v948 = vunpack.c.l.s4 1983009808
      %v949 = vunpack.c.0.s8 %v948
      %v950 = vlaneseq
      %v951 = vshrl.u32 %v950, 7
      %v952 = vsub.s32 %v949, %v951
      %v953 = vrot.slane %v946, %v952
      %v955 = vpack.c.bf16 %v953, %v953
      %v956 = vld [vmem:[%s5] sm:$0xf]
      %v957 = vld [vmem:[%s5 + $0x4] sm:$0xf]
      %v960 = vunpack.c.l.b16 %v956
      %v961 = vunpack.c.l.b16 %v957
      %v962 = vpack.c.b16 %v961, %v960
      %vm964 = vcmask 130048
      %v966 = vsel %vm964, %v955, 0
      %968 = vmatprep.subr.bf16.mxu0 0
      %969 = vmatpush1.bf16.msra.mxu0 0
      %970 = vmatprep.subr.bf16.mxu0 0
      %971 = vmatpush1.bf16.msra.mxu0 0
      %972 = vmatprep.subr.bf16.mxu0 0
      %973 = vmatpush1.bf16.msra.mxu0 0
      %974 = vmatprep.subr.bf16.mxu0 0
      %975 = vmatpush1.bf16.msra.mxu0 0
      %976 = vmatprep.subr.bf16.mxu0 0
      %977 = vmatpush1.bf16.msra.mxu0 0
      %978 = vmatprep.subr.bf16.mxu0 0
      %979 = vmatpush1.bf16.msra.mxu0 0
      %980 = vmatprep.subr.bf16.mxu0 0
      %981 = vmatpush1.bf16.msra.mxu0 0
      %982 = vmatprep.subr.bf16.mxu0 0
      %983 = vmatpush1.bf16.msra.mxu0 %v962
      %984 = vmatprep.subr.bf16.mxu0 0
      %985 = vmatpush2.bf16.msra.mxu0 0
      %986 = vmatprep.subr.bf16.mxu0 0
      %987 = vmatpush2.bf16.msra.mxu0 0
      %988 = vmatprep.subr.bf16.mxu0 0
      %989 = vmatpush2.bf16.msra.mxu0 0
      %990 = vmatprep.subr.bf16.mxu0 0
      %991 = vmatpush2.bf16.msra.mxu0 0
      %992 = vmatprep.subr.bf16.mxu0 0
      %993 = vmatpush2.bf16.msra.mxu0 0
      %994 = vmatprep.subr.bf16.mxu0 0
      %995 = vmatpush2.bf16.msra.mxu0 0
      %996 = vmatprep.subr.bf16.mxu0 0
      %997 = vmatpush2.bf16.msra.mxu0 0
      %998 = vmatprep.subr.bf16.mxu0 0
      %999 = vmatpush2.bf16.msra.mxu0 0
      %1000 = vmatprep.mubr.bf16.mxu0 0
      %1001 = vmatmul.mubr.bf16.gmra.mxu0 %v966
      %v1002 = vpop.f32.mrf.mxu0
      %v1003 = vadd.f32 0.0, %v1002
      %v1004 = vpop.f32.mrf.mxu0
      %v1005 = vpop.f32.mrf.mxu0
      %v1006 = vpop.f32.mrf.mxu0
      %1007 = vdwg.mxu0
      %v1008 = vadd.f32 %v941, %v1003
      %v1009 = vld [vmem:[#allocation2 + $0x1] sm:$0x3]
      %v1010 = vld [vmem:[#allocation2 + $0x5] sm:$0x3]
      %v1013 = vcombine.low %v1009, %v1010
      %v1015 = vunpack.c.l.s4 1983009808
      %v1016 = vunpack.c.0.s8 %v1015
      %v1017 = vlaneseq
      %v1018 = vshrl.u32 %v1017, 7
      %v1019 = vsub.s32 %v1016, %v1018
      %v1020 = vrot.slane %v1013, %v1019
      %v1022 = vpack.c.bf16 %v1020, %v1020
      %s1023 = scalar_lea.vmem %s5, 8
      %v1024 = vld [vmem:[%s1023] sm:$0xf]
      %v1025 = vld [vmem:[%s1023 + $0x4] sm:$0xf]
      %v1028 = vunpack.c.l.b16 %v1024
      %v1029 = vunpack.c.l.b16 %v1025
      %v1030 = vpack.c.b16 %v1029, %v1028
      %v1033 = vsel %vm964, %v1022, 0
      %1035 = vmatprep.subr.bf16.mxu0 0
      %1036 = vmatpush1.bf16.msra.mxu0 0
      %1037 = vmatprep.subr.bf16.mxu0 0
      %1038 = vmatpush1.bf16.msra.mxu0 0
      %1039 = vmatprep.subr.bf16.mxu0 0
      %1040 = vmatpush1.bf16.msra.mxu0 0
      %1041 = vmatprep.subr.bf16.mxu0 0
      %1042 = vmatpush1.bf16.msra.mxu0 0
      %1043 = vmatprep.subr.bf16.mxu0 0
      %1044 = vmatpush1.bf16.msra.mxu0 0
      %1045 = vmatprep.subr.bf16.mxu0 0
      %1046 = vmatpush1.bf16.msra.mxu0 0
      %1047 = vmatprep.subr.bf16.mxu0 0
      %1048 = vmatpush1.bf16.msra.mxu0 0
      %1049 = vmatprep.subr.bf16.mxu0 0
      %1050 = vmatpush1.bf16.msra.mxu0 %v1030
      %1051 = vmatprep.subr.bf16.mxu0 0
      %1052 = vmatpush2.bf16.msra.mxu0 0
      %1053 = vmatprep.subr.bf16.mxu0 0
      %1054 = vmatpush2.bf16.msra.mxu0 0
      %1055 = vmatprep.subr.bf16.mxu0 0
      %1056 = vmatpush2.bf16.msra.mxu0 0
      %1057 = vmatprep.subr.bf16.mxu0 0
      %1058 = vmatpush2.bf16.msra.mxu0 0
      %1059 = vmatprep.subr.bf16.mxu0 0
      %1060 = vmatpush2.bf16.msra.mxu0 0
      %1061 = vmatprep.subr.bf16.mxu0 0
      %1062 = vmatpush2.bf16.msra.mxu0 0
      %1063 = vmatprep.subr.bf16.mxu0 0
      %1064 = vmatpush2.bf16.msra.mxu0 0
      %1065 = vmatprep.subr.bf16.mxu0 0
      %1066 = vmatpush2.bf16.msra.mxu0 0
      %1067 = vmatprep.mubr.bf16.mxu0 0
      %1068 = vmatmul.mubr.bf16.gmra.mxu0 %v1033
      %v1069 = vpop.f32.mrf.mxu0
      %v1070 = vadd.f32 0.0, %v1069
      %v1071 = vpop.f32.mrf.mxu0
      %v1072 = vpop.f32.mrf.mxu0
      %v1073 = vpop.f32.mrf.mxu0
      %1074 = vdwg.mxu0
      %v1075 = vadd.f32 %v1008, %v1070
      %v1076 = vld [vmem:[#allocation2 + $0x2] sm:$0x3]
      %v1077 = vld [vmem:[#allocation2 + $0x6] sm:$0x3]
      %v1080 = vcombine.low %v1076, %v1077
      %v1082 = vunpack.c.l.s4 1983009808
      %v1083 = vunpack.c.0.s8 %v1082
      %v1084 = vlaneseq
      %v1085 = vshrl.u32 %v1084, 7
      %v1086 = vsub.s32 %v1083, %v1085
      %v1087 = vrot.slane %v1080, %v1086
      %v1089 = vpack.c.bf16 %v1087, %v1087
      %s1090 = scalar_lea.vmem %s5, 16
      %v1091 = vld [vmem:[%s1090] sm:$0xf]
      %v1092 = vld [vmem:[%s1090 + $0x4] sm:$0xf]
      %v1095 = vunpack.c.l.b16 %v1091
      %v1096 = vunpack.c.l.b16 %v1092
      %v1097 = vpack.c.b16 %v1096, %v1095
      %v1100 = vsel %vm964, %v1089, 0
      %1102 = vmatprep.subr.bf16.mxu0 0
      %1103 = vmatpush1.bf16.msra.mxu0 0
      %1104 = vmatprep.subr.bf16.mxu0 0
      %1105 = vmatpush1.bf16.msra.mxu0 0
      %1106 = vmatprep.subr.bf16.mxu0 0
      %1107 = vmatpush1.bf16.msra.mxu0 0
      %1108 = vmatprep.subr.bf16.mxu0 0
      %1109 = vmatpush1.bf16.msra.mxu0 0
      %1110 = vmatprep.subr.bf16.mxu0 0
      %1111 = vmatpush1.bf16.msra.mxu0 0
      %1112 = vmatprep.subr.bf16.mxu0 0
      %1113 = vmatpush1.bf16.msra.mxu0 0
      %1114 = vmatprep.subr.bf16.mxu0 0
      %1115 = vmatpush1.bf16.msra.mxu0 0
      %1116 = vmatprep.subr.bf16.mxu0 0
      %1117 = vmatpush1.bf16.msra.mxu0 %v1097
      %1118 = vmatprep.subr.bf16.mxu0 0
      %1119 = vmatpush2.bf16.msra.mxu0 0
      %1120 = vmatprep.subr.bf16.mxu0 0
      %1121 = vmatpush2.bf16.msra.mxu0 0
      %1122 = vmatprep.subr.bf16.mxu0 0
      %1123 = vmatpush2.bf16.msra.mxu0 0
      %1124 = vmatprep.subr.bf16.mxu0 0
      %1125 = vmatpush2.bf16.msra.mxu0 0
      %1126 = vmatprep.subr.bf16.mxu0 0
      %1127 = vmatpush2.bf16.msra.mxu0 0
      %1128 = vmatprep.subr.bf16.mxu0 0
      %1129 = vmatpush2.bf16.msra.mxu0 0
      %1130 = vmatprep.subr.bf16.mxu0 0
      %1131 = vmatpush2.bf16.msra.mxu0 0
      %1132 = vmatprep.subr.bf16.mxu0 0
      %1133 = vmatpush2.bf16.msra.mxu0 0
      %1134 = vmatprep.mubr.bf16.mxu0 0
      %1135 = vmatmul.mubr.bf16.gmra.mxu0 %v1100
      %v1136 = vpop.f32.mrf.mxu0
      %v1137 = vadd.f32 0.0, %v1136
      %v1138 = vpop.f32.mrf.mxu0
      %v1139 = vpop.f32.mrf.mxu0
      %v1140 = vpop.f32.mrf.mxu0
      %1141 = vdwg.mxu0
      %v1142 = vadd.f32 %v1075, %v1137
      %v1143 = vld [vmem:[%s880] sm:$0x3]
      %v1144 = vld [vmem:[%s880 + $0x4] sm:$0x3]
      %v1147 = vcombine.low %v1143, %v1144
      %v1149 = vunpack.c.l.s4 1983009808
      %v1150 = vunpack.c.0.s8 %v1149
      %v1151 = vlaneseq
      %v1152 = vshrl.u32 %v1151, 7
      %v1153 = vsub.s32 %v1150, %v1152
      %v1154 = vrot.slane %v1147, %v1153
      %v1156 = vpack.c.bf16 %v1154, %v1154
      %s1157 = scalar_lea.vmem %s5, 24
      %v1158 = vld [vmem:[%s1157] sm:$0xf]
      %v1159 = vld [vmem:[%s1157 + $0x4] sm:$0xf]
      %v1162 = vunpack.c.l.b16 %v1158
      %v1163 = vunpack.c.l.b16 %v1159
      %v1164 = vpack.c.b16 %v1163, %v1162
      %v1167 = vsel %vm964, %v1156, 0
      %1169 = vmatprep.subr.bf16.mxu0 0
      %1170 = vmatpush1.bf16.msra.mxu0 0
      %1171 = vmatprep.subr.bf16.mxu0 0
      %1172 = vmatpush1.bf16.msra.mxu0 0
      %1173 = vmatprep.subr.bf16.mxu0 0
      %1174 = vmatpush1.bf16.msra.mxu0 0
      %1175 = vmatprep.subr.bf16.mxu0 0
      %1176 = vmatpush1.bf16.msra.mxu0 0
      %1177 = vmatprep.subr.bf16.mxu0 0
      %1178 = vmatpush1.bf16.msra.mxu0 0
      %1179 = vmatprep.subr.bf16.mxu0 0
      %1180 = vmatpush1.bf16.msra.mxu0 0
      %1181 = vmatprep.subr.bf16.mxu0 0
      %1182 = vmatpush1.bf16.msra.mxu0 0
      %1183 = vmatprep.subr.bf16.mxu0 0
      %1184 = vmatpush1.bf16.msra.mxu0 %v1164
      %1185 = vmatprep.subr.bf16.mxu0 0
      %1186 = vmatpush2.bf16.msra.mxu0 0
      %1187 = vmatprep.subr.bf16.mxu0 0
      %1188 = vmatpush2.bf16.msra.mxu0 0
      %1189 = vmatprep.subr.bf16.mxu0 0
      %1190 = vmatpush2.bf16.msra.mxu0 0
      %1191 = vmatprep.subr.bf16.mxu0 0
      %1192 = vmatpush2.bf16.msra.mxu0 0
      %1193 = vmatprep.subr.bf16.mxu0 0
      %1194 = vmatpush2.bf16.msra.mxu0 0
      %1195 = vmatprep.subr.bf16.mxu0 0
      %1196 = vmatpush2.bf16.msra.mxu0 0
      %1197 = vmatprep.subr.bf16.mxu0 0
      %1198 = vmatpush2.bf16.msra.mxu0 0
      %1199 = vmatprep.subr.bf16.mxu0 0
      %1200 = vmatpush2.bf16.msra.mxu0 0
      %1201 = vmatprep.mubr.bf16.mxu0 0
      %1202 = vmatmul.mubr.bf16.gmra.mxu0 %v1167
      %v1203 = vpop.f32.mrf.mxu0
      %v1204 = vadd.f32 0.0, %v1203
      %v1205 = vpop.f32.mrf.mxu0
      %v1206 = vpop.f32.mrf.mxu0
      %v1207 = vpop.f32.mrf.mxu0
      %1208 = vdwg.mxu0
      %v1209 = vadd.f32 %v1142, %v1204
      %v1210 = vld [vmem:[%s880 + $0x1] sm:$0x3]
      %v1211 = vld [vmem:[%s880 + $0x5] sm:$0x3]
      %v1214 = vcombine.low %v1210, %v1211
      %v1216 = vunpack.c.l.s4 1983009808
      %v1217 = vunpack.c.0.s8 %v1216
      %v1218 = vlaneseq
      %v1219 = vshrl.u32 %v1218, 7
      %v1220 = vsub.s32 %v1217, %v1219
      %v1221 = vrot.slane %v1214, %v1220
      %v1223 = vpack.c.bf16 %v1221, %v1221
      %s1224 = scalar_lea.vmem %s5, 32
      %v1225 = vld [vmem:[%s1224] sm:$0xf]
      %v1226 = vld [vmem:[%s1224 + $0x4] sm:$0xf]
      %v1229 = vunpack.c.l.b16 %v1225
      %v1230 = vunpack.c.l.b16 %v1226
      %v1231 = vpack.c.b16 %v1230, %v1229
      %v1234 = vsel %vm964, %v1223, 0
      %1236 = vmatprep.subr.bf16.mxu0 0
      %1237 = vmatpush1.bf16.msra.mxu0 0
      %1238 = vmatprep.subr.bf16.mxu0 0
      %1239 = vmatpush1.bf16.msra.mxu0 0
      %1240 = vmatprep.subr.bf16.mxu0 0
      %1241 = vmatpush1.bf16.msra.mxu0 0
      %1242 = vmatprep.subr.bf16.mxu0 0
      %1243 = vmatpush1.bf16.msra.mxu0 0
      %1244 = vmatprep.subr.bf16.mxu0 0
      %1245 = vmatpush1.bf16.msra.mxu0 0
      %1246 = vmatprep.subr.bf16.mxu0 0
      %1247 = vmatpush1.bf16.msra.mxu0 0
      %1248 = vmatprep.subr.bf16.mxu0 0
      %1249 = vmatpush1.bf16.msra.mxu0 0
      %1250 = vmatprep.subr.bf16.mxu0 0
      %1251 = vmatpush1.bf16.msra.mxu0 %v1231
      %1252 = vmatprep.subr.bf16.mxu0 0
      %1253 = vmatpush2.bf16.msra.mxu0 0
      %1254 = vmatprep.subr.bf16.mxu0 0
      %1255 = vmatpush2.bf16.msra.mxu0 0
      %1256 = vmatprep.subr.bf16.mxu0 0
      %1257 = vmatpush2.bf16.msra.mxu0 0
      %1258 = vmatprep.subr.bf16.mxu0 0
      %1259 = vmatpush2.bf16.msra.mxu0 0
      %1260 = vmatprep.subr.bf16.mxu0 0
      %1261 = vmatpush2.bf16.msra.mxu0 0
      %1262 = vmatprep.subr.bf16.mxu0 0
      %1263 = vmatpush2.bf16.msra.mxu0 0
      %1264 = vmatprep.subr.bf16.mxu0 0
      %1265 = vmatpush2.bf16.msra.mxu0 0
      %1266 = vmatprep.subr.bf16.mxu0 0
      %1267 = vmatpush2.bf16.msra.mxu0 0
      %1268 = vmatprep.mubr.bf16.mxu0 0
      %1269 = vmatmul.mubr.bf16.gmra.mxu0 %v1234
      %v1270 = vpop.f32.mrf.mxu0
      %v1271 = vadd.f32 0.0, %v1270
      %v1272 = vpop.f32.mrf.mxu0
      %v1273 = vpop.f32.mrf.mxu0
      %v1274 = vpop.f32.mrf.mxu0
      %1275 = vdwg.mxu0
      %v1276 = vadd.f32 %v1209, %v1271
      %v1277 = vld [vmem:[%s880 + $0x2] sm:$0x3]
      %v1278 = vld [vmem:[%s880 + $0x6] sm:$0x3]
      %v1281 = vcombine.low %v1277, %v1278
      %v1283 = vunpack.c.l.s4 1983009808
      %v1284 = vunpack.c.0.s8 %v1283
      %v1285 = vlaneseq
      %v1286 = vshrl.u32 %v1285, 7
      %v1287 = vsub.s32 %v1284, %v1286
      %v1288 = vrot.slane %v1281, %v1287
      %v1290 = vpack.c.bf16 %v1288, %v1288
      %s1291 = scalar_lea.vmem %s5, 40
      %v1292 = vld [vmem:[%s1291] sm:$0xf]
      %v1293 = vld [vmem:[%s1291 + $0x4] sm:$0xf]
      %v1296 = vunpack.c.l.b16 %v1292
      %v1297 = vunpack.c.l.b16 %v1293
      %v1298 = vpack.c.b16 %v1297, %v1296
      %v1301 = vsel %vm964, %v1290, 0
      %1303 = vmatprep.subr.bf16.mxu0 0
      %1304 = vmatpush1.bf16.msra.mxu0 0
      %1305 = vmatprep.subr.bf16.mxu0 0
      %1306 = vmatpush1.bf16.msra.mxu0 0
      %1307 = vmatprep.subr.bf16.mxu0 0
      %1308 = vmatpush1.bf16.msra.mxu0 0
      %1309 = vmatprep.subr.bf16.mxu0 0
      %1310 = vmatpush1.bf16.msra.mxu0 0
      %1311 = vmatprep.subr.bf16.mxu0 0
      %1312 = vmatpush1.bf16.msra.mxu0 0
      %1313 = vmatprep.subr.bf16.mxu0 0
      %1314 = vmatpush1.bf16.msra.mxu0 0
      %1315 = vmatprep.subr.bf16.mxu0 0
      %1316 = vmatpush1.bf16.msra.mxu0 0
      %1317 = vmatprep.subr.bf16.mxu0 0
      %1318 = vmatpush1.bf16.msra.mxu0 %v1298
      %1319 = vmatprep.subr.bf16.mxu0 0
      %1320 = vmatpush2.bf16.msra.mxu0 0
      %1321 = vmatprep.subr.bf16.mxu0 0
      %1322 = vmatpush2.bf16.msra.mxu0 0
      %1323 = vmatprep.subr.bf16.mxu0 0
      %1324 = vmatpush2.bf16.msra.mxu0 0
      %1325 = vmatprep.subr.bf16.mxu0 0
      %1326 = vmatpush2.bf16.msra.mxu0 0
      %1327 = vmatprep.subr.bf16.mxu0 0
      %1328 = vmatpush2.bf16.msra.mxu0 0
      %1329 = vmatprep.subr.bf16.mxu0 0
      %1330 = vmatpush2.bf16.msra.mxu0 0
      %1331 = vmatprep.subr.bf16.mxu0 0
      %1332 = vmatpush2.bf16.msra.mxu0 0
      %1333 = vmatprep.subr.bf16.mxu0 0
      %1334 = vmatpush2.bf16.msra.mxu0 0
      %1335 = vmatprep.mubr.bf16.mxu0 0
      %1336 = vmatmul.mubr.bf16.gmra.mxu0 %v1301
      %v1337 = vpop.f32.mrf.mxu0
      %v1338 = vadd.f32 0.0, %v1337
      %v1339 = vpop.f32.mrf.mxu0
      %v1340 = vpop.f32.mrf.mxu0
      %v1341 = vpop.f32.mrf.mxu0
      %1342 = vdwg.mxu0
      %v1343 = vadd.f32 %v1276, %v1338
      %s1344 = scalar_lea.vmem [#allocation2], 8
      %v1345 = vld [vmem:[%s1344] sm:$0x3]
      %v1346 = vld [vmem:[%s1344 + $0x4] sm:$0x3]
      %v1349 = vcombine.low %v1345, %v1346
      %v1351 = vunpack.c.l.s4 1983009808
      %v1352 = vunpack.c.0.s8 %v1351
      %v1353 = vlaneseq
      %v1354 = vshrl.u32 %v1353, 7
      %v1355 = vsub.s32 %v1352, %v1354
      %v1356 = vrot.slane %v1349, %v1355
      %v1358 = vpack.c.bf16 %v1356, %v1356
      %s1359 = scalar_lea.vmem %s5, 48
      %v1360 = vld [vmem:[%s1359] sm:$0xf]
      %v1361 = vld [vmem:[%s1359 + $0x4] sm:$0xf]
      %v1364 = vunpack.c.l.b16 %v1360
      %v1365 = vunpack.c.l.b16 %v1361
      %v1366 = vpack.c.b16 %v1365, %v1364
      %v1369 = vsel %vm964, %v1358, 0
      %1371 = vmatprep.subr.bf16.mxu0 0
      %1372 = vmatpush1.bf16.msra.mxu0 0
      %1373 = vmatprep.subr.bf16.mxu0 0
      %1374 = vmatpush1.bf16.msra.mxu0 0
      %1375 = vmatprep.subr.bf16.mxu0 0
      %1376 = vmatpush1.bf16.msra.mxu0 0
      %1377 = vmatprep.subr.bf16.mxu0 0
      %1378 = vmatpush1.bf16.msra.mxu0 0
      %1379 = vmatprep.subr.bf16.mxu0 0
      %1380 = vmatpush1.bf16.msra.mxu0 0
      %1381 = vmatprep.subr.bf16.mxu0 0
      %1382 = vmatpush1.bf16.msra.mxu0 0
      %1383 = vmatprep.subr.bf16.mxu0 0
      %1384 = vmatpush1.bf16.msra.mxu0 0
      %1385 = vmatprep.subr.bf16.mxu0 0
      %1386 = vmatpush1.bf16.msra.mxu0 %v1366
      %1387 = vmatprep.subr.bf16.mxu0 0
      %1388 = vmatpush2.bf16.msra.mxu0 0
      %1389 = vmatprep.subr.bf16.mxu0 0
      %1390 = vmatpush2.bf16.msra.mxu0 0
      %1391 = vmatprep.subr.bf16.mxu0 0
      %1392 = vmatpush2.bf16.msra.mxu0 0
      %1393 = vmatprep.subr.bf16.mxu0 0
      %1394 = vmatpush2.bf16.msra.mxu0 0
      %1395 = vmatprep.subr.bf16.mxu0 0
      %1396 = vmatpush2.bf16.msra.mxu0 0
      %1397 = vmatprep.subr.bf16.mxu0 0
      %1398 = vmatpush2.bf16.msra.mxu0 0
      %1399 = vmatprep.subr.bf16.mxu0 0
      %1400 = vmatpush2.bf16.msra.mxu0 0
      %1401 = vmatprep.subr.bf16.mxu0 0
      %1402 = vmatpush2.bf16.msra.mxu0 0
      %1403 = vmatprep.mubr.bf16.mxu0 0
      %1404 = vmatmul.mubr.bf16.gmra.mxu0 %v1369
      %v1405 = vpop.f32.mrf.mxu0
      %v1406 = vadd.f32 0.0, %v1405
      %v1407 = vpop.f32.mrf.mxu0
      %v1408 = vpop.f32.mrf.mxu0
      %v1409 = vpop.f32.mrf.mxu0
      %1410 = vdwg.mxu0
      %v1411 = vadd.f32 %v1343, %v1406
      %v1412 = vld [vmem:[%s1344 + $0x1] sm:$0x3]
      %v1413 = vld [vmem:[%s1344 + $0x5] sm:$0x3]
      %v1416 = vcombine.low %v1412, %v1413
      %v1418 = vunpack.c.l.s4 1983009808
      %v1419 = vunpack.c.0.s8 %v1418
      %v1420 = vlaneseq
      %v1421 = vshrl.u32 %v1420, 7
      %v1422 = vsub.s32 %v1419, %v1421
      %v1423 = vrot.slane %v1416, %v1422
      %v1425 = vpack.c.bf16 %v1423, %v1423
      %s1426 = scalar_lea.vmem %s5, 56
      %v1427 = vld [vmem:[%s1426] sm:$0xf]
      %v1428 = vld [vmem:[%s1426 + $0x4] sm:$0xf]
      %v1431 = vunpack.c.l.b16 %v1427
      %v1432 = vunpack.c.l.b16 %v1428
      %v1433 = vpack.c.b16 %v1432, %v1431
      %v1436 = vsel %vm964, %v1425, 0
      %1438 = vmatprep.subr.bf16.mxu0 0
      %1439 = vmatpush1.bf16.msra.mxu0 0
      %1440 = vmatprep.subr.bf16.mxu0 0
      %1441 = vmatpush1.bf16.msra.mxu0 0
      %1442 = vmatprep.subr.bf16.mxu0 0
      %1443 = vmatpush1.bf16.msra.mxu0 0
      %1444 = vmatprep.subr.bf16.mxu0 0
      %1445 = vmatpush1.bf16.msra.mxu0 0
      %1446 = vmatprep.subr.bf16.mxu0 0
      %1447 = vmatpush1.bf16.msra.mxu0 0
      %1448 = vmatprep.subr.bf16.mxu0 0
      %1449 = vmatpush1.bf16.msra.mxu0 0
      %1450 = vmatprep.subr.bf16.mxu0 0
      %1451 = vmatpush1.bf16.msra.mxu0 0
      %1452 = vmatprep.subr.bf16.mxu0 0
      %1453 = vmatpush1.bf16.msra.mxu0 %v1433
      %1454 = vmatprep.subr.bf16.mxu0 0
      %1455 = vmatpush2.bf16.msra.mxu0 0
      %1456 = vmatprep.subr.bf16.mxu0 0
      %1457 = vmatpush2.bf16.msra.mxu0 0
      %1458 = vmatprep.subr.bf16.mxu0 0
      %1459 = vmatpush2.bf16.msra.mxu0 0
      %1460 = vmatprep.subr.bf16.mxu0 0
      %1461 = vmatpush2.bf16.msra.mxu0 0
      %1462 = vmatprep.subr.bf16.mxu0 0
      %1463 = vmatpush2.bf16.msra.mxu0 0
      %1464 = vmatprep.subr.bf16.mxu0 0
      %1465 = vmatpush2.bf16.msra.mxu0 0
      %1466 = vmatprep.subr.bf16.mxu0 0
      %1467 = vmatpush2.bf16.msra.mxu0 0
      %1468 = vmatprep.subr.bf16.mxu0 0
      %1469 = vmatpush2.bf16.msra.mxu0 0
      %1470 = vmatprep.mubr.bf16.mxu0 0
      %1471 = vmatmul.mubr.bf16.gmra.mxu0 %v1436
      %v1472 = vpop.f32.mrf.mxu0
      %v1473 = vadd.f32 0.0, %v1472
      %v1474 = vpop.f32.mrf.mxu0
      %v1475 = vpop.f32.mrf.mxu0
      %v1476 = vpop.f32.mrf.mxu0
      %1477 = vdwg.mxu0
      %v1478 = vadd.f32 %v1411, %v1473
      %v1479 = vld [vmem:[%s1344 + $0x2] sm:$0x3]
      %v1480 = vld [vmem:[%s1344 + $0x6] sm:$0x3]
      %v1483 = vcombine.low %v1479, %v1480
      %v1485 = vunpack.c.l.s4 1983009808
      %v1486 = vunpack.c.0.s8 %v1485
      %v1487 = vlaneseq
      %v1488 = vshrl.u32 %v1487, 7
      %v1489 = vsub.s32 %v1486, %v1488
      %v1490 = vrot.slane %v1483, %v1489
      %v1492 = vpack.c.bf16 %v1490, %v1490
      %s1493 = scalar_lea.vmem %s5, 64
      %v1494 = vld [vmem:[%s1493] sm:$0xf]
      %v1495 = vld [vmem:[%s1493 + $0x4] sm:$0xf]
      %v1498 = vunpack.c.l.b16 %v1494
      %v1499 = vunpack.c.l.b16 %v1495
      %v1500 = vpack.c.b16 %v1499, %v1498
      %v1503 = vsel %vm964, %v1492, 0
      %1505 = vmatprep.subr.bf16.mxu0 0
      %1506 = vmatpush1.bf16.msra.mxu0 0
      %1507 = vmatprep.subr.bf16.mxu0 0
      %1508 = vmatpush1.bf16.msra.mxu0 0
      %1509 = vmatprep.subr.bf16.mxu0 0
      %1510 = vmatpush1.bf16.msra.mxu0 0
      %1511 = vmatprep.subr.bf16.mxu0 0
      %1512 = vmatpush1.bf16.msra.mxu0 0
      %1513 = vmatprep.subr.bf16.mxu0 0
      %1514 = vmatpush1.bf16.msra.mxu0 0
      %1515 = vmatprep.subr.bf16.mxu0 0
      %1516 = vmatpush1.bf16.msra.mxu0 0
      %1517 = vmatprep.subr.bf16.mxu0 0
      %1518 = vmatpush1.bf16.msra.mxu0 0
      %1519 = vmatprep.subr.bf16.mxu0 0
      %1520 = vmatpush1.bf16.msra.mxu0 %v1500
      %1521 = vmatprep.subr.bf16.mxu0 0
      %1522 = vmatpush2.bf16.msra.mxu0 0
      %1523 = vmatprep.subr.bf16.mxu0 0
      %1524 = vmatpush2.bf16.msra.mxu0 0
      %1525 = vmatprep.subr.bf16.mxu0 0
      %1526 = vmatpush2.bf16.msra.mxu0 0
      %1527 = vmatprep.subr.bf16.mxu0 0
      %1528 = vmatpush2.bf16.msra.mxu0 0
      %1529 = vmatprep.subr.bf16.mxu0 0
      %1530 = vmatpush2.bf16.msra.mxu0 0
      %1531 = vmatprep.subr.bf16.mxu0 0
      %1532 = vmatpush2.bf16.msra.mxu0 0
      %1533 = vmatprep.subr.bf16.mxu0 0
      %1534 = vmatpush2.bf16.msra.mxu0 0
      %1535 = vmatprep.subr.bf16.mxu0 0
      %1536 = vmatpush2.bf16.msra.mxu0 0
      %1537 = vmatprep.mubr.bf16.mxu0 0
      %1538 = vmatmul.mubr.bf16.gmra.mxu0 %v1503
      %v1539 = vpop.f32.mrf.mxu0
      %v1540 = vadd.f32 0.0, %v1539
      %v1541 = vpop.f32.mrf.mxu0
      %v1542 = vpop.f32.mrf.mxu0
      %v1543 = vpop.f32.mrf.mxu0
      %1544 = vdwg.mxu0
      %v1545 = vadd.f32 %v1478, %v1540
      %v1546 = vmax.f32 %v1545, 0.0
      %1547 = vst.msk [vmem:[%s281] sm:$0xf] %vm864, %v1546
      %p1548 = scmp.lt.s32.totalorder %s18, 7
      %s1549 = scalar_select %p1548, %s18, 7
      %s1550 = smul.addr %s1549, 4
      %s1551 = scalar_lea.vmem %s7, %s1550
      // Predicated region
      $region49: #{_lambda_.7} parent=47 // pred_check
        %p1552 = pneg %p188
      $region50: #{_lambda_.7} parent=47 // pred_check_branch
        %1554 = sbr.rel (%p1552) target = $region52
      $region51: #{_lambda_.7} parent=47 // pred_region
        _
      $region52: #{_lambda_.7} parent=47 // pred_fallthru
        _
    $region48: #{_lambda_.7} parent=5 // pred_fallthru
      _
    %p1555 = scmp.le.s32.totalorder 2, %s13
    // Predicated region
    $region53: #{_lambda_.7} parent=5 // pred_check
      %p1556 = pneg %p1555
    $region54: #{_lambda_.7} parent=5 // pred_check_branch
      %1558 = sbr.rel (%p1556) target = $region56
    $region55: #{_lambda_.7} parent=5 // pred_region
      %s1559 = ssub.s32 %s13, 2
      // Predicated region
      $region57: #{_lambda_.7} parent=55 // pred_check
        %p1560 = pneg %p194
      $region58: #{_lambda_.7} parent=55 // pred_check_branch
        %1562 = sbr.rel (%p1560) target = $region60
      $region59: #{_lambda_.7} parent=55 // pred_region
        %p1563 = scmp.lt.s32.totalorder %s19, 7
        %s1564 = scalar_select %p1563, %s19, 7
        %s1565 = smul.addr %s1564, 4
        %s1566 = scalar_lea.vmem %s7, %s1565
      $region60: #{_lambda_.7} parent=55 // pred_fallthru
        _
    $region56: #{_lambda_.7} parent=5 // pred_fallthru
      _
  $region6: #{_lambda_.7} parent=0 // loop_footer
    %s17 = sadd.s32 1, %s13
  $region7: #{_lambda_.7} parent=0 // loop_footer_branch
    %12 = sbr.rel target = $region3
  $region8: #{_lambda_.7} parent=0 // loop_exit
    _

// kernel: _lambda_.9
$region0: #{_lambda_.9}
  #allocation0 [shape = 'u32[]', space=smem, size = 0x4, offset = 0x4, fixed_abs, tag = 'smem constant byte address 0x4 - core index']
  #allocation1 [shape = 'u32[144,128]{1,0:T(1,128)}', space=vmem, size = 0x12000, scoped, tag = 'internal scratch']
  #allocation2 [shape = 'f32[2,32]{1,0:T(2,128)}', space=vmem, size = 0x400, scoped, tag = 'scratch operand']
  %s0 = inlined_call_operand.vmem [shape: f32[4,2,128], index: 0, kind: input, shape index: {}]
  %s1 = inlined_call_operand.vmem [shape: f32[32,128], index: 1, kind: input, shape index: {}]
  %s2 = inlined_call_operand.vmem [shape: f32[32,128], index: 2, kind: input, shape index: {}]
  %s3 = inlined_call_operand.vmem [shape: f32[1,128], index: 3, kind: input, shape index: {}]
  %s4 = inlined_call_operand.vmem [shape: f32[32,128], index: 4, kind: input, shape index: {}]
  %s5 = inlined_call_operand.vmem [shape: f32[32,128], index: 5, kind: input, shape index: {}]
  %s6 = inlined_call_operand.vmem [shape: f32[1,128], index: 6, kind: input, shape index: {}]
  %s7 = inlined_call_operand.hbm [shape: f32[2,128], index: 7, kind: output, shape index: {}]
  %s8 = sld [smem:[#allocation0]]
  $region45: #{_lambda_.9} parent=0
    _
  %s10 = ssub.s32 1, %s8
  %s11 = scalar_select 0, %s10, %s8
  $region1: #{_lambda_.9} parent=0
    #allocation3 [shape = 'u8[1024]{0}', space=vmem, size = 0x400, scoped, tag = 'output window, operand 0, single buffered']
    #allocation4 [shape = 's32[1]{0}', space=sflag, size = 0x4, scoped, tag = 'scoped memory for _lambda_.9']
    %12 = vsyncpa [#allocation4], 0
    // Predicated region
    $region2: #{_lambda_.9} parent=1 // pred_check
      _
    $region3: #{_lambda_.9} parent=1 // pred_check_branch
      %14 = sbr.rel (0) target = $region5
    $region4: #{_lambda_.9} parent=1 // pred_region
      _
    $region5: #{_lambda_.9} parent=1 // pred_fallthru
      _
    // Predicated region
    $region6: #{_lambda_.9} parent=1 // pred_check
      _
    $region7: #{_lambda_.9} parent=1 // pred_check_branch
      %16 = sbr.rel (0) target = $region9
    $region8: #{_lambda_.9} parent=1 // pred_region
      _
    $region9: #{_lambda_.9} parent=1 // pred_fallthru
      _
    // Predicated region
    $region10: #{_lambda_.9} parent=1 // pred_check
      _
    $region11: #{_lambda_.9} parent=1 // pred_check_branch
      %18 = sbr.rel (0) target = $region13
    $region12: #{_lambda_.9} parent=1 // pred_region
      _
    $region13: #{_lambda_.9} parent=1 // pred_fallthru
      _
    // Predicated region
    $region14: #{_lambda_.9} parent=1 // pred_check
      _
    $region15: #{_lambda_.9} parent=1 // pred_check_branch
      %20 = sbr.rel (0) target = $region17
    $region16: #{_lambda_.9} parent=1 // pred_region
      _
    $region17: #{_lambda_.9} parent=1 // pred_fallthru
      _
    // Predicated region
    $region18: #{_lambda_.9} parent=1 // pred_check
      _
    $region19: #{_lambda_.9} parent=1 // pred_check_branch
      %22 = sbr.rel (0) target = $region21
    $region20: #{_lambda_.9} parent=1 // pred_region
      _
    $region21: #{_lambda_.9} parent=1 // pred_fallthru
      _
    // Predicated region
    $region22: #{_lambda_.9} parent=1 // pred_check
      _
    $region23: #{_lambda_.9} parent=1 // pred_check_branch
      %24 = sbr.rel (0) target = $region25
    $region24: #{_lambda_.9} parent=1 // pred_region
      _
    $region25: #{_lambda_.9} parent=1 // pred_fallthru
      _
    // Predicated region
    $region26: #{_lambda_.9} parent=1 // pred_check
      _
    $region27: #{_lambda_.9} parent=1 // pred_check_branch
      %26 = sbr.rel (0) target = $region29
    $region28: #{_lambda_.9} parent=1 // pred_region
      _
    $region29: #{_lambda_.9} parent=1 // pred_fallthru
      _
    %v27 = vld [vmem:[%s1] sm:$0xff]
    %v28 = vld [vmem:[%s1 + $0x8] sm:$0xff]
    %v29 = vld [vmem:[%s1 + $0x10] sm:$0xff]
    %v30 = vld [vmem:[%s1 + $0x18] sm:$0xff]
    %v31 = vld [vmem:[%s2] sm:$0xff]
    %v32 = vld [vmem:[%s2 + $0x8] sm:$0xff]
    %v33 = vld [vmem:[%s2 + $0x10] sm:$0xff]
    %v34 = vld [vmem:[%s2 + $0x18] sm:$0xff]
    %v35 = vld [vmem:[%s3] sm:$0x1]
    %v36 = vld [vmem:[%s4] sm:$0xff]
    %v37 = vld [vmem:[%s4 + $0x8] sm:$0xff]
    %v38 = vld [vmem:[%s4 + $0x10] sm:$0xff]
    %v39 = vld [vmem:[%s4 + $0x18] sm:$0xff]
    loop: start=0, step=1, limit=4
    $region30: #{_lambda_.9} parent=1 // loop_pre_header
      _
    $region31: #{_lambda_.9} parent=1 // loop_header
      %s41 = sphi 0, %s45
      %p42 = scmp.ge.s32.totalorder %s41, 4
      %v46 = vphi 0.0, %v267
      %v47 = vphi 0.0, %v565
      %v48 = vphi 0.0, %v261
      %v49 = vphi 0.0, %v559
      %v50 = vphi 0.0, %v571
    $region32: #{_lambda_.9} parent=1 // loop_header_branch
      %44 = sbr.rel (%p42) target = $region36
    $region33: #{_lambda_.9} parent=1 // loop_body
      %s51 = smul.u32 %s41, 2
      %s52 = scalar_lea.vmem %s0, %s51
      %v53 = vld [vmem:[%s52] sm:$0x3]
      %v55 = vrot.slane %v46, 1
      %56 = vrot.lane.b32.xlu0 %v55, 32
      %v57 = vpop.permute.xlu0 %56
      %vm58 = vcmask 261120
      %v59 = vsel %vm58, %v57, 0
      %61 = vmatprep.subr.mxu0 0.0
      %62 = vmatpush1.msra.mxu0 0.0
      %63 = vmatprep.subr.mxu0 0.0
      %64 = vmatpush1.msra.mxu0 0.0
      %65 = vmatprep.subr.mxu0 0.0
      %66 = vmatpush1.msra.mxu0 0.0
      %67 = vmatprep.subr.mxu0 0.0
      %68 = vmatpush1.msra.mxu0 0.0
      %69 = vmatprep.subr.mxu0 0.0
      %70 = vmatpush1.msra.mxu0 0.0
      %71 = vmatprep.subr.mxu0 0.0
      %72 = vmatpush1.msra.mxu0 0.0
      %73 = vmatprep.subr.mxu0 0.0
      %74 = vmatpush1.msra.mxu0 0.0
      %75 = vmatprep.subr.mxu0 0.0
      %76 = vmatpush1.msra.mxu0 0.0
      %77 = vmatprep.subr.mxu0 0.0
      %78 = vmatpush1.msra.mxu0 0.0
      %79 = vmatprep.subr.mxu0 0.0
      %80 = vmatpush1.msra.mxu0 0.0
      %81 = vmatprep.subr.mxu0 0.0
      %82 = vmatpush1.msra.mxu0 0.0
      %83 = vmatprep.subr.mxu0 0.0
      %84 = vmatpush1.msra.mxu0 0.0
      %85 = vmatprep.subr.mxu0 0.0
      %86 = vmatpush1.msra.mxu0 %v30
      %87 = vmatprep.subr.mxu0 0.0
      %88 = vmatpush1.msra.mxu0 %v29
      %89 = vmatprep.subr.mxu0 0.0
      %90 = vmatpush1.msra.mxu0 %v28
      %91 = vmatprep.subr.mxu0 0.0
      %92 = vmatpush1.msra.mxu0 %v27
      %93 = vmatprep.subr.mxu0 0.0
      %94 = vmatpush2.msra.mxu0 0.0
      %95 = vmatprep.subr.mxu0 0.0
      %96 = vmatpush2.msra.mxu0 0.0
      %97 = vmatprep.subr.mxu0 0.0
      %98 = vmatpush2.msra.mxu0 0.0
      %99 = vmatprep.subr.mxu0 0.0
      %100 = vmatpush2.msra.mxu0 0.0
      %101 = vmatprep.subr.mxu0 0.0
      %102 = vmatpush2.msra.mxu0 0.0
      %103 = vmatprep.subr.mxu0 0.0
      %104 = vmatpush2.msra.mxu0 0.0
      %105 = vmatprep.subr.mxu0 0.0
      %106 = vmatpush2.msra.mxu0 0.0
      %107 = vmatprep.subr.mxu0 0.0
      %108 = vmatpush2.msra.mxu0 0.0
      %109 = vmatprep.subr.mxu0 0.0
      %110 = vmatpush2.msra.mxu0 0.0
      %111 = vmatprep.subr.mxu0 0.0
      %112 = vmatpush2.msra.mxu0 0.0
      %113 = vmatprep.subr.mxu0 0.0
      %114 = vmatpush2.msra.mxu0 0.0
      %115 = vmatprep.subr.mxu0 0.0
      %116 = vmatpush2.msra.mxu0 0.0
      %117 = vmatprep.subr.mxu0 0.0
      %118 = vmatpush2.msra.mxu0 0.0
      %119 = vmatprep.subr.mxu0 0.0
      %120 = vmatpush2.msra.mxu0 0.0
      %121 = vmatprep.subr.mxu0 0.0
      %122 = vmatpush2.msra.mxu0 0.0
      %123 = vmatprep.subr.mxu0 0.0
      %124 = vmatpush2.msra.mxu0 0.0
      %125 = vmatprep.mubr.f32.mxu0 0.0
      %126 = vmatmul.mubr.f32.gmra.mxu0 %v59
      %v127 = vpop.f32.mrf.mxu0
      %v128 = vadd.f32 0.0, %v127
      %v129 = vpop.f32.mrf.mxu0
      %130 = vdwg.mxu0
      %v131 = vadd.f32 %v53, %v128
      %v132 = vxor.u32 %v131, 2147483648
      %v133 = vmul.f32 %v132, 1.442695
      %v134 = vpow.pop %v133
      %v135 = vadd.f32 %v134, 1.0
      %v136 = vrcp.pop %v135
      %v137 = vmul.f32 1.0, %v136
      %v138 = vtanh.pop %v131
      %v140 = vrot.slane %v48, 1
      %v142 = vmul.f32 %v137, %v140
      %144 = vrot.lane.b32.xlu0 %v138, 64
      %v145 = vpop.permute.xlu0 %144
      %v147 = vmul.f32 %v137, %v145
      %149 = vrot.lane.b32.xlu0 %v147, 32
      %v150 = vpop.permute.xlu0 %149
      %v152 = vadd.f32 %v142, %v150
      %v153 = vtanh.pop %v152
      %155 = vrot.lane.b32.xlu0 %v153, 64
      %v156 = vpop.permute.xlu0 %155
      %v158 = vmul.f32 %v137, %v156
      %160 = vrot.lane.b32.xlu0 %v158, 32
      %v161 = vpop.permute.xlu0 %160
      %vm163 = vcmask 253952
      %164 = vst.msk [vmem:[#allocation2] sm:$0x1] %vm163, %v161
      %v165 = vsel %vm58, %v161, 0
      %167 = vmatprep.subr.mxu0 0.0
      %168 = vmatpush1.msra.mxu0 0.0
      %169 = vmatprep.subr.mxu0 0.0
      %170 = vmatpush1.msra.mxu0 0.0
      %171 = vmatprep.subr.mxu0 0.0
      %172 = vmatpush1.msra.mxu0 0.0
      %173 = vmatprep.subr.mxu0 0.0
      %174 = vmatpush1.msra.mxu0 0.0
      %175 = vmatprep.subr.mxu0 0.0
      %176 = vmatpush1.msra.mxu0 0.0
      %177 = vmatprep.subr.mxu0 0.0
      %178 = vmatpush1.msra.mxu0 0.0
      %179 = vmatprep.subr.mxu0 0.0
      %180 = vmatpush1.msra.mxu0 0.0
      %181 = vmatprep.subr.mxu0 0.0
      %182 = vmatpush1.msra.mxu0 0.0
      %183 = vmatprep.subr.mxu0 0.0
      %184 = vmatpush1.msra.mxu0 0.0
      %185 = vmatprep.subr.mxu0 0.0
      %186 = vmatpush1.msra.mxu0 0.0
      %187 = vmatprep.subr.mxu0 0.0
      %188 = vmatpush1.msra.mxu0 0.0
      %189 = vmatprep.subr.mxu0 0.0
      %190 = vmatpush1.msra.mxu0 0.0
      %191 = vmatprep.subr.mxu0 0.0
      %192 = vmatpush1.msra.mxu0 %v30
      %193 = vmatprep.subr.mxu0 0.0
      %194 = vmatpush1.msra.mxu0 %v29
      %195 = vmatprep.subr.mxu0 0.0
      %196 = vmatpush1.msra.mxu0 %v28
      %197 = vmatprep.subr.mxu0 0.0
      %198 = vmatpush1.msra.mxu0 %v27
      %199 = vmatprep.subr.mxu0 0.0
      %200 = vmatpush2.msra.mxu0 0.0
      %201 = vmatprep.subr.mxu0 0.0
      %202 = vmatpush2.msra.mxu0 0.0
      %203 = vmatprep.subr.mxu0 0.0
      %204 = vmatpush2.msra.mxu0 0.0
      %205 = vmatprep.subr.mxu0 0.0
      %206 = vmatpush2.msra.mxu0 0.0
      %207 = vmatprep.subr.mxu0 0.0
      %208 = vmatpush2.msra.mxu0 0.0
      %209 = vmatprep.subr.mxu0 0.0
      %210 = vmatpush2.msra.mxu0 0.0
      %211 = vmatprep.subr.mxu0 0.0
      %212 = vmatpush2.msra.mxu0 0.0
      %213 = vmatprep.subr.mxu0 0.0
      %214 = vmatpush2.msra.mxu0 0.0
      %215 = vmatprep.subr.mxu0 0.0
      %216 = vmatpush2.msra.mxu0 0.0
      %217 = vmatprep.subr.mxu0 0.0
      %218 = vmatpush2.msra.mxu0 0.0
      %219 = vmatprep.subr.mxu0 0.0
      %220 = vmatpush2.msra.mxu0 0.0
      %221 = vmatprep.subr.mxu0 0.0
      %222 = vmatpush2.msra.mxu0 0.0
      %223 = vmatprep.subr.mxu0 0.0
      %224 = vmatpush2.msra.mxu0 0.0
      %225 = vmatprep.subr.mxu0 0.0
      %226 = vmatpush2.msra.mxu0 0.0
      %227 = vmatprep.subr.mxu0 0.0
      %228 = vmatpush2.msra.mxu0 0.0
      %229 = vmatprep.subr.mxu0 0.0
      %230 = vmatpush2.msra.mxu0 0.0
      %231 = vmatprep.mubr.f32.mxu0 0.0
      %232 = vmatmul.mubr.f32.gmra.mxu0 %v165
      %v233 = vpop.f32.mrf.mxu0
      %v234 = vadd.f32 0.0, %v233
      %v235 = vpop.f32.mrf.mxu0
      %236 = vdwg.mxu0
      %v238 = vrot.slane %v234, 7
      %v240 = vadd.f32 %v53, %v238
      %v241 = vxor.u32 %v240, 2147483648
      %v242 = vmul.f32 %v241, 1.442695
      %v243 = vpow.pop %v242
      %v244 = vadd.f32 %v243, 1.0
      %v245 = vrcp.pop %v244
      %v246 = vmul.f32 1.0, %v245
      %v247 = vtanh.pop %v240
      %v249 = vrot.slane %v152, 7
      %v251 = vmul.f32 %v246, %v249
      %253 = vrot.lane.b32.xlu0 %v247, 64
      %v254 = vpop.permute.xlu0 %253
      %v256 = vmul.f32 %v246, %v254
      %258 = vrot.lane.b32.xlu0 %v256, 32
      %v259 = vpop.permute.xlu0 %258
      %v261 = vadd.f32 %v251, %v259
      %v262 = vtanh.pop %v261
      %264 = vrot.lane.b32.xlu0 %v262, 64
      %v265 = vpop.permute.xlu0 %264
      %v267 = vmul.f32 %v246, %v265
      %269 = vrot.lane.b32.xlu0 %v267, 32
      %v270 = vpop.permute.xlu0 %269
      %vm272 = vcmask 254977
      %273 = vst.msk [vmem:[#allocation2] sm:$0x2] %vm272, %v270
      %v274 = vld [vmem:[#allocation2] sm:$0x3]
      %v276 = vlaneseq
      %v277 = vshrl.u32 %v276, 7
      %v278 = vsub.s32 0, %v277
      %v279 = vrot.slane %v35, %v278
      %v282 = vsel %vm58, %v274, 0
      %284 = vmatprep.subr.mxu0 0.0
      %285 = vmatpush1.msra.mxu0 0.0
      %286 = vmatprep.subr.mxu0 0.0
      %287 = vmatpush1.msra.mxu0 0.0
      %288 = vmatprep.subr.mxu0 0.0
      %289 = vmatpush1.msra.mxu0 0.0
      %290 = vmatprep.subr.mxu0 0.0
      %291 = vmatpush1.msra.mxu0 0.0
      %292 = vmatprep.subr.mxu0 0.0
      %293 = vmatpush1.msra.mxu0 0.0
      %294 = vmatprep.subr.mxu0 0.0
      %295 = vmatpush1.msra.mxu0 0.0
      %296 = vmatprep.subr.mxu0 0.0
      %297 = vmatpush1.msra.mxu0 0.0
      %298 = vmatprep.subr.mxu0 0.0
      %299 = vmatpush1.msra.mxu0 0.0
      %300 = vmatprep.subr.mxu0 0.0
      %301 = vmatpush1.msra.mxu0 0.0
      %302 = vmatprep.subr.mxu0 0.0
      %303 = vmatpush1.msra.mxu0 0.0
      %304 = vmatprep.subr.mxu0 0.0
      %305 = vmatpush1.msra.mxu0 0.0
      %306 = vmatprep.subr.mxu0 0.0
      %307 = vmatpush1.msra.mxu0 0.0
      %308 = vmatprep.subr.mxu0 0.0
      %309 = vmatpush1.msra.mxu0 %v34
      %310 = vmatprep.subr.mxu0 0.0
      %311 = vmatpush1.msra.mxu0 %v33
      %312 = vmatprep.subr.mxu0 0.0
      %313 = vmatpush1.msra.mxu0 %v32
      %314 = vmatprep.subr.mxu0 0.0
      %315 = vmatpush1.msra.mxu0 %v31
      %316 = vmatprep.subr.mxu0 0.0
      %317 = vmatpush2.msra.mxu0 0.0
      %318 = vmatprep.subr.mxu0 0.0
      %319 = vmatpush2.msra.mxu0 0.0
      %320 = vmatprep.subr.mxu0 0.0
      %321 = vmatpush2.msra.mxu0 0.0
      %322 = vmatprep.subr.mxu0 0.0
      %323 = vmatpush2.msra.mxu0 0.0
      %324 = vmatprep.subr.mxu0 0.0
      %325 = vmatpush2.msra.mxu0 0.0
      %326 = vmatprep.subr.mxu0 0.0
      %327 = vmatpush2.msra.mxu0 0.0
      %328 = vmatprep.subr.mxu0 0.0
      %329 = vmatpush2.msra.mxu0 0.0
      %330 = vmatprep.subr.mxu0 0.0
      %331 = vmatpush2.msra.mxu0 0.0
      %332 = vmatprep.subr.mxu0 0.0
      %333 = vmatpush2.msra.mxu0 0.0
      %334 = vmatprep.subr.mxu0 0.0
      %335 = vmatpush2.msra.mxu0 0.0
      %336 = vmatprep.subr.mxu0 0.0
      %337 = vmatpush2.msra.mxu0 0.0
      %338 = vmatprep.subr.mxu0 0.0
      %339 = vmatpush2.msra.mxu0 0.0
      %340 = vmatprep.subr.mxu0 0.0
      %341 = vmatpush2.msra.mxu0 0.0
      %342 = vmatprep.subr.mxu0 0.0
      %343 = vmatpush2.msra.mxu0 0.0
      %344 = vmatprep.subr.mxu0 0.0
      %345 = vmatpush2.msra.mxu0 0.0
      %346 = vmatprep.subr.mxu0 0.0
      %347 = vmatpush2.msra.mxu0 0.0
      %348 = vmatprep.mubr.f32.mxu0 0.0
      %349 = vmatmul.mubr.f32.gmra.mxu0 %v282
      %v350 = vpop.f32.mrf.mxu0
      %v351 = vadd.f32 %v279, %v350
      %v352 = vpop.f32.mrf.mxu0
      %353 = vdwg.mxu0
      %v355 = vrot.slane %v47, 1
      %356 = vrot.lane.b32.xlu0 %v355, 32
      %v357 = vpop.permute.xlu0 %356
      %v358 = vsel %vm58, %v357, 0
      %360 = vmatprep.subr.mxu0 0.0
      %361 = vmatpush1.msra.mxu0 0.0
      %362 = vmatprep.subr.mxu0 0.0
      %363 = vmatpush1.msra.mxu0 0.0
      %364 = vmatprep.subr.mxu0 0.0
      %365 = vmatpush1.msra.mxu0 0.0
      %366 = vmatprep.subr.mxu0 0.0
      %367 = vmatpush1.msra.mxu0 0.0
      %368 = vmatprep.subr.mxu0 0.0
      %369 = vmatpush1.msra.mxu0 0.0
      %370 = vmatprep.subr.mxu0 0.0
      %371 = vmatpush1.msra.mxu0 0.0
      %372 = vmatprep.subr.mxu0 0.0
      %373 = vmatpush1.msra.mxu0 0.0
      %374 = vmatprep.subr.mxu0 0.0
      %375 = vmatpush1.msra.mxu0 0.0
      %376 = vmatprep.subr.mxu0 0.0
      %377 = vmatpush1.msra.mxu0 0.0
      %378 = vmatprep.subr.mxu0 0.0
      %379 = vmatpush1.msra.mxu0 0.0
      %380 = vmatprep.subr.mxu0 0.0
      %381 = vmatpush1.msra.mxu0 0.0
      %382 = vmatprep.subr.mxu0 0.0
      %383 = vmatpush1.msra.mxu0 0.0
      %384 = vmatprep.subr.mxu0 0.0
      %385 = vmatpush1.msra.mxu0 %v39
      %386 = vmatprep.subr.mxu0 0.0
      %387 = vmatpush1.msra.mxu0 %v38
      %388 = vmatprep.subr.mxu0 0.0
      %389 = vmatpush1.msra.mxu0 %v37
      %390 = vmatprep.subr.mxu0 0.0
      %391 = vmatpush1.msra.mxu0 %v36
      %392 = vmatprep.subr.mxu0 0.0
      %393 = vmatpush2.msra.mxu0 0.0
      %394 = vmatprep.subr.mxu0 0.0
      %395 = vmatpush2.msra.mxu0 0.0
      %396 = vmatprep.subr.mxu0 0.0
      %397 = vmatpush2.msra.mxu0 0.0
      %398 = vmatprep.subr.mxu0 0.0
      %399 = vmatpush2.msra.mxu0 0.0
      %400 = vmatprep.subr.mxu0 0.0
      %401 = vmatpush2.msra.mxu0 0.0
      %402 = vmatprep.subr.mxu0 0.0
      %403 = vmatpush2.msra.mxu0 0.0
      %404 = vmatprep.subr.mxu0 0.0
      %405 = vmatpush2.msra.mxu0 0.0
      %406 = vmatprep.subr.mxu0 0.0
      %407 = vmatpush2.msra.mxu0 0.0
      %408 = vmatprep.subr.mxu0 0.0
      %409 = vmatpush2.msra.mxu0 0.0
      %410 = vmatprep.subr.mxu0 0.0
      %411 = vmatpush2.msra.mxu0 0.0
      %412 = vmatprep.subr.mxu0 0.0
      %413 = vmatpush2.msra.mxu0 0.0
      %414 = vmatprep.subr.mxu0 0.0
      %415 = vmatpush2.msra.mxu0 0.0
      %416 = vmatprep.subr.mxu0 0.0
      %417 = vmatpush2.msra.mxu0 0.0
      %418 = vmatprep.subr.mxu0 0.0
      %419 = vmatpush2.msra.mxu0 0.0
      %420 = vmatprep.subr.mxu0 0.0
      %421 = vmatpush2.msra.mxu0 0.0
      %422 = vmatprep.subr.mxu0 0.0
      %423 = vmatpush2.msra.mxu0 0.0
      %424 = vmatprep.mubr.f32.mxu0 0.0
      %425 = vmatmul.mubr.f32.gmra.mxu0 %v358
      %v426 = vpop.f32.mrf.mxu0
      %v427 = vadd.f32 0.0, %v426
      %v428 = vpop.f32.mrf.mxu0
      %429 = vdwg.mxu0
      %v430 = vadd.f32 %v351, %v427
      %v431 = vxor.u32 %v430, 2147483648
      %v432 = vmul.f32 %v431, 1.442695
      %v433 = vpow.pop %v432
      %v434 = vadd.f32 %v433, 1.0
      %v435 = vrcp.pop %v434
      %v436 = vmul.f32 1.0, %v435
      %v437 = vtanh.pop %v430
      %v439 = vrot.slane %v49, 1
      %v441 = vmul.f32 %v436, %v439
      %443 = vrot.lane.b32.xlu0 %v437, 64
      %v444 = vpop.permute.xlu0 %443
      %v446 = vmul.f32 %v436, %v444
      %448 = vrot.lane.b32.xlu0 %v446, 32
      %v449 = vpop.permute.xlu0 %448
      %v451 = vadd.f32 %v441, %v449
      %v452 = vtanh.pop %v451
      %454 = vrot.lane.b32.xlu0 %v452, 64
      %v455 = vpop.permute.xlu0 %454
      %v457 = vmul.f32 %v436, %v455
      %459 = vrot.lane.b32.xlu0 %v457, 32
      %v460 = vpop.permute.xlu0 %459
      %462 = vst.msk [vmem:[#allocation2] sm:$0x1] %vm163, %v460
      %v463 = vsel %vm58, %v460, 0
      %465 = vmatprep.subr.mxu0 0.0
      %466 = vmatpush1.msra.mxu0 0.0
      %467 = vmatprep.subr.mxu0 0.0
      %468 = vmatpush1.msra.mxu0 0.0
      %469 = vmatprep.subr.mxu0 0.0
      %470 = vmatpush1.msra.mxu0 0.0
      %471 = vmatprep.subr.mxu0 0.0
      %472 = vmatpush1.msra.mxu0 0.0
      %473 = vmatprep.subr.mxu0 0.0
      %474 = vmatpush1.msra.mxu0 0.0
      %475 = vmatprep.subr.mxu0 0.0
      %476 = vmatpush1.msra.mxu0 0.0
      %477 = vmatprep.subr.mxu0 0.0
      %478 = vmatpush1.msra.mxu0 0.0
      %479 = vmatprep.subr.mxu0 0.0
      %480 = vmatpush1.msra.mxu0 0.0
      %481 = vmatprep.subr.mxu0 0.0
      %482 = vmatpush1.msra.mxu0 0.0
      %483 = vmatprep.subr.mxu0 0.0
      %484 = vmatpush1.msra.mxu0 0.0
      %485 = vmatprep.subr.mxu0 0.0
      %486 = vmatpush1.msra.mxu0 0.0
      %487 = vmatprep.subr.mxu0 0.0
      %488 = vmatpush1.msra.mxu0 0.0
      %489 = vmatprep.subr.mxu0 0.0
      %490 = vmatpush1.msra.mxu0 %v39
      %491 = vmatprep.subr.mxu0 0.0
      %492 = vmatpush1.msra.mxu0 %v38
      %493 = vmatprep.subr.mxu0 0.0
      %494 = vmatpush1.msra.mxu0 %v37
      %495 = vmatprep.subr.mxu0 0.0
      %496 = vmatpush1.msra.mxu0 %v36
      %497 = vmatprep.subr.mxu0 0.0
      %498 = vmatpush2.msra.mxu0 0.0
      %499 = vmatprep.subr.mxu0 0.0
      %500 = vmatpush2.msra.mxu0 0.0
      %501 = vmatprep.subr.mxu0 0.0
      %502 = vmatpush2.msra.mxu0 0.0
      %503 = vmatprep.subr.mxu0 0.0
      %504 = vmatpush2.msra.mxu0 0.0
      %505 = vmatprep.subr.mxu0 0.0
      %506 = vmatpush2.msra.mxu0 0.0
      %507 = vmatprep.subr.mxu0 0.0
      %508 = vmatpush2.msra.mxu0 0.0
      %509 = vmatprep.subr.mxu0 0.0
      %510 = vmatpush2.msra.mxu0 0.0
      %511 = vmatprep.subr.mxu0 0.0
      %512 = vmatpush2.msra.mxu0 0.0
      %513 = vmatprep.subr.mxu0 0.0
      %514 = vmatpush2.msra.mxu0 0.0
      %515 = vmatprep.subr.mxu0 0.0
      %516 = vmatpush2.msra.mxu0 0.0
      %517 = vmatprep.subr.mxu0 0.0
      %518 = vmatpush2.msra.mxu0 0.0
      %519 = vmatprep.subr.mxu0 0.0
      %520 = vmatpush2.msra.mxu0 0.0
      %521 = vmatprep.subr.mxu0 0.0
      %522 = vmatpush2.msra.mxu0 0.0
      %523 = vmatprep.subr.mxu0 0.0
      %524 = vmatpush2.msra.mxu0 0.0
      %525 = vmatprep.subr.mxu0 0.0
      %526 = vmatpush2.msra.mxu0 0.0
      %527 = vmatprep.subr.mxu0 0.0
      %528 = vmatpush2.msra.mxu0 0.0
      %529 = vmatprep.mubr.f32.mxu0 0.0
      %530 = vmatmul.mubr.f32.gmra.mxu0 %v463
      %v531 = vpop.f32.mrf.mxu0
      %v532 = vadd.f32 0.0, %v531
      %v533 = vpop.f32.mrf.mxu0
      %534 = vdwg.mxu0
      %v536 = vrot.slane %v532, 7
      %v538 = vadd.f32 %v351, %v536
      %v539 = vxor.u32 %v538, 2147483648
      %v540 = vmul.f32 %v539, 1.442695
      %v541 = vpow.pop %v540
      %v542 = vadd.f32 %v541, 1.0
      %v543 = vrcp.pop %v542
      %v544 = vmul.f32 1.0, %v543
      %v545 = vtanh.pop %v538
      %v547 = vrot.slane %v451, 7
      %v549 = vmul.f32 %v544, %v547
      %551 = vrot.lane.b32.xlu0 %v545, 64
      %v552 = vpop.permute.xlu0 %551
      %v554 = vmul.f32 %v544, %v552
      %556 = vrot.lane.b32.xlu0 %v554, 32
      %v557 = vpop.permute.xlu0 %556
      %v559 = vadd.f32 %v549, %v557
      %v560 = vtanh.pop %v559
      %562 = vrot.lane.b32.xlu0 %v560, 64
      %v563 = vpop.permute.xlu0 %562
      %v565 = vmul.f32 %v544, %v563
      %567 = vrot.lane.b32.xlu0 %v565, 32
      %v568 = vpop.permute.xlu0 %567
      %570 = vst.msk [vmem:[#allocation2] sm:$0x2] %vm272, %v568
      %v571 = vld [vmem:[#allocation2] sm:$0x3]
    $region34: #{_lambda_.9} parent=1 // loop_footer
      %s45 = sadd.s32 1, %s41
    $region35: #{_lambda_.9} parent=1 // loop_footer_branch
      %40 = sbr.rel target = $region31
    $region36: #{_lambda_.9} parent=1 // loop_exit
      _
    %v572 = vld [vmem:[%s5] sm:$0xff]
    %v573 = vld [vmem:[%s5 + $0x8] sm:$0xff]
    %v574 = vld [vmem:[%s5 + $0x10] sm:$0xff]
    %v575 = vld [vmem:[%s5 + $0x18] sm:$0xff]
    %v576 = vld [vmem:[%s6] sm:$0x1]
    %v578 = vlaneseq
    %v579 = vshrl.u32 %v578, 7
    %v580 = vsub.s32 0, %v579
    %v581 = vrot.slane %v576, %v580
    %vm583 = vcmask 261120
    %v585 = vsel %vm583, %v50, 0
    %587 = vmatprep.subr.mxu0 0.0
    %588 = vmatpush1.msra.mxu0 0.0
    %589 = vmatprep.subr.mxu0 0.0
    %590 = vmatpush1.msra.mxu0 0.0
    %591 = vmatprep.subr.mxu0 0.0
    %592 = vmatpush1.msra.mxu0 0.0
    %593 = vmatprep.subr.mxu0 0.0
    %594 = vmatpush1.msra.mxu0 0.0
    %595 = vmatprep.subr.mxu0 0.0
    %596 = vmatpush1.msra.mxu0 0.0
    %597 = vmatprep.subr.mxu0 0.0
    %598 = vmatpush1.msra.mxu0 0.0
    %599 = vmatprep.subr.mxu0 0.0
    %600 = vmatpush1.msra.mxu0 0.0
    %601 = vmatprep.subr.mxu0 0.0
    %602 = vmatpush1.msra.mxu0 0.0
    %603 = vmatprep.subr.mxu0 0.0
    %604 = vmatpush1.msra.mxu0 0.0
    %605 = vmatprep.subr.mxu0 0.0
    %606 = vmatpush1.msra.mxu0 0.0
    %607 = vmatprep.subr.mxu0 0.0
    %608 = vmatpush1.msra.mxu0 0.0
    %609 = vmatprep.subr.mxu0 0.0
    %610 = vmatpush1.msra.mxu0 0.0
    %611 = vmatprep.subr.mxu0 0.0
    %612 = vmatpush1.msra.mxu0 %v575
    %613 = vmatprep.subr.mxu0 0.0
    %614 = vmatpush1.msra.mxu0 %v574
    %615 = vmatprep.subr.mxu0 0.0
    %616 = vmatpush1.msra.mxu0 %v573
    %617 = vmatprep.subr.mxu0 0.0
    %618 = vmatpush1.msra.mxu0 %v572
    %619 = vmatprep.subr.mxu0 0.0
    %620 = vmatpush2.msra.mxu0 0.0
    %621 = vmatprep.subr.mxu0 0.0
    %622 = vmatpush2.msra.mxu0 0.0
    %623 = vmatprep.subr.mxu0 0.0
    %624 = vmatpush2.msra.mxu0 0.0
    %625 = vmatprep.subr.mxu0 0.0
    %626 = vmatpush2.msra.mxu0 0.0
    %627 = vmatprep.subr.mxu0 0.0
    %628 = vmatpush2.msra.mxu0 0.0
    %629 = vmatprep.subr.mxu0 0.0
    %630 = vmatpush2.msra.mxu0 0.0
    %631 = vmatprep.subr.mxu0 0.0
    %632 = vmatpush2.msra.mxu0 0.0
    %633 = vmatprep.subr.mxu0 0.0
    %634 = vmatpush2.msra.mxu0 0.0
    %635 = vmatprep.subr.mxu0 0.0
    %636 = vmatpush2.msra.mxu0 0.0
    %637 = vmatprep.subr.mxu0 0.0
    %638 = vmatpush2.msra.mxu0 0.0
    %639 = vmatprep.subr.mxu0 0.0
    %640 = vmatpush2.msra.mxu0 0.0
    %641 = vmatprep.subr.mxu0 0.0
    %642 = vmatpush2.msra.mxu0 0.0
    %643 = vmatprep.subr.mxu0 0.0
    %644 = vmatpush2.msra.mxu0 0.0
    %645 = vmatprep.subr.mxu0 0.0
    %646 = vmatpush2.msra.mxu0 0.0
    %647 = vmatprep.subr.mxu0 0.0
    %648 = vmatpush2.msra.mxu0 0.0
    %649 = vmatprep.subr.mxu0 0.0
    %650 = vmatpush2.msra.mxu0 0.0
    %651 = vmatprep.mubr.f32.mxu0 0.0
    %652 = vmatmul.mubr.f32.gmra.mxu0 %v585
    %v653 = vpop.f32.mrf.mxu0
    %v654 = vadd.f32 %v581, %v653
    %v655 = vpop.f32.mrf.mxu0
    %656 = vdwg.mxu0
    %657 = vst [vmem:[#allocation3] sm:$0x3] %v654
    // Predicated region
    $region37: #{_lambda_.9} parent=1 // pred_check
      _
    $region38: #{_lambda_.9} parent=1 // pred_check_branch
      %659 = sbr.rel (0) target = $region40
    $region39: #{_lambda_.9} parent=1 // pred_region
      %s661 = ssub.s32 32, 32
      %662 = vsyncadd [#allocation4], %s661
      %s664 = sshll.u32 [#allocation3], 4
      %s665 = int_to_ptr.vmem [resolvable:$true] %s664
      %667 = dma.vmem_to_hbm [thread:$0]  %s665, 32, %s7, [#allocation4]
    $region40: #{_lambda_.9} parent=1 // pred_fallthru
      _
    // Predicated region
    $region41: #{_lambda_.9} parent=1 // pred_check
      _
    $region42: #{_lambda_.9} parent=1 // pred_check_branch
      %669 = sbr.rel (0) target = $region44
    $region43: #{_lambda_.9} parent=1 // pred_region
      %670 = dma.done [#allocation4], 32
    $region44: #{_lambda_.9} parent=1 // pred_fallthru
      _
    %671 = vsyncpa [#allocation4], 1

</llo_original>
